<compile_context>
chip_gen: v7x
topology: tpu7x:2x2x1
jax: 0.10.0
libtpu: 0.0.40
codegen_flags: <defaults>
</compile_context>

<pallas_src>
import jax
import jax.numpy as jnp
from jax.experimental import pallas as pl
from jax.experimental.pallas import tpu as pltpu

BN_EPS = 1e-3


# ---------------------------------------------------------------------------
# Pallas kernels
# ---------------------------------------------------------------------------
def _binarize(x):
    # Binarization1.forward: +1 where x > 0, -1 where x <= 0.
    return jnp.where(x <= 0, -1.0, 1.0)


def _make_upsample_kernel(H, W, Cin, Cout4, use_shifts, relu):
    """Phase-decomposed binarized ConvTranspose2d (stride 2).

    use_shifts=True : 3x3, s=2, p=1, op=1  ->  (H*W, 4*Cin) x (4*Cin, 4*Cout)
    use_shifts=False: 2x2, s=2, p=0, op=0  ->  (H*W,   Cin) x (  Cin, 4*Cout)
    Output is phase-packed (H, W, 4*Cout); fused per-channel affine
    (folded BatchNorm or Scale_2d) and optional ReLU.
    """

    def kernel(x_ref, w_ref, scale_ref, shift_ref, o_ref):
        xb = _binarize(x_ref[0])                            # (H, W, Cin) f32 ±1
        if use_shifts:
            # pad one zero row (bottom) and one zero col (right): shifts (dh,dw)∈{0,1}²
            zr = jnp.zeros((1, W, Cin), xb.dtype)
            zc = jnp.zeros((H + 1, 1, Cin), xb.dtype)
            xp = jnp.concatenate([xb, zr], axis=0)
            xp = jnp.concatenate([xp, zc], axis=1)          # (H+1, W+1, Cin)
            cols = jnp.concatenate(
                [xp[0:H, 0:W], xp[0:H, 1:W + 1],
                 xp[1:H + 1, 0:W], xp[1:H + 1, 1:W + 1]],
                axis=-1)                                    # (H, W, 4*Cin)
            lhs = cols.astype(jnp.bfloat16).reshape(H * W, 4 * Cin)
        else:
            lhs = xb.astype(jnp.bfloat16).reshape(H * W, Cin)

        y = jnp.dot(lhs, w_ref[...], preferred_element_type=jnp.float32)
        y = y * scale_ref[...] + shift_ref[...]
        if relu:
            y = jnp.maximum(y, 0.0)
        o_ref[0] = y.reshape(H, W, Cout4)

    return kernel


def upsample_pallas(x, w_packed, scale4, shift4, *, use_shifts, relu):
    """x: (N, H, W, Cin) f32.  Returns phase-packed (N, H, W, 4*Cout) f32."""
    N, H, W, Cin = x.shape
    Kdim, Cout4 = w_packed.shape

    return pl.pallas_call(
        _make_upsample_kernel(H, W, Cin, Cout4, use_shifts, relu),
        out_shape=jax.ShapeDtypeStruct((N, H, W, Cout4), jnp.float32),
        grid_spec=pltpu.PrefetchScalarGridSpec(
            num_scalar_prefetch=0,
            grid=(N,),
            in_specs=[
                pl.BlockSpec((1, H, W, Cin), lambda n: (n, 0, 0, 0)),
                pl.BlockSpec((Kdim, Cout4), lambda n: (0, 0)),
                pl.BlockSpec((1, Cout4), lambda n: (0, 0)),
                pl.BlockSpec((1, Cout4), lambda n: (0, 0)),
            ],
            out_specs=pl.BlockSpec((1, H, W, Cout4), lambda n: (n, 0, 0, 0)),
        ),
        compiler_params=pltpu.CompilerParams(dimension_semantics=("parallel",)),
    )(x, w_packed,
      scale4.reshape(1, Cout4).astype(jnp.float32),
      shift4.reshape(1, Cout4).astype(jnp.float32))


def _make_nb_kernel(H, W, C):
    """Fused non_bottleneck_1d: 4 convs + biases + folded BNs + residual + ReLU.

    All intermediates live in VMEM; each conv is a single (H*W, 3C) x (3C, C)
    bf16 matmul with f32 accumulation.
    """
    HW = H * W

    def conv_v(inp, w):  # (3,1) conv, pad 1 top/bottom; inp: (H, W, C) f32
        z = jnp.zeros((1, W, C), inp.dtype)
        xp = jnp.concatenate([z, inp, z], axis=0)           # (H+2, W, C)
        cols = jnp.concatenate([xp[0:H], xp[1:H + 1], xp[2:H + 2]], axis=-1)
        lhs = cols.astype(jnp.bfloat16).reshape(HW, 3 * C)
        return jnp.dot(lhs, w, preferred_element_type=jnp.float32)

    def conv_h(inp, w):  # (1,3) conv, pad 1 left/right
        z = jnp.zeros((H, 1, C), inp.dtype)
        xp = jnp.concatenate([z, inp, z], axis=1)           # (H, W+2, C)
        cols = jnp.concatenate([xp[:, 0:W], xp[:, 1:W + 1], xp[:, 2:W + 2]],
                               axis=-1)
        lhs = cols.astype(jnp.bfloat16).reshape(HW, 3 * C)
        return jnp.dot(lhs, w, preferred_element_type=jnp.float32)

    def kernel(x_ref, w_ref, aff_ref, o_ref):
        x = x_ref[0]                                        # (H, W, C) f32
        a = aff_ref[...]                                    # (8, C) f32

        y = jnp.maximum(conv_v(x, w_ref[0]) + a[1:2], 0.0)                 # conv3x1_1 + b, relu
        y = conv_h(y.reshape(H, W, C), w_ref[1]) * a[2:3] + a[3:4]         # conv1x3_1 + b, bn1
        y = jnp.maximum(y, 0.0)
        y = jnp.maximum(conv_v(y.reshape(H, W, C), w_ref[2]) + a[5:6], 0.0)  # conv3x1_2 + b, relu
        y = conv_h(y.reshape(H, W, C), w_ref[3]) * a[6:7] + a[7:8]         # conv1x3_2 + b, bn2
        y = jnp.maximum(y + x.reshape(HW, C), 0.0)          # dropout p=0; residual + relu
        o_ref[0] = y.reshape(H, W, C)

    return kernel


def nb_pallas(x, w4, aff):
    """x: (N, H, W, C) f32.  w4: (4, 3C, C) bf16.  aff: (8, C) f32."""
    N, H, W, C = x.shape
    return pl.pallas_call(
        _make_nb_kernel(H, W, C),
        out_shape=jax.ShapeDtypeStruct((N, H, W, C), jnp.float32),
        grid_spec=pltpu.PrefetchScalarGridSpec(
            num_scalar_prefetch=0,
            grid=(N,),
            in_specs=[
                pl.BlockSpec((1, H, W, C), lambda n: (n, 0, 0, 0)),
                pl.BlockSpec((4, 3 * C, C), lambda n: (0, 0, 0)),
                pl.BlockSpec((8, C), lambda n: (0, 0)),
            ],
            out_specs=pl.BlockSpec((1, H, W, C), lambda n: (n, 0, 0, 0)),
        ),
        compiler_params=pltpu.CompilerParams(dimension_semantics=("parallel",)),
    )(x, w4, aff)


# ---------------------------------------------------------------------------
# Parameter packing / layout plumbing (tiny, weights only)
# ---------------------------------------------------------------------------
def binarize_f(x):
    return jnp.where(x <= 0, -1.0, 1.0).astype(jnp.float32)


def bn_fold(bn):
    s = bn["g"] * jax.lax.rsqrt(bn["v"] + BN_EPS)
    return s, bn["be"] - bn["m"] * s


def _tap(phase, shift):
    # ConvTranspose2d(3, s=2, p=1, op=1) phase decomposition (per axis):
    #   even output (phase 0): uses input shift 0 with kernel tap 1
    #   odd  output (phase 1): shift 0 -> tap 2, shift 1 -> tap 0
    if phase == 0:
        return 1 if shift == 0 else None
    return 2 if shift == 0 else 0


def pack_tconv3(w_t):
    """Binarized (Cin, Cout, 3, 3) tconv weight -> (4*Cin, 4*Cout) phase matrix."""
    Cin, Cout = w_t.shape[0], w_t.shape[1]
    wb = binarize_f(w_t)
    out = jnp.zeros((4 * Cin, 4 * Cout), jnp.float32)
    for r in range(2):
        for c in range(2):
            for dh in range(2):
                for dw in range(2):
                    kh, kw = _tap(r, dh), _tap(c, dw)
                    if kh is None or kw is None:
                        continue
                    sh, ph = dh * 2 + dw, r * 2 + c
                    out = out.at[sh * Cin:(sh + 1) * Cin,
                                 ph * Cout:(ph + 1) * Cout].set(wb[:, :, kh, kw])
    return out.astype(jnp.bfloat16)


def pack_tconv2(w_t):
    """Binarized (Cin, Cout, 2, 2) tconv weight -> (Cin, 4*Cout)."""
    Cin, Cout = w_t.shape[0], w_t.shape[1]
    wb = binarize_f(w_t)                                    # out[2i+r,2j+c] = x[i,j] @ w[:,:,r,c]
    return jnp.transpose(wb, (0, 2, 3, 1)).reshape(Cin, 4 * Cout).astype(jnp.bfloat16)


def pack_nb(p, C):
    def mat_v(w):  # (C, C, 3, 1) -> (3C, C), rows = (tap, Cin)
        return jnp.transpose(w[:, :, :, 0], (2, 1, 0)).reshape(3 * C, C)

    def mat_h(w):  # (C, C, 1, 3) -> (3C, C)
        return jnp.transpose(w[:, :, 0, :], (2, 1, 0)).reshape(3 * C, C)

    w4 = jnp.stack([mat_v(p["w31_1"]), mat_h(p["w13_1"]),
                    mat_v(p["w31_2"]), mat_h(p["w13_2"])]).astype(jnp.bfloat16)

    s1, sh1 = bn_fold(p["bn1"])
    s2, sh2 = bn_fold(p["bn2"])
    ones = jnp.ones((C,), jnp.float32)
    aff = jnp.stack([
        ones, p["b31_1"],                      # conv3x1_1: bias only
        s1, s1 * p["b13_1"] + sh1,             # conv1x3_1: bias folded through bn1
        ones, p["b31_2"],                      # conv3x1_2: bias only
        s2, s2 * p["b13_2"] + sh2,             # conv1x3_2: bias folded through bn2
    ]).astype(jnp.float32)
    return w4, aff


def depth_to_space2(y, cout):
    # phase-packed (N, H, W, 4*Cout) -> (N, 2H, 2W, Cout); pure layout plumbing.
    N, H, W, _ = y.shape
    y = y.reshape(N, H, W, 2, 2, cout)
    y = jnp.transpose(y, (0, 1, 3, 2, 4, 5))
    return y.reshape(N, 2 * H, 2 * W, cout)


# ---------------------------------------------------------------------------
# Decoder forward (NCHW in / NCHW out, like the PyTorch module)
# ---------------------------------------------------------------------------
def decoder_forward(x_nchw, params):
    x = jnp.transpose(x_nchw, (0, 2, 3, 1)).astype(jnp.float32)   # NCHW -> NHWC

    # ---- UpsamplerBlock(128 -> 64): binarized TConv3x3/s2 + BN + ReLU -------
    s, sh = bn_fold(params["up1"]["bn"])    # TConv bias unused in the reference
    y = upsample_pallas(x, pack_tconv3(params["up1"]["w"]),
                        jnp.tile(s, 4), jnp.tile(sh, 4),
                        use_shifts=True, relu=True)
    x = depth_to_space2(y, 64)

    # ---- 2x non_bottleneck_1d(64) -------------------------------------------
    for name in ("nb1", "nb2"):
        w4, aff = pack_nb(params[name], 64)
        x = nb_pallas(x, w4, aff)

    # ---- UpsamplerBlock(64 -> 16) -------------------------------------------
    s, sh = bn_fold(params["up2"]["bn"])
    y = upsample_pallas(x, pack_tconv3(params["up2"]["w"]),
                        jnp.tile(s, 4), jnp.tile(sh, 4),
                        use_shifts=True, relu=True)
    x = depth_to_space2(y, 16)

    # ---- 2x non_bottleneck_1d(16) -------------------------------------------
    for name in ("nb3", "nb4"):
        w4, aff = pack_nb(params[name], 16)
        x = nb_pallas(x, w4, aff)

    # ---- output_conv: binarized TConv2x2/s2 + Scale_2d -----------------------
    nc = params["scale_par"].shape[0]
    y = upsample_pallas(x, pack_tconv2(params["wout"]),
                        jnp.tile(params["scale_par"], 4),
                        jnp.zeros((4 * nc,), jnp.float32),
                        use_shifts=False, relu=False)
    x = depth_to_space2(y, nc)

    return jnp.transpose(x, (0, 3, 1, 2))                         # NHWC -> NCHW


# ---------------------------------------------------------------------------
# Deterministic parameter construction
# ---------------------------------------------------------------------------
def init_params(num_classes):
    key = jax.random.PRNGKey(0)
    counter = [0]

    def rnd(shape, s=0.1):
        counter[0] += 1
        return s * jax.random.normal(jax.random.fold_in(key, counter[0]),
                                     shape, jnp.float32)

    def bn(ch):
        return dict(g=1.0 + rnd((ch,), 0.05), be=rnd((ch,), 0.05),
                    m=rnd((ch,), 0.05), v=1.0 + jnp.abs(rnd((ch,), 0.05)))

    def nb(ch):
        return dict(
            w31_1=rnd((ch, ch, 3, 1)), b31_1=rnd((ch,)),
            w13_1=rnd((ch, ch, 1, 3)), b13_1=rnd((ch,)),
            bn1=bn(ch),
            w31_2=rnd((ch, ch, 3, 1)), b31_2=rnd((ch,)),
            w13_2=rnd((ch, ch, 1, 3)), b13_2=rnd((ch,)),
            bn2=bn(ch),
        )

    return dict(
        up1=dict(w=rnd((128, 64, 3, 3)), bn=bn(64)),
        nb1=nb(64), nb2=nb(64),
        up2=dict(w=rnd((64, 16, 3, 3)), bn=bn(16)),
        nb3=nb(16), nb4=nb(16),
        wout=rnd((16, num_classes, 2, 2)),
        scale_par=jnp.full((num_classes,), 0.001, jnp.float32),   # Scale_2d init_val
    )


# ---------------------------------------------------------------------------
if __name__ == "__main__":
    num_classes = 8
    params = init_params(num_classes)

    # Decoder expects the encoder feature map: (N, 128, H, W)
    x = jax.random.normal(jax.random.PRNGKey(0), (2, 128, 4, 4), jnp.float32)

    out = jax.jit(decoder_forward)(x, params)
    jax.block_until_ready(out)

    assert out.shape == (2, num_classes, 32, 32), out.shape
    assert out.dtype == jnp.float32
    print("KERNEL_OK")
</pallas_src>

<mosaic_0001>
module attributes {stable_mosaic.version = 11 : i64} {
  func.func @kernel(%arg0: i32, %arg1: memref<1x4x4x128xf32, #tpu.memory_space<vmem>>, %arg2: memref<512x256xbf16, #tpu.memory_space<vmem>>, %arg3: memref<1x256xf32, #tpu.memory_space<vmem>>, %arg4: memref<1x256xf32, #tpu.memory_space<vmem>>, %arg5: memref<1x4x4x256xf32, #tpu.memory_space<vmem>>) attributes {dimension_semantics = [#tpu.dimension_semantics<parallel>], iteration_bounds = array<i64: 2>, scalar_prefetch = 0 : i64, scratch_operands = 0 : i64, tpu.core_type = #tpu.core_type<tc>, window_params = [{transform_indices = @transform_0, window_bounds = array<i64: 1, 4, 4, 128>}, {pipeline_mode = #tpu.pipeline_mode<synchronous>, transform_indices = @transform_1, window_bounds = array<i64: 512, 256>}, {pipeline_mode = #tpu.pipeline_mode<synchronous>, transform_indices = @transform_2, window_bounds = array<i64: 1, 256>}, {pipeline_mode = #tpu.pipeline_mode<synchronous>, transform_indices = @transform_3, window_bounds = array<i64: 1, 256>}, {transform_indices = @transform_4, window_bounds = array<i64: 1, 4, 4, 256>}]} {
    %c0 = arith.constant 0 : index
    %c0_0 = arith.constant 0 : index
    %c0_1 = arith.constant 0 : index
    %c0_2 = arith.constant 0 : index
    %0 = vector.load %arg1[%c0, %c0_0, %c0_1, %c0_2] : memref<1x4x4x128xf32, #tpu.memory_space<vmem>>, vector<1x4x4x128xf32>
    %1 = vector.shape_cast %0 : vector<1x4x4x128xf32> to vector<4x4x128xf32>
    %cst = arith.constant 0.000000e+00 : f32
    %2 = vector.broadcast %cst : f32 to vector<4x4x128xf32>
    %3 = arith.cmpf ole, %1, %2 : vector<4x4x128xf32>
    %cst_3 = arith.constant -1.000000e+00 : f32
    %cst_4 = arith.constant 1.000000e+00 : f32
    %4 = vector.broadcast %cst_3 : f32 to vector<4x4x128xf32>
    %5 = vector.broadcast %cst_4 : f32 to vector<4x4x128xf32>
    %6 = arith.select %3, %4, %5 : vector<4x4x128xi1>, vector<4x4x128xf32>
    %cst_5 = arith.constant 0.000000e+00 : f32
    %7 = vector.broadcast %cst_5 : f32 to vector<1x4x128xf32>
    %cst_6 = arith.constant 0.000000e+00 : f32
    %8 = vector.broadcast %cst_6 : f32 to vector<5x1x128xf32>
    %9 = tpu.concatenate %6, %7 in 0 : vector<4x4x128xf32>, vector<1x4x128xf32> -> vector<5x4x128xf32>
    %10 = tpu.concatenate %9, %8 in 1 : vector<5x4x128xf32>, vector<5x1x128xf32> -> vector<5x5x128xf32>
    %11 = vector.extract_strided_slice %10 {offsets = [0, 0, 0], sizes = [4, 4, 128], strides = [1, 1, 1]} : vector<5x5x128xf32> to vector<4x4x128xf32>
    %12 = vector.extract_strided_slice %10 {offsets = [0, 1, 0], sizes = [4, 4, 128], strides = [1, 1, 1]} : vector<5x5x128xf32> to vector<4x4x128xf32>
    %13 = vector.extract_strided_slice %10 {offsets = [1, 0, 0], sizes = [4, 4, 128], strides = [1, 1, 1]} : vector<5x5x128xf32> to vector<4x4x128xf32>
    %14 = vector.extract_strided_slice %10 {offsets = [1, 1, 0], sizes = [4, 4, 128], strides = [1, 1, 1]} : vector<5x5x128xf32> to vector<4x4x128xf32>
    %15 = tpu.concatenate %11, %12, %13, %14 in 2 : vector<4x4x128xf32>, vector<4x4x128xf32>, vector<4x4x128xf32>, vector<4x4x128xf32> -> vector<4x4x512xf32>
    %16 = arith.truncf %15 : vector<4x4x512xf32> to vector<4x4x512xbf16>
    %17 = vector.shape_cast %16 : vector<4x4x512xbf16> to vector<16x512xbf16>
    %c0_7 = arith.constant 0 : index
    %c0_8 = arith.constant 0 : index
    %18 = vector.load %arg2[%c0_7, %c0_8] : memref<512x256xbf16, #tpu.memory_space<vmem>>, vector<512x256xbf16>
    %cst_9 = arith.constant dense<0.000000e+00> : vector<16x256xf32>
    %19 = tpu.matmul %17, %18, %cst_9 {dimension_numbers = #tpu.dot_dimension_numbers<[1], [0], [0], [1], [0, 0, 1, 1], [], []>} : vector<16x512xbf16>, vector<512x256xbf16>, vector<16x256xf32> -> vector<16x256xf32>
    %c0_10 = arith.constant 0 : index
    %c0_11 = arith.constant 0 : index
    %20 = vector.load %arg3[%c0_10, %c0_11] : memref<1x256xf32, #tpu.memory_space<vmem>>, vector<1x256xf32>
    %21 = vector.broadcast %20 : vector<1x256xf32> to vector<16x256xf32>
    %22 = arith.mulf %19, %21 : vector<16x256xf32>
    %c0_12 = arith.constant 0 : index
    %c0_13 = arith.constant 0 : index
    %23 = vector.load %arg4[%c0_12, %c0_13] : memref<1x256xf32, #tpu.memory_space<vmem>>, vector<1x256xf32>
    %24 = vector.broadcast %23 : vector<1x256xf32> to vector<16x256xf32>
    %25 = arith.addf %22, %24 : vector<16x256xf32>
    %cst_14 = arith.constant 0.000000e+00 : f32
    %26 = vector.broadcast %cst_14 : f32 to vector<16x256xf32>
    %27 = arith.maximumf %25, %26 : vector<16x256xf32>
    %28 = vector.shape_cast %27 : vector<16x256xf32> to vector<4x4x256xf32>
    %c0_15 = arith.constant 0 : index
    %c0_16 = arith.constant 0 : index
    %c0_17 = arith.constant 0 : index
    %c0_18 = arith.constant 0 : index
    %29 = vector.load %arg5[%c0_15, %c0_16, %c0_17, %c0_18] : memref<1x4x4x256xf32, #tpu.memory_space<vmem>>, vector<1x4x4x256xf32>
    %30 = vector.shape_cast %29 : vector<1x4x4x256xf32> to vector<4x4x256xf32>
    %31 = vector.shape_cast %28 : vector<4x4x256xf32> to vector<1x4x4x256xf32>
    tpu.vector_store %arg5[%c0_15, %c0_16, %c0_17, %c0_18], %31 {strides = array<i32>} : memref<1x4x4x256xf32, #tpu.memory_space<vmem>>, vector<1x4x4x256xf32>,
    return
  }
  func.func @transform_0(%arg0: i32) -> (i32, i32, i32, i32) {
    %c0_i32 = arith.constant 0 : i32
    %c0_i32_0 = arith.constant 0 : i32
    %c0_i32_1 = arith.constant 0 : i32
    %c0_i32_2 = arith.constant 0 : i32
    return %arg0, %c0_i32, %c0_i32_0, %c0_i32_1 : i32, i32, i32, i32
  }
  func.func @transform_1(%arg0: i32) -> (i32, i32) {
    %c0_i32 = arith.constant 0 : i32
    %c0_i32_0 = arith.constant 0 : i32
    %c0_i32_1 = arith.constant 0 : i32
    return %c0_i32, %c0_i32_0 : i32, i32
  }
  func.func @transform_2(%arg0: i32) -> (i32, i32) {
    %c0_i32 = arith.constant 0 : i32
    %c0_i32_0 = arith.constant 0 : i32
    %c0_i32_1 = arith.constant 0 : i32
    return %c0_i32, %c0_i32_0 : i32, i32
  }
  func.func @transform_3(%arg0: i32) -> (i32, i32) {
    %c0_i32 = arith.constant 0 : i32
    %c0_i32_0 = arith.constant 0 : i32
    %c0_i32_1 = arith.constant 0 : i32
    return %c0_i32, %c0_i32_0 : i32, i32
  }
  func.func @transform_4(%arg0: i32) -> (i32, i32, i32, i32) {
    %c0_i32 = arith.constant 0 : i32
    %c0_i32_0 = arith.constant 0 : i32
    %c0_i32_1 = arith.constant 0 : i32
    %c0_i32_2 = arith.constant 0 : i32
    return %arg0, %c0_i32, %c0_i32_0, %c0_i32_1 : i32, i32, i32, i32
  }
}

module attributes {stable_mosaic.version = 11 : i64} {
  func.func @kernel(%arg0: i32, %arg1: memref<1x8x8x64xf32, #tpu.memory_space<vmem>>, %arg2: memref<4x192x64xbf16, #tpu.memory_space<vmem>>, %arg3: memref<8x64xf32, #tpu.memory_space<vmem>>, %arg4: memref<1x8x8x64xf32, #tpu.memory_space<vmem>>) attributes {dimension_semantics = [#tpu.dimension_semantics<parallel>], iteration_bounds = array<i64: 2>, scalar_prefetch = 0 : i64, scratch_operands = 0 : i64, tpu.core_type = #tpu.core_type<tc>, window_params = [{transform_indices = @transform_0, window_bounds = array<i64: 1, 8, 8, 64>}, {pipeline_mode = #tpu.pipeline_mode<synchronous>, transform_indices = @transform_1, window_bounds = array<i64: 4, 192, 64>}, {pipeline_mode = #tpu.pipeline_mode<synchronous>, transform_indices = @transform_2, window_bounds = array<i64: 8, 64>}, {transform_indices = @transform_3, window_bounds = array<i64: 1, 8, 8, 64>}]} {
    %c0 = arith.constant 0 : index
    %c0_0 = arith.constant 0 : index
    %c0_1 = arith.constant 0 : index
    %c0_2 = arith.constant 0 : index
    %0 = vector.load %arg1[%c0, %c0_0, %c0_1, %c0_2] : memref<1x8x8x64xf32, #tpu.memory_space<vmem>>, vector<1x8x8x64xf32>
    %1 = vector.shape_cast %0 : vector<1x8x8x64xf32> to vector<8x8x64xf32>
    %c0_3 = arith.constant 0 : index
    %c0_4 = arith.constant 0 : index
    %2 = vector.load %arg3[%c0_3, %c0_4] : memref<8x64xf32, #tpu.memory_space<vmem>>, vector<8x64xf32>
    %c0_5 = arith.constant 0 : index
    %c0_6 = arith.constant 0 : index
    %c0_7 = arith.constant 0 : index
    %3 = vector.load %arg2[%c0_5, %c0_6, %c0_7] : memref<4x192x64xbf16, #tpu.memory_space<vmem>>, vector<1x192x64xbf16>
    %4 = vector.shape_cast %3 : vector<1x192x64xbf16> to vector<192x64xbf16>
    %cst = arith.constant 0.000000e+00 : f32
    %5 = vector.broadcast %cst : f32 to vector<1x8x64xf32>
    %6 = tpu.concatenate %5, %1, %5 in 0 : vector<1x8x64xf32>, vector<8x8x64xf32>, vector<1x8x64xf32> -> vector<10x8x64xf32>
    %7 = vector.extract_strided_slice %6 {offsets = [0, 0, 0], sizes = [8, 8, 64], strides = [1, 1, 1]} : vector<10x8x64xf32> to vector<8x8x64xf32>
    %8 = vector.extract_strided_slice %6 {offsets = [1, 0, 0], sizes = [8, 8, 64], strides = [1, 1, 1]} : vector<10x8x64xf32> to vector<8x8x64xf32>
    %9 = vector.extract_strided_slice %6 {offsets = [2, 0, 0], sizes = [8, 8, 64], strides = [1, 1, 1]} : vector<10x8x64xf32> to vector<8x8x64xf32>
    %10 = tpu.concatenate %7, %8, %9 in 2 : vector<8x8x64xf32>, vector<8x8x64xf32>, vector<8x8x64xf32> -> vector<8x8x192xf32>
    %11 = arith.truncf %10 : vector<8x8x192xf32> to vector<8x8x192xbf16>
    %12 = vector.shape_cast %11 : vector<8x8x192xbf16> to vector<64x192xbf16>
    %cst_8 = arith.constant dense<0.000000e+00> : vector<64x64xf32>
    %13 = tpu.matmul %12, %4, %cst_8 {dimension_numbers = #tpu.dot_dimension_numbers<[1], [0], [0], [1], [0, 0, 1, 1], [], []>} : vector<64x192xbf16>, vector<192x64xbf16>, vector<64x64xf32> -> vector<64x64xf32>
    %14 = vector.extract_strided_slice %2 {offsets = [1, 0], sizes = [1, 64], strides = [1, 1]} : vector<8x64xf32> to vector<1x64xf32>
    %15 = vector.broadcast %14 : vector<1x64xf32> to vector<64x64xf32>
    %16 = arith.addf %13, %15 : vector<64x64xf32>
    %cst_9 = arith.constant 0.000000e+00 : f32
    %17 = vector.broadcast %cst_9 : f32 to vector<64x64xf32>
    %18 = arith.maximumf %16, %17 : vector<64x64xf32>
    %19 = vector.shape_cast %18 : vector<64x64xf32> to vector<8x8x64xf32>
    %c1 = arith.constant 1 : index
    %c0_10 = arith.constant 0 : index
    %c0_11 = arith.constant 0 : index
    %20 = vector.load %arg2[%c1, %c0_10, %c0_11] : memref<4x192x64xbf16, #tpu.memory_space<vmem>>, vector<1x192x64xbf16>
    %21 = vector.shape_cast %20 : vector<1x192x64xbf16> to vector<192x64xbf16>
    %cst_12 = arith.constant 0.000000e+00 : f32
    %22 = vector.broadcast %cst_12 : f32 to vector<8x1x64xf32>
    %23 = tpu.concatenate %22, %19, %22 in 1 : vector<8x1x64xf32>, vector<8x8x64xf32>, vector<8x1x64xf32> -> vector<8x10x64xf32>
    %24 = vector.extract_strided_slice %23 {offsets = [0, 0, 0], sizes = [8, 8, 64], strides = [1, 1, 1]} : vector<8x10x64xf32> to vector<8x8x64xf32>
    %25 = vector.extract_strided_slice %23 {offsets = [0, 1, 0], sizes = [8, 8, 64], strides = [1, 1, 1]} : vector<8x10x64xf32> to vector<8x8x64xf32>
    %26 = vector.extract_strided_slice %23 {offsets = [0, 2, 0], sizes = [8, 8, 64], strides = [1, 1, 1]} : vector<8x10x64xf32> to vector<8x8x64xf32>
    %27 = tpu.concatenate %24, %25, %26 in 2 : vector<8x8x64xf32>, vector<8x8x64xf32>, vector<8x8x64xf32> -> vector<8x8x192xf32>
    %28 = arith.truncf %27 : vector<8x8x192xf32> to vector<8x8x192xbf16>
    %29 = vector.shape_cast %28 : vector<8x8x192xbf16> to vector<64x192xbf16>
    %cst_13 = arith.constant dense<0.000000e+00> : vector<64x64xf32>
    %30 = tpu.matmul %29, %21, %cst_13 {dimension_numbers = #tpu.dot_dimension_numbers<[1], [0], [0], [1], [0, 0, 1, 1], [], []>} : vector<64x192xbf16>, vector<192x64xbf16>, vector<64x64xf32> -> vector<64x64xf32>
    %31 = vector.extract_strided_slice %2 {offsets = [2, 0], sizes = [1, 64], strides = [1, 1]} : vector<8x64xf32> to vector<1x64xf32>
    %32 = vector.broadcast %31 : vector<1x64xf32> to vector<64x64xf32>
    %33 = arith.mulf %30, %32 : vector<64x64xf32>
    %34 = vector.extract_strided_slice %2 {offsets = [3, 0], sizes = [1, 64], strides = [1, 1]} : vector<8x64xf32> to vector<1x64xf32>
    %35 = vector.broadcast %34 : vector<1x64xf32> to vector<64x64xf32>
    %36 = arith.addf %33, %35 : vector<64x64xf32>
    %cst_14 = arith.constant 0.000000e+00 : f32
    %37 = vector.broadcast %cst_14 : f32 to vector<64x64xf32>
    %38 = arith.maximumf %36, %37 : vector<64x64xf32>
    %39 = vector.shape_cast %38 : vector<64x64xf32> to vector<8x8x64xf32>
    %c2 = arith.constant 2 : index
    %c0_15 = arith.constant 0 : index
    %c0_16 = arith.constant 0 : index
    %40 = vector.load %arg2[%c2, %c0_15, %c0_16] : memref<4x192x64xbf16, #tpu.memory_space<vmem>>, vector<1x192x64xbf16>
    %41 = vector.shape_cast %40 : vector<1x192x64xbf16> to vector<192x64xbf16>
    %cst_17 = arith.constant 0.000000e+00 : f32
    %42 = vector.broadcast %cst_17 : f32 to vector<1x8x64xf32>
    %43 = tpu.concatenate %42, %39, %42 in 0 : vector<1x8x64xf32>, vector<8x8x64xf32>, vector<1x8x64xf32> -> vector<10x8x64xf32>
    %44 = vector.extract_strided_slice %43 {offsets = [0, 0, 0], sizes = [8, 8, 64], strides = [1, 1, 1]} : vector<10x8x64xf32> to vector<8x8x64xf32>
    %45 = vector.extract_strided_slice %43 {offsets = [1, 0, 0], sizes = [8, 8, 64], strides = [1, 1, 1]} : vector<10x8x64xf32> to vector<8x8x64xf32>
    %46 = vector.extract_strided_slice %43 {offsets = [2, 0, 0], sizes = [8, 8, 64], strides = [1, 1, 1]} : vector<10x8x64xf32> to vector<8x8x64xf32>
    %47 = tpu.concatenate %44, %45, %46 in 2 : vector<8x8x64xf32>, vector<8x8x64xf32>, vector<8x8x64xf32> -> vector<8x8x192xf32>
    %48 = arith.truncf %47 : vector<8x8x192xf32> to vector<8x8x192xbf16>
    %49 = vector.shape_cast %48 : vector<8x8x192xbf16> to vector<64x192xbf16>
    %cst_18 = arith.constant dense<0.000000e+00> : vector<64x64xf32>
    %50 = tpu.matmul %49, %41, %cst_18 {dimension_numbers = #tpu.dot_dimension_numbers<[1], [0], [0], [1], [0, 0, 1, 1], [], []>} : vector<64x192xbf16>, vector<192x64xbf16>, vector<64x64xf32> -> vector<64x64xf32>
    %51 = vector.extract_strided_slice %2 {offsets = [5, 0], sizes = [1, 64], strides = [1, 1]} : vector<8x64xf32> to vector<1x64xf32>
    %52 = vector.broadcast %51 : vector<1x64xf32> to vector<64x64xf32>
    %53 = arith.addf %50, %52 : vector<64x64xf32>
    %cst_19 = arith.constant 0.000000e+00 : f32
    %54 = vector.broadcast %cst_19 : f32 to vector<64x64xf32>
    %55 = arith.maximumf %53, %54 : vector<64x64xf32>
    %56 = vector.shape_cast %55 : vector<64x64xf32> to vector<8x8x64xf32>
    %c3 = arith.constant 3 : index
    %c0_20 = arith.constant 0 : index
    %c0_21 = arith.constant 0 : index
    %57 = vector.load %arg2[%c3, %c0_20, %c0_21] : memref<4x192x64xbf16, #tpu.memory_space<vmem>>, vector<1x192x64xbf16>
    %58 = vector.shape_cast %57 : vector<1x192x64xbf16> to vector<192x64xbf16>
    %cst_22 = arith.constant 0.000000e+00 : f32
    %59 = vector.broadcast %cst_22 : f32 to vector<8x1x64xf32>
    %60 = tpu.concatenate %59, %56, %59 in 1 : vector<8x1x64xf32>, vector<8x8x64xf32>, vector<8x1x64xf32> -> vector<8x10x64xf32>
    %61 = vector.extract_strided_slice %60 {offsets = [0, 0, 0], sizes = [8, 8, 64], strides = [1, 1, 1]} : vector<8x10x64xf32> to vector<8x8x64xf32>
    %62 = vector.extract_strided_slice %60 {offsets = [0, 1, 0], sizes = [8, 8, 64], strides = [1, 1, 1]} : vector<8x10x64xf32> to vector<8x8x64xf32>
    %63 = vector.extract_strided_slice %60 {offsets = [0, 2, 0], sizes = [8, 8, 64], strides = [1, 1, 1]} : vector<8x10x64xf32> to vector<8x8x64xf32>
    %64 = tpu.concatenate %61, %62, %63 in 2 : vector<8x8x64xf32>, vector<8x8x64xf32>, vector<8x8x64xf32> -> vector<8x8x192xf32>
    %65 = arith.truncf %64 : vector<8x8x192xf32> to vector<8x8x192xbf16>
    %66 = vector.shape_cast %65 : vector<8x8x192xbf16> to vector<64x192xbf16>
    %cst_23 = arith.constant dense<0.000000e+00> : vector<64x64xf32>
    %67 = tpu.matmul %66, %58, %cst_23 {dimension_numbers = #tpu.dot_dimension_numbers<[1], [0], [0], [1], [0, 0, 1, 1], [], []>} : vector<64x192xbf16>, vector<192x64xbf16>, vector<64x64xf32> -> vector<64x64xf32>
    %68 = vector.extract_strided_slice %2 {offsets = [6, 0], sizes = [1, 64], strides = [1, 1]} : vector<8x64xf32> to vector<1x64xf32>
    %69 = vector.broadcast %68 : vector<1x64xf32> to vector<64x64xf32>
    %70 = arith.mulf %67, %69 : vector<64x64xf32>
    %71 = vector.extract_strided_slice %2 {offsets = [7, 0], sizes = [1, 64], strides = [1, 1]} : vector<8x64xf32> to vector<1x64xf32>
    %72 = vector.broadcast %71 : vector<1x64xf32> to vector<64x64xf32>
    %73 = arith.addf %70, %72 : vector<64x64xf32>
    %74 = vector.shape_cast %1 : vector<8x8x64xf32> to vector<64x64xf32>
    %75 = arith.addf %73, %74 : vector<64x64xf32>
    %cst_24 = arith.constant 0.000000e+00 : f32
    %76 = vector.broadcast %cst_24 : f32 to vector<64x64xf32>
    %77 = arith.maximumf %75, %76 : vector<64x64xf32>
    %78 = vector.shape_cast %77 : vector<64x64xf32> to vector<8x8x64xf32>
    %c0_25 = arith.constant 0 : index
    %c0_26 = arith.constant 0 : index
    %c0_27 = arith.constant 0 : index
    %c0_28 = arith.constant 0 : index
    %79 = vector.load %arg4[%c0_25, %c0_26, %c0_27, %c0_28] : memref<1x8x8x64xf32, #tpu.memory_space<vmem>>, vector<1x8x8x64xf32>
    %80 = vector.shape_cast %79 : vector<1x8x8x64xf32> to vector<8x8x64xf32>
    %81 = vector.shape_cast %78 : vector<8x8x64xf32> to vector<1x8x8x64xf32>
    tpu.vector_store %arg4[%c0_25, %c0_26, %c0_27, %c0_28], %81 {strides = array<i32>} : memref<1x8x8x64xf32, #tpu.memory_space<vmem>>, vector<1x8x8x64xf32>,
    return
  }
  func.func @transform_0(%arg0: i32) -> (i32, i32, i32, i32) {
    %c0_i32 = arith.constant 0 : i32
    %c0_i32_0 = arith.constant 0 : i32
    %c0_i32_1 = arith.constant 0 : i32
    %c0_i32_2 = arith.constant 0 : i32
    return %arg0, %c0_i32, %c0_i32_0, %c0_i32_1 : i32, i32, i32, i32
  }
  func.func @transform_1(%arg0: i32) -> (i32, i32, i32) {
    %c0_i32 = arith.constant 0 : i32
    %c0_i32_0 = arith.constant 0 : i32
    %c0_i32_1 = arith.constant 0 : i32
    %c0_i32_2 = arith.constant 0 : i32
    return %c0_i32, %c0_i32_0, %c0_i32_1 : i32, i32, i32
  }
  func.func @transform_2(%arg0: i32) -> (i32, i32) {
    %c0_i32 = arith.constant 0 : i32
    %c0_i32_0 = arith.constant 0 : i32
    %c0_i32_1 = arith.constant 0 : i32
    return %c0_i32, %c0_i32_0 : i32, i32
  }
  func.func @transform_3(%arg0: i32) -> (i32, i32, i32, i32) {
    %c0_i32 = arith.constant 0 : i32
    %c0_i32_0 = arith.constant 0 : i32
    %c0_i32_1 = arith.constant 0 : i32
    %c0_i32_2 = arith.constant 0 : i32
    return %arg0, %c0_i32, %c0_i32_0, %c0_i32_1 : i32, i32, i32, i32
  }
}

module attributes {stable_mosaic.version = 11 : i64} {
  func.func @kernel(%arg0: i32, %arg1: memref<1x8x8x64xf32, #tpu.memory_space<vmem>>, %arg2: memref<256x64xbf16, #tpu.memory_space<vmem>>, %arg3: memref<1x64xf32, #tpu.memory_space<vmem>>, %arg4: memref<1x64xf32, #tpu.memory_space<vmem>>, %arg5: memref<1x8x8x64xf32, #tpu.memory_space<vmem>>) attributes {dimension_semantics = [#tpu.dimension_semantics<parallel>], iteration_bounds = array<i64: 2>, scalar_prefetch = 0 : i64, scratch_operands = 0 : i64, tpu.core_type = #tpu.core_type<tc>, window_params = [{transform_indices = @transform_0, window_bounds = array<i64: 1, 8, 8, 64>}, {pipeline_mode = #tpu.pipeline_mode<synchronous>, transform_indices = @transform_1, window_bounds = array<i64: 256, 64>}, {pipeline_mode = #tpu.pipeline_mode<synchronous>, transform_indices = @transform_2, window_bounds = array<i64: 1, 64>}, {pipeline_mode = #tpu.pipeline_mode<synchronous>, transform_indices = @transform_3, window_bounds = array<i64: 1, 64>}, {transform_indices = @transform_4, window_bounds = array<i64: 1, 8, 8, 64>}]} {
    %c0 = arith.constant 0 : index
    %c0_0 = arith.constant 0 : index
    %c0_1 = arith.constant 0 : index
    %c0_2 = arith.constant 0 : index
    %0 = vector.load %arg1[%c0, %c0_0, %c0_1, %c0_2] : memref<1x8x8x64xf32, #tpu.memory_space<vmem>>, vector<1x8x8x64xf32>
    %1 = vector.shape_cast %0 : vector<1x8x8x64xf32> to vector<8x8x64xf32>
    %cst = arith.constant 0.000000e+00 : f32
    %2 = vector.broadcast %cst : f32 to vector<8x8x64xf32>
    %3 = arith.cmpf ole, %1, %2 : vector<8x8x64xf32>
    %cst_3 = arith.constant -1.000000e+00 : f32
    %cst_4 = arith.constant 1.000000e+00 : f32
    %4 = vector.broadcast %cst_3 : f32 to vector<8x8x64xf32>
    %5 = vector.broadcast %cst_4 : f32 to vector<8x8x64xf32>
    %6 = arith.select %3, %4, %5 : vector<8x8x64xi1>, vector<8x8x64xf32>
    %cst_5 = arith.constant 0.000000e+00 : f32
    %7 = vector.broadcast %cst_5 : f32 to vector<1x8x64xf32>
    %cst_6 = arith.constant 0.000000e+00 : f32
    %8 = vector.broadcast %cst_6 : f32 to vector<9x1x64xf32>
    %9 = tpu.concatenate %6, %7 in 0 : vector<8x8x64xf32>, vector<1x8x64xf32> -> vector<9x8x64xf32>
    %10 = tpu.concatenate %9, %8 in 1 : vector<9x8x64xf32>, vector<9x1x64xf32> -> vector<9x9x64xf32>
    %11 = vector.extract_strided_slice %10 {offsets = [0, 0, 0], sizes = [8, 8, 64], strides = [1, 1, 1]} : vector<9x9x64xf32> to vector<8x8x64xf32>
    %12 = vector.extract_strided_slice %10 {offsets = [0, 1, 0], sizes = [8, 8, 64], strides = [1, 1, 1]} : vector<9x9x64xf32> to vector<8x8x64xf32>
    %13 = vector.extract_strided_slice %10 {offsets = [1, 0, 0], sizes = [8, 8, 64], strides = [1, 1, 1]} : vector<9x9x64xf32> to vector<8x8x64xf32>
    %14 = vector.extract_strided_slice %10 {offsets = [1, 1, 0], sizes = [8, 8, 64], strides = [1, 1, 1]} : vector<9x9x64xf32> to vector<8x8x64xf32>
    %15 = tpu.concatenate %11, %12, %13, %14 in 2 : vector<8x8x64xf32>, vector<8x8x64xf32>, vector<8x8x64xf32>, vector<8x8x64xf32> -> vector<8x8x256xf32>
    %16 = arith.truncf %15 : vector<8x8x256xf32> to vector<8x8x256xbf16>
    %17 = vector.shape_cast %16 : vector<8x8x256xbf16> to vector<64x256xbf16>
    %c0_7 = arith.constant 0 : index
    %c0_8 = arith.constant 0 : index
    %18 = vector.load %arg2[%c0_7, %c0_8] : memref<256x64xbf16, #tpu.memory_space<vmem>>, vector<256x64xbf16>
    %cst_9 = arith.constant dense<0.000000e+00> : vector<64x64xf32>
    %19 = tpu.matmul %17, %18, %cst_9 {dimension_numbers = #tpu.dot_dimension_numbers<[1], [0], [0], [1], [0, 0, 1, 1], [], []>} : vector<64x256xbf16>, vector<256x64xbf16>, vector<64x64xf32> -> vector<64x64xf32>
    %c0_10 = arith.constant 0 : index
    %c0_11 = arith.constant 0 : index
    %20 = vector.load %arg3[%c0_10, %c0_11] : memref<1x64xf32, #tpu.memory_space<vmem>>, vector<1x64xf32>
    %21 = vector.broadcast %20 : vector<1x64xf32> to vector<64x64xf32>
    %22 = arith.mulf %19, %21 : vector<64x64xf32>
    %c0_12 = arith.constant 0 : index
    %c0_13 = arith.constant 0 : index
    %23 = vector.load %arg4[%c0_12, %c0_13] : memref<1x64xf32, #tpu.memory_space<vmem>>, vector<1x64xf32>
    %24 = vector.broadcast %23 : vector<1x64xf32> to vector<64x64xf32>
    %25 = arith.addf %22, %24 : vector<64x64xf32>
    %cst_14 = arith.constant 0.000000e+00 : f32
    %26 = vector.broadcast %cst_14 : f32 to vector<64x64xf32>
    %27 = arith.maximumf %25, %26 : vector<64x64xf32>
    %28 = vector.shape_cast %27 : vector<64x64xf32> to vector<8x8x64xf32>
    %c0_15 = arith.constant 0 : index
    %c0_16 = arith.constant 0 : index
    %c0_17 = arith.constant 0 : index
    %c0_18 = arith.constant 0 : index
    %29 = vector.load %arg5[%c0_15, %c0_16, %c0_17, %c0_18] : memref<1x8x8x64xf32, #tpu.memory_space<vmem>>, vector<1x8x8x64xf32>
    %30 = vector.shape_cast %29 : vector<1x8x8x64xf32> to vector<8x8x64xf32>
    %31 = vector.shape_cast %28 : vector<8x8x64xf32> to vector<1x8x8x64xf32>
    tpu.vector_store %arg5[%c0_15, %c0_16, %c0_17, %c0_18], %31 {strides = array<i32>} : memref<1x8x8x64xf32, #tpu.memory_space<vmem>>, vector<1x8x8x64xf32>,
    return
  }
  func.func @transform_0(%arg0: i32) -> (i32, i32, i32, i32) {
    %c0_i32 = arith.constant 0 : i32
    %c0_i32_0 = arith.constant 0 : i32
    %c0_i32_1 = arith.constant 0 : i32
    %c0_i32_2 = arith.constant 0 : i32
    return %arg0, %c0_i32, %c0_i32_0, %c0_i32_1 : i32, i32, i32, i32
  }
  func.func @transform_1(%arg0: i32) -> (i32, i32) {
    %c0_i32 = arith.constant 0 : i32
    %c0_i32_0 = arith.constant 0 : i32
    %c0_i32_1 = arith.constant 0 : i32
    return %c0_i32, %c0_i32_0 : i32, i32
  }
  func.func @transform_2(%arg0: i32) -> (i32, i32) {
    %c0_i32 = arith.constant 0 : i32
    %c0_i32_0 = arith.constant 0 : i32
    %c0_i32_1 = arith.constant 0 : i32
    return %c0_i32, %c0_i32_0 : i32, i32
  }
  func.func @transform_3(%arg0: i32) -> (i32, i32) {
    %c0_i32 = arith.constant 0 : i32
    %c0_i32_0 = arith.constant 0 : i32
    %c0_i32_1 = arith.constant 0 : i32
    return %c0_i32, %c0_i32_0 : i32, i32
  }
  func.func @transform_4(%arg0: i32) -> (i32, i32, i32, i32) {
    %c0_i32 = arith.constant 0 : i32
    %c0_i32_0 = arith.constant 0 : i32
    %c0_i32_1 = arith.constant 0 : i32
    %c0_i32_2 = arith.constant 0 : i32
    return %arg0, %c0_i32, %c0_i32_0, %c0_i32_1 : i32, i32, i32, i32
  }
}

module attributes {stable_mosaic.version = 11 : i64} {
  func.func @kernel(%arg0: i32, %arg1: memref<1x16x16x16xf32, #tpu.memory_space<vmem>>, %arg2: memref<4x48x16xbf16, #tpu.memory_space<vmem>>, %arg3: memref<8x16xf32, #tpu.memory_space<vmem>>, %arg4: memref<1x16x16x16xf32, #tpu.memory_space<vmem>>) attributes {dimension_semantics = [#tpu.dimension_semantics<parallel>], iteration_bounds = array<i64: 2>, scalar_prefetch = 0 : i64, scratch_operands = 0 : i64, tpu.core_type = #tpu.core_type<tc>, window_params = [{transform_indices = @transform_0, window_bounds = array<i64: 1, 16, 16, 16>}, {pipeline_mode = #tpu.pipeline_mode<synchronous>, transform_indices = @transform_1, window_bounds = array<i64: 4, 48, 16>}, {pipeline_mode = #tpu.pipeline_mode<synchronous>, transform_indices = @transform_2, window_bounds = array<i64: 8, 16>}, {transform_indices = @transform_3, window_bounds = array<i64: 1, 16, 16, 16>}]} {
    %c0 = arith.constant 0 : index
    %c0_0 = arith.constant 0 : index
    %c0_1 = arith.constant 0 : index
    %c0_2 = arith.constant 0 : index
    %0 = vector.load %arg1[%c0, %c0_0, %c0_1, %c0_2] : memref<1x16x16x16xf32, #tpu.memory_space<vmem>>, vector<1x16x16x16xf32>
    %1 = vector.shape_cast %0 : vector<1x16x16x16xf32> to vector<16x16x16xf32>
    %c0_3 = arith.constant 0 : index
    %c0_4 = arith.constant 0 : index
    %2 = vector.load %arg3[%c0_3, %c0_4] : memref<8x16xf32, #tpu.memory_space<vmem>>, vector<8x16xf32>
    %c0_5 = arith.constant 0 : index
    %c0_6 = arith.constant 0 : index
    %c0_7 = arith.constant 0 : index
    %3 = vector.load %arg2[%c0_5, %c0_6, %c0_7] : memref<4x48x16xbf16, #tpu.memory_space<vmem>>, vector<1x48x16xbf16>
    %4 = vector.shape_cast %3 : vector<1x48x16xbf16> to vector<48x16xbf16>
    %cst = arith.constant 0.000000e+00 : f32
    %5 = vector.broadcast %cst : f32 to vector<1x16x16xf32>
    %6 = tpu.concatenate %5, %1, %5 in 0 : vector<1x16x16xf32>, vector<16x16x16xf32>, vector<1x16x16xf32> -> vector<18x16x16xf32>
    %7 = vector.extract_strided_slice %6 {offsets = [0, 0, 0], sizes = [16, 16, 16], strides = [1, 1, 1]} : vector<18x16x16xf32> to vector<16x16x16xf32>
    %8 = vector.extract_strided_slice %6 {offsets = [1, 0, 0], sizes = [16, 16, 16], strides = [1, 1, 1]} : vector<18x16x16xf32> to vector<16x16x16xf32>
    %9 = vector.extract_strided_slice %6 {offsets = [2, 0, 0], sizes = [16, 16, 16], strides = [1, 1, 1]} : vector<18x16x16xf32> to vector<16x16x16xf32>
    %10 = tpu.concatenate %7, %8, %9 in 2 : vector<16x16x16xf32>, vector<16x16x16xf32>, vector<16x16x16xf32> -> vector<16x16x48xf32>
    %11 = arith.truncf %10 : vector<16x16x48xf32> to vector<16x16x48xbf16>
    %12 = vector.shape_cast %11 : vector<16x16x48xbf16> to vector<256x48xbf16>
    %cst_8 = arith.constant dense<0.000000e+00> : vector<256x16xf32>
    %13 = tpu.matmul %12, %4, %cst_8 {dimension_numbers = #tpu.dot_dimension_numbers<[1], [0], [0], [1], [0, 0, 1, 1], [], []>} : vector<256x48xbf16>, vector<48x16xbf16>, vector<256x16xf32> -> vector<256x16xf32>
    %14 = vector.extract_strided_slice %2 {offsets = [1, 0], sizes = [1, 16], strides = [1, 1]} : vector<8x16xf32> to vector<1x16xf32>
    %15 = vector.broadcast %14 : vector<1x16xf32> to vector<256x16xf32>
    %16 = arith.addf %13, %15 : vector<256x16xf32>
    %cst_9 = arith.constant 0.000000e+00 : f32
    %17 = vector.broadcast %cst_9 : f32 to vector<256x16xf32>
    %18 = arith.maximumf %16, %17 : vector<256x16xf32>
    %19 = vector.shape_cast %18 : vector<256x16xf32> to vector<16x16x16xf32>
    %c1 = arith.constant 1 : index
    %c0_10 = arith.constant 0 : index
    %c0_11 = arith.constant 0 : index
    %20 = vector.load %arg2[%c1, %c0_10, %c0_11] : memref<4x48x16xbf16, #tpu.memory_space<vmem>>, vector<1x48x16xbf16>
    %21 = vector.shape_cast %20 : vector<1x48x16xbf16> to vector<48x16xbf16>
    %cst_12 = arith.constant 0.000000e+00 : f32
    %22 = vector.broadcast %cst_12 : f32 to vector<16x1x16xf32>
    %23 = tpu.concatenate %22, %19, %22 in 1 : vector<16x1x16xf32>, vector<16x16x16xf32>, vector<16x1x16xf32> -> vector<16x18x16xf32>
    %24 = vector.extract_strided_slice %23 {offsets = [0, 0, 0], sizes = [16, 16, 16], strides = [1, 1, 1]} : vector<16x18x16xf32> to vector<16x16x16xf32>
    %25 = vector.extract_strided_slice %23 {offsets = [0, 1, 0], sizes = [16, 16, 16], strides = [1, 1, 1]} : vector<16x18x16xf32> to vector<16x16x16xf32>
    %26 = vector.extract_strided_slice %23 {offsets = [0, 2, 0], sizes = [16, 16, 16], strides = [1, 1, 1]} : vector<16x18x16xf32> to vector<16x16x16xf32>
    %27 = tpu.concatenate %24, %25, %26 in 2 : vector<16x16x16xf32>, vector<16x16x16xf32>, vector<16x16x16xf32> -> vector<16x16x48xf32>
    %28 = arith.truncf %27 : vector<16x16x48xf32> to vector<16x16x48xbf16>
    %29 = vector.shape_cast %28 : vector<16x16x48xbf16> to vector<256x48xbf16>
    %cst_13 = arith.constant dense<0.000000e+00> : vector<256x16xf32>
    %30 = tpu.matmul %29, %21, %cst_13 {dimension_numbers = #tpu.dot_dimension_numbers<[1], [0], [0], [1], [0, 0, 1, 1], [], []>} : vector<256x48xbf16>, vector<48x16xbf16>, vector<256x16xf32> -> vector<256x16xf32>
    %31 = vector.extract_strided_slice %2 {offsets = [2, 0], sizes = [1, 16], strides = [1, 1]} : vector<8x16xf32> to vector<1x16xf32>
    %32 = vector.broadcast %31 : vector<1x16xf32> to vector<256x16xf32>
    %33 = arith.mulf %30, %32 : vector<256x16xf32>
    %34 = vector.extract_strided_slice %2 {offsets = [3, 0], sizes = [1, 16], strides = [1, 1]} : vector<8x16xf32> to vector<1x16xf32>
    %35 = vector.broadcast %34 : vector<1x16xf32> to vector<256x16xf32>
    %36 = arith.addf %33, %35 : vector<256x16xf32>
    %cst_14 = arith.constant 0.000000e+00 : f32
    %37 = vector.broadcast %cst_14 : f32 to vector<256x16xf32>
    %38 = arith.maximumf %36, %37 : vector<256x16xf32>
    %39 = vector.shape_cast %38 : vector<256x16xf32> to vector<16x16x16xf32>
    %c2 = arith.constant 2 : index
    %c0_15 = arith.constant 0 : index
    %c0_16 = arith.constant 0 : index
    %40 = vector.load %arg2[%c2, %c0_15, %c0_16] : memref<4x48x16xbf16, #tpu.memory_space<vmem>>, vector<1x48x16xbf16>
    %41 = vector.shape_cast %40 : vector<1x48x16xbf16> to vector<48x16xbf16>
    %cst_17 = arith.constant 0.000000e+00 : f32
    %42 = vector.broadcast %cst_17 : f32 to vector<1x16x16xf32>
    %43 = tpu.concatenate %42, %39, %42 in 0 : vector<1x16x16xf32>, vector<16x16x16xf32>, vector<1x16x16xf32> -> vector<18x16x16xf32>
    %44 = vector.extract_strided_slice %43 {offsets = [0, 0, 0], sizes = [16, 16, 16], strides = [1, 1, 1]} : vector<18x16x16xf32> to vector<16x16x16xf32>
    %45 = vector.extract_strided_slice %43 {offsets = [1, 0, 0], sizes = [16, 16, 16], strides = [1, 1, 1]} : vector<18x16x16xf32> to vector<16x16x16xf32>
    %46 = vector.extract_strided_slice %43 {offsets = [2, 0, 0], sizes = [16, 16, 16], strides = [1, 1, 1]} : vector<18x16x16xf32> to vector<16x16x16xf32>
    %47 = tpu.concatenate %44, %45, %46 in 2 : vector<16x16x16xf32>, vector<16x16x16xf32>, vector<16x16x16xf32> -> vector<16x16x48xf32>
    %48 = arith.truncf %47 : vector<16x16x48xf32> to vector<16x16x48xbf16>
    %49 = vector.shape_cast %48 : vector<16x16x48xbf16> to vector<256x48xbf16>
    %cst_18 = arith.constant dense<0.000000e+00> : vector<256x16xf32>
    %50 = tpu.matmul %49, %41, %cst_18 {dimension_numbers = #tpu.dot_dimension_numbers<[1], [0], [0], [1], [0, 0, 1, 1], [], []>} : vector<256x48xbf16>, vector<48x16xbf16>, vector<256x16xf32> -> vector<256x16xf32>
    %51 = vector.extract_strided_slice %2 {offsets = [5, 0], sizes = [1, 16], strides = [1, 1]} : vector<8x16xf32> to vector<1x16xf32>
    %52 = vector.broadcast %51 : vector<1x16xf32> to vector<256x16xf32>
    %53 = arith.addf %50, %52 : vector<256x16xf32>
    %cst_19 = arith.constant 0.000000e+00 : f32
    %54 = vector.broadcast %cst_19 : f32 to vector<256x16xf32>
    %55 = arith.maximumf %53, %54 : vector<256x16xf32>
    %56 = vector.shape_cast %55 : vector<256x16xf32> to vector<16x16x16xf32>
    %c3 = arith.constant 3 : index
    %c0_20 = arith.constant 0 : index
    %c0_21 = arith.constant 0 : index
    %57 = vector.load %arg2[%c3, %c0_20, %c0_21] : memref<4x48x16xbf16, #tpu.memory_space<vmem>>, vector<1x48x16xbf16>
    %58 = vector.shape_cast %57 : vector<1x48x16xbf16> to vector<48x16xbf16>
    %cst_22 = arith.constant 0.000000e+00 : f32
    %59 = vector.broadcast %cst_22 : f32 to vector<16x1x16xf32>
    %60 = tpu.concatenate %59, %56, %59 in 1 : vector<16x1x16xf32>, vector<16x16x16xf32>, vector<16x1x16xf32> -> vector<16x18x16xf32>
    %61 = vector.extract_strided_slice %60 {offsets = [0, 0, 0], sizes = [16, 16, 16], strides = [1, 1, 1]} : vector<16x18x16xf32> to vector<16x16x16xf32>
    %62 = vector.extract_strided_slice %60 {offsets = [0, 1, 0], sizes = [16, 16, 16], strides = [1, 1, 1]} : vector<16x18x16xf32> to vector<16x16x16xf32>
    %63 = vector.extract_strided_slice %60 {offsets = [0, 2, 0], sizes = [16, 16, 16], strides = [1, 1, 1]} : vector<16x18x16xf32> to vector<16x16x16xf32>
    %64 = tpu.concatenate %61, %62, %63 in 2 : vector<16x16x16xf32>, vector<16x16x16xf32>, vector<16x16x16xf32> -> vector<16x16x48xf32>
    %65 = arith.truncf %64 : vector<16x16x48xf32> to vector<16x16x48xbf16>
    %66 = vector.shape_cast %65 : vector<16x16x48xbf16> to vector<256x48xbf16>
    %cst_23 = arith.constant dense<0.000000e+00> : vector<256x16xf32>
    %67 = tpu.matmul %66, %58, %cst_23 {dimension_numbers = #tpu.dot_dimension_numbers<[1], [0], [0], [1], [0, 0, 1, 1], [], []>} : vector<256x48xbf16>, vector<48x16xbf16>, vector<256x16xf32> -> vector<256x16xf32>
    %68 = vector.extract_strided_slice %2 {offsets = [6, 0], sizes = [1, 16], strides = [1, 1]} : vector<8x16xf32> to vector<1x16xf32>
    %69 = vector.broadcast %68 : vector<1x16xf32> to vector<256x16xf32>
    %70 = arith.mulf %67, %69 : vector<256x16xf32>
    %71 = vector.extract_strided_slice %2 {offsets = [7, 0], sizes = [1, 16], strides = [1, 1]} : vector<8x16xf32> to vector<1x16xf32>
    %72 = vector.broadcast %71 : vector<1x16xf32> to vector<256x16xf32>
    %73 = arith.addf %70, %72 : vector<256x16xf32>
    %74 = vector.shape_cast %1 : vector<16x16x16xf32> to vector<256x16xf32>
    %75 = arith.addf %73, %74 : vector<256x16xf32>
    %cst_24 = arith.constant 0.000000e+00 : f32
    %76 = vector.broadcast %cst_24 : f32 to vector<256x16xf32>
    %77 = arith.maximumf %75, %76 : vector<256x16xf32>
    %78 = vector.shape_cast %77 : vector<256x16xf32> to vector<16x16x16xf32>
    %c0_25 = arith.constant 0 : index
    %c0_26 = arith.constant 0 : index
    %c0_27 = arith.constant 0 : index
    %c0_28 = arith.constant 0 : index
    %79 = vector.load %arg4[%c0_25, %c0_26, %c0_27, %c0_28] : memref<1x16x16x16xf32, #tpu.memory_space<vmem>>, vector<1x16x16x16xf32>
    %80 = vector.shape_cast %79 : vector<1x16x16x16xf32> to vector<16x16x16xf32>
    %81 = vector.shape_cast %78 : vector<16x16x16xf32> to vector<1x16x16x16xf32>
    tpu.vector_store %arg4[%c0_25, %c0_26, %c0_27, %c0_28], %81 {strides = array<i32>} : memref<1x16x16x16xf32, #tpu.memory_space<vmem>>, vector<1x16x16x16xf32>,
    return
  }
  func.func @transform_0(%arg0: i32) -> (i32, i32, i32, i32) {
    %c0_i32 = arith.constant 0 : i32
    %c0_i32_0 = arith.constant 0 : i32
    %c0_i32_1 = arith.constant 0 : i32
    %c0_i32_2 = arith.constant 0 : i32
    return %arg0, %c0_i32, %c0_i32_0, %c0_i32_1 : i32, i32, i32, i32
  }
  func.func @transform_1(%arg0: i32) -> (i32, i32, i32) {
    %c0_i32 = arith.constant 0 : i32
    %c0_i32_0 = arith.constant 0 : i32
    %c0_i32_1 = arith.constant 0 : i32
    %c0_i32_2 = arith.constant 0 : i32
    return %c0_i32, %c0_i32_0, %c0_i32_1 : i32, i32, i32
  }
  func.func @transform_2(%arg0: i32) -> (i32, i32) {
    %c0_i32 = arith.constant 0 : i32
    %c0_i32_0 = arith.constant 0 : i32
    %c0_i32_1 = arith.constant 0 : i32
    return %c0_i32, %c0_i32_0 : i32, i32
  }
  func.func @transform_3(%arg0: i32) -> (i32, i32, i32, i32) {
    %c0_i32 = arith.constant 0 : i32
    %c0_i32_0 = arith.constant 0 : i32
    %c0_i32_1 = arith.constant 0 : i32
    %c0_i32_2 = arith.constant 0 : i32
    return %arg0, %c0_i32, %c0_i32_0, %c0_i32_1 : i32, i32, i32, i32
  }
}

module attributes {stable_mosaic.version = 11 : i64} {
  func.func @kernel(%arg0: i32, %arg1: memref<1x16x16x16xf32, #tpu.memory_space<vmem>>, %arg2: memref<16x32xbf16, #tpu.memory_space<vmem>>, %arg3: memref<1x32xf32, #tpu.memory_space<vmem>>, %arg4: memref<1x32xf32, #tpu.memory_space<vmem>>, %arg5: memref<1x16x16x32xf32, #tpu.memory_space<vmem>>) attributes {dimension_semantics = [#tpu.dimension_semantics<parallel>], iteration_bounds = array<i64: 2>, scalar_prefetch = 0 : i64, scratch_operands = 0 : i64, tpu.core_type = #tpu.core_type<tc>, window_params = [{transform_indices = @transform_0, window_bounds = array<i64: 1, 16, 16, 16>}, {pipeline_mode = #tpu.pipeline_mode<synchronous>, transform_indices = @transform_1, window_bounds = array<i64: 16, 32>}, {pipeline_mode = #tpu.pipeline_mode<synchronous>, transform_indices = @transform_2, window_bounds = array<i64: 1, 32>}, {pipeline_mode = #tpu.pipeline_mode<synchronous>, transform_indices = @transform_3, window_bounds = array<i64: 1, 32>}, {transform_indices = @transform_4, window_bounds = array<i64: 1, 16, 16, 32>}]} {
    %c0 = arith.constant 0 : index
    %c0_0 = arith.constant 0 : index
    %c0_1 = arith.constant 0 : index
    %c0_2 = arith.constant 0 : index
    %0 = vector.load %arg1[%c0, %c0_0, %c0_1, %c0_2] : memref<1x16x16x16xf32, #tpu.memory_space<vmem>>, vector<1x16x16x16xf32>
    %1 = vector.shape_cast %0 : vector<1x16x16x16xf32> to vector<16x16x16xf32>
    %cst = arith.constant 0.000000e+00 : f32
    %2 = vector.broadcast %cst : f32 to vector<16x16x16xf32>
    %3 = arith.cmpf ole, %1, %2 : vector<16x16x16xf32>
    %cst_3 = arith.constant -1.000000e+00 : f32
    %cst_4 = arith.constant 1.000000e+00 : f32
    %4 = vector.broadcast %cst_3 : f32 to vector<16x16x16xf32>
    %5 = vector.broadcast %cst_4 : f32 to vector<16x16x16xf32>
    %6 = arith.select %3, %4, %5 : vector<16x16x16xi1>, vector<16x16x16xf32>
    %7 = arith.truncf %6 : vector<16x16x16xf32> to vector<16x16x16xbf16>
    %8 = vector.shape_cast %7 : vector<16x16x16xbf16> to vector<256x16xbf16>
    %c0_5 = arith.constant 0 : index
    %c0_6 = arith.constant 0 : index
    %9 = vector.load %arg2[%c0_5, %c0_6] : memref<16x32xbf16, #tpu.memory_space<vmem>>, vector<16x32xbf16>
    %cst_7 = arith.constant dense<0.000000e+00> : vector<256x32xf32>
    %10 = tpu.matmul %8, %9, %cst_7 {dimension_numbers = #tpu.dot_dimension_numbers<[1], [0], [0], [1], [0, 0, 1, 1], [], []>} : vector<256x16xbf16>, vector<16x32xbf16>, vector<256x32xf32> -> vector<256x32xf32>
    %c0_8 = arith.constant 0 : index
    %c0_9 = arith.constant 0 : index
    %11 = vector.load %arg3[%c0_8, %c0_9] : memref<1x32xf32, #tpu.memory_space<vmem>>, vector<1x32xf32>
    %12 = vector.broadcast %11 : vector<1x32xf32> to vector<256x32xf32>
    %13 = arith.mulf %10, %12 : vector<256x32xf32>
    %c0_10 = arith.constant 0 : index
    %c0_11 = arith.constant 0 : index
    %14 = vector.load %arg4[%c0_10, %c0_11] : memref<1x32xf32, #tpu.memory_space<vmem>>, vector<1x32xf32>
    %15 = vector.broadcast %14 : vector<1x32xf32> to vector<256x32xf32>
    %16 = arith.addf %13, %15 : vector<256x32xf32>
    %17 = vector.shape_cast %16 : vector<256x32xf32> to vector<16x16x32xf32>
    %c0_12 = arith.constant 0 : index
    %c0_13 = arith.constant 0 : index
    %c0_14 = arith.constant 0 : index
    %c0_15 = arith.constant 0 : index
    %18 = vector.load %arg5[%c0_12, %c0_13, %c0_14, %c0_15] : memref<1x16x16x32xf32, #tpu.memory_space<vmem>>, vector<1x16x16x32xf32>
    %19 = vector.shape_cast %18 : vector<1x16x16x32xf32> to vector<16x16x32xf32>
    %20 = vector.shape_cast %17 : vector<16x16x32xf32> to vector<1x16x16x32xf32>
    tpu.vector_store %arg5[%c0_12, %c0_13, %c0_14, %c0_15], %20 {strides = array<i32>} : memref<1x16x16x32xf32, #tpu.memory_space<vmem>>, vector<1x16x16x32xf32>,
    return
  }
  func.func @transform_0(%arg0: i32) -> (i32, i32, i32, i32) {
    %c0_i32 = arith.constant 0 : i32
    %c0_i32_0 = arith.constant 0 : i32
    %c0_i32_1 = arith.constant 0 : i32
    %c0_i32_2 = arith.constant 0 : i32
    return %arg0, %c0_i32, %c0_i32_0, %c0_i32_1 : i32, i32, i32, i32
  }
  func.func @transform_1(%arg0: i32) -> (i32, i32) {
    %c0_i32 = arith.constant 0 : i32
    %c0_i32_0 = arith.constant 0 : i32
    %c0_i32_1 = arith.constant 0 : i32
    return %c0_i32, %c0_i32_0 : i32, i32
  }
  func.func @transform_2(%arg0: i32) -> (i32, i32) {
    %c0_i32 = arith.constant 0 : i32
    %c0_i32_0 = arith.constant 0 : i32
    %c0_i32_1 = arith.constant 0 : i32
    return %c0_i32, %c0_i32_0 : i32, i32
  }
  func.func @transform_3(%arg0: i32) -> (i32, i32) {
    %c0_i32 = arith.constant 0 : i32
    %c0_i32_0 = arith.constant 0 : i32
    %c0_i32_1 = arith.constant 0 : i32
    return %c0_i32, %c0_i32_0 : i32, i32
  }
  func.func @transform_4(%arg0: i32) -> (i32, i32, i32, i32) {
    %c0_i32 = arith.constant 0 : i32
    %c0_i32_0 = arith.constant 0 : i32
    %c0_i32_1 = arith.constant 0 : i32
    %c0_i32_2 = arith.constant 0 : i32
    return %arg0, %c0_i32, %c0_i32_0, %c0_i32_1 : i32, i32, i32, i32
  }
}

</mosaic_0001>

<llo_original>
// kernel: tile.28
$region0: #{tile.28}
  #allocation0 [shape = 's32[1]{0}', space=sflag, size = 0x4, scoped, tag = 'scoped memory for tile.28']
  %s0 = inlined_call_operand.vmem [shape: f32[64], index: 0, kind: input, shape index: {}]
  %s1 = inlined_call_operand.vmem [shape: f32[4,64], index: 1, kind: output, shape index: {}]
  // Predicated region
  $region2: #{tile.28} parent=0 // pred_check
    _
  $region3: #{tile.28} parent=0 // pred_check_branch
    %3 = sbr.rel (0) target = $region5
  $region4: #{tile.28} parent=0 // pred_region
    _
  $region5: #{tile.28} parent=0 // pred_fallthru
    _
  %v4 = vld [vmem:[%s0] ss:$0 sm:$0xff]
  %5 = vst [vmem:[%s1] sm:$0xf] %v4

// kernel: tile.33
$region0: #{tile.33}
  %s0 = inlined_call_operand.vmem [shape: f32[4,64], index: 0, kind: input, shape index: {}]
  %s1 = inlined_call_operand.vmem [shape: f32[1,256], index: 1, kind: output, shape index: {}]
  $region1: #{tile.33} parent=0
    #allocation0 [shape = 'u8[8192]{0}', space=vmem, size = 0x2000, scoped, tag = 'scoped mem for output reshape']
    #allocation1 [shape = 'u8[4096]{0}', space=vmem, size = 0x1000, scoped, tag = 'scoped mem for input reshape']
    %s3 = sshllo.u32 0, 4
    %v4 = vld [vmem:[%s0] sm:%s3]
    %5 = vst [vmem:[#allocation1] sm:%s3] %v4
    %s6 = smov 3
    %v7 = vld [vmem:[#allocation1] ss:$2 sm:%s6]
    %vm8 = vcmask 523264
    %9 = vst.msk [vmem:[#allocation0] ss:$8 sm:$0x3] %vm8, %v7
    %s10 = scalar_lea.vmem [#allocation1], 1
    %s11 = smov 3
    %v12 = vld [vmem:[%s10] ss:$2 sm:%s11]
    %13 = vrot.lane.b32.xlu0 %v12, 64
    %v14 = vpop.permute.xlu0 %13
    %vm15 = vcmask 1048064
    %16 = vst.msk [vmem:[#allocation0] ss:$8 sm:$0x3] %vm15, %v14
    %s18 = sshllo.u32 0, 1
    %v20 = vld [vmem:[#allocation0] sm:%s18]
    %s21 = sshllo.u32 0, 1
    %22 = vst [vmem:[%s1] sm:%s21] %v20
    %s23 = scalar_lea.vmem [#allocation0], 8
    %v24 = vld [vmem:[%s23] sm:%s18]
    %s25 = sshllo.u32 0, 1
    %s26 = scalar_lea.vmem %s1, 1
    %27 = vst [vmem:[%s26] sm:%s25] %v24

// kernel: decoder_forward.7
$region0: #{decoder_forward.7}
  #allocation0 [shape = 'u32[]', space=smem, size = 0x4, offset = 0x4, fixed_abs, tag = 'smem constant byte address 0x4 - core index']
  #allocation1 [shape = 'u32[144,128]{1,0:T(1,128)}', space=vmem, size = 0x12000, scoped, tag = 'internal scratch']
  %s0 = inlined_call_operand.vmem [shape: f32[2,4,4,128], index: 0, kind: input, shape index: {}]
  %s1 = inlined_call_operand.vmem [shape: bf16[512,256], index: 1, kind: input, shape index: {}]
  %s2 = inlined_call_operand.vmem [shape: f32[1,256], index: 2, kind: input, shape index: {}]
  %s3 = inlined_call_operand.vmem [shape: f32[1,256], index: 3, kind: input, shape index: {}]
  %s4 = inlined_call_operand.vmem [shape: f32[2,4,4,256], index: 4, kind: output, shape index: {}]
  %s5 = sld [smem:[#allocation0]]
  $region49: #{decoder_forward.7} parent=0
    _
  %s7 = ssub.s32 1, %s5
  %s8 = scalar_select 0, %s7, %s5
  loop: start=0, step=1, limit=4
  $region2: #{decoder_forward.7} parent=0 // loop_pre_header
    _
  $region3: #{decoder_forward.7} parent=0 // loop_header
    %s10 = sphi 0, %s14
    %p11 = scmp.ge.s32.totalorder %s10, 4
    %s20 = sphi 0, %s22
    %s23 = sphi 0, %s20
    %s24 = sphi 0, %s23
    %s40 = sphi 0, %s24
    %s44 = sphi 0, %s44
    %s46 = sphi 0, %s44
    %s47 = sphi 0, %s46
    %s61 = sphi 0, %s47
    %s65 = sphi 0, %s65
    %s67 = sphi 0, %s65
    %s68 = sphi 0, %s67
    %s82 = sphi 0, %s68
    %s86 = sphi 0, %s86
    %s88 = sphi 0, %s86
    %s89 = sphi 0, %s88
    %s103 = sphi 0, %s89
    %s109 = sphi 0, %s111
    %s112 = sphi 0, %s109
    %s113 = sphi 0, %s112
    %s129 = sphi 0, %s113
  $region4: #{decoder_forward.7} parent=0 // loop_header_branch
    %13 = sbr.rel (%p11) target = $region8
  $region5: #{decoder_forward.7} parent=0 // loop_body
    %s15 = ssub.s32 %s10, 1
    %s16 = ssub.s32 %s10, 2
    %s17 = sadd.s32 %s10, 1
    %s18 = ssub.s32 %s10, %s17
    %p19 = scmp.eq.s32.totalorder %s18, 0
    %s21 = sadd.s32 %s20, 1
    %s22 = scalar_select %p19, %s20, %s21
    %p25 = pneg %p19
    %p26 = scmp.eq.s32.totalorder %s10, 1
    %p27 = por %p25, %p26
    %p28 = scmp.ne.s32.totalorder %s20, %s23
    %p29 = scmp.eq.s32.totalorder %s10, 0
    %p30 = por %p28, %p29
    %p31 = scmp.ne.s32.totalorder %s20, %s23
    %p32 = scmp.eq.s32.totalorder %s15, 1
    %p33 = por %p31, %p32
    %p34 = scmp.ne.s32.totalorder %s23, %s24
    %p35 = scmp.eq.s32.totalorder %s15, 0
    %p36 = por %p34, %p35
    %p37 = scmp.ne.s32.totalorder %s23, %s24
    %p38 = scmp.eq.s32.totalorder %s16, 1
    %p39 = por %p37, %p38
    %p41 = scmp.ne.s32.totalorder %s24, %s40
    %p42 = scmp.eq.s32.totalorder %s16, 0
    %p43 = por %p41, %p42
    %s45 = sadd.s32 %s44, 1
    %p48 = scmp.eq.s32.totalorder %s10, 1
    %p49 = scmp.ne.s32.totalorder %s44, %s46
    %p50 = scmp.eq.s32.totalorder %s10, 0
    %p51 = por %p49, %p50
    %p52 = scmp.ne.s32.totalorder %s44, %s46
    %p53 = scmp.eq.s32.totalorder %s15, 1
    %p54 = por %p52, %p53
    %p55 = scmp.ne.s32.totalorder %s46, %s47
    %p56 = scmp.eq.s32.totalorder %s15, 0
    %p57 = por %p55, %p56
    %p58 = scmp.ne.s32.totalorder %s46, %s47
    %p59 = scmp.eq.s32.totalorder %s16, 1
    %p60 = por %p58, %p59
    %p62 = scmp.ne.s32.totalorder %s47, %s61
    %p63 = scmp.eq.s32.totalorder %s16, 0
    %p64 = por %p62, %p63
    %s66 = sadd.s32 %s65, 1
    %p69 = scmp.eq.s32.totalorder %s10, 1
    %p70 = scmp.ne.s32.totalorder %s65, %s67
    %p71 = scmp.eq.s32.totalorder %s10, 0
    %p72 = por %p70, %p71
    %p73 = scmp.ne.s32.totalorder %s65, %s67
    %p74 = scmp.eq.s32.totalorder %s15, 1
    %p75 = por %p73, %p74
    %p76 = scmp.ne.s32.totalorder %s67, %s68
    %p77 = scmp.eq.s32.totalorder %s15, 0
    %p78 = por %p76, %p77
    %p79 = scmp.ne.s32.totalorder %s67, %s68
    %p80 = scmp.eq.s32.totalorder %s16, 1
    %p81 = por %p79, %p80
    %p83 = scmp.ne.s32.totalorder %s68, %s82
    %p84 = scmp.eq.s32.totalorder %s16, 0
    %p85 = por %p83, %p84
    %s87 = sadd.s32 %s86, 1
    %p90 = scmp.eq.s32.totalorder %s10, 1
    %p91 = scmp.ne.s32.totalorder %s86, %s88
    %p92 = scmp.eq.s32.totalorder %s10, 0
    %p93 = por %p91, %p92
    %p94 = scmp.ne.s32.totalorder %s86, %s88
    %p95 = scmp.eq.s32.totalorder %s15, 1
    %p96 = por %p94, %p95
    %p97 = scmp.ne.s32.totalorder %s88, %s89
    %p98 = scmp.eq.s32.totalorder %s15, 0
    %p99 = por %p97, %p98
    %p100 = scmp.ne.s32.totalorder %s88, %s89
    %p101 = scmp.eq.s32.totalorder %s16, 1
    %p102 = por %p100, %p101
    %p104 = scmp.ne.s32.totalorder %s89, %s103
    %p105 = scmp.eq.s32.totalorder %s16, 0
    %p106 = por %p104, %p105
    %s107 = ssub.s32 %s10, %s17
    %p108 = scmp.eq.s32.totalorder %s107, 0
    %s110 = sadd.s32 %s109, 1
    %s111 = scalar_select %p108, %s109, %s110
    %p114 = pneg %p108
    %p115 = scmp.eq.s32.totalorder %s10, 1
    %p116 = por %p114, %p115
    %p117 = scmp.ne.s32.totalorder %s109, %s112
    %p118 = scmp.eq.s32.totalorder %s10, 0
    %p119 = por %p117, %p118
    %p120 = scmp.ne.s32.totalorder %s109, %s112
    %p121 = scmp.eq.s32.totalorder %s15, 1
    %p122 = por %p120, %p121
    %p123 = scmp.ne.s32.totalorder %s112, %s113
    %p124 = scmp.eq.s32.totalorder %s15, 0
    %p125 = por %p123, %p124
    %p126 = scmp.ne.s32.totalorder %s112, %s113
    %p127 = scmp.eq.s32.totalorder %s16, 1
    %p128 = por %p126, %p127
    %p130 = scmp.ne.s32.totalorder %s113, %s129
    %p131 = scmp.eq.s32.totalorder %s16, 0
    %p132 = por %p130, %p131
    %p133 = scmp.le.s32.totalorder 1, %s10
    %p134 = scmp.lt.s32.totalorder %s10, 3
    %p135 = pnand %p133, %p134
    %p136 = pneg %p135
    // Predicated region
    $region9: #{decoder_forward.7} parent=5 // pred_check
      _
    $region10: #{decoder_forward.7} parent=5 // pred_check_branch
      %138 = sbr.rel (%p135) target = $region12
    $region11: #{decoder_forward.7} parent=5 // pred_region
      %s139 = ssub.s32 %s10, 1
      // Predicated region
      $region13: #{decoder_forward.7} parent=11 // pred_check
        %p140 = pneg %p57
      $region14: #{decoder_forward.7} parent=11 // pred_check_branch
        %142 = sbr.rel (%p140) target = $region16
      $region15: #{decoder_forward.7} parent=11 // pred_region
        _
      $region16: #{decoder_forward.7} parent=11 // pred_fallthru
        _
      // Predicated region
      $region17: #{decoder_forward.7} parent=11 // pred_check
        %p143 = pneg %p78
      $region18: #{decoder_forward.7} parent=11 // pred_check_branch
        %145 = sbr.rel (%p143) target = $region20
      $region19: #{decoder_forward.7} parent=11 // pred_region
        _
      $region20: #{decoder_forward.7} parent=11 // pred_fallthru
        _
      // Predicated region
      $region21: #{decoder_forward.7} parent=11 // pred_check
        %p146 = pneg %p99
      $region22: #{decoder_forward.7} parent=11 // pred_check_branch
        %148 = sbr.rel (%p146) target = $region24
      $region23: #{decoder_forward.7} parent=11 // pred_region
        _
      $region24: #{decoder_forward.7} parent=11 // pred_fallthru
        _
    $region12: #{decoder_forward.7} parent=5 // pred_fallthru
      _
    %p149 = scmp.lt.s32.totalorder %s10, 2
    // Predicated region
    $region25: #{decoder_forward.7} parent=5 // pred_check
      %p150 = pneg %p149
    $region26: #{decoder_forward.7} parent=5 // pred_check_branch
      %152 = sbr.rel (%p150) target = $region28
    $region27: #{decoder_forward.7} parent=5 // pred_region
      // Predicated region
      $region29: #{decoder_forward.7} parent=27 // pred_check
        %p153 = pneg %p30
      $region30: #{decoder_forward.7} parent=27 // pred_check_branch
        %155 = sbr.rel (%p153) target = $region32
      $region31: #{decoder_forward.7} parent=27 // pred_region
        %p156 = scmp.lt.s32.totalorder %s10, 1
        %s157 = scalar_select %p156, %s10, 1
        %s158 = smul.addr %s157, 4
        %s159 = smul.addr %s158, 4
        %s160 = scalar_lea.vmem %s0, %s159
      $region32: #{decoder_forward.7} parent=27 // pred_fallthru
        _
    $region28: #{decoder_forward.7} parent=5 // pred_fallthru
      _
    %p161 = scmp.le.s32.totalorder 1, %s10
    %p162 = scmp.lt.s32.totalorder %s10, 3
    %p163 = pnand %p161, %p162
    %p164 = pneg %p163
    // Predicated region
    $region33: #{decoder_forward.7} parent=5 // pred_check
      _
    $region34: #{decoder_forward.7} parent=5 // pred_check_branch
      %166 = sbr.rel (%p163) target = $region36
    $region35: #{decoder_forward.7} parent=5 // pred_region
      %s167 = ssub.s32 %s10, 1
      %p168 = scmp.lt.s32.totalorder %s15, 1
      %s169 = scalar_select %p168, %s15, 1
      %s170 = smul.addr %s169, 4
      %s171 = smul.addr %s170, 4
      %s172 = scalar_lea.vmem %s0, %s171
      %p173 = pneg %p36
      %p174 = pneg %p33
      %p175 = pneg %p57
      %p176 = pneg %p54
      %p177 = pneg %p78
      %p178 = pneg %p75
      %p179 = pneg %p99
      %p180 = pneg %p96
      %p181 = pneg %p125
      %p182 = pneg %p122
      %p183 = scmp.lt.s32.totalorder %s15, 1
      %s184 = scalar_select %p183, %s15, 1
      %s185 = smul.addr %s184, 8
      %s186 = smul.addr %s185, 4
      %s187 = scalar_lea.vmem %s4, %s186
      %p188 = scmp.lt.s32.totalorder %s15, 1
      %s189 = scalar_select %p188, %s15, 1
      %s190 = smul.addr %s189, 4
      %s191 = smul.addr %s190, 4
      %s192 = scalar_lea.vmem %s0, %s191
      %p193 = scmp.lt.s32.totalorder %s15, 1
      %s194 = scalar_select %p193, %s15, 1
      %s195 = smul.addr %s194, 8
      %s196 = smul.addr %s195, 4
      %s197 = scalar_lea.vmem %s4, %s196
      %v198 = vld [vmem:[%s192] sm:$0xf]
      %v199 = vld [vmem:[%s192 + $0x4] sm:$0xf]
      %v200 = vld [vmem:[%s192 + $0x8] sm:$0xf]
      %v201 = vld [vmem:[%s192 + $0xc] sm:$0xf]
      %vm202 = vcmp.le.f32.partialorder %v198, 0.0
      %vm203 = vcmp.le.f32.partialorder %v199, 0.0
      %vm204 = vcmp.le.f32.partialorder %v200, 0.0
      %vm205 = vcmp.le.f32.partialorder %v201, 0.0
      %v206 = vsel %vm202, -1.0, 1.0
      %v207 = vsel %vm203, -1.0, 1.0
      %v208 = vsel %vm204, -1.0, 1.0
      %v209 = vsel %vm205, -1.0, 1.0
      %vm210 = vcmask 1043456
      %v211 = vsel %vm210, %v206, 0.0
      %v212 = vsel %vm210, %v207, 0.0
      %v213 = vsel %vm210, %v208, 0.0
      %v214 = vsel %vm210, %v209, 0.0
      %v219 = vrot.slane %v211, 1
      %v220 = vrot.slane %v212, 1
      %v221 = vrot.slane %v213, 1
      %v222 = vrot.slane %v214, 1
      %v228 = vrot.slane 0.0, 1
      %v230 = vpack.c.bf16 %v211, %v211
      %v231 = vpack.c.bf16 %v219, %v219
      %v232 = vpack.c.bf16 %v212, %v212
      %v233 = vpack.c.bf16 %v220, %v220
      %v234 = vpack.c.bf16 %v213, %v213
      %v235 = vpack.c.bf16 %v221, %v221
      %v236 = vpack.c.bf16 %v214, %v214
      %v237 = vpack.c.bf16 %v222, %v222
      %v238 = vpack.c.bf16 0.0, 0.0
      %v239 = vpack.c.bf16 %v228, %v228
      %v250 = vcombine.low %v230, %v231
      %v251 = vcombine.low %v232, %v233
      %v253 = vunpack.c.l.s4 1983009808
      %v254 = vunpack.c.0.s8 %v253
      %v255 = vlaneseq
      %v256 = vshrl.u32 %v255, 7
      %v257 = vsub.s32 %v254, %v256
      %v258 = vrot.slane %v250, %v257
      %v260 = vunpack.c.l.s4 1983009808
      %v261 = vunpack.c.0.s8 %v260
      %v262 = vlaneseq
      %v263 = vshrl.u32 %v262, 7
      %v264 = vsub.s32 %v261, %v263
      %v265 = vrot.slane %v251, %v264
      %v266 = vcombine.low %v258, %v265
      %v267 = vcombine.low %v234, %v235
      %v269 = vunpack.c.l.s4 1983009808
      %v270 = vunpack.c.0.s8 %v269
      %v271 = vlaneseq
      %v272 = vshrl.u32 %v271, 7
      %v273 = vsub.s32 %v270, %v272
      %v274 = vrot.slane %v267, %v273
      %v275 = vcombine.low %v265, %v274
      %v276 = vcombine.low %v236, %v237
      %v278 = vunpack.c.l.s4 1983009808
      %v279 = vunpack.c.0.s8 %v278
      %v280 = vlaneseq
      %v281 = vshrl.u32 %v280, 7
      %v282 = vsub.s32 %v279, %v281
      %v283 = vrot.slane %v276, %v282
      %v284 = vcombine.low %v274, %v283
      %v285 = vcombine.low %v238, %v239
      %v287 = vunpack.c.l.s4 1983009808
      %v288 = vunpack.c.0.s8 %v287
      %v289 = vlaneseq
      %v290 = vshrl.u32 %v289, 7
      %v291 = vsub.s32 %v288, %v290
      %v292 = vrot.slane %v285, %v291
      %v293 = vcombine.low %v283, %v292
      %v294 = vld [vmem:[%s1] sm:$0xff]
      %v295 = vld [vmem:[%s1 + $0x8] sm:$0xff]
      %v296 = vld [vmem:[%s1 + $0x10] sm:$0xff]
      %v297 = vld [vmem:[%s1 + $0x18] sm:$0xff]
      %v298 = vld [vmem:[%s1 + $0x20] sm:$0xff]
      %v299 = vld [vmem:[%s1 + $0x28] sm:$0xff]
      %v300 = vld [vmem:[%s1 + $0x30] sm:$0xff]
      %v301 = vld [vmem:[%s1 + $0x38] sm:$0xff]
      %v302 = vld [vmem:[%s1 + $0x40] sm:$0xff]
      %v303 = vld [vmem:[%s1 + $0x48] sm:$0xff]
      %v304 = vld [vmem:[%s1 + $0x50] sm:$0xff]
      %v305 = vld [vmem:[%s1 + $0x58] sm:$0xff]
      %v306 = vld [vmem:[%s1 + $0x60] sm:$0xff]
      %v307 = vld [vmem:[%s1 + $0x68] sm:$0xff]
      %v308 = vld [vmem:[%s1 + $0x70] sm:$0xff]
      %v309 = vld [vmem:[%s1 + $0x78] sm:$0xff]
      %v310 = vld [vmem:[%s1 + $0x80] sm:$0xff]
      %v311 = vld [vmem:[%s1 + $0x88] sm:$0xff]
      %v312 = vld [vmem:[%s1 + $0x90] sm:$0xff]
      %v313 = vld [vmem:[%s1 + $0x98] sm:$0xff]
      %v314 = vld [vmem:[%s1 + $0xa0] sm:$0xff]
      %v315 = vld [vmem:[%s1 + $0xa8] sm:$0xff]
      %v316 = vld [vmem:[%s1 + $0xb0] sm:$0xff]
      %v317 = vld [vmem:[%s1 + $0xb8] sm:$0xff]
      %v318 = vld [vmem:[%s1 + $0xc0] sm:$0xff]
      %v319 = vld [vmem:[%s1 + $0xc8] sm:$0xff]
      %v320 = vld [vmem:[%s1 + $0xd0] sm:$0xff]
      %v321 = vld [vmem:[%s1 + $0xd8] sm:$0xff]
      %v322 = vld [vmem:[%s1 + $0xe0] sm:$0xff]
      %v323 = vld [vmem:[%s1 + $0xe8] sm:$0xff]
      %v324 = vld [vmem:[%s1 + $0xf0] sm:$0xff]
      %v325 = vld [vmem:[%s1 + $0xf8] sm:$0xff]
      %v326 = vld [vmem:[%s1 + $0x100] sm:$0xff]
      %v327 = vld [vmem:[%s1 + $0x108] sm:$0xff]
      %v328 = vld [vmem:[%s1 + $0x110] sm:$0xff]
      %v329 = vld [vmem:[%s1 + $0x118] sm:$0xff]
      %v330 = vld [vmem:[%s1 + $0x120] sm:$0xff]
      %v331 = vld [vmem:[%s1 + $0x128] sm:$0xff]
      %v332 = vld [vmem:[%s1 + $0x130] sm:$0xff]
      %v333 = vld [vmem:[%s1 + $0x138] sm:$0xff]
      %v334 = vld [vmem:[%s1 + $0x140] sm:$0xff]
      %v335 = vld [vmem:[%s1 + $0x148] sm:$0xff]
      %v336 = vld [vmem:[%s1 + $0x150] sm:$0xff]
      %v337 = vld [vmem:[%s1 + $0x158] sm:$0xff]
      %v338 = vld [vmem:[%s1 + $0x160] sm:$0xff]
      %v339 = vld [vmem:[%s1 + $0x168] sm:$0xff]
      %v340 = vld [vmem:[%s1 + $0x170] sm:$0xff]
      %v341 = vld [vmem:[%s1 + $0x178] sm:$0xff]
      %v342 = vld [vmem:[%s1 + $0x180] sm:$0xff]
      %v343 = vld [vmem:[%s1 + $0x188] sm:$0xff]
      %v344 = vld [vmem:[%s1 + $0x190] sm:$0xff]
      %v345 = vld [vmem:[%s1 + $0x198] sm:$0xff]
      %v346 = vld [vmem:[%s1 + $0x1a0] sm:$0xff]
      %v347 = vld [vmem:[%s1 + $0x1a8] sm:$0xff]
      %v348 = vld [vmem:[%s1 + $0x1b0] sm:$0xff]
      %v349 = vld [vmem:[%s1 + $0x1b8] sm:$0xff]
      %v350 = vld [vmem:[%s1 + $0x1c0] sm:$0xff]
      %v351 = vld [vmem:[%s1 + $0x1c8] sm:$0xff]
      %v352 = vld [vmem:[%s1 + $0x1d0] sm:$0xff]
      %v353 = vld [vmem:[%s1 + $0x1d8] sm:$0xff]
      %v354 = vld [vmem:[%s1 + $0x1e0] sm:$0xff]
      %v355 = vld [vmem:[%s1 + $0x1e8] sm:$0xff]
      %v356 = vld [vmem:[%s1 + $0x1f0] sm:$0xff]
      %v357 = vld [vmem:[%s1 + $0x1f8] sm:$0xff]
      %v358 = vcombine.low %v266, %v275
      %v359 = vcombine.high %v266, %v275
      %v360 = vcombine.low %v284, %v293
      %v361 = vcombine.high %v284, %v293
      %v363 = vunpack.c.l.s4 1983009808
      %v364 = vunpack.c.0.s8 %v363
      %v365 = vlaneseq
      %v366 = vshrl.u32 %v365, 7
      %v367 = vsub.s32 %v364, %v366
      %v368 = vrot.slane %v358, %v367
      %v370 = vunpack.c.l.s4 1983009808
      %v371 = vunpack.c.0.s8 %v370
      %v372 = vlaneseq
      %v373 = vshrl.u32 %v372, 7
      %v374 = vsub.s32 %v371, %v373
      %v375 = vrot.slane %v359, %v374
      %v377 = vunpack.c.l.s4 1983009808
      %v378 = vunpack.c.0.s8 %v377
      %v379 = vlaneseq
      %v380 = vshrl.u32 %v379, 7
      %v381 = vsub.s32 %v378, %v380
      %v382 = vrot.slane %v360, %v381
      %v384 = vunpack.c.l.s4 1983009808
      %v385 = vunpack.c.0.s8 %v384
      %v386 = vlaneseq
      %v387 = vshrl.u32 %v386, 7
      %v388 = vsub.s32 %v385, %v387
      %v389 = vrot.slane %v361, %v388
      %v390 = vcombine.low %v368, %v382
      %v391 = vcombine.high %v368, %v382
      %v392 = vcombine.low %v375, %v389
      %v393 = vcombine.high %v375, %v389
      %v462 = vunpack.c.l.b16 %v294
      %v463 = vunpack.c.h.b16 %v294
      %v464 = vunpack.c.l.b16 %v295
      %v465 = vunpack.c.h.b16 %v295
      %v466 = vunpack.c.l.b16 %v296
      %v467 = vunpack.c.h.b16 %v296
      %v468 = vunpack.c.l.b16 %v297
      %v469 = vunpack.c.h.b16 %v297
      %v470 = vunpack.c.l.b16 %v298
      %v471 = vunpack.c.h.b16 %v298
      %v472 = vunpack.c.l.b16 %v299
      %v473 = vunpack.c.h.b16 %v299
      %v474 = vunpack.c.l.b16 %v300
      %v475 = vunpack.c.h.b16 %v300
      %v476 = vunpack.c.l.b16 %v301
      %v477 = vunpack.c.h.b16 %v301
      %v478 = vunpack.c.l.b16 %v302
      %v479 = vunpack.c.h.b16 %v302
      %v480 = vunpack.c.l.b16 %v303
      %v481 = vunpack.c.h.b16 %v303
      %v482 = vunpack.c.l.b16 %v304
      %v483 = vunpack.c.h.b16 %v304
      %v484 = vunpack.c.l.b16 %v305
      %v485 = vunpack.c.h.b16 %v305
      %v486 = vunpack.c.l.b16 %v306
      %v487 = vunpack.c.h.b16 %v306
      %v488 = vunpack.c.l.b16 %v307
      %v489 = vunpack.c.h.b16 %v307
      %v490 = vunpack.c.l.b16 %v308
      %v491 = vunpack.c.h.b16 %v308
      %v492 = vunpack.c.l.b16 %v309
      %v493 = vunpack.c.h.b16 %v309
      %v494 = vunpack.c.l.b16 %v310
      %v495 = vunpack.c.h.b16 %v310
      %v496 = vunpack.c.l.b16 %v311
      %v497 = vunpack.c.h.b16 %v311
      %v498 = vunpack.c.l.b16 %v312
      %v499 = vunpack.c.h.b16 %v312
      %v500 = vunpack.c.l.b16 %v313
      %v501 = vunpack.c.h.b16 %v313
      %v502 = vunpack.c.l.b16 %v314
      %v503 = vunpack.c.h.b16 %v314
      %v504 = vunpack.c.l.b16 %v315
      %v505 = vunpack.c.h.b16 %v315
      %v506 = vunpack.c.l.b16 %v316
      %v507 = vunpack.c.h.b16 %v316
      %v508 = vunpack.c.l.b16 %v317
      %v509 = vunpack.c.h.b16 %v317
      %v510 = vunpack.c.l.b16 %v318
      %v511 = vunpack.c.h.b16 %v318
      %v512 = vunpack.c.l.b16 %v319
      %v513 = vunpack.c.h.b16 %v319
      %v514 = vunpack.c.l.b16 %v320
      %v515 = vunpack.c.h.b16 %v320
      %v516 = vunpack.c.l.b16 %v321
      %v517 = vunpack.c.h.b16 %v321
      %v518 = vunpack.c.l.b16 %v322
      %v519 = vunpack.c.h.b16 %v322
      %v520 = vunpack.c.l.b16 %v323
      %v521 = vunpack.c.h.b16 %v323
      %v522 = vunpack.c.l.b16 %v324
      %v523 = vunpack.c.h.b16 %v324
      %v524 = vunpack.c.l.b16 %v325
      %v525 = vunpack.c.h.b16 %v325
      %v526 = vunpack.c.l.b16 %v326
      %v527 = vunpack.c.h.b16 %v326
      %v528 = vunpack.c.l.b16 %v327
      %v529 = vunpack.c.h.b16 %v327
      %v530 = vunpack.c.l.b16 %v328
      %v531 = vunpack.c.h.b16 %v328
      %v532 = vunpack.c.l.b16 %v329
      %v533 = vunpack.c.h.b16 %v329
      %v534 = vunpack.c.l.b16 %v330
      %v535 = vunpack.c.h.b16 %v330
      %v536 = vunpack.c.l.b16 %v331
      %v537 = vunpack.c.h.b16 %v331
      %v538 = vunpack.c.l.b16 %v332
      %v539 = vunpack.c.h.b16 %v332
      %v540 = vunpack.c.l.b16 %v333
      %v541 = vunpack.c.h.b16 %v333
      %v542 = vunpack.c.l.b16 %v334
      %v543 = vunpack.c.h.b16 %v334
      %v544 = vunpack.c.l.b16 %v335
      %v545 = vunpack.c.h.b16 %v335
      %v546 = vunpack.c.l.b16 %v336
      %v547 = vunpack.c.h.b16 %v336
      %v548 = vunpack.c.l.b16 %v337
      %v549 = vunpack.c.h.b16 %v337
      %v550 = vunpack.c.l.b16 %v338
      %v551 = vunpack.c.h.b16 %v338
      %v552 = vunpack.c.l.b16 %v339
      %v553 = vunpack.c.h.b16 %v339
      %v554 = vunpack.c.l.b16 %v340
      %v555 = vunpack.c.h.b16 %v340
      %v556 = vunpack.c.l.b16 %v341
      %v557 = vunpack.c.h.b16 %v341
      %v558 = vunpack.c.l.b16 %v342
      %v559 = vunpack.c.h.b16 %v342
      %v560 = vunpack.c.l.b16 %v343
      %v561 = vunpack.c.h.b16 %v343
      %v562 = vunpack.c.l.b16 %v344
      %v563 = vunpack.c.h.b16 %v344
      %v564 = vunpack.c.l.b16 %v345
      %v565 = vunpack.c.h.b16 %v345
      %v566 = vunpack.c.l.b16 %v346
      %v567 = vunpack.c.h.b16 %v346
      %v568 = vunpack.c.l.b16 %v347
      %v569 = vunpack.c.h.b16 %v347
      %v570 = vunpack.c.l.b16 %v348
      %v571 = vunpack.c.h.b16 %v348
      %v572 = vunpack.c.l.b16 %v349
      %v573 = vunpack.c.h.b16 %v349
      %v574 = vunpack.c.l.b16 %v350
      %v575 = vunpack.c.h.b16 %v350
      %v576 = vunpack.c.l.b16 %v351
      %v577 = vunpack.c.h.b16 %v351
      %v578 = vunpack.c.l.b16 %v352
      %v579 = vunpack.c.h.b16 %v352
      %v580 = vunpack.c.l.b16 %v353
      %v581 = vunpack.c.h.b16 %v353
      %v582 = vunpack.c.l.b16 %v354
      %v583 = vunpack.c.h.b16 %v354
      %v584 = vunpack.c.l.b16 %v355
      %v585 = vunpack.c.h.b16 %v355
      %v586 = vunpack.c.l.b16 %v356
      %v587 = vunpack.c.h.b16 %v356
      %v588 = vunpack.c.l.b16 %v357
      %v589 = vunpack.c.h.b16 %v357
      %v590 = vpack.c.b16 %v464, %v462
      %v591 = vpack.c.b16 %v465, %v463
      %v592 = vpack.c.b16 %v468, %v466
      %v593 = vpack.c.b16 %v469, %v467
      %v594 = vpack.c.b16 %v472, %v470
      %v595 = vpack.c.b16 %v473, %v471
      %v596 = vpack.c.b16 %v476, %v474
      %v597 = vpack.c.b16 %v477, %v475
      %v598 = vpack.c.b16 %v480, %v478
      %v599 = vpack.c.b16 %v481, %v479
      %v600 = vpack.c.b16 %v484, %v482
      %v601 = vpack.c.b16 %v485, %v483
      %v602 = vpack.c.b16 %v488, %v486
      %v603 = vpack.c.b16 %v489, %v487
      %v604 = vpack.c.b16 %v492, %v490
      %v605 = vpack.c.b16 %v493, %v491
      %v606 = vpack.c.b16 %v496, %v494
      %v607 = vpack.c.b16 %v497, %v495
      %v608 = vpack.c.b16 %v500, %v498
      %v609 = vpack.c.b16 %v501, %v499
      %v610 = vpack.c.b16 %v504, %v502
      %v611 = vpack.c.b16 %v505, %v503
      %v612 = vpack.c.b16 %v508, %v506
      %v613 = vpack.c.b16 %v509, %v507
      %v614 = vpack.c.b16 %v512, %v510
      %v615 = vpack.c.b16 %v513, %v511
      %v616 = vpack.c.b16 %v516, %v514
      %v617 = vpack.c.b16 %v517, %v515
      %v618 = vpack.c.b16 %v520, %v518
      %v619 = vpack.c.b16 %v521, %v519
      %v620 = vpack.c.b16 %v524, %v522
      %v621 = vpack.c.b16 %v525, %v523
      %v622 = vpack.c.b16 %v528, %v526
      %v623 = vpack.c.b16 %v529, %v527
      %v624 = vpack.c.b16 %v532, %v530
      %v625 = vpack.c.b16 %v533, %v531
      %v626 = vpack.c.b16 %v536, %v534
      %v627 = vpack.c.b16 %v537, %v535
      %v628 = vpack.c.b16 %v540, %v538
      %v629 = vpack.c.b16 %v541, %v539
      %v630 = vpack.c.b16 %v544, %v542
      %v631 = vpack.c.b16 %v545, %v543
      %v632 = vpack.c.b16 %v548, %v546
      %v633 = vpack.c.b16 %v549, %v547
      %v634 = vpack.c.b16 %v552, %v550
      %v635 = vpack.c.b16 %v553, %v551
      %v636 = vpack.c.b16 %v556, %v554
      %v637 = vpack.c.b16 %v557, %v555
      %v638 = vpack.c.b16 %v560, %v558
      %v639 = vpack.c.b16 %v561, %v559
      %v640 = vpack.c.b16 %v564, %v562
      %v641 = vpack.c.b16 %v565, %v563
      %v642 = vpack.c.b16 %v568, %v566
      %v643 = vpack.c.b16 %v569, %v567
      %v644 = vpack.c.b16 %v572, %v570
      %v645 = vpack.c.b16 %v573, %v571
      %v646 = vpack.c.b16 %v576, %v574
      %v647 = vpack.c.b16 %v577, %v575
      %v648 = vpack.c.b16 %v580, %v578
      %v649 = vpack.c.b16 %v581, %v579
      %v650 = vpack.c.b16 %v584, %v582
      %v651 = vpack.c.b16 %v585, %v583
      %v652 = vpack.c.b16 %v588, %v586
      %v653 = vpack.c.b16 %v589, %v587
      %718 = vmatprep.subr.bf16.mxu0 %v591
      %719 = vmatpush1.bf16.msra.mxu0 %v590
      %720 = vmatprep.subr.bf16.mxu0 %v593
      %721 = vmatpush1.bf16.msra.mxu0 %v592
      %722 = vmatprep.subr.bf16.mxu0 %v595
      %723 = vmatpush1.bf16.msra.mxu0 %v594
      %724 = vmatprep.subr.bf16.mxu0 %v597
      %725 = vmatpush1.bf16.msra.mxu0 %v596
      %726 = vmatprep.subr.bf16.mxu0 %v599
      %727 = vmatpush1.bf16.msra.mxu0 %v598
      %728 = vmatprep.subr.bf16.mxu0 %v601
      %729 = vmatpush1.bf16.msra.mxu0 %v600
      %730 = vmatprep.subr.bf16.mxu0 %v603
      %731 = vmatpush1.bf16.msra.mxu0 %v602
      %732 = vmatprep.subr.bf16.mxu0 %v605
      %733 = vmatpush1.bf16.msra.mxu0 %v604
      %734 = vmatprep.subr.bf16.mxu0 %v607
      %735 = vmatpush1.bf16.msra.mxu0 %v606
      %736 = vmatprep.subr.bf16.mxu0 %v609
      %737 = vmatpush1.bf16.msra.mxu0 %v608
      %738 = vmatprep.subr.bf16.mxu0 %v611
      %739 = vmatpush1.bf16.msra.mxu0 %v610
      %740 = vmatprep.subr.bf16.mxu0 %v613
      %741 = vmatpush1.bf16.msra.mxu0 %v612
      %742 = vmatprep.subr.bf16.mxu0 %v615
      %743 = vmatpush1.bf16.msra.mxu0 %v614
      %744 = vmatprep.subr.bf16.mxu0 %v617
      %745 = vmatpush1.bf16.msra.mxu0 %v616
      %746 = vmatprep.subr.bf16.mxu0 %v619
      %747 = vmatpush1.bf16.msra.mxu0 %v618
      %748 = vmatprep.subr.bf16.mxu0 %v621
      %749 = vmatpush1.bf16.msra.mxu0 %v620
      %750 = vmatprep.mubr.bf16.mxu0 %v391
      %751 = vmatmul.mubr.bf16.gmra.mrb[0].mxu0 %v390
      %v752 = vpop.f32.mrb[0].mxu0
      %v753 = vadd.f32 0.0, %v752
      %v754 = vpop.f32.mrb[0].mxu0
      %v755 = vadd.f32 0.0, %v754
      %v756 = vpop.f32.mrb[0].mxu0
      %v757 = vadd.f32 0.0, %v756
      %v758 = vpop.f32.mrb[0].mxu0
      %v759 = vadd.f32 0.0, %v758
      %760 = vdwg.mxu0
      %761 = vmatprep.subr.bf16.mxu0 %v623
      %762 = vmatpush1.bf16.msra.mxu0 %v622
      %763 = vmatprep.subr.bf16.mxu0 %v625
      %764 = vmatpush1.bf16.msra.mxu0 %v624
      %765 = vmatprep.subr.bf16.mxu0 %v627
      %766 = vmatpush1.bf16.msra.mxu0 %v626
      %767 = vmatprep.subr.bf16.mxu0 %v629
      %768 = vmatpush1.bf16.msra.mxu0 %v628
      %769 = vmatprep.subr.bf16.mxu0 %v631
      %770 = vmatpush1.bf16.msra.mxu0 %v630
      %771 = vmatprep.subr.bf16.mxu0 %v633
      %772 = vmatpush1.bf16.msra.mxu0 %v632
      %773 = vmatprep.subr.bf16.mxu0 %v635
      %774 = vmatpush1.bf16.msra.mxu0 %v634
      %775 = vmatprep.subr.bf16.mxu0 %v637
      %776 = vmatpush1.bf16.msra.mxu0 %v636
      %777 = vmatprep.subr.bf16.mxu0 %v639
      %778 = vmatpush1.bf16.msra.mxu0 %v638
      %779 = vmatprep.subr.bf16.mxu0 %v641
      %780 = vmatpush1.bf16.msra.mxu0 %v640
      %781 = vmatprep.subr.bf16.mxu0 %v643
      %782 = vmatpush1.bf16.msra.mxu0 %v642
      %783 = vmatprep.subr.bf16.mxu0 %v645
      %784 = vmatpush1.bf16.msra.mxu0 %v644
      %785 = vmatprep.subr.bf16.mxu0 %v647
      %786 = vmatpush1.bf16.msra.mxu0 %v646
      %787 = vmatprep.subr.bf16.mxu0 %v649
      %788 = vmatpush1.bf16.msra.mxu0 %v648
      %789 = vmatprep.subr.bf16.mxu0 %v651
      %790 = vmatpush1.bf16.msra.mxu0 %v650
      %791 = vmatprep.subr.bf16.mxu0 %v653
      %792 = vmatpush1.bf16.msra.mxu0 %v652
      %793 = vmatprep.mubr.bf16.mxu0 %v393
      %794 = vmatmul.mubr.bf16.gmra.mrb[0].mxu0 %v392
      %v795 = vpop.f32.mrb[0].mxu0
      %v796 = vadd.f32 %v753, %v795
      %v797 = vpop.f32.mrb[0].mxu0
      %v798 = vadd.f32 %v755, %v797
      %v799 = vpop.f32.mrb[0].mxu0
      %v800 = vadd.f32 %v757, %v799
      %v801 = vpop.f32.mrb[0].mxu0
      %v802 = vadd.f32 %v759, %v801
      %803 = vdwg.mxu0
      %v804 = vld [vmem:[%s2] sm:$0x3]
      %v806 = vlaneseq
      %v807 = vshrl.u32 %v806, 7
      %v808 = vsub.s32 0, %v807
      %v809 = vrot.slane %v804, %v808
      %v810 = vlaneseq
      %v811 = vshrl.u32 %v810, 7
      %v812 = vsub.s32 1, %v811
      %v813 = vrot.slane %v804, %v812
      %v816 = vmul.f32 %v796, %v809
      %v817 = vmul.f32 %v798, %v813
      %v818 = vmul.f32 %v800, %v809
      %v819 = vmul.f32 %v802, %v813
      %v820 = vld [vmem:[%s3] sm:$0x3]
      %v822 = vlaneseq
      %v823 = vshrl.u32 %v822, 7
      %v824 = vsub.s32 0, %v823
      %v825 = vrot.slane %v820, %v824
      %v826 = vlaneseq
      %v827 = vshrl.u32 %v826, 7
      %v828 = vsub.s32 1, %v827
      %v829 = vrot.slane %v820, %v828
      %v832 = vadd.f32 %v816, %v825
      %v833 = vadd.f32 %v817, %v829
      %v834 = vadd.f32 %v818, %v825
      %v835 = vadd.f32 %v819, %v829
      %v836 = vmax.f32 %v832, 0.0
      %v837 = vmax.f32 %v833, 0.0
      %v838 = vmax.f32 %v834, 0.0
      %v839 = vmax.f32 %v835, 0.0
      %v844 = vcombine.low %v836, %v837
      %v845 = vcombine.high %v836, %v837
      %v846 = vcombine.low %v838, %v839
      %v847 = vcombine.high %v838, %v839
      %852 = vst [vmem:[%s197] sm:$0xff] %v844
      %853 = vst [vmem:[%s197 + $0x8] sm:$0xff] %v845
      %854 = vst [vmem:[%s197 + $0x10] sm:$0xff] %v846
      %855 = vst [vmem:[%s197 + $0x18] sm:$0xff] %v847
      %p856 = scmp.lt.s32.totalorder %s15, 1
      %s857 = scalar_select %p856, %s15, 1
      %s858 = smul.addr %s857, 8
      %s859 = smul.addr %s858, 4
      %s860 = scalar_lea.vmem %s4, %s859
      // Predicated region
      $region37: #{decoder_forward.7} parent=35 // pred_check
        %p861 = pneg %p122
      $region38: #{decoder_forward.7} parent=35 // pred_check_branch
        %863 = sbr.rel (%p861) target = $region40
      $region39: #{decoder_forward.7} parent=35 // pred_region
        _
      $region40: #{decoder_forward.7} parent=35 // pred_fallthru
        _
    $region36: #{decoder_forward.7} parent=5 // pred_fallthru
      _
    %p864 = scmp.le.s32.totalorder 2, %s10
    // Predicated region
    $region41: #{decoder_forward.7} parent=5 // pred_check
      %p865 = pneg %p864
    $region42: #{decoder_forward.7} parent=5 // pred_check_branch
      %867 = sbr.rel (%p865) target = $region44
    $region43: #{decoder_forward.7} parent=5 // pred_region
      %s868 = ssub.s32 %s10, 2
      // Predicated region
      $region45: #{decoder_forward.7} parent=43 // pred_check
        %p869 = pneg %p128
      $region46: #{decoder_forward.7} parent=43 // pred_check_branch
        %871 = sbr.rel (%p869) target = $region48
      $region47: #{decoder_forward.7} parent=43 // pred_region
        %p872 = scmp.lt.s32.totalorder %s16, 1
        %s873 = scalar_select %p872, %s16, 1
        %s874 = smul.addr %s873, 8
        %s875 = smul.addr %s874, 4
        %s876 = scalar_lea.vmem %s4, %s875
      $region48: #{decoder_forward.7} parent=43 // pred_fallthru
        _
    $region44: #{decoder_forward.7} parent=5 // pred_fallthru
      _
  $region6: #{decoder_forward.7} parent=0 // loop_footer
    %s14 = sadd.s32 1, %s10
  $region7: #{decoder_forward.7} parent=0 // loop_footer_branch
    %9 = sbr.rel target = $region3
  $region8: #{decoder_forward.7} parent=0 // loop_exit
    _

// kernel: decoder_forward.8
$region0: #{decoder_forward.8}
  #allocation0 [shape = 'u32[]', space=smem, size = 0x4, offset = 0x4, fixed_abs, tag = 'smem constant byte address 0x4 - core index']
  #allocation1 [shape = 'u32[144,128]{1,0:T(1,128)}', space=vmem, size = 0x12000, scoped, tag = 'internal scratch']
  %s0 = inlined_call_operand.vmem [shape: f32[2,8,8,64], index: 0, kind: input, shape index: {}]
  %s1 = inlined_call_operand.vmem [shape: bf16[4,192,64], index: 1, kind: input, shape index: {}]
  %s2 = inlined_call_operand.vmem [shape: f32[8,64], index: 2, kind: input, shape index: {}]
  %s3 = inlined_call_operand.vmem [shape: f32[2,8,8,64], index: 3, kind: output, shape index: {}]
  %s4 = sld [smem:[#allocation0]]
  $region45: #{decoder_forward.8} parent=0
    _
  %s6 = ssub.s32 1, %s4
  %s7 = scalar_select 0, %s6, %s4
  loop: start=0, step=1, limit=4
  $region2: #{decoder_forward.8} parent=0 // loop_pre_header
    _
  $region3: #{decoder_forward.8} parent=0 // loop_header
    %s9 = sphi 0, %s13
    %p10 = scmp.ge.s32.totalorder %s9, 4
    %s19 = sphi 0, %s21
    %s22 = sphi 0, %s19
    %s23 = sphi 0, %s22
    %s39 = sphi 0, %s23
    %s43 = sphi 0, %s43
    %s45 = sphi 0, %s43
    %s46 = sphi 0, %s45
    %s60 = sphi 0, %s46
    %s64 = sphi 0, %s64
    %s66 = sphi 0, %s64
    %s67 = sphi 0, %s66
    %s81 = sphi 0, %s67
    %s87 = sphi 0, %s89
    %s90 = sphi 0, %s87
    %s91 = sphi 0, %s90
    %s107 = sphi 0, %s91
  $region4: #{decoder_forward.8} parent=0 // loop_header_branch
    %12 = sbr.rel (%p10) target = $region8
  $region5: #{decoder_forward.8} parent=0 // loop_body
    %s14 = ssub.s32 %s9, 1
    %s15 = ssub.s32 %s9, 2
    %s16 = sadd.s32 %s9, 1
    %s17 = ssub.s32 %s9, %s16
    %p18 = scmp.eq.s32.totalorder %s17, 0
    %s20 = sadd.s32 %s19, 1
    %s21 = scalar_select %p18, %s19, %s20
    %p24 = pneg %p18
    %p25 = scmp.eq.s32.totalorder %s9, 1
    %p26 = por %p24, %p25
    %p27 = scmp.ne.s32.totalorder %s19, %s22
    %p28 = scmp.eq.s32.totalorder %s9, 0
    %p29 = por %p27, %p28
    %p30 = scmp.ne.s32.totalorder %s19, %s22
    %p31 = scmp.eq.s32.totalorder %s14, 1
    %p32 = por %p30, %p31
    %p33 = scmp.ne.s32.totalorder %s22, %s23
    %p34 = scmp.eq.s32.totalorder %s14, 0
    %p35 = por %p33, %p34
    %p36 = scmp.ne.s32.totalorder %s22, %s23
    %p37 = scmp.eq.s32.totalorder %s15, 1
    %p38 = por %p36, %p37
    %p40 = scmp.ne.s32.totalorder %s23, %s39
    %p41 = scmp.eq.s32.totalorder %s15, 0
    %p42 = por %p40, %p41
    %s44 = sadd.s32 %s43, 1
    %p47 = scmp.eq.s32.totalorder %s9, 1
    %p48 = scmp.ne.s32.totalorder %s43, %s45
    %p49 = scmp.eq.s32.totalorder %s9, 0
    %p50 = por %p48, %p49
    %p51 = scmp.ne.s32.totalorder %s43, %s45
    %p52 = scmp.eq.s32.totalorder %s14, 1
    %p53 = por %p51, %p52
    %p54 = scmp.ne.s32.totalorder %s45, %s46
    %p55 = scmp.eq.s32.totalorder %s14, 0
    %p56 = por %p54, %p55
    %p57 = scmp.ne.s32.totalorder %s45, %s46
    %p58 = scmp.eq.s32.totalorder %s15, 1
    %p59 = por %p57, %p58
    %p61 = scmp.ne.s32.totalorder %s46, %s60
    %p62 = scmp.eq.s32.totalorder %s15, 0
    %p63 = por %p61, %p62
    %s65 = sadd.s32 %s64, 1
    %p68 = scmp.eq.s32.totalorder %s9, 1
    %p69 = scmp.ne.s32.totalorder %s64, %s66
    %p70 = scmp.eq.s32.totalorder %s9, 0
    %p71 = por %p69, %p70
    %p72 = scmp.ne.s32.totalorder %s64, %s66
    %p73 = scmp.eq.s32.totalorder %s14, 1
    %p74 = por %p72, %p73
    %p75 = scmp.ne.s32.totalorder %s66, %s67
    %p76 = scmp.eq.s32.totalorder %s14, 0
    %p77 = por %p75, %p76
    %p78 = scmp.ne.s32.totalorder %s66, %s67
    %p79 = scmp.eq.s32.totalorder %s15, 1
    %p80 = por %p78, %p79
    %p82 = scmp.ne.s32.totalorder %s67, %s81
    %p83 = scmp.eq.s32.totalorder %s15, 0
    %p84 = por %p82, %p83
    %s85 = ssub.s32 %s9, %s16
    %p86 = scmp.eq.s32.totalorder %s85, 0
    %s88 = sadd.s32 %s87, 1
    %s89 = scalar_select %p86, %s87, %s88
    %p92 = pneg %p86
    %p93 = scmp.eq.s32.totalorder %s9, 1
    %p94 = por %p92, %p93
    %p95 = scmp.ne.s32.totalorder %s87, %s90
    %p96 = scmp.eq.s32.totalorder %s9, 0
    %p97 = por %p95, %p96
    %p98 = scmp.ne.s32.totalorder %s87, %s90
    %p99 = scmp.eq.s32.totalorder %s14, 1
    %p100 = por %p98, %p99
    %p101 = scmp.ne.s32.totalorder %s90, %s91
    %p102 = scmp.eq.s32.totalorder %s14, 0
    %p103 = por %p101, %p102
    %p104 = scmp.ne.s32.totalorder %s90, %s91
    %p105 = scmp.eq.s32.totalorder %s15, 1
    %p106 = por %p104, %p105
    %p108 = scmp.ne.s32.totalorder %s91, %s107
    %p109 = scmp.eq.s32.totalorder %s15, 0
    %p110 = por %p108, %p109
    %p111 = scmp.le.s32.totalorder 1, %s9
    %p112 = scmp.lt.s32.totalorder %s9, 3
    %p113 = pnand %p111, %p112
    %p114 = pneg %p113
    // Predicated region
    $region9: #{decoder_forward.8} parent=5 // pred_check
      _
    $region10: #{decoder_forward.8} parent=5 // pred_check_branch
      %116 = sbr.rel (%p113) target = $region12
    $region11: #{decoder_forward.8} parent=5 // pred_region
      %s117 = ssub.s32 %s9, 1
      // Predicated region
      $region13: #{decoder_forward.8} parent=11 // pred_check
        %p118 = pneg %p56
      $region14: #{decoder_forward.8} parent=11 // pred_check_branch
        %120 = sbr.rel (%p118) target = $region16
      $region15: #{decoder_forward.8} parent=11 // pred_region
        _
      $region16: #{decoder_forward.8} parent=11 // pred_fallthru
        _
      // Predicated region
      $region17: #{decoder_forward.8} parent=11 // pred_check
        %p121 = pneg %p77
      $region18: #{decoder_forward.8} parent=11 // pred_check_branch
        %123 = sbr.rel (%p121) target = $region20
      $region19: #{decoder_forward.8} parent=11 // pred_region
        _
      $region20: #{decoder_forward.8} parent=11 // pred_fallthru
        _
    $region12: #{decoder_forward.8} parent=5 // pred_fallthru
      _
    %p124 = scmp.lt.s32.totalorder %s9, 2
    // Predicated region
    $region21: #{decoder_forward.8} parent=5 // pred_check
      %p125 = pneg %p124
    $region22: #{decoder_forward.8} parent=5 // pred_check_branch
      %127 = sbr.rel (%p125) target = $region24
    $region23: #{decoder_forward.8} parent=5 // pred_region
      // Predicated region
      $region25: #{decoder_forward.8} parent=23 // pred_check
        %p128 = pneg %p29
      $region26: #{decoder_forward.8} parent=23 // pred_check_branch
        %130 = sbr.rel (%p128) target = $region28
      $region27: #{decoder_forward.8} parent=23 // pred_region
        %p131 = scmp.lt.s32.totalorder %s9, 1
        %s132 = scalar_select %p131, %s9, 1
        %s133 = smul.addr %s132, 8
        %s134 = smul.addr %s133, 8
        %s135 = scalar_lea.vmem %s0, %s134
      $region28: #{decoder_forward.8} parent=23 // pred_fallthru
        _
    $region24: #{decoder_forward.8} parent=5 // pred_fallthru
      _
    %p136 = scmp.le.s32.totalorder 1, %s9
    %p137 = scmp.lt.s32.totalorder %s9, 3
    %p138 = pnand %p136, %p137
    %p139 = pneg %p138
    // Predicated region
    $region29: #{decoder_forward.8} parent=5 // pred_check
      _
    $region30: #{decoder_forward.8} parent=5 // pred_check_branch
      %141 = sbr.rel (%p138) target = $region32
    $region31: #{decoder_forward.8} parent=5 // pred_region
      %s142 = ssub.s32 %s9, 1
      %p143 = scmp.lt.s32.totalorder %s14, 1
      %s144 = scalar_select %p143, %s14, 1
      %s145 = smul.addr %s144, 8
      %s146 = smul.addr %s145, 8
      %s147 = scalar_lea.vmem %s0, %s146
      %p148 = pneg %p35
      %p149 = pneg %p32
      %p150 = pneg %p56
      %p151 = pneg %p53
      %p152 = pneg %p77
      %p153 = pneg %p74
      %p154 = pneg %p103
      %p155 = pneg %p100
      %p156 = scmp.lt.s32.totalorder %s14, 1
      %s157 = scalar_select %p156, %s14, 1
      %s158 = smul.addr %s157, 8
      %s159 = smul.addr %s158, 8
      %s160 = scalar_lea.vmem %s3, %s159
      %p161 = scmp.lt.s32.totalorder %s14, 1
      %s162 = scalar_select %p161, %s14, 1
      %s163 = smul.addr %s162, 8
      %s164 = smul.addr %s163, 8
      %s165 = scalar_lea.vmem %s0, %s164
      %p166 = scmp.lt.s32.totalorder %s14, 1
      %s167 = scalar_select %p166, %s14, 1
      %s168 = smul.addr %s167, 8
      %s169 = smul.addr %s168, 8
      %s170 = scalar_lea.vmem %s3, %s169
      %v172 = vld [vmem:[%s165] sm:$0xff]
      %v173 = vld [vmem:[%s165 + $0x8] sm:$0xff]
      %v174 = vld [vmem:[%s165 + $0x10] sm:$0xff]
      %v175 = vld [vmem:[%s165 + $0x18] sm:$0xff]
      %v176 = vld [vmem:[%s165 + $0x20] sm:$0xff]
      %v177 = vld [vmem:[%s165 + $0x28] sm:$0xff]
      %v178 = vld [vmem:[%s165 + $0x30] sm:$0xff]
      %v179 = vld [vmem:[%s165 + $0x38] sm:$0xff]
      %v180 = vld [vmem:[%s2] sm:$0xff]
      %v181 = vld [vmem:[%s1] sm:$0xf]
      %v182 = vld [vmem:[%s1 + $0x4] sm:$0xf]
      %v183 = vld [vmem:[%s1 + $0x8] sm:$0xf]
      %v184 = vld [vmem:[%s1 + $0xc] sm:$0xf]
      %v185 = vld [vmem:[%s1 + $0x10] sm:$0xf]
      %v186 = vld [vmem:[%s1 + $0x14] sm:$0xf]
      %v187 = vld [vmem:[%s1 + $0x18] sm:$0xf]
      %v188 = vld [vmem:[%s1 + $0x1c] sm:$0xf]
      %v189 = vld [vmem:[%s1 + $0x20] sm:$0xf]
      %v190 = vld [vmem:[%s1 + $0x24] sm:$0xf]
      %v191 = vld [vmem:[%s1 + $0x28] sm:$0xf]
      %v192 = vld [vmem:[%s1 + $0x2c] sm:$0xf]
      %v193 = vld [vmem:[%s1 + $0x30] sm:$0xf]
      %v194 = vld [vmem:[%s1 + $0x34] sm:$0xf]
      %v195 = vld [vmem:[%s1 + $0x38] sm:$0xf]
      %v196 = vld [vmem:[%s1 + $0x3c] sm:$0xf]
      %v197 = vld [vmem:[%s1 + $0x40] sm:$0xf]
      %v198 = vld [vmem:[%s1 + $0x44] sm:$0xf]
      %v199 = vld [vmem:[%s1 + $0x48] sm:$0xf]
      %v200 = vld [vmem:[%s1 + $0x4c] sm:$0xf]
      %v201 = vld [vmem:[%s1 + $0x50] sm:$0xf]
      %v202 = vld [vmem:[%s1 + $0x54] sm:$0xf]
      %v203 = vld [vmem:[%s1 + $0x58] sm:$0xf]
      %v204 = vld [vmem:[%s1 + $0x5c] sm:$0xf]
      %213 = vrot.lane.b32.xlu0 %v172, 64
      %v214 = vpop.permute.xlu0 %213
      %215 = vrot.lane.b32.xlu0 %v173, 64
      %v216 = vpop.permute.xlu0 %215
      %217 = vrot.lane.b32.xlu0 %v174, 64
      %v218 = vpop.permute.xlu0 %217
      %219 = vrot.lane.b32.xlu0 %v175, 64
      %v220 = vpop.permute.xlu0 %219
      %221 = vrot.lane.b32.xlu0 %v176, 64
      %v222 = vpop.permute.xlu0 %221
      %223 = vrot.lane.b32.xlu0 %v177, 64
      %v224 = vpop.permute.xlu0 %223
      %225 = vrot.lane.b32.xlu0 %v178, 64
      %v226 = vpop.permute.xlu0 %225
      %227 = vrot.lane.b32.xlu0 %v179, 64
      %v228 = vpop.permute.xlu0 %227
      %vm237 = vcmask 523264
      %v238 = vsel %vm237, 0.0, %v214
      %v239 = vsel %vm237, %v172, %v216
      %v240 = vsel %vm237, %v173, %v218
      %v241 = vsel %vm237, %v174, %v220
      %v242 = vsel %vm237, %v175, %v222
      %v243 = vsel %vm237, %v176, %v224
      %v244 = vsel %vm237, %v177, %v226
      %v245 = vsel %vm237, %v178, %v228
      %v246 = vpack.c.bf16 %v238, %v238
      %v247 = vpack.c.bf16 %v173, %v173
      %v248 = vpack.c.bf16 %v239, %v239
      %v249 = vpack.c.bf16 %v174, %v174
      %v250 = vpack.c.bf16 %v240, %v240
      %v251 = vpack.c.bf16 %v175, %v175
      %v252 = vpack.c.bf16 %v241, %v241
      %v253 = vpack.c.bf16 %v176, %v176
      %v254 = vpack.c.bf16 %v242, %v242
      %v255 = vpack.c.bf16 %v177, %v177
      %v256 = vpack.c.bf16 %v243, %v243
      %v257 = vpack.c.bf16 %v178, %v178
      %v258 = vpack.c.bf16 %v244, %v244
      %v259 = vpack.c.bf16 %v179, %v179
      %v260 = vpack.c.bf16 %v245, %v245
      %v261 = vpack.c.bf16 0.0, 0.0
      %v278 = vunpack.c.l.b16 %v246
      %v279 = vunpack.c.l.b16 %v247
      %v280 = vunpack.c.l.b16 %v248
      %v281 = vunpack.c.l.b16 %v249
      %v282 = vunpack.c.l.b16 %v250
      %v283 = vunpack.c.l.b16 %v251
      %v284 = vunpack.c.l.b16 %v252
      %v285 = vunpack.c.l.b16 %v253
      %v286 = vunpack.c.l.b16 %v254
      %v287 = vunpack.c.l.b16 %v255
      %v288 = vunpack.c.l.b16 %v256
      %v289 = vunpack.c.l.b16 %v257
      %v290 = vunpack.c.l.b16 %v258
      %v291 = vunpack.c.l.b16 %v259
      %v292 = vunpack.c.l.b16 %v260
      %v293 = vunpack.c.l.b16 %v261
      %v294 = vlaneseq
      %v295 = vshrl.u32 %v294, 7
      %v296 = vsub.s32 1, %v295
      %v297 = vrot.slane %v180, %v296
      %v298 = vpack.c.b16 %v280, %v278
      %v299 = vpack.c.b16 %v281, %v279
      %v300 = vpack.c.b16 %v284, %v282
      %v301 = vpack.c.b16 %v285, %v283
      %v302 = vpack.c.b16 %v288, %v286
      %v303 = vpack.c.b16 %v289, %v287
      %v304 = vpack.c.b16 %v292, %v290
      %v305 = vpack.c.b16 %v293, %v291
      %v334 = vunpack.c.l.b16 %v181
      %v335 = vunpack.c.l.b16 %v182
      %v336 = vunpack.c.l.b16 %v183
      %v337 = vunpack.c.l.b16 %v184
      %v338 = vunpack.c.l.b16 %v185
      %v339 = vunpack.c.l.b16 %v186
      %v340 = vunpack.c.l.b16 %v187
      %v341 = vunpack.c.l.b16 %v188
      %v342 = vunpack.c.l.b16 %v189
      %v343 = vunpack.c.l.b16 %v190
      %v344 = vunpack.c.l.b16 %v191
      %v345 = vunpack.c.l.b16 %v192
      %v346 = vunpack.c.l.b16 %v193
      %v347 = vunpack.c.l.b16 %v194
      %v348 = vunpack.c.l.b16 %v195
      %v349 = vunpack.c.l.b16 %v196
      %v350 = vunpack.c.l.b16 %v197
      %v351 = vunpack.c.l.b16 %v198
      %v352 = vunpack.c.l.b16 %v199
      %v353 = vunpack.c.l.b16 %v200
      %v354 = vunpack.c.l.b16 %v201
      %v355 = vunpack.c.l.b16 %v202
      %v356 = vunpack.c.l.b16 %v203
      %v357 = vunpack.c.l.b16 %v204
      %v358 = vpack.c.b16 %v335, %v334
      %v359 = vpack.c.b16 %v337, %v336
      %v360 = vpack.c.b16 %v339, %v338
      %v361 = vpack.c.b16 %v341, %v340
      %v362 = vpack.c.b16 %v343, %v342
      %v363 = vpack.c.b16 %v345, %v344
      %v364 = vpack.c.b16 %v347, %v346
      %v365 = vpack.c.b16 %v349, %v348
      %v366 = vpack.c.b16 %v351, %v350
      %v367 = vpack.c.b16 %v353, %v352
      %v368 = vpack.c.b16 %v355, %v354
      %v369 = vpack.c.b16 %v357, %v356
      %v383 = vsel %vm237, %v299, 0
      %v386 = vsel %vm237, %v301, 0
      %v389 = vsel %vm237, %v303, 0
      %v392 = vsel %vm237, %v305, 0
      %394 = vmatprep.subr.bf16.mxu0 0
      %395 = vmatpush1.bf16.msra.mxu0 %v358
      %396 = vmatprep.subr.bf16.mxu0 0
      %397 = vmatpush1.bf16.msra.mxu0 %v359
      %398 = vmatprep.subr.bf16.mxu0 0
      %399 = vmatpush1.bf16.msra.mxu0 %v360
      %400 = vmatprep.subr.bf16.mxu0 0
      %401 = vmatpush1.bf16.msra.mxu0 %v361
      %402 = vmatprep.subr.bf16.mxu0 0
      %403 = vmatpush1.bf16.msra.mxu0 %v362
      %404 = vmatprep.subr.bf16.mxu0 0
      %405 = vmatpush1.bf16.msra.mxu0 %v363
      %406 = vmatprep.subr.bf16.mxu0 0
      %407 = vmatpush1.bf16.msra.mxu0 %v364
      %408 = vmatprep.subr.bf16.mxu0 0
      %409 = vmatpush1.bf16.msra.mxu0 %v365
      %410 = vmatprep.subr.bf16.mxu0 0
      %411 = vmatpush1.bf16.msra.mxu0 %v366
      %412 = vmatprep.subr.bf16.mxu0 0
      %413 = vmatpush1.bf16.msra.mxu0 %v367
      %414 = vmatprep.subr.bf16.mxu0 0
      %415 = vmatpush1.bf16.msra.mxu0 %v368
      %416 = vmatprep.subr.bf16.mxu0 0
      %417 = vmatpush1.bf16.msra.mxu0 %v369
      %418 = vmatprep.subr.bf16.mxu0 0
      %419 = vmatpush1.bf16.msra.mxu0 0
      %420 = vmatprep.subr.bf16.mxu0 0
      %421 = vmatpush1.bf16.msra.mxu0 0
      %422 = vmatprep.subr.bf16.mxu0 0
      %423 = vmatpush1.bf16.msra.mxu0 0
      %424 = vmatprep.subr.bf16.mxu0 0
      %425 = vmatpush1.bf16.msra.mxu0 0
      %426 = vmatprep.mubr.bf16.mxu0 %v383
      %427 = vmatmul.mubr.bf16.gmra.mrb[0].mxu0 %v298
      %v428 = vpop.f32.mrb[0].mxu0
      %v429 = vadd.f32 %v297, %v428
      %v430 = vpop.f32.mrb[0].mxu0
      %v431 = vpop.f32.mrb[0].mxu0
      %v432 = vadd.f32 %v297, %v431
      %v433 = vpop.f32.mrb[0].mxu0
      %434 = vmatprep.mubr.bf16.mxu0 %v386
      %435 = vmatmul.mubr.bf16.gmra.mrb[0].mxu0 %v300
      %v436 = vpop.f32.mrb[0].mxu0
      %v437 = vadd.f32 %v297, %v436
      %v438 = vpop.f32.mrb[0].mxu0
      %v439 = vpop.f32.mrb[0].mxu0
      %v440 = vadd.f32 %v297, %v439
      %v441 = vpop.f32.mrb[0].mxu0
      %442 = vmatprep.mubr.bf16.mxu0 %v389
      %443 = vmatmul.mubr.bf16.gmra.mrb[0].mxu0 %v302
      %v444 = vpop.f32.mrb[0].mxu0
      %v445 = vadd.f32 %v297, %v444
      %v446 = vpop.f32.mrb[0].mxu0
      %v447 = vpop.f32.mrb[0].mxu0
      %v448 = vadd.f32 %v297, %v447
      %v449 = vpop.f32.mrb[0].mxu0
      %450 = vmatprep.mubr.bf16.mxu0 %v392
      %451 = vmatmul.mubr.bf16.gmra.mrb[0].mxu0 %v304
      %v452 = vpop.f32.mrb[0].mxu0
      %v453 = vadd.f32 %v297, %v452
      %v454 = vpop.f32.mrb[0].mxu0
      %v455 = vpop.f32.mrb[0].mxu0
      %v456 = vadd.f32 %v297, %v455
      %v457 = vpop.f32.mrb[0].mxu0
      %458 = vdwg.mxu0
      %v459 = vmax.f32 %v429, 0.0
      %v460 = vmax.f32 %v432, 0.0
      %v461 = vmax.f32 %v437, 0.0
      %v462 = vmax.f32 %v440, 0.0
      %v463 = vmax.f32 %v445, 0.0
      %v464 = vmax.f32 %v448, 0.0
      %v465 = vmax.f32 %v453, 0.0
      %v466 = vmax.f32 %v456, 0.0
      %s467 = scalar_lea.vmem %s1, 96
      %v468 = vld [vmem:[%s467] sm:$0xf]
      %v469 = vld [vmem:[%s467 + $0x4] sm:$0xf]
      %v470 = vld [vmem:[%s467 + $0x8] sm:$0xf]
      %v471 = vld [vmem:[%s467 + $0xc] sm:$0xf]
      %v472 = vld [vmem:[%s467 + $0x10] sm:$0xf]
      %v473 = vld [vmem:[%s467 + $0x14] sm:$0xf]
      %v474 = vld [vmem:[%s467 + $0x18] sm:$0xf]
      %v475 = vld [vmem:[%s467 + $0x1c] sm:$0xf]
      %v476 = vld [vmem:[%s467 + $0x20] sm:$0xf]
      %v477 = vld [vmem:[%s467 + $0x24] sm:$0xf]
      %v478 = vld [vmem:[%s467 + $0x28] sm:$0xf]
      %v479 = vld [vmem:[%s467 + $0x2c] sm:$0xf]
      %v480 = vld [vmem:[%s467 + $0x30] sm:$0xf]
      %v481 = vld [vmem:[%s467 + $0x34] sm:$0xf]
      %v482 = vld [vmem:[%s467 + $0x38] sm:$0xf]
      %v483 = vld [vmem:[%s467 + $0x3c] sm:$0xf]
      %v484 = vld [vmem:[%s467 + $0x40] sm:$0xf]
      %v485 = vld [vmem:[%s467 + $0x44] sm:$0xf]
      %v486 = vld [vmem:[%s467 + $0x48] sm:$0xf]
      %v487 = vld [vmem:[%s467 + $0x4c] sm:$0xf]
      %v488 = vld [vmem:[%s467 + $0x50] sm:$0xf]
      %v489 = vld [vmem:[%s467 + $0x54] sm:$0xf]
      %v490 = vld [vmem:[%s467 + $0x58] sm:$0xf]
      %v491 = vld [vmem:[%s467 + $0x5c] sm:$0xf]
      %v500 = vrot.slane %v459, 7
      %v501 = vrot.slane %v460, 7
      %v502 = vrot.slane %v461, 7
      %v503 = vrot.slane %v462, 7
      %v504 = vrot.slane %v463, 7
      %v505 = vrot.slane %v464, 7
      %v506 = vrot.slane %v465, 7
      %v507 = vrot.slane %v466, 7
      %vm516 = vcmask 1040384
      %v517 = vsel %vm516, 0.0, %v500
      %v518 = vsel %vm516, 0.0, %v501
      %v519 = vsel %vm516, 0.0, %v502
      %v520 = vsel %vm516, 0.0, %v503
      %v521 = vsel %vm516, 0.0, %v504
      %v522 = vsel %vm516, 0.0, %v505
      %v523 = vsel %vm516, 0.0, %v506
      %v524 = vsel %vm516, 0.0, %v507
      %v525 = vsel %vm516, %v500, 0.0
      %v526 = vsel %vm516, %v501, 0.0
      %v527 = vsel %vm516, %v502, 0.0
      %v528 = vsel %vm516, %v503, 0.0
      %v529 = vsel %vm516, %v504, 0.0
      %v530 = vsel %vm516, %v505, 0.0
      %v531 = vsel %vm516, %v506, 0.0
      %v532 = vsel %vm516, %v507, 0.0
      %vm549 = vcmask 1046528
      %v550 = vrot.slane %v517, 1
      %v551 = vrot.slane %v525, 1
      %v552 = vsel %vm549, %v550, %v551
      %v553 = vrot.slane %v518, 1
      %v554 = vrot.slane %v526, 1
      %v555 = vsel %vm549, %v553, %v554
      %v556 = vrot.slane %v519, 1
      %v557 = vrot.slane %v527, 1
      %v558 = vsel %vm549, %v556, %v557
      %v559 = vrot.slane %v520, 1
      %v560 = vrot.slane %v528, 1
      %v561 = vsel %vm549, %v559, %v560
      %v562 = vrot.slane %v521, 1
      %v563 = vrot.slane %v529, 1
      %v564 = vsel %vm549, %v562, %v563
      %v565 = vrot.slane %v522, 1
      %v566 = vrot.slane %v530, 1
      %v567 = vsel %vm549, %v565, %v566
      %v568 = vrot.slane %v523, 1
      %v569 = vrot.slane %v531, 1
      %v570 = vsel %vm549, %v568, %v569
      %v571 = vrot.slane %v524, 1
      %v572 = vrot.slane %v532, 1
      %v573 = vsel %vm549, %v571, %v572
      %574 = vrot.lane.b32.xlu0 %v552, 64
      %v575 = vpop.permute.xlu0 %574
      %576 = vrot.lane.b32.xlu0 %v555, 64
      %v577 = vpop.permute.xlu0 %576
      %578 = vrot.lane.b32.xlu0 %v558, 64
      %v579 = vpop.permute.xlu0 %578
      %580 = vrot.lane.b32.xlu0 %v561, 64
      %v581 = vpop.permute.xlu0 %580
      %582 = vrot.lane.b32.xlu0 %v564, 64
      %v583 = vpop.permute.xlu0 %582
      %584 = vrot.lane.b32.xlu0 %v567, 64
      %v585 = vpop.permute.xlu0 %584
      %586 = vrot.lane.b32.xlu0 %v570, 64
      %v587 = vpop.permute.xlu0 %586
      %588 = vrot.lane.b32.xlu0 %v573, 64
      %v589 = vpop.permute.xlu0 %588
      %vm598 = vcmask 1045504
      %v599 = vrot.slane %v517, 2
      %v600 = vrot.slane %v525, 2
      %v601 = vsel %vm598, %v599, %v600
      %v602 = vrot.slane %v518, 2
      %v603 = vrot.slane %v526, 2
      %v604 = vsel %vm598, %v602, %v603
      %v605 = vrot.slane %v519, 2
      %v606 = vrot.slane %v527, 2
      %v607 = vsel %vm598, %v605, %v606
      %v608 = vrot.slane %v520, 2
      %v609 = vrot.slane %v528, 2
      %v610 = vsel %vm598, %v608, %v609
      %v611 = vrot.slane %v521, 2
      %v612 = vrot.slane %v529, 2
      %v613 = vsel %vm598, %v611, %v612
      %v614 = vrot.slane %v522, 2
      %v615 = vrot.slane %v530, 2
      %v616 = vsel %vm598, %v614, %v615
      %v617 = vrot.slane %v523, 2
      %v618 = vrot.slane %v531, 2
      %v619 = vsel %vm598, %v617, %v618
      %v620 = vrot.slane %v524, 2
      %v621 = vrot.slane %v532, 2
      %v622 = vsel %vm598, %v620, %v621
      %v631 = vsel %vm237, %v517, %v575
      %v632 = vsel %vm237, %v518, %v577
      %v633 = vsel %vm237, %v519, %v579
      %v634 = vsel %vm237, %v520, %v581
      %v635 = vsel %vm237, %v521, %v583
      %v636 = vsel %vm237, %v522, %v585
      %v637 = vsel %vm237, %v523, %v587
      %v638 = vsel %vm237, %v524, %v589
      %v639 = vpack.c.bf16 %v631, %v631
      %v640 = vpack.c.bf16 %v601, %v601
      %v641 = vpack.c.bf16 %v632, %v632
      %v642 = vpack.c.bf16 %v604, %v604
      %v643 = vpack.c.bf16 %v633, %v633
      %v644 = vpack.c.bf16 %v607, %v607
      %v645 = vpack.c.bf16 %v634, %v634
      %v646 = vpack.c.bf16 %v610, %v610
      %v647 = vpack.c.bf16 %v635, %v635
      %v648 = vpack.c.bf16 %v613, %v613
      %v649 = vpack.c.bf16 %v636, %v636
      %v650 = vpack.c.bf16 %v616, %v616
      %v651 = vpack.c.bf16 %v637, %v637
      %v652 = vpack.c.bf16 %v619, %v619
      %v653 = vpack.c.bf16 %v638, %v638
      %v654 = vpack.c.bf16 %v622, %v622
      %v671 = vunpack.c.l.b16 %v639
      %v672 = vunpack.c.l.b16 %v640
      %v673 = vunpack.c.l.b16 %v641
      %v674 = vunpack.c.l.b16 %v642
      %v675 = vunpack.c.l.b16 %v643
      %v676 = vunpack.c.l.b16 %v644
      %v677 = vunpack.c.l.b16 %v645
      %v678 = vunpack.c.l.b16 %v646
      %v679 = vunpack.c.l.b16 %v647
      %v680 = vunpack.c.l.b16 %v648
      %v681 = vunpack.c.l.b16 %v649
      %v682 = vunpack.c.l.b16 %v650
      %v683 = vunpack.c.l.b16 %v651
      %v684 = vunpack.c.l.b16 %v652
      %v685 = vunpack.c.l.b16 %v653
      %v686 = vunpack.c.l.b16 %v654
      %v687 = vpack.c.b16 %v673, %v671
      %v688 = vpack.c.b16 %v674, %v672
      %v689 = vpack.c.b16 %v677, %v675
      %v690 = vpack.c.b16 %v678, %v676
      %v691 = vpack.c.b16 %v681, %v679
      %v692 = vpack.c.b16 %v682, %v680
      %v693 = vpack.c.b16 %v685, %v683
      %v694 = vpack.c.b16 %v686, %v684
      %v723 = vunpack.c.l.b16 %v468
      %v724 = vunpack.c.l.b16 %v469
      %v725 = vunpack.c.l.b16 %v470
      %v726 = vunpack.c.l.b16 %v471
      %v727 = vunpack.c.l.b16 %v472
      %v728 = vunpack.c.l.b16 %v473
      %v729 = vunpack.c.l.b16 %v474
      %v730 = vunpack.c.l.b16 %v475
      %v731 = vunpack.c.l.b16 %v476
      %v732 = vunpack.c.l.b16 %v477
      %v733 = vunpack.c.l.b16 %v478
      %v734 = vunpack.c.l.b16 %v479
      %v735 = vunpack.c.l.b16 %v480
      %v736 = vunpack.c.l.b16 %v481
      %v737 = vunpack.c.l.b16 %v482
      %v738 = vunpack.c.l.b16 %v483
      %v739 = vunpack.c.l.b16 %v484
      %v740 = vunpack.c.l.b16 %v485
      %v741 = vunpack.c.l.b16 %v486
      %v742 = vunpack.c.l.b16 %v487
      %v743 = vunpack.c.l.b16 %v488
      %v744 = vunpack.c.l.b16 %v489
      %v745 = vunpack.c.l.b16 %v490
      %v746 = vunpack.c.l.b16 %v491
      %v747 = vpack.c.b16 %v724, %v723
      %v748 = vpack.c.b16 %v726, %v725
      %v749 = vpack.c.b16 %v728, %v727
      %v750 = vpack.c.b16 %v730, %v729
      %v751 = vpack.c.b16 %v732, %v731
      %v752 = vpack.c.b16 %v734, %v733
      %v753 = vpack.c.b16 %v736, %v735
      %v754 = vpack.c.b16 %v738, %v737
      %v755 = vpack.c.b16 %v740, %v739
      %v756 = vpack.c.b16 %v742, %v741
      %v757 = vpack.c.b16 %v744, %v743
      %v758 = vpack.c.b16 %v746, %v745
      %v772 = vsel %vm237, %v688, 0
      %v775 = vsel %vm237, %v690, 0
      %v778 = vsel %vm237, %v692, 0
      %v781 = vsel %vm237, %v694, 0
      %783 = vmatprep.subr.bf16.mxu0 0
      %784 = vmatpush1.bf16.msra.mxu0 %v747
      %785 = vmatprep.subr.bf16.mxu0 0
      %786 = vmatpush1.bf16.msra.mxu0 %v748
      %787 = vmatprep.subr.bf16.mxu0 0
      %788 = vmatpush1.bf16.msra.mxu0 %v749
      %789 = vmatprep.subr.bf16.mxu0 0
      %790 = vmatpush1.bf16.msra.mxu0 %v750
      %791 = vmatprep.subr.bf16.mxu0 0
      %792 = vmatpush1.bf16.msra.mxu0 %v751
      %793 = vmatprep.subr.bf16.mxu0 0
      %794 = vmatpush1.bf16.msra.mxu0 %v752
      %795 = vmatprep.subr.bf16.mxu0 0
      %796 = vmatpush1.bf16.msra.mxu0 %v753
      %797 = vmatprep.subr.bf16.mxu0 0
      %798 = vmatpush1.bf16.msra.mxu0 %v754
      %799 = vmatprep.subr.bf16.mxu0 0
      %800 = vmatpush1.bf16.msra.mxu0 %v755
      %801 = vmatprep.subr.bf16.mxu0 0
      %802 = vmatpush1.bf16.msra.mxu0 %v756
      %803 = vmatprep.subr.bf16.mxu0 0
      %804 = vmatpush1.bf16.msra.mxu0 %v757
      %805 = vmatprep.subr.bf16.mxu0 0
      %806 = vmatpush1.bf16.msra.mxu0 %v758
      %807 = vmatprep.subr.bf16.mxu0 0
      %808 = vmatpush1.bf16.msra.mxu0 0
      %809 = vmatprep.subr.bf16.mxu0 0
      %810 = vmatpush1.bf16.msra.mxu0 0
      %811 = vmatprep.subr.bf16.mxu0 0
      %812 = vmatpush1.bf16.msra.mxu0 0
      %813 = vmatprep.subr.bf16.mxu0 0
      %814 = vmatpush1.bf16.msra.mxu0 0
      %815 = vmatprep.mubr.bf16.mxu0 %v772
      %816 = vmatmul.mubr.bf16.gmra.mrb[0].mxu0 %v687
      %v817 = vpop.f32.mrb[0].mxu0
      %v818 = vadd.f32 0.0, %v817
      %v819 = vpop.f32.mrb[0].mxu0
      %v820 = vpop.f32.mrb[0].mxu0
      %v821 = vadd.f32 0.0, %v820
      %v822 = vpop.f32.mrb[0].mxu0
      %823 = vmatprep.mubr.bf16.mxu0 %v775
      %824 = vmatmul.mubr.bf16.gmra.mrb[0].mxu0 %v689
      %v825 = vpop.f32.mrb[0].mxu0
      %v826 = vadd.f32 0.0, %v825
      %v827 = vpop.f32.mrb[0].mxu0
      %v828 = vpop.f32.mrb[0].mxu0
      %v829 = vadd.f32 0.0, %v828
      %v830 = vpop.f32.mrb[0].mxu0
      %831 = vmatprep.mubr.bf16.mxu0 %v778
      %832 = vmatmul.mubr.bf16.gmra.mrb[0].mxu0 %v691
      %v833 = vpop.f32.mrb[0].mxu0
      %v834 = vadd.f32 0.0, %v833
      %v835 = vpop.f32.mrb[0].mxu0
      %v836 = vpop.f32.mrb[0].mxu0
      %v837 = vadd.f32 0.0, %v836
      %v838 = vpop.f32.mrb[0].mxu0
      %839 = vmatprep.mubr.bf16.mxu0 %v781
      %840 = vmatmul.mubr.bf16.gmra.mrb[0].mxu0 %v693
      %v841 = vpop.f32.mrb[0].mxu0
      %v842 = vadd.f32 0.0, %v841
      %v843 = vpop.f32.mrb[0].mxu0
      %v844 = vpop.f32.mrb[0].mxu0
      %v845 = vadd.f32 0.0, %v844
      %v846 = vpop.f32.mrb[0].mxu0
      %847 = vdwg.mxu0
      %v848 = vlaneseq
      %v849 = vshrl.u32 %v848, 7
      %v850 = vsub.s32 2, %v849
      %v851 = vrot.slane %v180, %v850
      %v852 = vmul.f32 %v818, %v851
      %v853 = vmul.f32 %v821, %v851
      %v854 = vmul.f32 %v826, %v851
      %v855 = vmul.f32 %v829, %v851
      %v856 = vmul.f32 %v834, %v851
      %v857 = vmul.f32 %v837, %v851
      %v858 = vmul.f32 %v842, %v851
      %v859 = vmul.f32 %v845, %v851
      %v860 = vlaneseq
      %v861 = vshrl.u32 %v860, 7
      %v862 = vsub.s32 3, %v861
      %v863 = vrot.slane %v180, %v862
      %v864 = vadd.f32 %v852, %v863
      %v865 = vadd.f32 %v853, %v863
      %v866 = vadd.f32 %v854, %v863
      %v867 = vadd.f32 %v855, %v863
      %v868 = vadd.f32 %v856, %v863
      %v869 = vadd.f32 %v857, %v863
      %v870 = vadd.f32 %v858, %v863
      %v871 = vadd.f32 %v859, %v863
      %v872 = vmax.f32 %v864, 0.0
      %v873 = vmax.f32 %v865, 0.0
      %v874 = vmax.f32 %v866, 0.0
      %v875 = vmax.f32 %v867, 0.0
      %v876 = vmax.f32 %v868, 0.0
      %v877 = vmax.f32 %v869, 0.0
      %v878 = vmax.f32 %v870, 0.0
      %v879 = vmax.f32 %v871, 0.0
      %s880 = scalar_lea.vmem %s1, 192
      %v881 = vld [vmem:[%s880] sm:$0xf]
      %v882 = vld [vmem:[%s880 + $0x4] sm:$0xf]
      %v883 = vld [vmem:[%s880 + $0x8] sm:$0xf]
      %v884 = vld [vmem:[%s880 + $0xc] sm:$0xf]
      %v885 = vld [vmem:[%s880 + $0x10] sm:$0xf]
      %v886 = vld [vmem:[%s880 + $0x14] sm:$0xf]
      %v887 = vld [vmem:[%s880 + $0x18] sm:$0xf]
      %v888 = vld [vmem:[%s880 + $0x1c] sm:$0xf]
      %v889 = vld [vmem:[%s880 + $0x20] sm:$0xf]
      %v890 = vld [vmem:[%s880 + $0x24] sm:$0xf]
      %v891 = vld [vmem:[%s880 + $0x28] sm:$0xf]
      %v892 = vld [vmem:[%s880 + $0x2c] sm:$0xf]
      %v893 = vld [vmem:[%s880 + $0x30] sm:$0xf]
      %v894 = vld [vmem:[%s880 + $0x34] sm:$0xf]
      %v895 = vld [vmem:[%s880 + $0x38] sm:$0xf]
      %v896 = vld [vmem:[%s880 + $0x3c] sm:$0xf]
      %v897 = vld [vmem:[%s880 + $0x40] sm:$0xf]
      %v898 = vld [vmem:[%s880 + $0x44] sm:$0xf]
      %v899 = vld [vmem:[%s880 + $0x48] sm:$0xf]
      %v900 = vld [vmem:[%s880 + $0x4c] sm:$0xf]
      %v901 = vld [vmem:[%s880 + $0x50] sm:$0xf]
      %v902 = vld [vmem:[%s880 + $0x54] sm:$0xf]
      %v903 = vld [vmem:[%s880 + $0x58] sm:$0xf]
      %v904 = vld [vmem:[%s880 + $0x5c] sm:$0xf]
      %913 = vrot.lane.b32.xlu0 %v872, 64
      %v914 = vpop.permute.xlu0 %913
      %915 = vrot.lane.b32.xlu0 %v873, 64
      %v916 = vpop.permute.xlu0 %915
      %917 = vrot.lane.b32.xlu0 %v874, 64
      %v918 = vpop.permute.xlu0 %917
      %919 = vrot.lane.b32.xlu0 %v875, 64
      %v920 = vpop.permute.xlu0 %919
      %921 = vrot.lane.b32.xlu0 %v876, 64
      %v922 = vpop.permute.xlu0 %921
      %923 = vrot.lane.b32.xlu0 %v877, 64
      %v924 = vpop.permute.xlu0 %923
      %925 = vrot.lane.b32.xlu0 %v878, 64
      %v926 = vpop.permute.xlu0 %925
      %927 = vrot.lane.b32.xlu0 %v879, 64
      %v928 = vpop.permute.xlu0 %927
      %v937 = vsel %vm237, 0.0, %v914
      %v938 = vsel %vm237, %v872, %v916
      %v939 = vsel %vm237, %v873, %v918
      %v940 = vsel %vm237, %v874, %v920
      %v941 = vsel %vm237, %v875, %v922
      %v942 = vsel %vm237, %v876, %v924
      %v943 = vsel %vm237, %v877, %v926
      %v944 = vsel %vm237, %v878, %v928
      %v945 = vpack.c.bf16 %v937, %v937
      %v946 = vpack.c.bf16 %v873, %v873
      %v947 = vpack.c.bf16 %v938, %v938
      %v948 = vpack.c.bf16 %v874, %v874
      %v949 = vpack.c.bf16 %v939, %v939
      %v950 = vpack.c.bf16 %v875, %v875
      %v951 = vpack.c.bf16 %v940, %v940
      %v952 = vpack.c.bf16 %v876, %v876
      %v953 = vpack.c.bf16 %v941, %v941
      %v954 = vpack.c.bf16 %v877, %v877
      %v955 = vpack.c.bf16 %v942, %v942
      %v956 = vpack.c.bf16 %v878, %v878
      %v957 = vpack.c.bf16 %v943, %v943
      %v958 = vpack.c.bf16 %v879, %v879
      %v959 = vpack.c.bf16 %v944, %v944
      %v975 = vunpack.c.l.b16 %v945
      %v976 = vunpack.c.l.b16 %v946
      %v977 = vunpack.c.l.b16 %v947
      %v978 = vunpack.c.l.b16 %v948
      %v979 = vunpack.c.l.b16 %v949
      %v980 = vunpack.c.l.b16 %v950
      %v981 = vunpack.c.l.b16 %v951
      %v982 = vunpack.c.l.b16 %v952
      %v983 = vunpack.c.l.b16 %v953
      %v984 = vunpack.c.l.b16 %v954
      %v985 = vunpack.c.l.b16 %v955
      %v986 = vunpack.c.l.b16 %v956
      %v987 = vunpack.c.l.b16 %v957
      %v988 = vunpack.c.l.b16 %v958
      %v989 = vunpack.c.l.b16 %v959
      %v990 = vlaneseq
      %v991 = vshrl.u32 %v990, 7
      %v992 = vsub.s32 5, %v991
      %v993 = vrot.slane %v180, %v992
      %v994 = vpack.c.b16 %v977, %v975
      %v995 = vpack.c.b16 %v978, %v976
      %v996 = vpack.c.b16 %v981, %v979
      %v997 = vpack.c.b16 %v982, %v980
      %v998 = vpack.c.b16 %v985, %v983
      %v999 = vpack.c.b16 %v986, %v984
      %v1000 = vpack.c.b16 %v989, %v987
      %v1001 = vpack.c.b16 %v293, %v988
      %v1030 = vunpack.c.l.b16 %v881
      %v1031 = vunpack.c.l.b16 %v882
      %v1032 = vunpack.c.l.b16 %v883
      %v1033 = vunpack.c.l.b16 %v884
      %v1034 = vunpack.c.l.b16 %v885
      %v1035 = vunpack.c.l.b16 %v886
      %v1036 = vunpack.c.l.b16 %v887
      %v1037 = vunpack.c.l.b16 %v888
      %v1038 = vunpack.c.l.b16 %v889
      %v1039 = vunpack.c.l.b16 %v890
      %v1040 = vunpack.c.l.b16 %v891
      %v1041 = vunpack.c.l.b16 %v892
      %v1042 = vunpack.c.l.b16 %v893
      %v1043 = vunpack.c.l.b16 %v894
      %v1044 = vunpack.c.l.b16 %v895
      %v1045 = vunpack.c.l.b16 %v896
      %v1046 = vunpack.c.l.b16 %v897
      %v1047 = vunpack.c.l.b16 %v898
      %v1048 = vunpack.c.l.b16 %v899
      %v1049 = vunpack.c.l.b16 %v900
      %v1050 = vunpack.c.l.b16 %v901
      %v1051 = vunpack.c.l.b16 %v902
      %v1052 = vunpack.c.l.b16 %v903
      %v1053 = vunpack.c.l.b16 %v904
      %v1054 = vpack.c.b16 %v1031, %v1030
      %v1055 = vpack.c.b16 %v1033, %v1032
      %v1056 = vpack.c.b16 %v1035, %v1034
      %v1057 = vpack.c.b16 %v1037, %v1036
      %v1058 = vpack.c.b16 %v1039, %v1038
      %v1059 = vpack.c.b16 %v1041, %v1040
      %v1060 = vpack.c.b16 %v1043, %v1042
      %v1061 = vpack.c.b16 %v1045, %v1044
      %v1062 = vpack.c.b16 %v1047, %v1046
      %v1063 = vpack.c.b16 %v1049, %v1048
      %v1064 = vpack.c.b16 %v1051, %v1050
      %v1065 = vpack.c.b16 %v1053, %v1052
      %v1079 = vsel %vm237, %v995, 0
      %v1082 = vsel %vm237, %v997, 0
      %v1085 = vsel %vm237, %v999, 0
      %v1088 = vsel %vm237, %v1001, 0
      %1090 = vmatprep.subr.bf16.mxu0 0
      %1091 = vmatpush1.bf16.msra.mxu0 %v1054
      %1092 = vmatprep.subr.bf16.mxu0 0
      %1093 = vmatpush1.bf16.msra.mxu0 %v1055
      %1094 = vmatprep.subr.bf16.mxu0 0
      %1095 = vmatpush1.bf16.msra.mxu0 %v1056
      %1096 = vmatprep.subr.bf16.mxu0 0
      %1097 = vmatpush1.bf16.msra.mxu0 %v1057
      %1098 = vmatprep.subr.bf16.mxu0 0
      %1099 = vmatpush1.bf16.msra.mxu0 %v1058
      %1100 = vmatprep.subr.bf16.mxu0 0
      %1101 = vmatpush1.bf16.msra.mxu0 %v1059
      %1102 = vmatprep.subr.bf16.mxu0 0
      %1103 = vmatpush1.bf16.msra.mxu0 %v1060
      %1104 = vmatprep.subr.bf16.mxu0 0
      %1105 = vmatpush1.bf16.msra.mxu0 %v1061
      %1106 = vmatprep.subr.bf16.mxu0 0
      %1107 = vmatpush1.bf16.msra.mxu0 %v1062
      %1108 = vmatprep.subr.bf16.mxu0 0
      %1109 = vmatpush1.bf16.msra.mxu0 %v1063
      %1110 = vmatprep.subr.bf16.mxu0 0
      %1111 = vmatpush1.bf16.msra.mxu0 %v1064
      %1112 = vmatprep.subr.bf16.mxu0 0
      %1113 = vmatpush1.bf16.msra.mxu0 %v1065
      %1114 = vmatprep.subr.bf16.mxu0 0
      %1115 = vmatpush1.bf16.msra.mxu0 0
      %1116 = vmatprep.subr.bf16.mxu0 0
      %1117 = vmatpush1.bf16.msra.mxu0 0
      %1118 = vmatprep.subr.bf16.mxu0 0
      %1119 = vmatpush1.bf16.msra.mxu0 0
      %1120 = vmatprep.subr.bf16.mxu0 0
      %1121 = vmatpush1.bf16.msra.mxu0 0
      %1122 = vmatprep.mubr.bf16.mxu0 %v1079
      %1123 = vmatmul.mubr.bf16.gmra.mrb[0].mxu0 %v994
      %v1124 = vpop.f32.mrb[0].mxu0
      %v1125 = vadd.f32 %v993, %v1124
      %v1126 = vpop.f32.mrb[0].mxu0
      %v1127 = vpop.f32.mrb[0].mxu0
      %v1128 = vadd.f32 %v993, %v1127
      %v1129 = vpop.f32.mrb[0].mxu0
      %1130 = vmatprep.mubr.bf16.mxu0 %v1082
      %1131 = vmatmul.mubr.bf16.gmra.mrb[0].mxu0 %v996
      %v1132 = vpop.f32.mrb[0].mxu0
      %v1133 = vadd.f32 %v993, %v1132
      %v1134 = vpop.f32.mrb[0].mxu0
      %v1135 = vpop.f32.mrb[0].mxu0
      %v1136 = vadd.f32 %v993, %v1135
      %v1137 = vpop.f32.mrb[0].mxu0
      %1138 = vmatprep.mubr.bf16.mxu0 %v1085
      %1139 = vmatmul.mubr.bf16.gmra.mrb[0].mxu0 %v998
      %v1140 = vpop.f32.mrb[0].mxu0
      %v1141 = vadd.f32 %v993, %v1140
      %v1142 = vpop.f32.mrb[0].mxu0
      %v1143 = vpop.f32.mrb[0].mxu0
      %v1144 = vadd.f32 %v993, %v1143
      %v1145 = vpop.f32.mrb[0].mxu0
      %1146 = vmatprep.mubr.bf16.mxu0 %v1088
      %1147 = vmatmul.mubr.bf16.gmra.mrb[0].mxu0 %v1000
      %v1148 = vpop.f32.mrb[0].mxu0
      %v1149 = vadd.f32 %v993, %v1148
      %v1150 = vpop.f32.mrb[0].mxu0
      %v1151 = vpop.f32.mrb[0].mxu0
      %v1152 = vadd.f32 %v993, %v1151
      %v1153 = vpop.f32.mrb[0].mxu0
      %1154 = vdwg.mxu0
      %v1155 = vmax.f32 %v1125, 0.0
      %v1156 = vmax.f32 %v1128, 0.0
      %v1157 = vmax.f32 %v1133, 0.0
      %v1158 = vmax.f32 %v1136, 0.0
      %v1159 = vmax.f32 %v1141, 0.0
      %v1160 = vmax.f32 %v1144, 0.0
      %v1161 = vmax.f32 %v1149, 0.0
      %v1162 = vmax.f32 %v1152, 0.0
      %s1163 = scalar_lea.vmem %s1, 288
      %v1164 = vld [vmem:[%s1163] sm:$0xf]
      %v1165 = vld [vmem:[%s1163 + $0x4] sm:$0xf]
      %v1166 = vld [vmem:[%s1163 + $0x8] sm:$0xf]
      %v1167 = vld [vmem:[%s1163 + $0xc] sm:$0xf]
      %v1168 = vld [vmem:[%s1163 + $0x10] sm:$0xf]
      %v1169 = vld [vmem:[%s1163 + $0x14] sm:$0xf]
      %v1170 = vld [vmem:[%s1163 + $0x18] sm:$0xf]
      %v1171 = vld [vmem:[%s1163 + $0x1c] sm:$0xf]
      %v1172 = vld [vmem:[%s1163 + $0x20] sm:$0xf]
      %v1173 = vld [vmem:[%s1163 + $0x24] sm:$0xf]
      %v1174 = vld [vmem:[%s1163 + $0x28] sm:$0xf]
      %v1175 = vld [vmem:[%s1163 + $0x2c] sm:$0xf]
      %v1176 = vld [vmem:[%s1163 + $0x30] sm:$0xf]
      %v1177 = vld [vmem:[%s1163 + $0x34] sm:$0xf]
      %v1178 = vld [vmem:[%s1163 + $0x38] sm:$0xf]
      %v1179 = vld [vmem:[%s1163 + $0x3c] sm:$0xf]
      %v1180 = vld [vmem:[%s1163 + $0x40] sm:$0xf]
      %v1181 = vld [vmem:[%s1163 + $0x44] sm:$0xf]
      %v1182 = vld [vmem:[%s1163 + $0x48] sm:$0xf]
      %v1183 = vld [vmem:[%s1163 + $0x4c] sm:$0xf]
      %v1184 = vld [vmem:[%s1163 + $0x50] sm:$0xf]
      %v1185 = vld [vmem:[%s1163 + $0x54] sm:$0xf]
      %v1186 = vld [vmem:[%s1163 + $0x58] sm:$0xf]
      %v1187 = vld [vmem:[%s1163 + $0x5c] sm:$0xf]
      %v1196 = vrot.slane %v1155, 7
      %v1197 = vrot.slane %v1156, 7
      %v1198 = vrot.slane %v1157, 7
      %v1199 = vrot.slane %v1158, 7
      %v1200 = vrot.slane %v1159, 7
      %v1201 = vrot.slane %v1160, 7
      %v1202 = vrot.slane %v1161, 7
      %v1203 = vrot.slane %v1162, 7
      %v1212 = vsel %vm516, 0.0, %v1196
      %v1213 = vsel %vm516, 0.0, %v1197
      %v1214 = vsel %vm516, 0.0, %v1198
      %v1215 = vsel %vm516, 0.0, %v1199
      %v1216 = vsel %vm516, 0.0, %v1200
      %v1217 = vsel %vm516, 0.0, %v1201
      %v1218 = vsel %vm516, 0.0, %v1202
      %v1219 = vsel %vm516, 0.0, %v1203
      %v1220 = vsel %vm516, %v1196, 0.0
      %v1221 = vsel %vm516, %v1197, 0.0
      %v1222 = vsel %vm516, %v1198, 0.0
      %v1223 = vsel %vm516, %v1199, 0.0
      %v1224 = vsel %vm516, %v1200, 0.0
      %v1225 = vsel %vm516, %v1201, 0.0
      %v1226 = vsel %vm516, %v1202, 0.0
      %v1227 = vsel %vm516, %v1203, 0.0
      %v1244 = vrot.slane %v1212, 1
      %v1245 = vrot.slane %v1220, 1
      %v1246 = vsel %vm549, %v1244, %v1245
      %v1247 = vrot.slane %v1213, 1
      %v1248 = vrot.slane %v1221, 1
      %v1249 = vsel %vm549, %v1247, %v1248
      %v1250 = vrot.slane %v1214, 1
      %v1251 = vrot.slane %v1222, 1
      %v1252 = vsel %vm549, %v1250, %v1251
      %v1253 = vrot.slane %v1215, 1
      %v1254 = vrot.slane %v1223, 1
      %v1255 = vsel %vm549, %v1253, %v1254
      %v1256 = vrot.slane %v1216, 1
      %v1257 = vrot.slane %v1224, 1
      %v1258 = vsel %vm549, %v1256, %v1257
      %v1259 = vrot.slane %v1217, 1
      %v1260 = vrot.slane %v1225, 1
      %v1261 = vsel %vm549, %v1259, %v1260
      %v1262 = vrot.slane %v1218, 1
      %v1263 = vrot.slane %v1226, 1
      %v1264 = vsel %vm549, %v1262, %v1263
      %v1265 = vrot.slane %v1219, 1
      %v1266 = vrot.slane %v1227, 1
      %v1267 = vsel %vm549, %v1265, %v1266
      %1268 = vrot.lane.b32.xlu0 %v1246, 64
      %v1269 = vpop.permute.xlu0 %1268
      %1270 = vrot.lane.b32.xlu0 %v1249, 64
      %v1271 = vpop.permute.xlu0 %1270
      %1272 = vrot.lane.b32.xlu0 %v1252, 64
      %v1273 = vpop.permute.xlu0 %1272
      %1274 = vrot.lane.b32.xlu0 %v1255, 64
      %v1275 = vpop.permute.xlu0 %1274
      %1276 = vrot.lane.b32.xlu0 %v1258, 64
      %v1277 = vpop.permute.xlu0 %1276
      %1278 = vrot.lane.b32.xlu0 %v1261, 64
      %v1279 = vpop.permute.xlu0 %1278
      %1280 = vrot.lane.b32.xlu0 %v1264, 64
      %v1281 = vpop.permute.xlu0 %1280
      %1282 = vrot.lane.b32.xlu0 %v1267, 64
      %v1283 = vpop.permute.xlu0 %1282
      %v1292 = vrot.slane %v1212, 2
      %v1293 = vrot.slane %v1220, 2
      %v1294 = vsel %vm598, %v1292, %v1293
      %v1295 = vrot.slane %v1213, 2
      %v1296 = vrot.slane %v1221, 2
      %v1297 = vsel %vm598, %v1295, %v1296
      %v1298 = vrot.slane %v1214, 2
      %v1299 = vrot.slane %v1222, 2
      %v1300 = vsel %vm598, %v1298, %v1299
      %v1301 = vrot.slane %v1215, 2
      %v1302 = vrot.slane %v1223, 2
      %v1303 = vsel %vm598, %v1301, %v1302
      %v1304 = vrot.slane %v1216, 2
      %v1305 = vrot.slane %v1224, 2
      %v1306 = vsel %vm598, %v1304, %v1305
      %v1307 = vrot.slane %v1217, 2
      %v1308 = vrot.slane %v1225, 2
      %v1309 = vsel %vm598, %v1307, %v1308
      %v1310 = vrot.slane %v1218, 2
      %v1311 = vrot.slane %v1226, 2
      %v1312 = vsel %vm598, %v1310, %v1311
      %v1313 = vrot.slane %v1219, 2
      %v1314 = vrot.slane %v1227, 2
      %v1315 = vsel %vm598, %v1313, %v1314
      %v1324 = vsel %vm237, %v1212, %v1269
      %v1325 = vsel %vm237, %v1213, %v1271
      %v1326 = vsel %vm237, %v1214, %v1273
      %v1327 = vsel %vm237, %v1215, %v1275
      %v1328 = vsel %vm237, %v1216, %v1277
      %v1329 = vsel %vm237, %v1217, %v1279
      %v1330 = vsel %vm237, %v1218, %v1281
      %v1331 = vsel %vm237, %v1219, %v1283
      %v1332 = vpack.c.bf16 %v1324, %v1324
      %v1333 = vpack.c.bf16 %v1294, %v1294
      %v1334 = vpack.c.bf16 %v1325, %v1325
      %v1335 = vpack.c.bf16 %v1297, %v1297
      %v1336 = vpack.c.bf16 %v1326, %v1326
      %v1337 = vpack.c.bf16 %v1300, %v1300
      %v1338 = vpack.c.bf16 %v1327, %v1327
      %v1339 = vpack.c.bf16 %v1303, %v1303
      %v1340 = vpack.c.bf16 %v1328, %v1328
      %v1341 = vpack.c.bf16 %v1306, %v1306
      %v1342 = vpack.c.bf16 %v1329, %v1329
      %v1343 = vpack.c.bf16 %v1309, %v1309
      %v1344 = vpack.c.bf16 %v1330, %v1330
      %v1345 = vpack.c.bf16 %v1312, %v1312
      %v1346 = vpack.c.bf16 %v1331, %v1331
      %v1347 = vpack.c.bf16 %v1315, %v1315
      %v1364 = vunpack.c.l.b16 %v1332
      %v1365 = vunpack.c.l.b16 %v1333
      %v1366 = vunpack.c.l.b16 %v1334
      %v1367 = vunpack.c.l.b16 %v1335
      %v1368 = vunpack.c.l.b16 %v1336
      %v1369 = vunpack.c.l.b16 %v1337
      %v1370 = vunpack.c.l.b16 %v1338
      %v1371 = vunpack.c.l.b16 %v1339
      %v1372 = vunpack.c.l.b16 %v1340
      %v1373 = vunpack.c.l.b16 %v1341
      %v1374 = vunpack.c.l.b16 %v1342
      %v1375 = vunpack.c.l.b16 %v1343
      %v1376 = vunpack.c.l.b16 %v1344
      %v1377 = vunpack.c.l.b16 %v1345
      %v1378 = vunpack.c.l.b16 %v1346
      %v1379 = vunpack.c.l.b16 %v1347
      %v1380 = vpack.c.b16 %v1366, %v1364
      %v1381 = vpack.c.b16 %v1367, %v1365
      %v1382 = vpack.c.b16 %v1370, %v1368
      %v1383 = vpack.c.b16 %v1371, %v1369
      %v1384 = vpack.c.b16 %v1374, %v1372
      %v1385 = vpack.c.b16 %v1375, %v1373
      %v1386 = vpack.c.b16 %v1378, %v1376
      %v1387 = vpack.c.b16 %v1379, %v1377
      %v1416 = vunpack.c.l.b16 %v1164
      %v1417 = vunpack.c.l.b16 %v1165
      %v1418 = vunpack.c.l.b16 %v1166
      %v1419 = vunpack.c.l.b16 %v1167
      %v1420 = vunpack.c.l.b16 %v1168
      %v1421 = vunpack.c.l.b16 %v1169
      %v1422 = vunpack.c.l.b16 %v1170
      %v1423 = vunpack.c.l.b16 %v1171
      %v1424 = vunpack.c.l.b16 %v1172
      %v1425 = vunpack.c.l.b16 %v1173
      %v1426 = vunpack.c.l.b16 %v1174
      %v1427 = vunpack.c.l.b16 %v1175
      %v1428 = vunpack.c.l.b16 %v1176
      %v1429 = vunpack.c.l.b16 %v1177
      %v1430 = vunpack.c.l.b16 %v1178
      %v1431 = vunpack.c.l.b16 %v1179
      %v1432 = vunpack.c.l.b16 %v1180
      %v1433 = vunpack.c.l.b16 %v1181
      %v1434 = vunpack.c.l.b16 %v1182
      %v1435 = vunpack.c.l.b16 %v1183
      %v1436 = vunpack.c.l.b16 %v1184
      %v1437 = vunpack.c.l.b16 %v1185
      %v1438 = vunpack.c.l.b16 %v1186
      %v1439 = vunpack.c.l.b16 %v1187
      %v1440 = vpack.c.b16 %v1417, %v1416
      %v1441 = vpack.c.b16 %v1419, %v1418
      %v1442 = vpack.c.b16 %v1421, %v1420
      %v1443 = vpack.c.b16 %v1423, %v1422
      %v1444 = vpack.c.b16 %v1425, %v1424
      %v1445 = vpack.c.b16 %v1427, %v1426
      %v1446 = vpack.c.b16 %v1429, %v1428
      %v1447 = vpack.c.b16 %v1431, %v1430
      %v1448 = vpack.c.b16 %v1433, %v1432
      %v1449 = vpack.c.b16 %v1435, %v1434
      %v1450 = vpack.c.b16 %v1437, %v1436
      %v1451 = vpack.c.b16 %v1439, %v1438
      %v1465 = vsel %vm237, %v1381, 0
      %v1468 = vsel %vm237, %v1383, 0
      %v1471 = vsel %vm237, %v1385, 0
      %v1474 = vsel %vm237, %v1387, 0
      %1476 = vmatprep.subr.bf16.mxu0 0
      %1477 = vmatpush1.bf16.msra.mxu0 %v1440
      %1478 = vmatprep.subr.bf16.mxu0 0
      %1479 = vmatpush1.bf16.msra.mxu0 %v1441
      %1480 = vmatprep.subr.bf16.mxu0 0
      %1481 = vmatpush1.bf16.msra.mxu0 %v1442
      %1482 = vmatprep.subr.bf16.mxu0 0
      %1483 = vmatpush1.bf16.msra.mxu0 %v1443
      %1484 = vmatprep.subr.bf16.mxu0 0
      %1485 = vmatpush1.bf16.msra.mxu0 %v1444
      %1486 = vmatprep.subr.bf16.mxu0 0
      %1487 = vmatpush1.bf16.msra.mxu0 %v1445
      %1488 = vmatprep.subr.bf16.mxu0 0
      %1489 = vmatpush1.bf16.msra.mxu0 %v1446
      %1490 = vmatprep.subr.bf16.mxu0 0
      %1491 = vmatpush1.bf16.msra.mxu0 %v1447
      %1492 = vmatprep.subr.bf16.mxu0 0
      %1493 = vmatpush1.bf16.msra.mxu0 %v1448
      %1494 = vmatprep.subr.bf16.mxu0 0
      %1495 = vmatpush1.bf16.msra.mxu0 %v1449
      %1496 = vmatprep.subr.bf16.mxu0 0
      %1497 = vmatpush1.bf16.msra.mxu0 %v1450
      %1498 = vmatprep.subr.bf16.mxu0 0
      %1499 = vmatpush1.bf16.msra.mxu0 %v1451
      %1500 = vmatprep.subr.bf16.mxu0 0
      %1501 = vmatpush1.bf16.msra.mxu0 0
      %1502 = vmatprep.subr.bf16.mxu0 0
      %1503 = vmatpush1.bf16.msra.mxu0 0
      %1504 = vmatprep.subr.bf16.mxu0 0
      %1505 = vmatpush1.bf16.msra.mxu0 0
      %1506 = vmatprep.subr.bf16.mxu0 0
      %1507 = vmatpush1.bf16.msra.mxu0 0
      %1508 = vmatprep.mubr.bf16.mxu0 %v1465
      %1509 = vmatmul.mubr.bf16.gmra.mrb[0].mxu0 %v1380
      %v1510 = vpop.f32.mrb[0].mxu0
      %v1511 = vadd.f32 0.0, %v1510
      %v1512 = vpop.f32.mrb[0].mxu0
      %v1513 = vpop.f32.mrb[0].mxu0
      %v1514 = vadd.f32 0.0, %v1513
      %v1515 = vpop.f32.mrb[0].mxu0
      %1516 = vmatprep.mubr.bf16.mxu0 %v1468
      %1517 = vmatmul.mubr.bf16.gmra.mrb[0].mxu0 %v1382
      %v1518 = vpop.f32.mrb[0].mxu0
      %v1519 = vadd.f32 0.0, %v1518
      %v1520 = vpop.f32.mrb[0].mxu0
      %v1521 = vpop.f32.mrb[0].mxu0
      %v1522 = vadd.f32 0.0, %v1521
      %v1523 = vpop.f32.mrb[0].mxu0
      %1524 = vmatprep.mubr.bf16.mxu0 %v1471
      %1525 = vmatmul.mubr.bf16.gmra.mrb[0].mxu0 %v1384
      %v1526 = vpop.f32.mrb[0].mxu0
      %v1527 = vadd.f32 0.0, %v1526
      %v1528 = vpop.f32.mrb[0].mxu0
      %v1529 = vpop.f32.mrb[0].mxu0
      %v1530 = vadd.f32 0.0, %v1529
      %v1531 = vpop.f32.mrb[0].mxu0
      %1532 = vmatprep.mubr.bf16.mxu0 %v1474
      %1533 = vmatmul.mubr.bf16.gmra.mrb[0].mxu0 %v1386
      %v1534 = vpop.f32.mrb[0].mxu0
      %v1535 = vadd.f32 0.0, %v1534
      %v1536 = vpop.f32.mrb[0].mxu0
      %v1537 = vpop.f32.mrb[0].mxu0
      %v1538 = vadd.f32 0.0, %v1537
      %v1539 = vpop.f32.mrb[0].mxu0
      %1540 = vdwg.mxu0
      %v1541 = vlaneseq
      %v1542 = vshrl.u32 %v1541, 7
      %v1543 = vsub.s32 6, %v1542
      %v1544 = vrot.slane %v180, %v1543
      %v1545 = vmul.f32 %v1511, %v1544
      %v1546 = vmul.f32 %v1514, %v1544
      %v1547 = vmul.f32 %v1519, %v1544
      %v1548 = vmul.f32 %v1522, %v1544
      %v1549 = vmul.f32 %v1527, %v1544
      %v1550 = vmul.f32 %v1530, %v1544
      %v1551 = vmul.f32 %v1535, %v1544
      %v1552 = vmul.f32 %v1538, %v1544
      %v1553 = vlaneseq
      %v1554 = vshrl.u32 %v1553, 7
      %v1555 = vsub.s32 7, %v1554
      %v1556 = vrot.slane %v180, %v1555
      %v1557 = vadd.f32 %v1545, %v1556
      %v1558 = vadd.f32 %v1546, %v1556
      %v1559 = vadd.f32 %v1547, %v1556
      %v1560 = vadd.f32 %v1548, %v1556
      %v1561 = vadd.f32 %v1549, %v1556
      %v1562 = vadd.f32 %v1550, %v1556
      %v1563 = vadd.f32 %v1551, %v1556
      %v1564 = vadd.f32 %v1552, %v1556
      %v1565 = vadd.f32 %v1557, %v172
      %v1566 = vadd.f32 %v1558, %v173
      %v1567 = vadd.f32 %v1559, %v174
      %v1568 = vadd.f32 %v1560, %v175
      %v1569 = vadd.f32 %v1561, %v176
      %v1570 = vadd.f32 %v1562, %v177
      %v1571 = vadd.f32 %v1563, %v178
      %v1572 = vadd.f32 %v1564, %v179
      %v1573 = vmax.f32 %v1565, 0.0
      %v1574 = vmax.f32 %v1566, 0.0
      %v1575 = vmax.f32 %v1567, 0.0
      %v1576 = vmax.f32 %v1568, 0.0
      %v1577 = vmax.f32 %v1569, 0.0
      %v1578 = vmax.f32 %v1570, 0.0
      %v1579 = vmax.f32 %v1571, 0.0
      %v1580 = vmax.f32 %v1572, 0.0
      %1581 = vst.msk [vmem:[%s170] sm:$0xff] %vm237, %v1573
      %1582 = vst.msk [vmem:[%s170 + $0x8] sm:$0xff] %vm237, %v1574
      %1583 = vst.msk [vmem:[%s170 + $0x10] sm:$0xff] %vm237, %v1575
      %1584 = vst.msk [vmem:[%s170 + $0x18] sm:$0xff] %vm237, %v1576
      %1585 = vst.msk [vmem:[%s170 + $0x20] sm:$0xff] %vm237, %v1577
      %1586 = vst.msk [vmem:[%s170 + $0x28] sm:$0xff] %vm237, %v1578
      %1587 = vst.msk [vmem:[%s170 + $0x30] sm:$0xff] %vm237, %v1579
      %1588 = vst.msk [vmem:[%s170 + $0x38] sm:$0xff] %vm237, %v1580
      %p1589 = scmp.lt.s32.totalorder %s14, 1
      %s1590 = scalar_select %p1589, %s14, 1
      %s1591 = smul.addr %s1590, 8
      %s1592 = smul.addr %s1591, 8
      %s1593 = scalar_lea.vmem %s3, %s1592
      // Predicated region
      $region33: #{decoder_forward.8} parent=31 // pred_check
        %p1594 = pneg %p100
      $region34: #{decoder_forward.8} parent=31 // pred_check_branch
        %1596 = sbr.rel (%p1594) target = $region36
      $region35: #{decoder_forward.8} parent=31 // pred_region
        _
      $region36: #{decoder_forward.8} parent=31 // pred_fallthru
        _
    $region32: #{decoder_forward.8} parent=5 // pred_fallthru
      _
    %p1597 = scmp.le.s32.totalorder 2, %s9
    // Predicated region
    $region37: #{decoder_forward.8} parent=5 // pred_check
      %p1598 = pneg %p1597
    $region38: #{decoder_forward.8} parent=5 // pred_check_branch
      %1600 = sbr.rel (%p1598) target = $region40
    $region39: #{decoder_forward.8} parent=5 // pred_region
      %s1601 = ssub.s32 %s9, 2
      // Predicated region
      $region41: #{decoder_forward.8} parent=39 // pred_check
        %p1602 = pneg %p106
      $region42: #{decoder_forward.8} parent=39 // pred_check_branch
        %1604 = sbr.rel (%p1602) target = $region44
      $region43: #{decoder_forward.8} parent=39 // pred_region
        %p1605 = scmp.lt.s32.totalorder %s15, 1
        %s1606 = scalar_select %p1605, %s15, 1
        %s1607 = smul.addr %s1606, 8
        %s1608 = smul.addr %s1607, 8
        %s1609 = scalar_lea.vmem %s3, %s1608
      $region44: #{decoder_forward.8} parent=39 // pred_fallthru
        _
    $region40: #{decoder_forward.8} parent=5 // pred_fallthru
      _
  $region6: #{decoder_forward.8} parent=0 // loop_footer
    %s13 = sadd.s32 1, %s9
  $region7: #{decoder_forward.8} parent=0 // loop_footer_branch
    %8 = sbr.rel target = $region3
  $region8: #{decoder_forward.8} parent=0 // loop_exit
    _

// kernel: tile.38
$region0: #{tile.38}
  #allocation0 [shape = 's32[1]{0}', space=sflag, size = 0x4, scoped, tag = 'scoped memory for tile.38']
  %s0 = inlined_call_operand.vmem [shape: f32[16], index: 0, kind: input, shape index: {}]
  %s1 = inlined_call_operand.vmem [shape: f32[4,16], index: 1, kind: output, shape index: {}]
  // Predicated region
  $region2: #{tile.38} parent=0 // pred_check
    _
  $region3: #{tile.38} parent=0 // pred_check_branch
    %3 = sbr.rel (0) target = $region5
  $region4: #{tile.38} parent=0 // pred_region
    _
  $region5: #{tile.38} parent=0 // pred_fallthru
    _
  %v4 = vld [vmem:[%s0] ss:$0 sm:$0xff]
  %5 = vst [vmem:[%s1] sm:$0xf] %v4

// kernel: tile.43
$region0: #{tile.43}
  %s0 = inlined_call_operand.vmem [shape: f32[4,16], index: 0, kind: input, shape index: {}]
  %s1 = inlined_call_operand.vmem [shape: f32[1,64], index: 1, kind: output, shape index: {}]
  $region1: #{tile.43} parent=0
    #allocation0 [shape = 'u8[4096]{0}', space=vmem, size = 0x1000, scoped, tag = 'scoped mem for output reshape']
    #allocation1 [shape = 'u8[4096]{0}', space=vmem, size = 0x1000, scoped, tag = 'scoped mem for input reshape']
    %s3 = sshllo.u32 0, 4
    %v4 = vld [vmem:[%s0] sm:%s3]
    %5 = vst [vmem:[#allocation1] sm:%s3] %v4
    %v6 = vld [vmem:[#allocation1] sm:$0x1]
    %vm7 = vcmask 130048
    %8 = vst.msk [vmem:[#allocation0] sm:$0x1] %vm7, %v6
    %s9 = scalar_lea.vmem [#allocation1], 3
    %v10 = vld [vmem:[%s9] sm:$0x1]
    %11 = vrot.lane.b32.xlu0 %v10, 48
    %v12 = vpop.permute.xlu0 %11
    %vm13 = vcmask 523648
    %14 = vst.msk [vmem:[#allocation0] sm:$0x1] %vm13, %v12
    %s15 = scalar_lea.vmem [#allocation1], 2
    %v16 = vld [vmem:[%s15] sm:$0x1]
    %17 = vrot.lane.b32.xlu0 %v16, 32
    %v18 = vpop.permute.xlu0 %17
    %vm19 = vcmask 392448
    %20 = vst.msk [vmem:[#allocation0] sm:$0x1] %vm19, %v18
    %s21 = scalar_lea.vmem [#allocation1], 1
    %v22 = vld [vmem:[%s21] sm:$0x1]
    %23 = vrot.lane.b32.xlu0 %v22, 16
    %v24 = vpop.permute.xlu0 %23
    %vm25 = vcmask 261248
    %26 = vst.msk [vmem:[#allocation0] sm:$0x1] %vm25, %v24
    %s28 = sshllo.u32 0, 1
    %v30 = vld [vmem:[#allocation0] sm:%s28]
    %s31 = sshllo.u32 0, 1
    %32 = vst [vmem:[%s1] sm:%s31] %v30

// kernel: decoder_forward.10
$region0: #{decoder_forward.10}
  #allocation0 [shape = 'u32[]', space=smem, size = 0x4, offset = 0x4, fixed_abs, tag = 'smem constant byte address 0x4 - core index']
  #allocation1 [shape = 'u32[144,128]{1,0:T(1,128)}', space=vmem, size = 0x12000, scoped, tag = 'internal scratch']
  %s0 = inlined_call_operand.vmem [shape: f32[2,8,8,64], index: 0, kind: input, shape index: {}]
  %s1 = inlined_call_operand.vmem [shape: bf16[256,64], index: 1, kind: input, shape index: {}]
  %s2 = inlined_call_operand.vmem [shape: f32[1,64], index: 2, kind: input, shape index: {}]
  %s3 = inlined_call_operand.vmem [shape: f32[1,64], index: 3, kind: input, shape index: {}]
  %s4 = inlined_call_operand.vmem [shape: f32[2,8,8,64], index: 4, kind: output, shape index: {}]
  %s5 = sld [smem:[#allocation0]]
  $region49: #{decoder_forward.10} parent=0
    _
  %s7 = ssub.s32 1, %s5
  %s8 = scalar_select 0, %s7, %s5
  loop: start=0, step=1, limit=4
  $region2: #{decoder_forward.10} parent=0 // loop_pre_header
    _
  $region3: #{decoder_forward.10} parent=0 // loop_header
    %s10 = sphi 0, %s14
    %p11 = scmp.ge.s32.totalorder %s10, 4
    %s20 = sphi 0, %s22
    %s23 = sphi 0, %s20
    %s24 = sphi 0, %s23
    %s40 = sphi 0, %s24
    %s44 = sphi 0, %s44
    %s46 = sphi 0, %s44
    %s47 = sphi 0, %s46
    %s61 = sphi 0, %s47
    %s65 = sphi 0, %s65
    %s67 = sphi 0, %s65
    %s68 = sphi 0, %s67
    %s82 = sphi 0, %s68
    %s86 = sphi 0, %s86
    %s88 = sphi 0, %s86
    %s89 = sphi 0, %s88
    %s103 = sphi 0, %s89
    %s109 = sphi 0, %s111
    %s112 = sphi 0, %s109
    %s113 = sphi 0, %s112
    %s129 = sphi 0, %s113
  $region4: #{decoder_forward.10} parent=0 // loop_header_branch
    %13 = sbr.rel (%p11) target = $region8
  $region5: #{decoder_forward.10} parent=0 // loop_body
    %s15 = ssub.s32 %s10, 1
    %s16 = ssub.s32 %s10, 2
    %s17 = sadd.s32 %s10, 1
    %s18 = ssub.s32 %s10, %s17
    %p19 = scmp.eq.s32.totalorder %s18, 0
    %s21 = sadd.s32 %s20, 1
    %s22 = scalar_select %p19, %s20, %s21
    %p25 = pneg %p19
    %p26 = scmp.eq.s32.totalorder %s10, 1
    %p27 = por %p25, %p26
    %p28 = scmp.ne.s32.totalorder %s20, %s23
    %p29 = scmp.eq.s32.totalorder %s10, 0
    %p30 = por %p28, %p29
    %p31 = scmp.ne.s32.totalorder %s20, %s23
    %p32 = scmp.eq.s32.totalorder %s15, 1
    %p33 = por %p31, %p32
    %p34 = scmp.ne.s32.totalorder %s23, %s24
    %p35 = scmp.eq.s32.totalorder %s15, 0
    %p36 = por %p34, %p35
    %p37 = scmp.ne.s32.totalorder %s23, %s24
    %p38 = scmp.eq.s32.totalorder %s16, 1
    %p39 = por %p37, %p38
    %p41 = scmp.ne.s32.totalorder %s24, %s40
    %p42 = scmp.eq.s32.totalorder %s16, 0
    %p43 = por %p41, %p42
    %s45 = sadd.s32 %s44, 1
    %p48 = scmp.eq.s32.totalorder %s10, 1
    %p49 = scmp.ne.s32.totalorder %s44, %s46
    %p50 = scmp.eq.s32.totalorder %s10, 0
    %p51 = por %p49, %p50
    %p52 = scmp.ne.s32.totalorder %s44, %s46
    %p53 = scmp.eq.s32.totalorder %s15, 1
    %p54 = por %p52, %p53
    %p55 = scmp.ne.s32.totalorder %s46, %s47
    %p56 = scmp.eq.s32.totalorder %s15, 0
    %p57 = por %p55, %p56
    %p58 = scmp.ne.s32.totalorder %s46, %s47
    %p59 = scmp.eq.s32.totalorder %s16, 1
    %p60 = por %p58, %p59
    %p62 = scmp.ne.s32.totalorder %s47, %s61
    %p63 = scmp.eq.s32.totalorder %s16, 0
    %p64 = por %p62, %p63
    %s66 = sadd.s32 %s65, 1
    %p69 = scmp.eq.s32.totalorder %s10, 1
    %p70 = scmp.ne.s32.totalorder %s65, %s67
    %p71 = scmp.eq.s32.totalorder %s10, 0
    %p72 = por %p70, %p71
    %p73 = scmp.ne.s32.totalorder %s65, %s67
    %p74 = scmp.eq.s32.totalorder %s15, 1
    %p75 = por %p73, %p74
    %p76 = scmp.ne.s32.totalorder %s67, %s68
    %p77 = scmp.eq.s32.totalorder %s15, 0
    %p78 = por %p76, %p77
    %p79 = scmp.ne.s32.totalorder %s67, %s68
    %p80 = scmp.eq.s32.totalorder %s16, 1
    %p81 = por %p79, %p80
    %p83 = scmp.ne.s32.totalorder %s68, %s82
    %p84 = scmp.eq.s32.totalorder %s16, 0
    %p85 = por %p83, %p84
    %s87 = sadd.s32 %s86, 1
    %p90 = scmp.eq.s32.totalorder %s10, 1
    %p91 = scmp.ne.s32.totalorder %s86, %s88
    %p92 = scmp.eq.s32.totalorder %s10, 0
    %p93 = por %p91, %p92
    %p94 = scmp.ne.s32.totalorder %s86, %s88
    %p95 = scmp.eq.s32.totalorder %s15, 1
    %p96 = por %p94, %p95
    %p97 = scmp.ne.s32.totalorder %s88, %s89
    %p98 = scmp.eq.s32.totalorder %s15, 0
    %p99 = por %p97, %p98
    %p100 = scmp.ne.s32.totalorder %s88, %s89
    %p101 = scmp.eq.s32.totalorder %s16, 1
    %p102 = por %p100, %p101
    %p104 = scmp.ne.s32.totalorder %s89, %s103
    %p105 = scmp.eq.s32.totalorder %s16, 0
    %p106 = por %p104, %p105
    %s107 = ssub.s32 %s10, %s17
    %p108 = scmp.eq.s32.totalorder %s107, 0
    %s110 = sadd.s32 %s109, 1
    %s111 = scalar_select %p108, %s109, %s110
    %p114 = pneg %p108
    %p115 = scmp.eq.s32.totalorder %s10, 1
    %p116 = por %p114, %p115
    %p117 = scmp.ne.s32.totalorder %s109, %s112
    %p118 = scmp.eq.s32.totalorder %s10, 0
    %p119 = por %p117, %p118
    %p120 = scmp.ne.s32.totalorder %s109, %s112
    %p121 = scmp.eq.s32.totalorder %s15, 1
    %p122 = por %p120, %p121
    %p123 = scmp.ne.s32.totalorder %s112, %s113
    %p124 = scmp.eq.s32.totalorder %s15, 0
    %p125 = por %p123, %p124
    %p126 = scmp.ne.s32.totalorder %s112, %s113
    %p127 = scmp.eq.s32.totalorder %s16, 1
    %p128 = por %p126, %p127
    %p130 = scmp.ne.s32.totalorder %s113, %s129
    %p131 = scmp.eq.s32.totalorder %s16, 0
    %p132 = por %p130, %p131
    %p133 = scmp.le.s32.totalorder 1, %s10
    %p134 = scmp.lt.s32.totalorder %s10, 3
    %p135 = pnand %p133, %p134
    %p136 = pneg %p135
    // Predicated region
    $region9: #{decoder_forward.10} parent=5 // pred_check
      _
    $region10: #{decoder_forward.10} parent=5 // pred_check_branch
      %138 = sbr.rel (%p135) target = $region12
    $region11: #{decoder_forward.10} parent=5 // pred_region
      %s139 = ssub.s32 %s10, 1
      // Predicated region
      $region13: #{decoder_forward.10} parent=11 // pred_check
        %p140 = pneg %p57
      $region14: #{decoder_forward.10} parent=11 // pred_check_branch
        %142 = sbr.rel (%p140) target = $region16
      $region15: #{decoder_forward.10} parent=11 // pred_region
        _
      $region16: #{decoder_forward.10} parent=11 // pred_fallthru
        _
      // Predicated region
      $region17: #{decoder_forward.10} parent=11 // pred_check
        %p143 = pneg %p78
      $region18: #{decoder_forward.10} parent=11 // pred_check_branch
        %145 = sbr.rel (%p143) target = $region20
      $region19: #{decoder_forward.10} parent=11 // pred_region
        _
      $region20: #{decoder_forward.10} parent=11 // pred_fallthru
        _
      // Predicated region
      $region21: #{decoder_forward.10} parent=11 // pred_check
        %p146 = pneg %p99
      $region22: #{decoder_forward.10} parent=11 // pred_check_branch
        %148 = sbr.rel (%p146) target = $region24
      $region23: #{decoder_forward.10} parent=11 // pred_region
        _
      $region24: #{decoder_forward.10} parent=11 // pred_fallthru
        _
    $region12: #{decoder_forward.10} parent=5 // pred_fallthru
      _
    %p149 = scmp.lt.s32.totalorder %s10, 2
    // Predicated region
    $region25: #{decoder_forward.10} parent=5 // pred_check
      %p150 = pneg %p149
    $region26: #{decoder_forward.10} parent=5 // pred_check_branch
      %152 = sbr.rel (%p150) target = $region28
    $region27: #{decoder_forward.10} parent=5 // pred_region
      // Predicated region
      $region29: #{decoder_forward.10} parent=27 // pred_check
        %p153 = pneg %p30
      $region30: #{decoder_forward.10} parent=27 // pred_check_branch
        %155 = sbr.rel (%p153) target = $region32
      $region31: #{decoder_forward.10} parent=27 // pred_region
        %p156 = scmp.lt.s32.totalorder %s10, 1
        %s157 = scalar_select %p156, %s10, 1
        %s158 = smul.addr %s157, 8
        %s159 = smul.addr %s158, 8
        %s160 = scalar_lea.vmem %s0, %s159
      $region32: #{decoder_forward.10} parent=27 // pred_fallthru
        _
    $region28: #{decoder_forward.10} parent=5 // pred_fallthru
      _
    %p161 = scmp.le.s32.totalorder 1, %s10
    %p162 = scmp.lt.s32.totalorder %s10, 3
    %p163 = pnand %p161, %p162
    %p164 = pneg %p163
    // Predicated region
    $region33: #{decoder_forward.10} parent=5 // pred_check
      _
    $region34: #{decoder_forward.10} parent=5 // pred_check_branch
      %166 = sbr.rel (%p163) target = $region36
    $region35: #{decoder_forward.10} parent=5 // pred_region
      %s167 = ssub.s32 %s10, 1
      %p168 = scmp.lt.s32.totalorder %s15, 1
      %s169 = scalar_select %p168, %s15, 1
      %s170 = smul.addr %s169, 8
      %s171 = smul.addr %s170, 8
      %s172 = scalar_lea.vmem %s0, %s171
      %p173 = pneg %p36
      %p174 = pneg %p33
      %p175 = pneg %p57
      %p176 = pneg %p54
      %p177 = pneg %p78
      %p178 = pneg %p75
      %p179 = pneg %p99
      %p180 = pneg %p96
      %p181 = pneg %p125
      %p182 = pneg %p122
      %p183 = scmp.lt.s32.totalorder %s15, 1
      %s184 = scalar_select %p183, %s15, 1
      %s185 = smul.addr %s184, 8
      %s186 = smul.addr %s185, 8
      %s187 = scalar_lea.vmem %s4, %s186
      %p188 = scmp.lt.s32.totalorder %s15, 1
      %s189 = scalar_select %p188, %s15, 1
      %s190 = smul.addr %s189, 8
      %s191 = smul.addr %s190, 8
      %s192 = scalar_lea.vmem %s0, %s191
      %p193 = scmp.lt.s32.totalorder %s15, 1
      %s194 = scalar_select %p193, %s15, 1
      %s195 = smul.addr %s194, 8
      %s196 = smul.addr %s195, 8
      %s197 = scalar_lea.vmem %s4, %s196
      %v199 = vld [vmem:[%s192] sm:$0xff]
      %v200 = vld [vmem:[%s192 + $0x8] sm:$0xff]
      %v201 = vld [vmem:[%s192 + $0x10] sm:$0xff]
      %v202 = vld [vmem:[%s192 + $0x18] sm:$0xff]
      %v203 = vld [vmem:[%s192 + $0x20] sm:$0xff]
      %v204 = vld [vmem:[%s192 + $0x28] sm:$0xff]
      %v205 = vld [vmem:[%s192 + $0x30] sm:$0xff]
      %v206 = vld [vmem:[%s192 + $0x38] sm:$0xff]
      %vm207 = vcmp.le.f32.partialorder %v199, 0.0
      %vm208 = vcmp.le.f32.partialorder %v200, 0.0
      %vm209 = vcmp.le.f32.partialorder %v201, 0.0
      %vm210 = vcmp.le.f32.partialorder %v202, 0.0
      %vm211 = vcmp.le.f32.partialorder %v203, 0.0
      %vm212 = vcmp.le.f32.partialorder %v204, 0.0
      %vm213 = vcmp.le.f32.partialorder %v205, 0.0
      %vm214 = vcmp.le.f32.partialorder %v206, 0.0
      %v215 = vsel %vm207, -1.0, 1.0
      %v216 = vsel %vm208, -1.0, 1.0
      %v217 = vsel %vm209, -1.0, 1.0
      %v218 = vsel %vm210, -1.0, 1.0
      %v219 = vsel %vm211, -1.0, 1.0
      %v220 = vsel %vm212, -1.0, 1.0
      %v221 = vsel %vm213, -1.0, 1.0
      %v222 = vsel %vm214, -1.0, 1.0
      %vm232 = vcmask 1046528
      %v233 = vrot.slane %v215, 1
      %v234 = vrot.slane 0.0, 1
      %v235 = vsel %vm232, %v233, %v234
      %v236 = vrot.slane %v216, 1
      %v237 = vsel %vm232, %v236, %v234
      %v238 = vrot.slane %v217, 1
      %v239 = vsel %vm232, %v238, %v234
      %v240 = vrot.slane %v218, 1
      %v241 = vsel %vm232, %v240, %v234
      %v242 = vrot.slane %v219, 1
      %v243 = vsel %vm232, %v242, %v234
      %v244 = vrot.slane %v220, 1
      %v245 = vsel %vm232, %v244, %v234
      %v246 = vrot.slane %v221, 1
      %v247 = vsel %vm232, %v246, %v234
      %v248 = vrot.slane %v222, 1
      %v249 = vsel %vm232, %v248, %v234
      %250 = vrot.lane.b32.xlu0 %v235, 64
      %v251 = vpop.permute.xlu0 %250
      %252 = vrot.lane.b32.xlu0 %v237, 64
      %v253 = vpop.permute.xlu0 %252
      %254 = vrot.lane.b32.xlu0 %v239, 64
      %v255 = vpop.permute.xlu0 %254
      %256 = vrot.lane.b32.xlu0 %v241, 64
      %v257 = vpop.permute.xlu0 %256
      %258 = vrot.lane.b32.xlu0 %v243, 64
      %v259 = vpop.permute.xlu0 %258
      %260 = vrot.lane.b32.xlu0 %v245, 64
      %v261 = vpop.permute.xlu0 %260
      %262 = vrot.lane.b32.xlu0 %v247, 64
      %v263 = vpop.permute.xlu0 %262
      %264 = vrot.lane.b32.xlu0 %v249, 64
      %v265 = vpop.permute.xlu0 %264
      %v274 = vsel %vm232, %v234, %v234
      %275 = vrot.lane.b32.xlu0 %v274, 64
      %v276 = vpop.permute.xlu0 %275
      %vm278 = vcmask 523264
      %v279 = vsel %vm278, %v215, %v251
      %v280 = vsel %vm278, %v216, %v253
      %v281 = vsel %vm278, %v217, %v255
      %v282 = vsel %vm278, %v218, %v257
      %v283 = vsel %vm278, %v219, %v259
      %v284 = vsel %vm278, %v220, %v261
      %v285 = vsel %vm278, %v221, %v263
      %v286 = vsel %vm278, %v222, %v265
      %v287 = vsel %vm278, 0.0, %v276
      %v288 = vpack.c.bf16 %v279, %v279
      %v289 = vpack.c.bf16 %v280, %v280
      %v290 = vpack.c.bf16 %v281, %v281
      %v291 = vpack.c.bf16 %v282, %v282
      %v292 = vpack.c.bf16 %v283, %v283
      %v293 = vpack.c.bf16 %v284, %v284
      %v294 = vpack.c.bf16 %v285, %v285
      %v295 = vpack.c.bf16 %v286, %v286
      %v296 = vpack.c.bf16 %v287, %v287
      %v306 = vunpack.c.l.b16 %v288
      %v307 = vunpack.c.l.b16 %v289
      %v308 = vunpack.c.l.b16 %v290
      %v309 = vunpack.c.l.b16 %v291
      %v310 = vunpack.c.l.b16 %v292
      %v311 = vunpack.c.l.b16 %v293
      %v312 = vunpack.c.l.b16 %v294
      %v313 = vunpack.c.l.b16 %v295
      %v314 = vunpack.c.l.b16 %v296
      %v315 = vld [vmem:[%s1] sm:$0xf]
      %v316 = vld [vmem:[%s1 + $0x4] sm:$0xf]
      %v317 = vld [vmem:[%s1 + $0x8] sm:$0xf]
      %v318 = vld [vmem:[%s1 + $0xc] sm:$0xf]
      %v319 = vld [vmem:[%s1 + $0x10] sm:$0xf]
      %v320 = vld [vmem:[%s1 + $0x14] sm:$0xf]
      %v321 = vld [vmem:[%s1 + $0x18] sm:$0xf]
      %v322 = vld [vmem:[%s1 + $0x1c] sm:$0xf]
      %v323 = vld [vmem:[%s1 + $0x20] sm:$0xf]
      %v324 = vld [vmem:[%s1 + $0x24] sm:$0xf]
      %v325 = vld [vmem:[%s1 + $0x28] sm:$0xf]
      %v326 = vld [vmem:[%s1 + $0x2c] sm:$0xf]
      %v327 = vld [vmem:[%s1 + $0x30] sm:$0xf]
      %v328 = vld [vmem:[%s1 + $0x34] sm:$0xf]
      %v329 = vld [vmem:[%s1 + $0x38] sm:$0xf]
      %v330 = vld [vmem:[%s1 + $0x3c] sm:$0xf]
      %v331 = vld [vmem:[%s1 + $0x40] sm:$0xf]
      %v332 = vld [vmem:[%s1 + $0x44] sm:$0xf]
      %v333 = vld [vmem:[%s1 + $0x48] sm:$0xf]
      %v334 = vld [vmem:[%s1 + $0x4c] sm:$0xf]
      %v335 = vld [vmem:[%s1 + $0x50] sm:$0xf]
      %v336 = vld [vmem:[%s1 + $0x54] sm:$0xf]
      %v337 = vld [vmem:[%s1 + $0x58] sm:$0xf]
      %v338 = vld [vmem:[%s1 + $0x5c] sm:$0xf]
      %v339 = vld [vmem:[%s1 + $0x60] sm:$0xf]
      %v340 = vld [vmem:[%s1 + $0x64] sm:$0xf]
      %v341 = vld [vmem:[%s1 + $0x68] sm:$0xf]
      %v342 = vld [vmem:[%s1 + $0x6c] sm:$0xf]
      %v343 = vld [vmem:[%s1 + $0x70] sm:$0xf]
      %v344 = vld [vmem:[%s1 + $0x74] sm:$0xf]
      %v345 = vld [vmem:[%s1 + $0x78] sm:$0xf]
      %v346 = vld [vmem:[%s1 + $0x7c] sm:$0xf]
      %v347 = vpack.c.b16 %v307, %v306
      %v348 = vpack.c.b16 %v308, %v307
      %v349 = vpack.c.b16 %v309, %v308
      %v350 = vpack.c.b16 %v310, %v309
      %v351 = vpack.c.b16 %v311, %v310
      %v352 = vpack.c.b16 %v312, %v311
      %v353 = vpack.c.b16 %v313, %v312
      %v354 = vpack.c.b16 %v314, %v313
      %v395 = vunpack.c.l.b16 %v315
      %v396 = vunpack.c.l.b16 %v316
      %v397 = vunpack.c.l.b16 %v317
      %v398 = vunpack.c.l.b16 %v318
      %v399 = vunpack.c.l.b16 %v319
      %v400 = vunpack.c.l.b16 %v320
      %v401 = vunpack.c.l.b16 %v321
      %v402 = vunpack.c.l.b16 %v322
      %v403 = vunpack.c.l.b16 %v323
      %v404 = vunpack.c.l.b16 %v324
      %v405 = vunpack.c.l.b16 %v325
      %v406 = vunpack.c.l.b16 %v326
      %v407 = vunpack.c.l.b16 %v327
      %v408 = vunpack.c.l.b16 %v328
      %v409 = vunpack.c.l.b16 %v329
      %v410 = vunpack.c.l.b16 %v330
      %v411 = vunpack.c.l.b16 %v331
      %v412 = vunpack.c.l.b16 %v332
      %v413 = vunpack.c.l.b16 %v333
      %v414 = vunpack.c.l.b16 %v334
      %v415 = vunpack.c.l.b16 %v335
      %v416 = vunpack.c.l.b16 %v336
      %v417 = vunpack.c.l.b16 %v337
      %v418 = vunpack.c.l.b16 %v338
      %v419 = vunpack.c.l.b16 %v339
      %v420 = vunpack.c.l.b16 %v340
      %v421 = vunpack.c.l.b16 %v341
      %v422 = vunpack.c.l.b16 %v342
      %v423 = vunpack.c.l.b16 %v343
      %v424 = vunpack.c.l.b16 %v344
      %v425 = vunpack.c.l.b16 %v345
      %v426 = vunpack.c.l.b16 %v346
      %v427 = vpack.c.b16 %v396, %v395
      %v428 = vpack.c.b16 %v398, %v397
      %v429 = vpack.c.b16 %v400, %v399
      %v430 = vpack.c.b16 %v402, %v401
      %v431 = vpack.c.b16 %v404, %v403
      %v432 = vpack.c.b16 %v406, %v405
      %v433 = vpack.c.b16 %v408, %v407
      %v434 = vpack.c.b16 %v410, %v409
      %v435 = vpack.c.b16 %v412, %v411
      %v436 = vpack.c.b16 %v414, %v413
      %v437 = vpack.c.b16 %v416, %v415
      %v438 = vpack.c.b16 %v418, %v417
      %v439 = vpack.c.b16 %v420, %v419
      %v440 = vpack.c.b16 %v422, %v421
      %v441 = vpack.c.b16 %v424, %v423
      %v442 = vpack.c.b16 %v426, %v425
      %459 = vmatprep.subr.bf16.mxu0 0
      %460 = vmatpush1.bf16.msra.mxu0 %v427
      %461 = vmatprep.subr.bf16.mxu0 0
      %462 = vmatpush1.bf16.msra.mxu0 %v428
      %463 = vmatprep.subr.bf16.mxu0 0
      %464 = vmatpush1.bf16.msra.mxu0 %v429
      %465 = vmatprep.subr.bf16.mxu0 0
      %466 = vmatpush1.bf16.msra.mxu0 %v430
      %467 = vmatprep.subr.bf16.mxu0 0
      %468 = vmatpush1.bf16.msra.mxu0 %v431
      %469 = vmatprep.subr.bf16.mxu0 0
      %470 = vmatpush1.bf16.msra.mxu0 %v432
      %471 = vmatprep.subr.bf16.mxu0 0
      %472 = vmatpush1.bf16.msra.mxu0 %v433
      %473 = vmatprep.subr.bf16.mxu0 0
      %474 = vmatpush1.bf16.msra.mxu0 %v434
      %475 = vmatprep.subr.bf16.mxu0 0
      %476 = vmatpush1.bf16.msra.mxu0 %v435
      %477 = vmatprep.subr.bf16.mxu0 0
      %478 = vmatpush1.bf16.msra.mxu0 %v436
      %479 = vmatprep.subr.bf16.mxu0 0
      %480 = vmatpush1.bf16.msra.mxu0 %v437
      %481 = vmatprep.subr.bf16.mxu0 0
      %482 = vmatpush1.bf16.msra.mxu0 %v438
      %483 = vmatprep.subr.bf16.mxu0 0
      %484 = vmatpush1.bf16.msra.mxu0 %v439
      %485 = vmatprep.subr.bf16.mxu0 0
      %486 = vmatpush1.bf16.msra.mxu0 %v440
      %487 = vmatprep.subr.bf16.mxu0 0
      %488 = vmatpush1.bf16.msra.mxu0 %v441
      %489 = vmatprep.subr.bf16.mxu0 0
      %490 = vmatpush1.bf16.msra.mxu0 %v442
      %491 = vmatprep.mubr.bf16.mxu0 %v348
      %492 = vmatmul.mubr.bf16.gmra.mrb[0].mxu0 %v347
      %v493 = vpop.f32.mrb[0].mxu0
      %v494 = vadd.f32 0.0, %v493
      %v495 = vpop.f32.mrb[0].mxu0
      %v496 = vpop.f32.mrb[0].mxu0
      %v497 = vadd.f32 0.0, %v496
      %v498 = vpop.f32.mrb[0].mxu0
      %499 = vmatprep.mubr.bf16.mxu0 %v350
      %500 = vmatmul.mubr.bf16.gmra.mrb[0].mxu0 %v349
      %v501 = vpop.f32.mrb[0].mxu0
      %v502 = vadd.f32 0.0, %v501
      %v503 = vpop.f32.mrb[0].mxu0
      %v504 = vpop.f32.mrb[0].mxu0
      %v505 = vadd.f32 0.0, %v504
      %v506 = vpop.f32.mrb[0].mxu0
      %507 = vmatprep.mubr.bf16.mxu0 %v352
      %508 = vmatmul.mubr.bf16.gmra.mrb[0].mxu0 %v351
      %v509 = vpop.f32.mrb[0].mxu0
      %v510 = vadd.f32 0.0, %v509
      %v511 = vpop.f32.mrb[0].mxu0
      %v512 = vpop.f32.mrb[0].mxu0
      %v513 = vadd.f32 0.0, %v512
      %v514 = vpop.f32.mrb[0].mxu0
      %515 = vmatprep.mubr.bf16.mxu0 %v354
      %516 = vmatmul.mubr.bf16.gmra.mrb[0].mxu0 %v353
      %v517 = vpop.f32.mrb[0].mxu0
      %v518 = vadd.f32 0.0, %v517
      %v519 = vpop.f32.mrb[0].mxu0
      %v520 = vpop.f32.mrb[0].mxu0
      %v521 = vadd.f32 0.0, %v520
      %v522 = vpop.f32.mrb[0].mxu0
      %523 = vdwg.mxu0
      %v524 = vld [vmem:[%s2] sm:$0x1]
      %v526 = vlaneseq
      %v527 = vshrl.u32 %v526, 7
      %v528 = vsub.s32 0, %v527
      %v529 = vrot.slane %v524, %v528
      %v531 = vmul.f32 %v494, %v529
      %v532 = vmul.f32 %v497, %v529
      %v533 = vmul.f32 %v502, %v529
      %v534 = vmul.f32 %v505, %v529
      %v535 = vmul.f32 %v510, %v529
      %v536 = vmul.f32 %v513, %v529
      %v537 = vmul.f32 %v518, %v529
      %v538 = vmul.f32 %v521, %v529
      %v539 = vld [vmem:[%s3] sm:$0x1]
      %v541 = vlaneseq
      %v542 = vshrl.u32 %v541, 7
      %v543 = vsub.s32 0, %v542
      %v544 = vrot.slane %v539, %v543
      %v546 = vadd.f32 %v531, %v544
      %v547 = vadd.f32 %v532, %v544
      %v548 = vadd.f32 %v533, %v544
      %v549 = vadd.f32 %v534, %v544
      %v550 = vadd.f32 %v535, %v544
      %v551 = vadd.f32 %v536, %v544
      %v552 = vadd.f32 %v537, %v544
      %v553 = vadd.f32 %v538, %v544
      %v554 = vmax.f32 %v546, 0.0
      %v555 = vmax.f32 %v547, 0.0
      %v556 = vmax.f32 %v548, 0.0
      %v557 = vmax.f32 %v549, 0.0
      %v558 = vmax.f32 %v550, 0.0
      %v559 = vmax.f32 %v551, 0.0
      %v560 = vmax.f32 %v552, 0.0
      %v561 = vmax.f32 %v553, 0.0
      %562 = vst.msk [vmem:[%s197] sm:$0xff] %vm278, %v554
      %563 = vst.msk [vmem:[%s197 + $0x8] sm:$0xff] %vm278, %v555
      %564 = vst.msk [vmem:[%s197 + $0x10] sm:$0xff] %vm278, %v556
      %565 = vst.msk [vmem:[%s197 + $0x18] sm:$0xff] %vm278, %v557
      %566 = vst.msk [vmem:[%s197 + $0x20] sm:$0xff] %vm278, %v558
      %567 = vst.msk [vmem:[%s197 + $0x28] sm:$0xff] %vm278, %v559
      %568 = vst.msk [vmem:[%s197 + $0x30] sm:$0xff] %vm278, %v560
      %569 = vst.msk [vmem:[%s197 + $0x38] sm:$0xff] %vm278, %v561
      %p570 = scmp.lt.s32.totalorder %s15, 1
      %s571 = scalar_select %p570, %s15, 1
      %s572 = smul.addr %s571, 8
      %s573 = smul.addr %s572, 8
      %s574 = scalar_lea.vmem %s4, %s573
      // Predicated region
      $region37: #{decoder_forward.10} parent=35 // pred_check
        %p575 = pneg %p122
      $region38: #{decoder_forward.10} parent=35 // pred_check_branch
        %577 = sbr.rel (%p575) target = $region40
      $region39: #{decoder_forward.10} parent=35 // pred_region
        _
      $region40: #{decoder_forward.10} parent=35 // pred_fallthru
        _
    $region36: #{decoder_forward.10} parent=5 // pred_fallthru
      _
    %p578 = scmp.le.s32.totalorder 2, %s10
    // Predicated region
    $region41: #{decoder_forward.10} parent=5 // pred_check
      %p579 = pneg %p578
    $region42: #{decoder_forward.10} parent=5 // pred_check_branch
      %581 = sbr.rel (%p579) target = $region44
    $region43: #{decoder_forward.10} parent=5 // pred_region
      %s582 = ssub.s32 %s10, 2
      // Predicated region
      $region45: #{decoder_forward.10} parent=43 // pred_check
        %p583 = pneg %p128
      $region46: #{decoder_forward.10} parent=43 // pred_check_branch
        %585 = sbr.rel (%p583) target = $region48
      $region47: #{decoder_forward.10} parent=43 // pred_region
        %p586 = scmp.lt.s32.totalorder %s16, 1
        %s587 = scalar_select %p586, %s16, 1
        %s588 = smul.addr %s587, 8
        %s589 = smul.addr %s588, 8
        %s590 = scalar_lea.vmem %s4, %s589
      $region48: #{decoder_forward.10} parent=43 // pred_fallthru
        _
    $region44: #{decoder_forward.10} parent=5 // pred_fallthru
      _
  $region6: #{decoder_forward.10} parent=0 // loop_footer
    %s14 = sadd.s32 1, %s10
  $region7: #{decoder_forward.10} parent=0 // loop_footer_branch
    %9 = sbr.rel target = $region3
  $region8: #{decoder_forward.10} parent=0 // loop_exit
    _

// kernel: tile.48
$region0: #{tile.48}
  #allocation0 [shape = 's32[1]{0}', space=sflag, size = 0x4, scoped, tag = 'scoped memory for tile.48']
  %s0 = inlined_call_operand.vmem [shape: f32[8], index: 0, kind: input, shape index: {}]
  %s1 = inlined_call_operand.vmem [shape: f32[4,8], index: 1, kind: output, shape index: {}]
  // Predicated region
  $region2: #{tile.48} parent=0 // pred_check
    _
  $region3: #{tile.48} parent=0 // pred_check_branch
    %3 = sbr.rel (0) target = $region5
  $region4: #{tile.48} parent=0 // pred_region
    _
  $region5: #{tile.48} parent=0 // pred_fallthru
    _
  %v4 = vld [vmem:[%s0] ss:$0 sm:$0xff]
  %5 = vst [vmem:[%s1] sm:$0xf] %v4

// kernel: tile.49
$region0: #{tile.49}
  %s0 = inlined_call_operand.vmem [shape: f32[4,8], index: 0, kind: input, shape index: {}]
  %s1 = inlined_call_operand.vmem [shape: f32[1,32], index: 1, kind: output, shape index: {}]
  $region1: #{tile.49} parent=0
    #allocation0 [shape = 'u8[4096]{0}', space=vmem, size = 0x1000, scoped, tag = 'scoped mem for output reshape']
    #allocation1 [shape = 'u8[4096]{0}', space=vmem, size = 0x1000, scoped, tag = 'scoped mem for input reshape']
    %s3 = sshllo.u32 0, 4
    %v4 = vld [vmem:[%s0] sm:%s3]
    %5 = vst [vmem:[#allocation1] sm:%s3] %v4
    %v6 = vld [vmem:[#allocation1] sm:$0x1]
    %vm7 = vcmask 64512
    %8 = vst.msk [vmem:[#allocation0] sm:$0x1] %vm7, %v6
    %s9 = scalar_lea.vmem [#allocation1], 3
    %v10 = vld [vmem:[%s9] sm:$0x1]
    %11 = vrot.lane.b32.xlu0 %v10, 24
    %v12 = vpop.permute.xlu0 %11
    %vm13 = vcmask 261312
    %14 = vst.msk [vmem:[#allocation0] sm:$0x1] %vm13, %v12
    %s15 = scalar_lea.vmem [#allocation1], 2
    %v16 = vld [vmem:[%s15] sm:$0x1]
    %17 = vrot.lane.b32.xlu0 %v16, 16
    %v18 = vpop.permute.xlu0 %17
    %vm19 = vcmask 195712
    %20 = vst.msk [vmem:[#allocation0] sm:$0x1] %vm19, %v18
    %s21 = scalar_lea.vmem [#allocation1], 1
    %v22 = vld [vmem:[%s21] sm:$0x1]
    %23 = vrot.lane.b32.xlu0 %v22, 8
    %v24 = vpop.permute.xlu0 %23
    %vm25 = vcmask 130112
    %26 = vst.msk [vmem:[#allocation0] sm:$0x1] %vm25, %v24
    %s28 = sshllo.u32 0, 1
    %v30 = vld [vmem:[#allocation0] sm:%s28]
    %s31 = sshllo.u32 0, 1
    %32 = vst [vmem:[%s1] sm:%s31] %v30

// kernel: decoder_forward.13
$region0: #{decoder_forward.13}
  #allocation0 [shape = 'u32[]', space=smem, size = 0x4, offset = 0x4, fixed_abs, tag = 'smem constant byte address 0x4 - core index']
  #allocation1 [shape = 'u32[144,128]{1,0:T(1,128)}', space=vmem, size = 0x12000, scoped, tag = 'internal scratch']
  %s0 = inlined_call_operand.vmem [shape: f32[2,16,16,16], index: 0, kind: input, shape index: {}]
  %s1 = inlined_call_operand.vmem [shape: bf16[16,32], index: 1, kind: input, shape index: {}]
  %s2 = inlined_call_operand.vmem [shape: f32[1,32], index: 2, kind: input, shape index: {}]
  %s3 = inlined_call_operand.vmem [shape: f32[1,32], index: 3, kind: input, shape index: {}]
  %s4 = inlined_call_operand.vmem [shape: f32[2,16,16,32], index: 4, kind: output, shape index: {}]
  %s5 = sld [smem:[#allocation0]]
  $region49: #{decoder_forward.13} parent=0
    _
  %s7 = ssub.s32 1, %s5
  %s8 = scalar_select 0, %s7, %s5
  loop: start=0, step=1, limit=4
  $region2: #{decoder_forward.13} parent=0 // loop_pre_header
    _
  $region3: #{decoder_forward.13} parent=0 // loop_header
    %s10 = sphi 0, %s14
    %p11 = scmp.ge.s32.totalorder %s10, 4
    %s20 = sphi 0, %s22
    %s23 = sphi 0, %s20
    %s24 = sphi 0, %s23
    %s40 = sphi 0, %s24
    %s44 = sphi 0, %s44
    %s46 = sphi 0, %s44
    %s47 = sphi 0, %s46
    %s61 = sphi 0, %s47
    %s65 = sphi 0, %s65
    %s67 = sphi 0, %s65
    %s68 = sphi 0, %s67
    %s82 = sphi 0, %s68
    %s86 = sphi 0, %s86
    %s88 = sphi 0, %s86
    %s89 = sphi 0, %s88
    %s103 = sphi 0, %s89
    %s109 = sphi 0, %s111
    %s112 = sphi 0, %s109
    %s113 = sphi 0, %s112
    %s129 = sphi 0, %s113
  $region4: #{decoder_forward.13} parent=0 // loop_header_branch
    %13 = sbr.rel (%p11) target = $region8
  $region5: #{decoder_forward.13} parent=0 // loop_body
    %s15 = ssub.s32 %s10, 1
    %s16 = ssub.s32 %s10, 2
    %s17 = sadd.s32 %s10, 1
    %s18 = ssub.s32 %s10, %s17
    %p19 = scmp.eq.s32.totalorder %s18, 0
    %s21 = sadd.s32 %s20, 1
    %s22 = scalar_select %p19, %s20, %s21
    %p25 = pneg %p19
    %p26 = scmp.eq.s32.totalorder %s10, 1
    %p27 = por %p25, %p26
    %p28 = scmp.ne.s32.totalorder %s20, %s23
    %p29 = scmp.eq.s32.totalorder %s10, 0
    %p30 = por %p28, %p29
    %p31 = scmp.ne.s32.totalorder %s20, %s23
    %p32 = scmp.eq.s32.totalorder %s15, 1
    %p33 = por %p31, %p32
    %p34 = scmp.ne.s32.totalorder %s23, %s24
    %p35 = scmp.eq.s32.totalorder %s15, 0
    %p36 = por %p34, %p35
    %p37 = scmp.ne.s32.totalorder %s23, %s24
    %p38 = scmp.eq.s32.totalorder %s16, 1
    %p39 = por %p37, %p38
    %p41 = scmp.ne.s32.totalorder %s24, %s40
    %p42 = scmp.eq.s32.totalorder %s16, 0
    %p43 = por %p41, %p42
    %s45 = sadd.s32 %s44, 1
    %p48 = scmp.eq.s32.totalorder %s10, 1
    %p49 = scmp.ne.s32.totalorder %s44, %s46
    %p50 = scmp.eq.s32.totalorder %s10, 0
    %p51 = por %p49, %p50
    %p52 = scmp.ne.s32.totalorder %s44, %s46
    %p53 = scmp.eq.s32.totalorder %s15, 1
    %p54 = por %p52, %p53
    %p55 = scmp.ne.s32.totalorder %s46, %s47
    %p56 = scmp.eq.s32.totalorder %s15, 0
    %p57 = por %p55, %p56
    %p58 = scmp.ne.s32.totalorder %s46, %s47
    %p59 = scmp.eq.s32.totalorder %s16, 1
    %p60 = por %p58, %p59
    %p62 = scmp.ne.s32.totalorder %s47, %s61
    %p63 = scmp.eq.s32.totalorder %s16, 0
    %p64 = por %p62, %p63
    %s66 = sadd.s32 %s65, 1
    %p69 = scmp.eq.s32.totalorder %s10, 1
    %p70 = scmp.ne.s32.totalorder %s65, %s67
    %p71 = scmp.eq.s32.totalorder %s10, 0
    %p72 = por %p70, %p71
    %p73 = scmp.ne.s32.totalorder %s65, %s67
    %p74 = scmp.eq.s32.totalorder %s15, 1
    %p75 = por %p73, %p74
    %p76 = scmp.ne.s32.totalorder %s67, %s68
    %p77 = scmp.eq.s32.totalorder %s15, 0
    %p78 = por %p76, %p77
    %p79 = scmp.ne.s32.totalorder %s67, %s68
    %p80 = scmp.eq.s32.totalorder %s16, 1
    %p81 = por %p79, %p80
    %p83 = scmp.ne.s32.totalorder %s68, %s82
    %p84 = scmp.eq.s32.totalorder %s16, 0
    %p85 = por %p83, %p84
    %s87 = sadd.s32 %s86, 1
    %p90 = scmp.eq.s32.totalorder %s10, 1
    %p91 = scmp.ne.s32.totalorder %s86, %s88
    %p92 = scmp.eq.s32.totalorder %s10, 0
    %p93 = por %p91, %p92
    %p94 = scmp.ne.s32.totalorder %s86, %s88
    %p95 = scmp.eq.s32.totalorder %s15, 1
    %p96 = por %p94, %p95
    %p97 = scmp.ne.s32.totalorder %s88, %s89
    %p98 = scmp.eq.s32.totalorder %s15, 0
    %p99 = por %p97, %p98
    %p100 = scmp.ne.s32.totalorder %s88, %s89
    %p101 = scmp.eq.s32.totalorder %s16, 1
    %p102 = por %p100, %p101
    %p104 = scmp.ne.s32.totalorder %s89, %s103
    %p105 = scmp.eq.s32.totalorder %s16, 0
    %p106 = por %p104, %p105
    %s107 = ssub.s32 %s10, %s17
    %p108 = scmp.eq.s32.totalorder %s107, 0
    %s110 = sadd.s32 %s109, 1
    %s111 = scalar_select %p108, %s109, %s110
    %p114 = pneg %p108
    %p115 = scmp.eq.s32.totalorder %s10, 1
    %p116 = por %p114, %p115
    %p117 = scmp.ne.s32.totalorder %s109, %s112
    %p118 = scmp.eq.s32.totalorder %s10, 0
    %p119 = por %p117, %p118
    %p120 = scmp.ne.s32.totalorder %s109, %s112
    %p121 = scmp.eq.s32.totalorder %s15, 1
    %p122 = por %p120, %p121
    %p123 = scmp.ne.s32.totalorder %s112, %s113
    %p124 = scmp.eq.s32.totalorder %s15, 0
    %p125 = por %p123, %p124
    %p126 = scmp.ne.s32.totalorder %s112, %s113
    %p127 = scmp.eq.s32.totalorder %s16, 1
    %p128 = por %p126, %p127
    %p130 = scmp.ne.s32.totalorder %s113, %s129
    %p131 = scmp.eq.s32.totalorder %s16, 0
    %p132 = por %p130, %p131
    %p133 = scmp.le.s32.totalorder 1, %s10
    %p134 = scmp.lt.s32.totalorder %s10, 3
    %p135 = pnand %p133, %p134
    %p136 = pneg %p135
    // Predicated region
    $region9: #{decoder_forward.13} parent=5 // pred_check
      _
    $region10: #{decoder_forward.13} parent=5 // pred_check_branch
      %138 = sbr.rel (%p135) target = $region12
    $region11: #{decoder_forward.13} parent=5 // pred_region
      %s139 = ssub.s32 %s10, 1
      // Predicated region
      $region13: #{decoder_forward.13} parent=11 // pred_check
        %p140 = pneg %p57
      $region14: #{decoder_forward.13} parent=11 // pred_check_branch
        %142 = sbr.rel (%p140) target = $region16
      $region15: #{decoder_forward.13} parent=11 // pred_region
        _
      $region16: #{decoder_forward.13} parent=11 // pred_fallthru
        _
      // Predicated region
      $region17: #{decoder_forward.13} parent=11 // pred_check
        %p143 = pneg %p78
      $region18: #{decoder_forward.13} parent=11 // pred_check_branch
        %145 = sbr.rel (%p143) target = $region20
      $region19: #{decoder_forward.13} parent=11 // pred_region
        _
      $region20: #{decoder_forward.13} parent=11 // pred_fallthru
        _
      // Predicated region
      $region21: #{decoder_forward.13} parent=11 // pred_check
        %p146 = pneg %p99
      $region22: #{decoder_forward.13} parent=11 // pred_check_branch
        %148 = sbr.rel (%p146) target = $region24
      $region23: #{decoder_forward.13} parent=11 // pred_region
        _
      $region24: #{decoder_forward.13} parent=11 // pred_fallthru
        _
    $region12: #{decoder_forward.13} parent=5 // pred_fallthru
      _
    %p149 = scmp.lt.s32.totalorder %s10, 2
    // Predicated region
    $region25: #{decoder_forward.13} parent=5 // pred_check
      %p150 = pneg %p149
    $region26: #{decoder_forward.13} parent=5 // pred_check_branch
      %152 = sbr.rel (%p150) target = $region28
    $region27: #{decoder_forward.13} parent=5 // pred_region
      // Predicated region
      $region29: #{decoder_forward.13} parent=27 // pred_check
        %p153 = pneg %p30
      $region30: #{decoder_forward.13} parent=27 // pred_check_branch
        %155 = sbr.rel (%p153) target = $region32
      $region31: #{decoder_forward.13} parent=27 // pred_region
        %p156 = scmp.lt.s32.totalorder %s10, 1
        %s157 = scalar_select %p156, %s10, 1
        %s158 = smul.addr %s157, 32
        %s159 = smul.addr %s158, 8
        %s160 = scalar_lea.vmem %s0, %s159
      $region32: #{decoder_forward.13} parent=27 // pred_fallthru
        _
    $region28: #{decoder_forward.13} parent=5 // pred_fallthru
      _
    %p161 = scmp.le.s32.totalorder 1, %s10
    %p162 = scmp.lt.s32.totalorder %s10, 3
    %p163 = pnand %p161, %p162
    %p164 = pneg %p163
    // Predicated region
    $region33: #{decoder_forward.13} parent=5 // pred_check
      _
    $region34: #{decoder_forward.13} parent=5 // pred_check_branch
      %166 = sbr.rel (%p163) target = $region36
    $region35: #{decoder_forward.13} parent=5 // pred_region
      %s167 = ssub.s32 %s10, 1
      %p168 = scmp.lt.s32.totalorder %s15, 1
      %s169 = scalar_select %p168, %s15, 1
      %s170 = smul.addr %s169, 32
      %s171 = smul.addr %s170, 8
      %s172 = scalar_lea.vmem %s0, %s171
      %p173 = pneg %p36
      %p174 = pneg %p33
      %p175 = pneg %p57
      %p176 = pneg %p54
      %p177 = pneg %p78
      %p178 = pneg %p75
      %p179 = pneg %p99
      %p180 = pneg %p96
      %p181 = pneg %p125
      %p182 = pneg %p122
      %p183 = scmp.lt.s32.totalorder %s15, 1
      %s184 = scalar_select %p183, %s15, 1
      %s185 = smul.addr %s184, 32
      %s186 = smul.addr %s185, 8
      %s187 = scalar_lea.vmem %s4, %s186
      %p188 = scmp.lt.s32.totalorder %s15, 1
      %s189 = scalar_select %p188, %s15, 1
      %s190 = smul.addr %s189, 32
      %s191 = smul.addr %s190, 8
      %s192 = scalar_lea.vmem %s0, %s191
      %p193 = scmp.lt.s32.totalorder %s15, 1
      %s194 = scalar_select %p193, %s15, 1
      %s195 = smul.addr %s194, 32
      %s196 = smul.addr %s195, 8
      %s197 = scalar_lea.vmem %s4, %s196
      %v199 = vld [vmem:[%s192] sm:$0xff]
      %v200 = vld [vmem:[%s192 + $0x8] sm:$0xff]
      %v201 = vld [vmem:[%s192 + $0x10] sm:$0xff]
      %v202 = vld [vmem:[%s192 + $0x18] sm:$0xff]
      %v203 = vld [vmem:[%s192 + $0x20] sm:$0xff]
      %v204 = vld [vmem:[%s192 + $0x28] sm:$0xff]
      %v205 = vld [vmem:[%s192 + $0x30] sm:$0xff]
      %v206 = vld [vmem:[%s192 + $0x38] sm:$0xff]
      %v207 = vld [vmem:[%s192 + $0x40] sm:$0xff]
      %v208 = vld [vmem:[%s192 + $0x48] sm:$0xff]
      %v209 = vld [vmem:[%s192 + $0x50] sm:$0xff]
      %v210 = vld [vmem:[%s192 + $0x58] sm:$0xff]
      %v211 = vld [vmem:[%s192 + $0x60] sm:$0xff]
      %v212 = vld [vmem:[%s192 + $0x68] sm:$0xff]
      %v213 = vld [vmem:[%s192 + $0x70] sm:$0xff]
      %v214 = vld [vmem:[%s192 + $0x78] sm:$0xff]
      %v215 = vld [vmem:[%s192 + $0x80] sm:$0xff]
      %v216 = vld [vmem:[%s192 + $0x88] sm:$0xff]
      %v217 = vld [vmem:[%s192 + $0x90] sm:$0xff]
      %v218 = vld [vmem:[%s192 + $0x98] sm:$0xff]
      %v219 = vld [vmem:[%s192 + $0xa0] sm:$0xff]
      %v220 = vld [vmem:[%s192 + $0xa8] sm:$0xff]
      %v221 = vld [vmem:[%s192 + $0xb0] sm:$0xff]
      %v222 = vld [vmem:[%s192 + $0xb8] sm:$0xff]
      %v223 = vld [vmem:[%s192 + $0xc0] sm:$0xff]
      %v224 = vld [vmem:[%s192 + $0xc8] sm:$0xff]
      %v225 = vld [vmem:[%s192 + $0xd0] sm:$0xff]
      %v226 = vld [vmem:[%s192 + $0xd8] sm:$0xff]
      %v227 = vld [vmem:[%s192 + $0xe0] sm:$0xff]
      %v228 = vld [vmem:[%s192 + $0xe8] sm:$0xff]
      %v229 = vld [vmem:[%s192 + $0xf0] sm:$0xff]
      %v230 = vld [vmem:[%s192 + $0xf8] sm:$0xff]
      %vm231 = vcmp.le.f32.partialorder %v199, 0.0
      %vm232 = vcmp.le.f32.partialorder %v200, 0.0
      %vm233 = vcmp.le.f32.partialorder %v201, 0.0
      %vm234 = vcmp.le.f32.partialorder %v202, 0.0
      %vm235 = vcmp.le.f32.partialorder %v203, 0.0
      %vm236 = vcmp.le.f32.partialorder %v204, 0.0
      %vm237 = vcmp.le.f32.partialorder %v205, 0.0
      %vm238 = vcmp.le.f32.partialorder %v206, 0.0
      %vm239 = vcmp.le.f32.partialorder %v207, 0.0
      %vm240 = vcmp.le.f32.partialorder %v208, 0.0
      %vm241 = vcmp.le.f32.partialorder %v209, 0.0
      %vm242 = vcmp.le.f32.partialorder %v210, 0.0
      %vm243 = vcmp.le.f32.partialorder %v211, 0.0
      %vm244 = vcmp.le.f32.partialorder %v212, 0.0
      %vm245 = vcmp.le.f32.partialorder %v213, 0.0
      %vm246 = vcmp.le.f32.partialorder %v214, 0.0
      %vm247 = vcmp.le.f32.partialorder %v215, 0.0
      %vm248 = vcmp.le.f32.partialorder %v216, 0.0
      %vm249 = vcmp.le.f32.partialorder %v217, 0.0
      %vm250 = vcmp.le.f32.partialorder %v218, 0.0
      %vm251 = vcmp.le.f32.partialorder %v219, 0.0
      %vm252 = vcmp.le.f32.partialorder %v220, 0.0
      %vm253 = vcmp.le.f32.partialorder %v221, 0.0
      %vm254 = vcmp.le.f32.partialorder %v222, 0.0
      %vm255 = vcmp.le.f32.partialorder %v223, 0.0
      %vm256 = vcmp.le.f32.partialorder %v224, 0.0
      %vm257 = vcmp.le.f32.partialorder %v225, 0.0
      %vm258 = vcmp.le.f32.partialorder %v226, 0.0
      %vm259 = vcmp.le.f32.partialorder %v227, 0.0
      %vm260 = vcmp.le.f32.partialorder %v228, 0.0
      %vm261 = vcmp.le.f32.partialorder %v229, 0.0
      %vm262 = vcmp.le.f32.partialorder %v230, 0.0
      %v263 = vsel %vm231, -1.0, 1.0
      %v264 = vsel %vm232, -1.0, 1.0
      %v265 = vsel %vm233, -1.0, 1.0
      %v266 = vsel %vm234, -1.0, 1.0
      %v267 = vsel %vm235, -1.0, 1.0
      %v268 = vsel %vm236, -1.0, 1.0
      %v269 = vsel %vm237, -1.0, 1.0
      %v270 = vsel %vm238, -1.0, 1.0
      %v271 = vsel %vm239, -1.0, 1.0
      %v272 = vsel %vm240, -1.0, 1.0
      %v273 = vsel %vm241, -1.0, 1.0
      %v274 = vsel %vm242, -1.0, 1.0
      %v275 = vsel %vm243, -1.0, 1.0
      %v276 = vsel %vm244, -1.0, 1.0
      %v277 = vsel %vm245, -1.0, 1.0
      %v278 = vsel %vm246, -1.0, 1.0
      %v279 = vsel %vm247, -1.0, 1.0
      %v280 = vsel %vm248, -1.0, 1.0
      %v281 = vsel %vm249, -1.0, 1.0
      %v282 = vsel %vm250, -1.0, 1.0
      %v283 = vsel %vm251, -1.0, 1.0
      %v284 = vsel %vm252, -1.0, 1.0
      %v285 = vsel %vm253, -1.0, 1.0
      %v286 = vsel %vm254, -1.0, 1.0
      %v287 = vsel %vm255, -1.0, 1.0
      %v288 = vsel %vm256, -1.0, 1.0
      %v289 = vsel %vm257, -1.0, 1.0
      %v290 = vsel %vm258, -1.0, 1.0
      %v291 = vsel %vm259, -1.0, 1.0
      %v292 = vsel %vm260, -1.0, 1.0
      %v293 = vsel %vm261, -1.0, 1.0
      %v294 = vsel %vm262, -1.0, 1.0
      %v295 = vpack.c.bf16 %v264, %v263
      %v296 = vpack.c.bf16 %v266, %v265
      %v297 = vpack.c.bf16 %v268, %v267
      %v298 = vpack.c.bf16 %v270, %v269
      %v299 = vpack.c.bf16 %v272, %v271
      %v300 = vpack.c.bf16 %v274, %v273
      %v301 = vpack.c.bf16 %v276, %v275
      %v302 = vpack.c.bf16 %v278, %v277
      %v303 = vpack.c.bf16 %v280, %v279
      %v304 = vpack.c.bf16 %v282, %v281
      %v305 = vpack.c.bf16 %v284, %v283
      %v306 = vpack.c.bf16 %v286, %v285
      %v307 = vpack.c.bf16 %v288, %v287
      %v308 = vpack.c.bf16 %v290, %v289
      %v309 = vpack.c.bf16 %v292, %v291
      %v310 = vpack.c.bf16 %v294, %v293
      %v311 = vld [vmem:[%s1] sm:$0xf]
      %v312 = vld [vmem:[%s1 + $0x4] sm:$0xf]
      %v315 = vunpack.c.l.b16 %v311
      %v316 = vunpack.c.l.b16 %v312
      %v317 = vpack.c.b16 %v316, %v315
      %vm319 = vcmask 130048
      %v321 = vsel %vm319, %v295, 0
      %v324 = vsel %vm319, %v296, 0
      %v327 = vsel %vm319, %v297, 0
      %v330 = vsel %vm319, %v298, 0
      %v333 = vsel %vm319, %v299, 0
      %v336 = vsel %vm319, %v300, 0
      %v339 = vsel %vm319, %v301, 0
      %v342 = vsel %vm319, %v302, 0
      %v345 = vsel %vm319, %v303, 0
      %v348 = vsel %vm319, %v304, 0
      %v351 = vsel %vm319, %v305, 0
      %v354 = vsel %vm319, %v306, 0
      %v357 = vsel %vm319, %v307, 0
      %v360 = vsel %vm319, %v308, 0
      %v363 = vsel %vm319, %v309, 0
      %v366 = vsel %vm319, %v310, 0
      %368 = vmatprep.subr.bf16.mxu0 0
      %369 = vmatpush1.bf16.msra.mxu0 %v317
      %370 = vmatprep.subr.bf16.mxu0 0
      %371 = vmatpush1.bf16.msra.mxu0 0
      %372 = vmatprep.subr.bf16.mxu0 0
      %373 = vmatpush1.bf16.msra.mxu0 0
      %374 = vmatprep.subr.bf16.mxu0 0
      %375 = vmatpush1.bf16.msra.mxu0 0
      %376 = vmatprep.subr.bf16.mxu0 0
      %377 = vmatpush1.bf16.msra.mxu0 0
      %378 = vmatprep.subr.bf16.mxu0 0
      %379 = vmatpush1.bf16.msra.mxu0 0
      %380 = vmatprep.subr.bf16.mxu0 0
      %381 = vmatpush1.bf16.msra.mxu0 0
      %382 = vmatprep.subr.bf16.mxu0 0
      %383 = vmatpush1.bf16.msra.mxu0 0
      %384 = vmatprep.subr.bf16.mxu0 0
      %385 = vmatpush1.bf16.msra.mxu0 0
      %386 = vmatprep.subr.bf16.mxu0 0
      %387 = vmatpush1.bf16.msra.mxu0 0
      %388 = vmatprep.subr.bf16.mxu0 0
      %389 = vmatpush1.bf16.msra.mxu0 0
      %390 = vmatprep.subr.bf16.mxu0 0
      %391 = vmatpush1.bf16.msra.mxu0 0
      %392 = vmatprep.subr.bf16.mxu0 0
      %393 = vmatpush1.bf16.msra.mxu0 0
      %394 = vmatprep.subr.bf16.mxu0 0
      %395 = vmatpush1.bf16.msra.mxu0 0
      %396 = vmatprep.subr.bf16.mxu0 0
      %397 = vmatpush1.bf16.msra.mxu0 0
      %398 = vmatprep.subr.bf16.mxu0 0
      %399 = vmatpush1.bf16.msra.mxu0 0
      %400 = vmatprep.mubr.bf16.mxu0 0
      %401 = vmatmul.mubr.bf16.gmra.mrb[0].mxu0 %v321
      %v402 = vpop.f32.mrb[0].mxu0
      %v403 = vadd.f32 0.0, %v402
      %v404 = vpop.f32.mrb[0].mxu0
      %v405 = vpop.f32.mrb[0].mxu0
      %v406 = vadd.f32 0.0, %v405
      %v407 = vpop.f32.mrb[0].mxu0
      %408 = vmatprep.mubr.bf16.mxu0 0
      %409 = vmatmul.mubr.bf16.gmra.mrb[0].mxu0 %v324
      %v410 = vpop.f32.mrb[0].mxu0
      %v411 = vadd.f32 0.0, %v410
      %v412 = vpop.f32.mrb[0].mxu0
      %v413 = vpop.f32.mrb[0].mxu0
      %v414 = vadd.f32 0.0, %v413
      %v415 = vpop.f32.mrb[0].mxu0
      %416 = vmatprep.mubr.bf16.mxu0 0
      %417 = vmatmul.mubr.bf16.gmra.mrb[0].mxu0 %v327
      %v418 = vpop.f32.mrb[0].mxu0
      %v419 = vadd.f32 0.0, %v418
      %v420 = vpop.f32.mrb[0].mxu0
      %v421 = vpop.f32.mrb[0].mxu0
      %v422 = vadd.f32 0.0, %v421
      %v423 = vpop.f32.mrb[0].mxu0
      %424 = vmatprep.mubr.bf16.mxu0 0
      %425 = vmatmul.mubr.bf16.gmra.mrb[0].mxu0 %v330
      %v426 = vpop.f32.mrb[0].mxu0
      %v427 = vadd.f32 0.0, %v426
      %v428 = vpop.f32.mrb[0].mxu0
      %v429 = vpop.f32.mrb[0].mxu0
      %v430 = vadd.f32 0.0, %v429
      %v431 = vpop.f32.mrb[0].mxu0
      %432 = vmatprep.mubr.bf16.mxu0 0
      %433 = vmatmul.mubr.bf16.gmra.mrb[0].mxu0 %v333
      %v434 = vpop.f32.mrb[0].mxu0
      %v435 = vadd.f32 0.0, %v434
      %v436 = vpop.f32.mrb[0].mxu0
      %v437 = vpop.f32.mrb[0].mxu0
      %v438 = vadd.f32 0.0, %v437
      %v439 = vpop.f32.mrb[0].mxu0
      %440 = vmatprep.mubr.bf16.mxu0 0
      %441 = vmatmul.mubr.bf16.gmra.mrb[0].mxu0 %v336
      %v442 = vpop.f32.mrb[0].mxu0
      %v443 = vadd.f32 0.0, %v442
      %v444 = vpop.f32.mrb[0].mxu0
      %v445 = vpop.f32.mrb[0].mxu0
      %v446 = vadd.f32 0.0, %v445
      %v447 = vpop.f32.mrb[0].mxu0
      %448 = vmatprep.mubr.bf16.mxu0 0
      %449 = vmatmul.mubr.bf16.gmra.mrb[0].mxu0 %v339
      %v450 = vpop.f32.mrb[0].mxu0
      %v451 = vadd.f32 0.0, %v450
      %v452 = vpop.f32.mrb[0].mxu0
      %v453 = vpop.f32.mrb[0].mxu0
      %v454 = vadd.f32 0.0, %v453
      %v455 = vpop.f32.mrb[0].mxu0
      %456 = vmatprep.mubr.bf16.mxu0 0
      %457 = vmatmul.mubr.bf16.gmra.mrb[0].mxu0 %v342
      %v458 = vpop.f32.mrb[0].mxu0
      %v459 = vadd.f32 0.0, %v458
      %v460 = vpop.f32.mrb[0].mxu0
      %v461 = vpop.f32.mrb[0].mxu0
      %v462 = vadd.f32 0.0, %v461
      %v463 = vpop.f32.mrb[0].mxu0
      %464 = vmatprep.mubr.bf16.mxu0 0
      %465 = vmatmul.mubr.bf16.gmra.mrb[0].mxu0 %v345
      %v466 = vpop.f32.mrb[0].mxu0
      %v467 = vadd.f32 0.0, %v466
      %v468 = vpop.f32.mrb[0].mxu0
      %v469 = vpop.f32.mrb[0].mxu0
      %v470 = vadd.f32 0.0, %v469
      %v471 = vpop.f32.mrb[0].mxu0
      %472 = vmatprep.mubr.bf16.mxu0 0
      %473 = vmatmul.mubr.bf16.gmra.mrb[0].mxu0 %v348
      %v474 = vpop.f32.mrb[0].mxu0
      %v475 = vadd.f32 0.0, %v474
      %v476 = vpop.f32.mrb[0].mxu0
      %v477 = vpop.f32.mrb[0].mxu0
      %v478 = vadd.f32 0.0, %v477
      %v479 = vpop.f32.mrb[0].mxu0
      %480 = vmatprep.mubr.bf16.mxu0 0
      %481 = vmatmul.mubr.bf16.gmra.mrb[0].mxu0 %v351
      %v482 = vpop.f32.mrb[0].mxu0
      %v483 = vadd.f32 0.0, %v482
      %v484 = vpop.f32.mrb[0].mxu0
      %v485 = vpop.f32.mrb[0].mxu0
      %v486 = vadd.f32 0.0, %v485
      %v487 = vpop.f32.mrb[0].mxu0
      %488 = vmatprep.mubr.bf16.mxu0 0
      %489 = vmatmul.mubr.bf16.gmra.mrb[0].mxu0 %v354
      %v490 = vpop.f32.mrb[0].mxu0
      %v491 = vadd.f32 0.0, %v490
      %v492 = vpop.f32.mrb[0].mxu0
      %v493 = vpop.f32.mrb[0].mxu0
      %v494 = vadd.f32 0.0, %v493
      %v495 = vpop.f32.mrb[0].mxu0
      %496 = vmatprep.mubr.bf16.mxu0 0
      %497 = vmatmul.mubr.bf16.gmra.mrb[0].mxu0 %v357
      %v498 = vpop.f32.mrb[0].mxu0
      %v499 = vadd.f32 0.0, %v498
      %v500 = vpop.f32.mrb[0].mxu0
      %v501 = vpop.f32.mrb[0].mxu0
      %v502 = vadd.f32 0.0, %v501
      %v503 = vpop.f32.mrb[0].mxu0
      %504 = vmatprep.mubr.bf16.mxu0 0
      %505 = vmatmul.mubr.bf16.gmra.mrb[0].mxu0 %v360
      %v506 = vpop.f32.mrb[0].mxu0
      %v507 = vadd.f32 0.0, %v506
      %v508 = vpop.f32.mrb[0].mxu0
      %v509 = vpop.f32.mrb[0].mxu0
      %v510 = vadd.f32 0.0, %v509
      %v511 = vpop.f32.mrb[0].mxu0
      %512 = vmatprep.mubr.bf16.mxu0 0
      %513 = vmatmul.mubr.bf16.gmra.mrb[0].mxu0 %v363
      %v514 = vpop.f32.mrb[0].mxu0
      %v515 = vadd.f32 0.0, %v514
      %v516 = vpop.f32.mrb[0].mxu0
      %v517 = vpop.f32.mrb[0].mxu0
      %v518 = vadd.f32 0.0, %v517
      %v519 = vpop.f32.mrb[0].mxu0
      %520 = vmatprep.mubr.bf16.mxu0 0
      %521 = vmatmul.mubr.bf16.gmra.mrb[0].mxu0 %v366
      %v522 = vpop.f32.mrb[0].mxu0
      %v523 = vadd.f32 0.0, %v522
      %v524 = vpop.f32.mrb[0].mxu0
      %v525 = vpop.f32.mrb[0].mxu0
      %v526 = vadd.f32 0.0, %v525
      %v527 = vpop.f32.mrb[0].mxu0
      %528 = vdwg.mxu0
      %v529 = vld [vmem:[%s2] sm:$0x1]
      %v531 = vlaneseq
      %v532 = vshrl.u32 %v531, 7
      %v533 = vsub.s32 0, %v532
      %v534 = vrot.slane %v529, %v533
      %v536 = vmul.f32 %v403, %v534
      %v537 = vmul.f32 %v406, %v534
      %v538 = vmul.f32 %v411, %v534
      %v539 = vmul.f32 %v414, %v534
      %v540 = vmul.f32 %v419, %v534
      %v541 = vmul.f32 %v422, %v534
      %v542 = vmul.f32 %v427, %v534
      %v543 = vmul.f32 %v430, %v534
      %v544 = vmul.f32 %v435, %v534
      %v545 = vmul.f32 %v438, %v534
      %v546 = vmul.f32 %v443, %v534
      %v547 = vmul.f32 %v446, %v534
      %v548 = vmul.f32 %v451, %v534
      %v549 = vmul.f32 %v454, %v534
      %v550 = vmul.f32 %v459, %v534
      %v551 = vmul.f32 %v462, %v534
      %v552 = vmul.f32 %v467, %v534
      %v553 = vmul.f32 %v470, %v534
      %v554 = vmul.f32 %v475, %v534
      %v555 = vmul.f32 %v478, %v534
      %v556 = vmul.f32 %v483, %v534
      %v557 = vmul.f32 %v486, %v534
      %v558 = vmul.f32 %v491, %v534
      %v559 = vmul.f32 %v494, %v534
      %v560 = vmul.f32 %v499, %v534
      %v561 = vmul.f32 %v502, %v534
      %v562 = vmul.f32 %v507, %v534
      %v563 = vmul.f32 %v510, %v534
      %v564 = vmul.f32 %v515, %v534
      %v565 = vmul.f32 %v518, %v534
      %v566 = vmul.f32 %v523, %v534
      %v567 = vmul.f32 %v526, %v534
      %v568 = vld [vmem:[%s3] sm:$0x1]
      %v570 = vlaneseq
      %v571 = vshrl.u32 %v570, 7
      %v572 = vsub.s32 0, %v571
      %v573 = vrot.slane %v568, %v572
      %v575 = vadd.f32 %v536, %v573
      %v576 = vadd.f32 %v537, %v573
      %v577 = vadd.f32 %v538, %v573
      %v578 = vadd.f32 %v539, %v573
      %v579 = vadd.f32 %v540, %v573
      %v580 = vadd.f32 %v541, %v573
      %v581 = vadd.f32 %v542, %v573
      %v582 = vadd.f32 %v543, %v573
      %v583 = vadd.f32 %v544, %v573
      %v584 = vadd.f32 %v545, %v573
      %v585 = vadd.f32 %v546, %v573
      %v586 = vadd.f32 %v547, %v573
      %v587 = vadd.f32 %v548, %v573
      %v588 = vadd.f32 %v549, %v573
      %v589 = vadd.f32 %v550, %v573
      %v590 = vadd.f32 %v551, %v573
      %v591 = vadd.f32 %v552, %v573
      %v592 = vadd.f32 %v553, %v573
      %v593 = vadd.f32 %v554, %v573
      %v594 = vadd.f32 %v555, %v573
      %v595 = vadd.f32 %v556, %v573
      %v596 = vadd.f32 %v557, %v573
      %v597 = vadd.f32 %v558, %v573
      %v598 = vadd.f32 %v559, %v573
      %v599 = vadd.f32 %v560, %v573
      %v600 = vadd.f32 %v561, %v573
      %v601 = vadd.f32 %v562, %v573
      %v602 = vadd.f32 %v563, %v573
      %v603 = vadd.f32 %v564, %v573
      %v604 = vadd.f32 %v565, %v573
      %v605 = vadd.f32 %v566, %v573
      %v606 = vadd.f32 %v567, %v573
      %vm607 = vcmask 261120
      %608 = vst.msk [vmem:[%s197] sm:$0xff] %vm607, %v575
      %609 = vst.msk [vmem:[%s197 + $0x8] sm:$0xff] %vm607, %v576
      %610 = vst.msk [vmem:[%s197 + $0x10] sm:$0xff] %vm607, %v577
      %611 = vst.msk [vmem:[%s197 + $0x18] sm:$0xff] %vm607, %v578
      %612 = vst.msk [vmem:[%s197 + $0x20] sm:$0xff] %vm607, %v579
      %613 = vst.msk [vmem:[%s197 + $0x28] sm:$0xff] %vm607, %v580
      %614 = vst.msk [vmem:[%s197 + $0x30] sm:$0xff] %vm607, %v581
      %615 = vst.msk [vmem:[%s197 + $0x38] sm:$0xff] %vm607, %v582
      %616 = vst.msk [vmem:[%s197 + $0x40] sm:$0xff] %vm607, %v583
      %617 = vst.msk [vmem:[%s197 + $0x48] sm:$0xff] %vm607, %v584
      %618 = vst.msk [vmem:[%s197 + $0x50] sm:$0xff] %vm607, %v585
      %619 = vst.msk [vmem:[%s197 + $0x58] sm:$0xff] %vm607, %v586
      %620 = vst.msk [vmem:[%s197 + $0x60] sm:$0xff] %vm607, %v587
      %621 = vst.msk [vmem:[%s197 + $0x68] sm:$0xff] %vm607, %v588
      %622 = vst.msk [vmem:[%s197 + $0x70] sm:$0xff] %vm607, %v589
      %623 = vst.msk [vmem:[%s197 + $0x78] sm:$0xff] %vm607, %v590
      %624 = vst.msk [vmem:[%s197 + $0x80] sm:$0xff] %vm607, %v591
      %625 = vst.msk [vmem:[%s197 + $0x88] sm:$0xff] %vm607, %v592
      %626 = vst.msk [vmem:[%s197 + $0x90] sm:$0xff] %vm607, %v593
      %627 = vst.msk [vmem:[%s197 + $0x98] sm:$0xff] %vm607, %v594
      %628 = vst.msk [vmem:[%s197 + $0xa0] sm:$0xff] %vm607, %v595
      %629 = vst.msk [vmem:[%s197 + $0xa8] sm:$0xff] %vm607, %v596
      %630 = vst.msk [vmem:[%s197 + $0xb0] sm:$0xff] %vm607, %v597
      %631 = vst.msk [vmem:[%s197 + $0xb8] sm:$0xff] %vm607, %v598
      %632 = vst.msk [vmem:[%s197 + $0xc0] sm:$0xff] %vm607, %v599
      %633 = vst.msk [vmem:[%s197 + $0xc8] sm:$0xff] %vm607, %v600
      %634 = vst.msk [vmem:[%s197 + $0xd0] sm:$0xff] %vm607, %v601
      %635 = vst.msk [vmem:[%s197 + $0xd8] sm:$0xff] %vm607, %v602
      %636 = vst.msk [vmem:[%s197 + $0xe0] sm:$0xff] %vm607, %v603
      %637 = vst.msk [vmem:[%s197 + $0xe8] sm:$0xff] %vm607, %v604
      %638 = vst.msk [vmem:[%s197 + $0xf0] sm:$0xff] %vm607, %v605
      %639 = vst.msk [vmem:[%s197 + $0xf8] sm:$0xff] %vm607, %v606
      %p640 = scmp.lt.s32.totalorder %s15, 1
      %s641 = scalar_select %p640, %s15, 1
      %s642 = smul.addr %s641, 32
      %s643 = smul.addr %s642, 8
      %s644 = scalar_lea.vmem %s4, %s643
      // Predicated region
      $region37: #{decoder_forward.13} parent=35 // pred_check
        %p645 = pneg %p122
      $region38: #{decoder_forward.13} parent=35 // pred_check_branch
        %647 = sbr.rel (%p645) target = $region40
      $region39: #{decoder_forward.13} parent=35 // pred_region
        _
      $region40: #{decoder_forward.13} parent=35 // pred_fallthru
        _
    $region36: #{decoder_forward.13} parent=5 // pred_fallthru
      _
    %p648 = scmp.le.s32.totalorder 2, %s10
    // Predicated region
    $region41: #{decoder_forward.13} parent=5 // pred_check
      %p649 = pneg %p648
    $region42: #{decoder_forward.13} parent=5 // pred_check_branch
      %651 = sbr.rel (%p649) target = $region44
    $region43: #{decoder_forward.13} parent=5 // pred_region
      %s652 = ssub.s32 %s10, 2
      // Predicated region
      $region45: #{decoder_forward.13} parent=43 // pred_check
        %p653 = pneg %p128
      $region46: #{decoder_forward.13} parent=43 // pred_check_branch
        %655 = sbr.rel (%p653) target = $region48
      $region47: #{decoder_forward.13} parent=43 // pred_region
        %p656 = scmp.lt.s32.totalorder %s16, 1
        %s657 = scalar_select %p656, %s16, 1
        %s658 = smul.addr %s657, 32
        %s659 = smul.addr %s658, 8
        %s660 = scalar_lea.vmem %s4, %s659
      $region48: #{decoder_forward.13} parent=43 // pred_fallthru
        _
    $region44: #{decoder_forward.13} parent=5 // pred_fallthru
      _
  $region6: #{decoder_forward.13} parent=0 // loop_footer
    %s14 = sadd.s32 1, %s10
  $region7: #{decoder_forward.13} parent=0 // loop_footer_branch
    %9 = sbr.rel target = $region3
  $region8: #{decoder_forward.13} parent=0 // loop_exit
    _

// kernel: decoder_forward.11
$region0: #{decoder_forward.11}
  #allocation0 [shape = 'u32[]', space=smem, size = 0x4, offset = 0x4, fixed_abs, tag = 'smem constant byte address 0x4 - core index']
  #allocation1 [shape = 'u32[144,128]{1,0:T(1,128)}', space=vmem, size = 0x12000, scoped, tag = 'internal scratch']
  %s0 = inlined_call_operand.vmem [shape: f32[2,16,16,16], index: 0, kind: input, shape index: {}]
  %s1 = inlined_call_operand.vmem [shape: bf16[4,48,16], index: 1, kind: input, shape index: {}]
  %s2 = inlined_call_operand.vmem [shape: f32[8,16], index: 2, kind: input, shape index: {}]
  %s3 = inlined_call_operand.vmem [shape: f32[2,16,16,16], index: 3, kind: output, shape index: {}]
  %s4 = sld [smem:[#allocation0]]
  $region45: #{decoder_forward.11} parent=0
    _
  %s6 = ssub.s32 1, %s4
  %s7 = scalar_select 0, %s6, %s4
  loop: start=0, step=1, limit=4
  $region2: #{decoder_forward.11} parent=0 // loop_pre_header
    _
  $region3: #{decoder_forward.11} parent=0 // loop_header
    %s9 = sphi 0, %s13
    %p10 = scmp.ge.s32.totalorder %s9, 4
    %s19 = sphi 0, %s21
    %s22 = sphi 0, %s19
    %s23 = sphi 0, %s22
    %s39 = sphi 0, %s23
    %s43 = sphi 0, %s43
    %s45 = sphi 0, %s43
    %s46 = sphi 0, %s45
    %s60 = sphi 0, %s46
    %s64 = sphi 0, %s64
    %s66 = sphi 0, %s64
    %s67 = sphi 0, %s66
    %s81 = sphi 0, %s67
    %s87 = sphi 0, %s89
    %s90 = sphi 0, %s87
    %s91 = sphi 0, %s90
    %s107 = sphi 0, %s91
  $region4: #{decoder_forward.11} parent=0 // loop_header_branch
    %12 = sbr.rel (%p10) target = $region8
  $region5: #{decoder_forward.11} parent=0 // loop_body
    %s14 = ssub.s32 %s9, 1
    %s15 = ssub.s32 %s9, 2
    %s16 = sadd.s32 %s9, 1
    %s17 = ssub.s32 %s9, %s16
    %p18 = scmp.eq.s32.totalorder %s17, 0
    %s20 = sadd.s32 %s19, 1
    %s21 = scalar_select %p18, %s19, %s20
    %p24 = pneg %p18
    %p25 = scmp.eq.s32.totalorder %s9, 1
    %p26 = por %p24, %p25
    %p27 = scmp.ne.s32.totalorder %s19, %s22
    %p28 = scmp.eq.s32.totalorder %s9, 0
    %p29 = por %p27, %p28
    %p30 = scmp.ne.s32.totalorder %s19, %s22
    %p31 = scmp.eq.s32.totalorder %s14, 1
    %p32 = por %p30, %p31
    %p33 = scmp.ne.s32.totalorder %s22, %s23
    %p34 = scmp.eq.s32.totalorder %s14, 0
    %p35 = por %p33, %p34
    %p36 = scmp.ne.s32.totalorder %s22, %s23
    %p37 = scmp.eq.s32.totalorder %s15, 1
    %p38 = por %p36, %p37
    %p40 = scmp.ne.s32.totalorder %s23, %s39
    %p41 = scmp.eq.s32.totalorder %s15, 0
    %p42 = por %p40, %p41
    %s44 = sadd.s32 %s43, 1
    %p47 = scmp.eq.s32.totalorder %s9, 1
    %p48 = scmp.ne.s32.totalorder %s43, %s45
    %p49 = scmp.eq.s32.totalorder %s9, 0
    %p50 = por %p48, %p49
    %p51 = scmp.ne.s32.totalorder %s43, %s45
    %p52 = scmp.eq.s32.totalorder %s14, 1
    %p53 = por %p51, %p52
    %p54 = scmp.ne.s32.totalorder %s45, %s46
    %p55 = scmp.eq.s32.totalorder %s14, 0
    %p56 = por %p54, %p55
    %p57 = scmp.ne.s32.totalorder %s45, %s46
    %p58 = scmp.eq.s32.totalorder %s15, 1
    %p59 = por %p57, %p58
    %p61 = scmp.ne.s32.totalorder %s46, %s60
    %p62 = scmp.eq.s32.totalorder %s15, 0
    %p63 = por %p61, %p62
    %s65 = sadd.s32 %s64, 1
    %p68 = scmp.eq.s32.totalorder %s9, 1
    %p69 = scmp.ne.s32.totalorder %s64, %s66
    %p70 = scmp.eq.s32.totalorder %s9, 0
    %p71 = por %p69, %p70
    %p72 = scmp.ne.s32.totalorder %s64, %s66
    %p73 = scmp.eq.s32.totalorder %s14, 1
    %p74 = por %p72, %p73
    %p75 = scmp.ne.s32.totalorder %s66, %s67
    %p76 = scmp.eq.s32.totalorder %s14, 0
    %p77 = por %p75, %p76
    %p78 = scmp.ne.s32.totalorder %s66, %s67
    %p79 = scmp.eq.s32.totalorder %s15, 1
    %p80 = por %p78, %p79
    %p82 = scmp.ne.s32.totalorder %s67, %s81
    %p83 = scmp.eq.s32.totalorder %s15, 0
    %p84 = por %p82, %p83
    %s85 = ssub.s32 %s9, %s16
    %p86 = scmp.eq.s32.totalorder %s85, 0
    %s88 = sadd.s32 %s87, 1
    %s89 = scalar_select %p86, %s87, %s88
    %p92 = pneg %p86
    %p93 = scmp.eq.s32.totalorder %s9, 1
    %p94 = por %p92, %p93
    %p95 = scmp.ne.s32.totalorder %s87, %s90
    %p96 = scmp.eq.s32.totalorder %s9, 0
    %p97 = por %p95, %p96
    %p98 = scmp.ne.s32.totalorder %s87, %s90
    %p99 = scmp.eq.s32.totalorder %s14, 1
    %p100 = por %p98, %p99
    %p101 = scmp.ne.s32.totalorder %s90, %s91
    %p102 = scmp.eq.s32.totalorder %s14, 0
    %p103 = por %p101, %p102
    %p104 = scmp.ne.s32.totalorder %s90, %s91
    %p105 = scmp.eq.s32.totalorder %s15, 1
    %p106 = por %p104, %p105
    %p108 = scmp.ne.s32.totalorder %s91, %s107
    %p109 = scmp.eq.s32.totalorder %s15, 0
    %p110 = por %p108, %p109
    %p111 = scmp.le.s32.totalorder 1, %s9
    %p112 = scmp.lt.s32.totalorder %s9, 3
    %p113 = pnand %p111, %p112
    %p114 = pneg %p113
    // Predicated region
    $region9: #{decoder_forward.11} parent=5 // pred_check
      _
    $region10: #{decoder_forward.11} parent=5 // pred_check_branch
      %116 = sbr.rel (%p113) target = $region12
    $region11: #{decoder_forward.11} parent=5 // pred_region
      %s117 = ssub.s32 %s9, 1
      // Predicated region
      $region13: #{decoder_forward.11} parent=11 // pred_check
        %p118 = pneg %p56
      $region14: #{decoder_forward.11} parent=11 // pred_check_branch
        %120 = sbr.rel (%p118) target = $region16
      $region15: #{decoder_forward.11} parent=11 // pred_region
        _
      $region16: #{decoder_forward.11} parent=11 // pred_fallthru
        _
      // Predicated region
      $region17: #{decoder_forward.11} parent=11 // pred_check
        %p121 = pneg %p77
      $region18: #{decoder_forward.11} parent=11 // pred_check_branch
        %123 = sbr.rel (%p121) target = $region20
      $region19: #{decoder_forward.11} parent=11 // pred_region
        _
      $region20: #{decoder_forward.11} parent=11 // pred_fallthru
        _
    $region12: #{decoder_forward.11} parent=5 // pred_fallthru
      _
    %p124 = scmp.lt.s32.totalorder %s9, 2
    // Predicated region
    $region21: #{decoder_forward.11} parent=5 // pred_check
      %p125 = pneg %p124
    $region22: #{decoder_forward.11} parent=5 // pred_check_branch
      %127 = sbr.rel (%p125) target = $region24
    $region23: #{decoder_forward.11} parent=5 // pred_region
      // Predicated region
      $region25: #{decoder_forward.11} parent=23 // pred_check
        %p128 = pneg %p29
      $region26: #{decoder_forward.11} parent=23 // pred_check_branch
        %130 = sbr.rel (%p128) target = $region28
      $region27: #{decoder_forward.11} parent=23 // pred_region
        %p131 = scmp.lt.s32.totalorder %s9, 1
        %s132 = scalar_select %p131, %s9, 1
        %s133 = smul.addr %s132, 32
        %s134 = smul.addr %s133, 8
        %s135 = scalar_lea.vmem %s0, %s134
      $region28: #{decoder_forward.11} parent=23 // pred_fallthru
        _
    $region24: #{decoder_forward.11} parent=5 // pred_fallthru
      _
    %p136 = scmp.le.s32.totalorder 1, %s9
    %p137 = scmp.lt.s32.totalorder %s9, 3
    %p138 = pnand %p136, %p137
    %p139 = pneg %p138
    // Predicated region
    $region29: #{decoder_forward.11} parent=5 // pred_check
      _
    $region30: #{decoder_forward.11} parent=5 // pred_check_branch
      %141 = sbr.rel (%p138) target = $region32
    $region31: #{decoder_forward.11} parent=5 // pred_region
      %s142 = ssub.s32 %s9, 1
      %p143 = scmp.lt.s32.totalorder %s14, 1
      %s144 = scalar_select %p143, %s14, 1
      %s145 = smul.addr %s144, 32
      %s146 = smul.addr %s145, 8
      %s147 = scalar_lea.vmem %s0, %s146
      %p148 = pneg %p35
      %p149 = pneg %p32
      %p150 = pneg %p56
      %p151 = pneg %p53
      %p152 = pneg %p77
      %p153 = pneg %p74
      %p154 = pneg %p103
      %p155 = pneg %p100
      %p156 = scmp.lt.s32.totalorder %s14, 1
      %s157 = scalar_select %p156, %s14, 1
      %s158 = smul.addr %s157, 32
      %s159 = smul.addr %s158, 8
      %s160 = scalar_lea.vmem %s3, %s159
      %p161 = scmp.lt.s32.totalorder %s14, 1
      %s162 = scalar_select %p161, %s14, 1
      %s163 = smul.addr %s162, 32
      %s164 = smul.addr %s163, 8
      %s165 = scalar_lea.vmem %s0, %s164
      %p166 = scmp.lt.s32.totalorder %s14, 1
      %s167 = scalar_select %p166, %s14, 1
      %s168 = smul.addr %s167, 32
      %s169 = smul.addr %s168, 8
      %s170 = scalar_lea.vmem %s3, %s169
      %v172 = vld [vmem:[%s165] sm:$0xff]
      %v173 = vld [vmem:[%s165 + $0x8] sm:$0xff]
      %v174 = vld [vmem:[%s165 + $0x10] sm:$0xff]
      %v175 = vld [vmem:[%s165 + $0x18] sm:$0xff]
      %v176 = vld [vmem:[%s165 + $0x20] sm:$0xff]
      %v177 = vld [vmem:[%s165 + $0x28] sm:$0xff]
      %v178 = vld [vmem:[%s165 + $0x30] sm:$0xff]
      %v179 = vld [vmem:[%s165 + $0x38] sm:$0xff]
      %v180 = vld [vmem:[%s165 + $0x40] sm:$0xff]
      %v181 = vld [vmem:[%s165 + $0x48] sm:$0xff]
      %v182 = vld [vmem:[%s165 + $0x50] sm:$0xff]
      %v183 = vld [vmem:[%s165 + $0x58] sm:$0xff]
      %v184 = vld [vmem:[%s165 + $0x60] sm:$0xff]
      %v185 = vld [vmem:[%s165 + $0x68] sm:$0xff]
      %v186 = vld [vmem:[%s165 + $0x70] sm:$0xff]
      %v187 = vld [vmem:[%s165 + $0x78] sm:$0xff]
      %v188 = vld [vmem:[%s165 + $0x80] sm:$0xff]
      %v189 = vld [vmem:[%s165 + $0x88] sm:$0xff]
      %v190 = vld [vmem:[%s165 + $0x90] sm:$0xff]
      %v191 = vld [vmem:[%s165 + $0x98] sm:$0xff]
      %v192 = vld [vmem:[%s165 + $0xa0] sm:$0xff]
      %v193 = vld [vmem:[%s165 + $0xa8] sm:$0xff]
      %v194 = vld [vmem:[%s165 + $0xb0] sm:$0xff]
      %v195 = vld [vmem:[%s165 + $0xb8] sm:$0xff]
      %v196 = vld [vmem:[%s165 + $0xc0] sm:$0xff]
      %v197 = vld [vmem:[%s165 + $0xc8] sm:$0xff]
      %v198 = vld [vmem:[%s165 + $0xd0] sm:$0xff]
      %v199 = vld [vmem:[%s165 + $0xd8] sm:$0xff]
      %v200 = vld [vmem:[%s165 + $0xe0] sm:$0xff]
      %v201 = vld [vmem:[%s165 + $0xe8] sm:$0xff]
      %v202 = vld [vmem:[%s165 + $0xf0] sm:$0xff]
      %v203 = vld [vmem:[%s165 + $0xf8] sm:$0xff]
      %v204 = vld [vmem:[%s2] sm:$0xff]
      %v205 = vld [vmem:[%s1] sm:$0xf]
      %v206 = vld [vmem:[%s1 + $0x4] sm:$0xf]
      %v207 = vld [vmem:[%s1 + $0x8] sm:$0xf]
      %v208 = vld [vmem:[%s1 + $0xc] sm:$0xf]
      %v209 = vld [vmem:[%s1 + $0x10] sm:$0xf]
      %v210 = vld [vmem:[%s1 + $0x14] sm:$0xf]
      %243 = vrot.lane.b32.xlu0 %v172, 16
      %v244 = vpop.permute.xlu0 %243
      %245 = vrot.lane.b32.xlu0 %v173, 16
      %v246 = vpop.permute.xlu0 %245
      %247 = vrot.lane.b32.xlu0 %v174, 16
      %v248 = vpop.permute.xlu0 %247
      %249 = vrot.lane.b32.xlu0 %v175, 16
      %v250 = vpop.permute.xlu0 %249
      %251 = vrot.lane.b32.xlu0 %v176, 16
      %v252 = vpop.permute.xlu0 %251
      %253 = vrot.lane.b32.xlu0 %v177, 16
      %v254 = vpop.permute.xlu0 %253
      %255 = vrot.lane.b32.xlu0 %v178, 16
      %v256 = vpop.permute.xlu0 %255
      %257 = vrot.lane.b32.xlu0 %v179, 16
      %v258 = vpop.permute.xlu0 %257
      %259 = vrot.lane.b32.xlu0 %v180, 16
      %v260 = vpop.permute.xlu0 %259
      %261 = vrot.lane.b32.xlu0 %v181, 16
      %v262 = vpop.permute.xlu0 %261
      %263 = vrot.lane.b32.xlu0 %v182, 16
      %v264 = vpop.permute.xlu0 %263
      %265 = vrot.lane.b32.xlu0 %v183, 16
      %v266 = vpop.permute.xlu0 %265
      %267 = vrot.lane.b32.xlu0 %v184, 16
      %v268 = vpop.permute.xlu0 %267
      %269 = vrot.lane.b32.xlu0 %v185, 16
      %v270 = vpop.permute.xlu0 %269
      %271 = vrot.lane.b32.xlu0 %v186, 16
      %v272 = vpop.permute.xlu0 %271
      %273 = vrot.lane.b32.xlu0 %v187, 16
      %v274 = vpop.permute.xlu0 %273
      %275 = vrot.lane.b32.xlu0 %v188, 16
      %v276 = vpop.permute.xlu0 %275
      %277 = vrot.lane.b32.xlu0 %v189, 16
      %v278 = vpop.permute.xlu0 %277
      %279 = vrot.lane.b32.xlu0 %v190, 16
      %v280 = vpop.permute.xlu0 %279
      %281 = vrot.lane.b32.xlu0 %v191, 16
      %v282 = vpop.permute.xlu0 %281
      %283 = vrot.lane.b32.xlu0 %v192, 16
      %v284 = vpop.permute.xlu0 %283
      %285 = vrot.lane.b32.xlu0 %v193, 16
      %v286 = vpop.permute.xlu0 %285
      %287 = vrot.lane.b32.xlu0 %v194, 16
      %v288 = vpop.permute.xlu0 %287
      %289 = vrot.lane.b32.xlu0 %v195, 16
      %v290 = vpop.permute.xlu0 %289
      %291 = vrot.lane.b32.xlu0 %v196, 16
      %v292 = vpop.permute.xlu0 %291
      %293 = vrot.lane.b32.xlu0 %v197, 16
      %v294 = vpop.permute.xlu0 %293
      %295 = vrot.lane.b32.xlu0 %v198, 16
      %v296 = vpop.permute.xlu0 %295
      %297 = vrot.lane.b32.xlu0 %v199, 16
      %v298 = vpop.permute.xlu0 %297
      %299 = vrot.lane.b32.xlu0 %v200, 16
      %v300 = vpop.permute.xlu0 %299
      %301 = vrot.lane.b32.xlu0 %v201, 16
      %v302 = vpop.permute.xlu0 %301
      %303 = vrot.lane.b32.xlu0 %v202, 16
      %v304 = vpop.permute.xlu0 %303
      %305 = vrot.lane.b32.xlu0 %v203, 16
      %v306 = vpop.permute.xlu0 %305
      %340 = vrot.lane.b32.xlu0 %v174, 32
      %v341 = vpop.permute.xlu0 %340
      %342 = vrot.lane.b32.xlu0 %v175, 32
      %v343 = vpop.permute.xlu0 %342
      %344 = vrot.lane.b32.xlu0 %v176, 32
      %v345 = vpop.permute.xlu0 %344
      %346 = vrot.lane.b32.xlu0 %v177, 32
      %v347 = vpop.permute.xlu0 %346
      %348 = vrot.lane.b32.xlu0 %v178, 32
      %v349 = vpop.permute.xlu0 %348
      %350 = vrot.lane.b32.xlu0 %v179, 32
      %v351 = vpop.permute.xlu0 %350
      %352 = vrot.lane.b32.xlu0 %v180, 32
      %v353 = vpop.permute.xlu0 %352
      %354 = vrot.lane.b32.xlu0 %v181, 32
      %v355 = vpop.permute.xlu0 %354
      %356 = vrot.lane.b32.xlu0 %v182, 32
      %v357 = vpop.permute.xlu0 %356
      %358 = vrot.lane.b32.xlu0 %v183, 32
      %v359 = vpop.permute.xlu0 %358
      %360 = vrot.lane.b32.xlu0 %v184, 32
      %v361 = vpop.permute.xlu0 %360
      %362 = vrot.lane.b32.xlu0 %v185, 32
      %v363 = vpop.permute.xlu0 %362
      %364 = vrot.lane.b32.xlu0 %v186, 32
      %v365 = vpop.permute.xlu0 %364
      %366 = vrot.lane.b32.xlu0 %v187, 32
      %v367 = vpop.permute.xlu0 %366
      %368 = vrot.lane.b32.xlu0 %v188, 32
      %v369 = vpop.permute.xlu0 %368
      %370 = vrot.lane.b32.xlu0 %v189, 32
      %v371 = vpop.permute.xlu0 %370
      %372 = vrot.lane.b32.xlu0 %v190, 32
      %v373 = vpop.permute.xlu0 %372
      %374 = vrot.lane.b32.xlu0 %v191, 32
      %v375 = vpop.permute.xlu0 %374
      %376 = vrot.lane.b32.xlu0 %v192, 32
      %v377 = vpop.permute.xlu0 %376
      %378 = vrot.lane.b32.xlu0 %v193, 32
      %v379 = vpop.permute.xlu0 %378
      %380 = vrot.lane.b32.xlu0 %v194, 32
      %v381 = vpop.permute.xlu0 %380
      %382 = vrot.lane.b32.xlu0 %v195, 32
      %v383 = vpop.permute.xlu0 %382
      %384 = vrot.lane.b32.xlu0 %v196, 32
      %v385 = vpop.permute.xlu0 %384
      %386 = vrot.lane.b32.xlu0 %v197, 32
      %v387 = vpop.permute.xlu0 %386
      %388 = vrot.lane.b32.xlu0 %v198, 32
      %v389 = vpop.permute.xlu0 %388
      %390 = vrot.lane.b32.xlu0 %v199, 32
      %v391 = vpop.permute.xlu0 %390
      %392 = vrot.lane.b32.xlu0 %v200, 32
      %v393 = vpop.permute.xlu0 %392
      %394 = vrot.lane.b32.xlu0 %v201, 32
      %v395 = vpop.permute.xlu0 %394
      %396 = vrot.lane.b32.xlu0 %v202, 32
      %v397 = vpop.permute.xlu0 %396
      %398 = vrot.lane.b32.xlu0 %v203, 32
      %v399 = vpop.permute.xlu0 %398
      %400 = vrot.lane.b32.xlu0 0.0, 32
      %v401 = vpop.permute.xlu0 %400
      %vm433 = vcmask 130048
      %v434 = vsel %vm433, 0.0, %v244
      %v435 = vsel %vm433, 0.0, %v246
      %v436 = vsel %vm433, %v172, %v248
      %v437 = vsel %vm433, %v173, %v250
      %v438 = vsel %vm433, %v174, %v252
      %v439 = vsel %vm433, %v175, %v254
      %v440 = vsel %vm433, %v176, %v256
      %v441 = vsel %vm433, %v177, %v258
      %v442 = vsel %vm433, %v178, %v260
      %v443 = vsel %vm433, %v179, %v262
      %v444 = vsel %vm433, %v180, %v264
      %v445 = vsel %vm433, %v181, %v266
      %v446 = vsel %vm433, %v182, %v268
      %v447 = vsel %vm433, %v183, %v270
      %v448 = vsel %vm433, %v184, %v272
      %v449 = vsel %vm433, %v185, %v274
      %v450 = vsel %vm433, %v186, %v276
      %v451 = vsel %vm433, %v187, %v278
      %v452 = vsel %vm433, %v188, %v280
      %v453 = vsel %vm433, %v189, %v282
      %v454 = vsel %vm433, %v190, %v284
      %v455 = vsel %vm433, %v191, %v286
      %v456 = vsel %vm433, %v192, %v288
      %v457 = vsel %vm433, %v193, %v290
      %v458 = vsel %vm433, %v194, %v292
      %v459 = vsel %vm433, %v195, %v294
      %v460 = vsel %vm433, %v196, %v296
      %v461 = vsel %vm433, %v197, %v298
      %v462 = vsel %vm433, %v198, %v300
      %v463 = vsel %vm433, %v199, %v302
      %v464 = vsel %vm433, %v200, %v304
      %v465 = vsel %vm433, %v201, %v306
      %vm466 = vcmask 261120
      %v467 = vsel %vm466, %v434, %v341
      %v468 = vsel %vm466, %v435, %v343
      %v469 = vsel %vm466, %v436, %v345
      %v470 = vsel %vm466, %v437, %v347
      %v471 = vsel %vm466, %v438, %v349
      %v472 = vsel %vm466, %v439, %v351
      %v473 = vsel %vm466, %v440, %v353
      %v474 = vsel %vm466, %v441, %v355
      %v475 = vsel %vm466, %v442, %v357
      %v476 = vsel %vm466, %v443, %v359
      %v477 = vsel %vm466, %v444, %v361
      %v478 = vsel %vm466, %v445, %v363
      %v479 = vsel %vm466, %v446, %v365
      %v480 = vsel %vm466, %v447, %v367
      %v481 = vsel %vm466, %v448, %v369
      %v482 = vsel %vm466, %v449, %v371
      %v483 = vsel %vm466, %v450, %v373
      %v484 = vsel %vm466, %v451, %v375
      %v485 = vsel %vm466, %v452, %v377
      %v486 = vsel %vm466, %v453, %v379
      %v487 = vsel %vm466, %v454, %v381
      %v488 = vsel %vm466, %v455, %v383
      %v489 = vsel %vm466, %v456, %v385
      %v490 = vsel %vm466, %v457, %v387
      %v491 = vsel %vm466, %v458, %v389
      %v492 = vsel %vm466, %v459, %v391
      %v493 = vsel %vm466, %v460, %v393
      %v494 = vsel %vm466, %v461, %v395
      %v495 = vsel %vm466, %v462, %v397
      %v496 = vsel %vm466, %v463, %v399
      %v497 = vsel %vm466, %v464, %v401
      %v498 = vsel %vm466, %v465, %v401
      %v499 = vpack.c.bf16 %v468, %v467
      %v500 = vpack.c.bf16 %v470, %v469
      %v501 = vpack.c.bf16 %v472, %v471
      %v502 = vpack.c.bf16 %v474, %v473
      %v503 = vpack.c.bf16 %v476, %v475
      %v504 = vpack.c.bf16 %v478, %v477
      %v505 = vpack.c.bf16 %v480, %v479
      %v506 = vpack.c.bf16 %v482, %v481
      %v507 = vpack.c.bf16 %v484, %v483
      %v508 = vpack.c.bf16 %v486, %v485
      %v509 = vpack.c.bf16 %v488, %v487
      %v510 = vpack.c.bf16 %v490, %v489
      %v511 = vpack.c.bf16 %v492, %v491
      %v512 = vpack.c.bf16 %v494, %v493
      %v513 = vpack.c.bf16 %v496, %v495
      %v514 = vpack.c.bf16 %v498, %v497
      %v515 = vlaneseq
      %v516 = vshrl.u32 %v515, 7
      %v517 = vsub.s32 1, %v516
      %v518 = vrot.slane %v204, %v517
      %v525 = vunpack.c.l.b16 %v205
      %v526 = vunpack.c.l.b16 %v206
      %v527 = vunpack.c.l.b16 %v207
      %v528 = vunpack.c.l.b16 %v208
      %v529 = vunpack.c.l.b16 %v209
      %v530 = vunpack.c.l.b16 %v210
      %v531 = vpack.c.b16 %v526, %v525
      %v532 = vpack.c.b16 %v528, %v527
      %v533 = vpack.c.b16 %v530, %v529
      %vm537 = vcmask 392192
      %v539 = vsel %vm537, %v499, 0
      %v542 = vsel %vm537, %v500, 0
      %v545 = vsel %vm537, %v501, 0
      %v548 = vsel %vm537, %v502, 0
      %v551 = vsel %vm537, %v503, 0
      %v554 = vsel %vm537, %v504, 0
      %v557 = vsel %vm537, %v505, 0
      %v560 = vsel %vm537, %v506, 0
      %v563 = vsel %vm537, %v507, 0
      %v566 = vsel %vm537, %v508, 0
      %v569 = vsel %vm537, %v509, 0
      %v572 = vsel %vm537, %v510, 0
      %v575 = vsel %vm537, %v511, 0
      %v578 = vsel %vm537, %v512, 0
      %v581 = vsel %vm537, %v513, 0
      %v584 = vsel %vm537, %v514, 0
      %586 = vmatprep.subr.bf16.mxu0 0
      %587 = vmatpush1.bf16.msra.mxu0 %v531
      %588 = vmatprep.subr.bf16.mxu0 0
      %589 = vmatpush1.bf16.msra.mxu0 %v532
      %590 = vmatprep.subr.bf16.mxu0 0
      %591 = vmatpush1.bf16.msra.mxu0 %v533
      %592 = vmatprep.subr.bf16.mxu0 0
      %593 = vmatpush1.bf16.msra.mxu0 0
      %594 = vmatprep.subr.bf16.mxu0 0
      %595 = vmatpush1.bf16.msra.mxu0 0
      %596 = vmatprep.subr.bf16.mxu0 0
      %597 = vmatpush1.bf16.msra.mxu0 0
      %598 = vmatprep.subr.bf16.mxu0 0
      %599 = vmatpush1.bf16.msra.mxu0 0
      %600 = vmatprep.subr.bf16.mxu0 0
      %601 = vmatpush1.bf16.msra.mxu0 0
      %602 = vmatprep.subr.bf16.mxu0 0
      %603 = vmatpush1.bf16.msra.mxu0 0
      %604 = vmatprep.subr.bf16.mxu0 0
      %605 = vmatpush1.bf16.msra.mxu0 0
      %606 = vmatprep.subr.bf16.mxu0 0
      %607 = vmatpush1.bf16.msra.mxu0 0
      %608 = vmatprep.subr.bf16.mxu0 0
      %609 = vmatpush1.bf16.msra.mxu0 0
      %610 = vmatprep.subr.bf16.mxu0 0
      %611 = vmatpush1.bf16.msra.mxu0 0
      %612 = vmatprep.subr.bf16.mxu0 0
      %613 = vmatpush1.bf16.msra.mxu0 0
      %614 = vmatprep.subr.bf16.mxu0 0
      %615 = vmatpush1.bf16.msra.mxu0 0
      %616 = vmatprep.subr.bf16.mxu0 0
      %617 = vmatpush1.bf16.msra.mxu0 0
      %618 = vmatprep.mubr.bf16.mxu0 0
      %619 = vmatmul.mubr.bf16.gmra.mrb[0].mxu0 %v539
      %v620 = vpop.f32.mrb[0].mxu0
      %v621 = vadd.f32 %v518, %v620
      %v622 = vpop.f32.mrb[0].mxu0
      %v623 = vpop.f32.mrb[0].mxu0
      %v624 = vadd.f32 %v518, %v623
      %v625 = vpop.f32.mrb[0].mxu0
      %626 = vmatprep.mubr.bf16.mxu0 0
      %627 = vmatmul.mubr.bf16.gmra.mrb[0].mxu0 %v542
      %v628 = vpop.f32.mrb[0].mxu0
      %v629 = vadd.f32 %v518, %v628
      %v630 = vpop.f32.mrb[0].mxu0
      %v631 = vpop.f32.mrb[0].mxu0
      %v632 = vadd.f32 %v518, %v631
      %v633 = vpop.f32.mrb[0].mxu0
      %634 = vmatprep.mubr.bf16.mxu0 0
      %635 = vmatmul.mubr.bf16.gmra.mrb[0].mxu0 %v545
      %v636 = vpop.f32.mrb[0].mxu0
      %v637 = vadd.f32 %v518, %v636
      %v638 = vpop.f32.mrb[0].mxu0
      %v639 = vpop.f32.mrb[0].mxu0
      %v640 = vadd.f32 %v518, %v639
      %v641 = vpop.f32.mrb[0].mxu0
      %642 = vmatprep.mubr.bf16.mxu0 0
      %643 = vmatmul.mubr.bf16.gmra.mrb[0].mxu0 %v548
      %v644 = vpop.f32.mrb[0].mxu0
      %v645 = vadd.f32 %v518, %v644
      %v646 = vpop.f32.mrb[0].mxu0
      %v647 = vpop.f32.mrb[0].mxu0
      %v648 = vadd.f32 %v518, %v647
      %v649 = vpop.f32.mrb[0].mxu0
      %650 = vmatprep.mubr.bf16.mxu0 0
      %651 = vmatmul.mubr.bf16.gmra.mrb[0].mxu0 %v551
      %v652 = vpop.f32.mrb[0].mxu0
      %v653 = vadd.f32 %v518, %v652
      %v654 = vpop.f32.mrb[0].mxu0
      %v655 = vpop.f32.mrb[0].mxu0
      %v656 = vadd.f32 %v518, %v655
      %v657 = vpop.f32.mrb[0].mxu0
      %658 = vmatprep.mubr.bf16.mxu0 0
      %659 = vmatmul.mubr.bf16.gmra.mrb[0].mxu0 %v554
      %v660 = vpop.f32.mrb[0].mxu0
      %v661 = vadd.f32 %v518, %v660
      %v662 = vpop.f32.mrb[0].mxu0
      %v663 = vpop.f32.mrb[0].mxu0
      %v664 = vadd.f32 %v518, %v663
      %v665 = vpop.f32.mrb[0].mxu0
      %666 = vmatprep.mubr.bf16.mxu0 0
      %667 = vmatmul.mubr.bf16.gmra.mrb[0].mxu0 %v557
      %v668 = vpop.f32.mrb[0].mxu0
      %v669 = vadd.f32 %v518, %v668
      %v670 = vpop.f32.mrb[0].mxu0
      %v671 = vpop.f32.mrb[0].mxu0
      %v672 = vadd.f32 %v518, %v671
      %v673 = vpop.f32.mrb[0].mxu0
      %674 = vmatprep.mubr.bf16.mxu0 0
      %675 = vmatmul.mubr.bf16.gmra.mrb[0].mxu0 %v560
      %v676 = vpop.f32.mrb[0].mxu0
      %v677 = vadd.f32 %v518, %v676
      %v678 = vpop.f32.mrb[0].mxu0
      %v679 = vpop.f32.mrb[0].mxu0
      %v680 = vadd.f32 %v518, %v679
      %v681 = vpop.f32.mrb[0].mxu0
      %682 = vmatprep.mubr.bf16.mxu0 0
      %683 = vmatmul.mubr.bf16.gmra.mrb[0].mxu0 %v563
      %v684 = vpop.f32.mrb[0].mxu0
      %v685 = vadd.f32 %v518, %v684
      %v686 = vpop.f32.mrb[0].mxu0
      %v687 = vpop.f32.mrb[0].mxu0
      %v688 = vadd.f32 %v518, %v687
      %v689 = vpop.f32.mrb[0].mxu0
      %690 = vmatprep.mubr.bf16.mxu0 0
      %691 = vmatmul.mubr.bf16.gmra.mrb[0].mxu0 %v566
      %v692 = vpop.f32.mrb[0].mxu0
      %v693 = vadd.f32 %v518, %v692
      %v694 = vpop.f32.mrb[0].mxu0
      %v695 = vpop.f32.mrb[0].mxu0
      %v696 = vadd.f32 %v518, %v695
      %v697 = vpop.f32.mrb[0].mxu0
      %698 = vmatprep.mubr.bf16.mxu0 0
      %699 = vmatmul.mubr.bf16.gmra.mrb[0].mxu0 %v569
      %v700 = vpop.f32.mrb[0].mxu0
      %v701 = vadd.f32 %v518, %v700
      %v702 = vpop.f32.mrb[0].mxu0
      %v703 = vpop.f32.mrb[0].mxu0
      %v704 = vadd.f32 %v518, %v703
      %v705 = vpop.f32.mrb[0].mxu0
      %706 = vmatprep.mubr.bf16.mxu0 0
      %707 = vmatmul.mubr.bf16.gmra.mrb[0].mxu0 %v572
      %v708 = vpop.f32.mrb[0].mxu0
      %v709 = vadd.f32 %v518, %v708
      %v710 = vpop.f32.mrb[0].mxu0
      %v711 = vpop.f32.mrb[0].mxu0
      %v712 = vadd.f32 %v518, %v711
      %v713 = vpop.f32.mrb[0].mxu0
      %714 = vmatprep.mubr.bf16.mxu0 0
      %715 = vmatmul.mubr.bf16.gmra.mrb[0].mxu0 %v575
      %v716 = vpop.f32.mrb[0].mxu0
      %v717 = vadd.f32 %v518, %v716
      %v718 = vpop.f32.mrb[0].mxu0
      %v719 = vpop.f32.mrb[0].mxu0
      %v720 = vadd.f32 %v518, %v719
      %v721 = vpop.f32.mrb[0].mxu0
      %722 = vmatprep.mubr.bf16.mxu0 0
      %723 = vmatmul.mubr.bf16.gmra.mrb[0].mxu0 %v578
      %v724 = vpop.f32.mrb[0].mxu0
      %v725 = vadd.f32 %v518, %v724
      %v726 = vpop.f32.mrb[0].mxu0
      %v727 = vpop.f32.mrb[0].mxu0
      %v728 = vadd.f32 %v518, %v727
      %v729 = vpop.f32.mrb[0].mxu0
      %730 = vmatprep.mubr.bf16.mxu0 0
      %731 = vmatmul.mubr.bf16.gmra.mrb[0].mxu0 %v581
      %v732 = vpop.f32.mrb[0].mxu0
      %v733 = vadd.f32 %v518, %v732
      %v734 = vpop.f32.mrb[0].mxu0
      %v735 = vpop.f32.mrb[0].mxu0
      %v736 = vadd.f32 %v518, %v735
      %v737 = vpop.f32.mrb[0].mxu0
      %738 = vmatprep.mubr.bf16.mxu0 0
      %739 = vmatmul.mubr.bf16.gmra.mrb[0].mxu0 %v584
      %v740 = vpop.f32.mrb[0].mxu0
      %v741 = vadd.f32 %v518, %v740
      %v742 = vpop.f32.mrb[0].mxu0
      %v743 = vpop.f32.mrb[0].mxu0
      %v744 = vadd.f32 %v518, %v743
      %v745 = vpop.f32.mrb[0].mxu0
      %746 = vdwg.mxu0
      %v747 = vmax.f32 %v621, 0.0
      %v748 = vmax.f32 %v624, 0.0
      %v749 = vmax.f32 %v629, 0.0
      %v750 = vmax.f32 %v632, 0.0
      %v751 = vmax.f32 %v637, 0.0
      %v752 = vmax.f32 %v640, 0.0
      %v753 = vmax.f32 %v645, 0.0
      %v754 = vmax.f32 %v648, 0.0
      %v755 = vmax.f32 %v653, 0.0
      %v756 = vmax.f32 %v656, 0.0
      %v757 = vmax.f32 %v661, 0.0
      %v758 = vmax.f32 %v664, 0.0
      %v759 = vmax.f32 %v669, 0.0
      %v760 = vmax.f32 %v672, 0.0
      %v761 = vmax.f32 %v677, 0.0
      %v762 = vmax.f32 %v680, 0.0
      %v763 = vmax.f32 %v685, 0.0
      %v764 = vmax.f32 %v688, 0.0
      %v765 = vmax.f32 %v693, 0.0
      %v766 = vmax.f32 %v696, 0.0
      %v767 = vmax.f32 %v701, 0.0
      %v768 = vmax.f32 %v704, 0.0
      %v769 = vmax.f32 %v709, 0.0
      %v770 = vmax.f32 %v712, 0.0
      %v771 = vmax.f32 %v717, 0.0
      %v772 = vmax.f32 %v720, 0.0
      %v773 = vmax.f32 %v725, 0.0
      %v774 = vmax.f32 %v728, 0.0
      %v775 = vmax.f32 %v733, 0.0
      %v776 = vmax.f32 %v736, 0.0
      %v777 = vmax.f32 %v741, 0.0
      %v778 = vmax.f32 %v744, 0.0
      %s779 = scalar_lea.vmem %s1, 24
      %v780 = vld [vmem:[%s779] sm:$0xf]
      %v781 = vld [vmem:[%s779 + $0x4] sm:$0xf]
      %v782 = vld [vmem:[%s779 + $0x8] sm:$0xf]
      %v783 = vld [vmem:[%s779 + $0xc] sm:$0xf]
      %v784 = vld [vmem:[%s779 + $0x10] sm:$0xf]
      %v785 = vld [vmem:[%s779 + $0x14] sm:$0xf]
      %vm818 = vcmask 1040384
      %v819 = vrot.slane %v747, 7
      %v820 = vrot.slane %v748, 7
      %v821 = vsel %vm818, %v819, %v820
      %v822 = vrot.slane %v749, 7
      %v823 = vrot.slane %v750, 7
      %v824 = vsel %vm818, %v822, %v823
      %v825 = vrot.slane %v751, 7
      %v826 = vrot.slane %v752, 7
      %v827 = vsel %vm818, %v825, %v826
      %v828 = vrot.slane %v753, 7
      %v829 = vrot.slane %v754, 7
      %v830 = vsel %vm818, %v828, %v829
      %v831 = vrot.slane %v755, 7
      %v832 = vrot.slane %v756, 7
      %v833 = vsel %vm818, %v831, %v832
      %v834 = vrot.slane %v757, 7
      %v835 = vrot.slane %v758, 7
      %v836 = vsel %vm818, %v834, %v835
      %v837 = vrot.slane %v759, 7
      %v838 = vrot.slane %v760, 7
      %v839 = vsel %vm818, %v837, %v838
      %v840 = vrot.slane %v761, 7
      %v841 = vrot.slane %v762, 7
      %v842 = vsel %vm818, %v840, %v841
      %v843 = vrot.slane %v763, 7
      %v844 = vrot.slane %v764, 7
      %v845 = vsel %vm818, %v843, %v844
      %v846 = vrot.slane %v765, 7
      %v847 = vrot.slane %v766, 7
      %v848 = vsel %vm818, %v846, %v847
      %v849 = vrot.slane %v767, 7
      %v850 = vrot.slane %v768, 7
      %v851 = vsel %vm818, %v849, %v850
      %v852 = vrot.slane %v769, 7
      %v853 = vrot.slane %v770, 7
      %v854 = vsel %vm818, %v852, %v853
      %v855 = vrot.slane %v771, 7
      %v856 = vrot.slane %v772, 7
      %v857 = vsel %vm818, %v855, %v856
      %v858 = vrot.slane %v773, 7
      %v859 = vrot.slane %v774, 7
      %v860 = vsel %vm818, %v858, %v859
      %v861 = vrot.slane %v775, 7
      %v862 = vrot.slane %v776, 7
      %v863 = vsel %vm818, %v861, %v862
      %v864 = vrot.slane %v777, 7
      %v865 = vrot.slane %v778, 7
      %v866 = vsel %vm818, %v864, %v865
      %v915 = vsel %vm818, 0.0, %v819
      %v916 = vsel %vm818, 0.0, %v822
      %v917 = vsel %vm818, 0.0, %v825
      %v918 = vsel %vm818, 0.0, %v828
      %v919 = vsel %vm818, 0.0, %v831
      %v920 = vsel %vm818, 0.0, %v834
      %v921 = vsel %vm818, 0.0, %v837
      %v922 = vsel %vm818, 0.0, %v840
      %v923 = vsel %vm818, 0.0, %v843
      %v924 = vsel %vm818, 0.0, %v846
      %v925 = vsel %vm818, 0.0, %v849
      %v926 = vsel %vm818, 0.0, %v852
      %v927 = vsel %vm818, 0.0, %v855
      %v928 = vsel %vm818, 0.0, %v858
      %v929 = vsel %vm818, 0.0, %v861
      %v930 = vsel %vm818, 0.0, %v864
      %v931 = vsel %vm818, %v820, 0.0
      %v932 = vsel %vm818, %v823, 0.0
      %v933 = vsel %vm818, %v826, 0.0
      %v934 = vsel %vm818, %v829, 0.0
      %v935 = vsel %vm818, %v832, 0.0
      %v936 = vsel %vm818, %v835, 0.0
      %v937 = vsel %vm818, %v838, 0.0
      %v938 = vsel %vm818, %v841, 0.0
      %v939 = vsel %vm818, %v844, 0.0
      %v940 = vsel %vm818, %v847, 0.0
      %v941 = vsel %vm818, %v850, 0.0
      %v942 = vsel %vm818, %v853, 0.0
      %v943 = vsel %vm818, %v856, 0.0
      %v944 = vsel %vm818, %v859, 0.0
      %v945 = vsel %vm818, %v862, 0.0
      %v946 = vsel %vm818, %v865, 0.0
      %vm979 = vcmask 1046528
      %v980 = vrot.slane %v915, 1
      %v981 = vrot.slane %v821, 1
      %v982 = vsel %vm979, %v980, %v981
      %v983 = vrot.slane %v931, 1
      %v984 = vsel %vm979, %v981, %v983
      %v985 = vrot.slane %v916, 1
      %v986 = vrot.slane %v824, 1
      %v987 = vsel %vm979, %v985, %v986
      %v988 = vrot.slane %v932, 1
      %v989 = vsel %vm979, %v986, %v988
      %v990 = vrot.slane %v917, 1
      %v991 = vrot.slane %v827, 1
      %v992 = vsel %vm979, %v990, %v991
      %v993 = vrot.slane %v933, 1
      %v994 = vsel %vm979, %v991, %v993
      %v995 = vrot.slane %v918, 1
      %v996 = vrot.slane %v830, 1
      %v997 = vsel %vm979, %v995, %v996
      %v998 = vrot.slane %v934, 1
      %v999 = vsel %vm979, %v996, %v998
      %v1000 = vrot.slane %v919, 1
      %v1001 = vrot.slane %v833, 1
      %v1002 = vsel %vm979, %v1000, %v1001
      %v1003 = vrot.slane %v935, 1
      %v1004 = vsel %vm979, %v1001, %v1003
      %v1005 = vrot.slane %v920, 1
      %v1006 = vrot.slane %v836, 1
      %v1007 = vsel %vm979, %v1005, %v1006
      %v1008 = vrot.slane %v936, 1
      %v1009 = vsel %vm979, %v1006, %v1008
      %v1010 = vrot.slane %v921, 1
      %v1011 = vrot.slane %v839, 1
      %v1012 = vsel %vm979, %v1010, %v1011
      %v1013 = vrot.slane %v937, 1
      %v1014 = vsel %vm979, %v1011, %v1013
      %v1015 = vrot.slane %v922, 1
      %v1016 = vrot.slane %v842, 1
      %v1017 = vsel %vm979, %v1015, %v1016
      %v1018 = vrot.slane %v938, 1
      %v1019 = vsel %vm979, %v1016, %v1018
      %v1020 = vrot.slane %v923, 1
      %v1021 = vrot.slane %v845, 1
      %v1022 = vsel %vm979, %v1020, %v1021
      %v1023 = vrot.slane %v939, 1
      %v1024 = vsel %vm979, %v1021, %v1023
      %v1025 = vrot.slane %v924, 1
      %v1026 = vrot.slane %v848, 1
      %v1027 = vsel %vm979, %v1025, %v1026
      %v1028 = vrot.slane %v940, 1
      %v1029 = vsel %vm979, %v1026, %v1028
      %v1030 = vrot.slane %v925, 1
      %v1031 = vrot.slane %v851, 1
      %v1032 = vsel %vm979, %v1030, %v1031
      %v1033 = vrot.slane %v941, 1
      %v1034 = vsel %vm979, %v1031, %v1033
      %v1035 = vrot.slane %v926, 1
      %v1036 = vrot.slane %v854, 1
      %v1037 = vsel %vm979, %v1035, %v1036
      %v1038 = vrot.slane %v942, 1
      %v1039 = vsel %vm979, %v1036, %v1038
      %v1040 = vrot.slane %v927, 1
      %v1041 = vrot.slane %v857, 1
      %v1042 = vsel %vm979, %v1040, %v1041
      %v1043 = vrot.slane %v943, 1
      %v1044 = vsel %vm979, %v1041, %v1043
      %v1045 = vrot.slane %v928, 1
      %v1046 = vrot.slane %v860, 1
      %v1047 = vsel %vm979, %v1045, %v1046
      %v1048 = vrot.slane %v944, 1
      %v1049 = vsel %vm979, %v1046, %v1048
      %v1050 = vrot.slane %v929, 1
      %v1051 = vrot.slane %v863, 1
      %v1052 = vsel %vm979, %v1050, %v1051
      %v1053 = vrot.slane %v945, 1
      %v1054 = vsel %vm979, %v1051, %v1053
      %v1055 = vrot.slane %v930, 1
      %v1056 = vrot.slane %v866, 1
      %v1057 = vsel %vm979, %v1055, %v1056
      %v1058 = vrot.slane %v946, 1
      %v1059 = vsel %vm979, %v1056, %v1058
      %1060 = vrot.lane.b32.xlu0 %v982, 16
      %v1061 = vpop.permute.xlu0 %1060
      %1062 = vrot.lane.b32.xlu0 %v984, 16
      %v1063 = vpop.permute.xlu0 %1062
      %1064 = vrot.lane.b32.xlu0 %v987, 16
      %v1065 = vpop.permute.xlu0 %1064
      %1066 = vrot.lane.b32.xlu0 %v989, 16
      %v1067 = vpop.permute.xlu0 %1066
      %1068 = vrot.lane.b32.xlu0 %v992, 16
      %v1069 = vpop.permute.xlu0 %1068
      %1070 = vrot.lane.b32.xlu0 %v994, 16
      %v1071 = vpop.permute.xlu0 %1070
      %1072 = vrot.lane.b32.xlu0 %v997, 16
      %v1073 = vpop.permute.xlu0 %1072
      %1074 = vrot.lane.b32.xlu0 %v999, 16
      %v1075 = vpop.permute.xlu0 %1074
      %1076 = vrot.lane.b32.xlu0 %v1002, 16
      %v1077 = vpop.permute.xlu0 %1076
      %1078 = vrot.lane.b32.xlu0 %v1004, 16
      %v1079 = vpop.permute.xlu0 %1078
      %1080 = vrot.lane.b32.xlu0 %v1007, 16
      %v1081 = vpop.permute.xlu0 %1080
      %1082 = vrot.lane.b32.xlu0 %v1009, 16
      %v1083 = vpop.permute.xlu0 %1082
      %1084 = vrot.lane.b32.xlu0 %v1012, 16
      %v1085 = vpop.permute.xlu0 %1084
      %1086 = vrot.lane.b32.xlu0 %v1014, 16
      %v1087 = vpop.permute.xlu0 %1086
      %1088 = vrot.lane.b32.xlu0 %v1017, 16
      %v1089 = vpop.permute.xlu0 %1088
      %1090 = vrot.lane.b32.xlu0 %v1019, 16
      %v1091 = vpop.permute.xlu0 %1090
      %1092 = vrot.lane.b32.xlu0 %v1022, 16
      %v1093 = vpop.permute.xlu0 %1092
      %1094 = vrot.lane.b32.xlu0 %v1024, 16
      %v1095 = vpop.permute.xlu0 %1094
      %1096 = vrot.lane.b32.xlu0 %v1027, 16
      %v1097 = vpop.permute.xlu0 %1096
      %1098 = vrot.lane.b32.xlu0 %v1029, 16
      %v1099 = vpop.permute.xlu0 %1098
      %1100 = vrot.lane.b32.xlu0 %v1032, 16
      %v1101 = vpop.permute.xlu0 %1100
      %1102 = vrot.lane.b32.xlu0 %v1034, 16
      %v1103 = vpop.permute.xlu0 %1102
      %1104 = vrot.lane.b32.xlu0 %v1037, 16
      %v1105 = vpop.permute.xlu0 %1104
      %1106 = vrot.lane.b32.xlu0 %v1039, 16
      %v1107 = vpop.permute.xlu0 %1106
      %1108 = vrot.lane.b32.xlu0 %v1042, 16
      %v1109 = vpop.permute.xlu0 %1108
      %1110 = vrot.lane.b32.xlu0 %v1044, 16
      %v1111 = vpop.permute.xlu0 %1110
      %1112 = vrot.lane.b32.xlu0 %v1047, 16
      %v1113 = vpop.permute.xlu0 %1112
      %1114 = vrot.lane.b32.xlu0 %v1049, 16
      %v1115 = vpop.permute.xlu0 %1114
      %1116 = vrot.lane.b32.xlu0 %v1052, 16
      %v1117 = vpop.permute.xlu0 %1116
      %1118 = vrot.lane.b32.xlu0 %v1054, 16
      %v1119 = vpop.permute.xlu0 %1118
      %1120 = vrot.lane.b32.xlu0 %v1057, 16
      %v1121 = vpop.permute.xlu0 %1120
      %1122 = vrot.lane.b32.xlu0 %v1059, 16
      %v1123 = vpop.permute.xlu0 %1122
      %vm1156 = vcmask 1045504
      %v1157 = vrot.slane %v915, 2
      %v1158 = vrot.slane %v821, 2
      %v1159 = vsel %vm1156, %v1157, %v1158
      %v1160 = vrot.slane %v931, 2
      %v1161 = vsel %vm1156, %v1158, %v1160
      %v1162 = vrot.slane %v916, 2
      %v1163 = vrot.slane %v824, 2
      %v1164 = vsel %vm1156, %v1162, %v1163
      %v1165 = vrot.slane %v932, 2
      %v1166 = vsel %vm1156, %v1163, %v1165
      %v1167 = vrot.slane %v917, 2
      %v1168 = vrot.slane %v827, 2
      %v1169 = vsel %vm1156, %v1167, %v1168
      %v1170 = vrot.slane %v933, 2
      %v1171 = vsel %vm1156, %v1168, %v1170
      %v1172 = vrot.slane %v918, 2
      %v1173 = vrot.slane %v830, 2
      %v1174 = vsel %vm1156, %v1172, %v1173
      %v1175 = vrot.slane %v934, 2
      %v1176 = vsel %vm1156, %v1173, %v1175
      %v1177 = vrot.slane %v919, 2
      %v1178 = vrot.slane %v833, 2
      %v1179 = vsel %vm1156, %v1177, %v1178
      %v1180 = vrot.slane %v935, 2
      %v1181 = vsel %vm1156, %v1178, %v1180
      %v1182 = vrot.slane %v920, 2
      %v1183 = vrot.slane %v836, 2
      %v1184 = vsel %vm1156, %v1182, %v1183
      %v1185 = vrot.slane %v936, 2
      %v1186 = vsel %vm1156, %v1183, %v1185
      %v1187 = vrot.slane %v921, 2
      %v1188 = vrot.slane %v839, 2
      %v1189 = vsel %vm1156, %v1187, %v1188
      %v1190 = vrot.slane %v937, 2
      %v1191 = vsel %vm1156, %v1188, %v1190
      %v1192 = vrot.slane %v922, 2
      %v1193 = vrot.slane %v842, 2
      %v1194 = vsel %vm1156, %v1192, %v1193
      %v1195 = vrot.slane %v938, 2
      %v1196 = vsel %vm1156, %v1193, %v1195
      %v1197 = vrot.slane %v923, 2
      %v1198 = vrot.slane %v845, 2
      %v1199 = vsel %vm1156, %v1197, %v1198
      %v1200 = vrot.slane %v939, 2
      %v1201 = vsel %vm1156, %v1198, %v1200
      %v1202 = vrot.slane %v924, 2
      %v1203 = vrot.slane %v848, 2
      %v1204 = vsel %vm1156, %v1202, %v1203
      %v1205 = vrot.slane %v940, 2
      %v1206 = vsel %vm1156, %v1203, %v1205
      %v1207 = vrot.slane %v925, 2
      %v1208 = vrot.slane %v851, 2
      %v1209 = vsel %vm1156, %v1207, %v1208
      %v1210 = vrot.slane %v941, 2
      %v1211 = vsel %vm1156, %v1208, %v1210
      %v1212 = vrot.slane %v926, 2
      %v1213 = vrot.slane %v854, 2
      %v1214 = vsel %vm1156, %v1212, %v1213
      %v1215 = vrot.slane %v942, 2
      %v1216 = vsel %vm1156, %v1213, %v1215
      %v1217 = vrot.slane %v927, 2
      %v1218 = vrot.slane %v857, 2
      %v1219 = vsel %vm1156, %v1217, %v1218
      %v1220 = vrot.slane %v943, 2
      %v1221 = vsel %vm1156, %v1218, %v1220
      %v1222 = vrot.slane %v928, 2
      %v1223 = vrot.slane %v860, 2
      %v1224 = vsel %vm1156, %v1222, %v1223
      %v1225 = vrot.slane %v944, 2
      %v1226 = vsel %vm1156, %v1223, %v1225
      %v1227 = vrot.slane %v929, 2
      %v1228 = vrot.slane %v863, 2
      %v1229 = vsel %vm1156, %v1227, %v1228
      %v1230 = vrot.slane %v945, 2
      %v1231 = vsel %vm1156, %v1228, %v1230
      %v1232 = vrot.slane %v930, 2
      %v1233 = vrot.slane %v866, 2
      %v1234 = vsel %vm1156, %v1232, %v1233
      %v1235 = vrot.slane %v946, 2
      %v1236 = vsel %vm1156, %v1233, %v1235
      %1237 = vrot.lane.b32.xlu0 %v1159, 32
      %v1238 = vpop.permute.xlu0 %1237
      %1239 = vrot.lane.b32.xlu0 %v1161, 32
      %v1240 = vpop.permute.xlu0 %1239
      %1241 = vrot.lane.b32.xlu0 %v1164, 32
      %v1242 = vpop.permute.xlu0 %1241
      %1243 = vrot.lane.b32.xlu0 %v1166, 32
      %v1244 = vpop.permute.xlu0 %1243
      %1245 = vrot.lane.b32.xlu0 %v1169, 32
      %v1246 = vpop.permute.xlu0 %1245
      %1247 = vrot.lane.b32.xlu0 %v1171, 32
      %v1248 = vpop.permute.xlu0 %1247
      %1249 = vrot.lane.b32.xlu0 %v1174, 32
      %v1250 = vpop.permute.xlu0 %1249
      %1251 = vrot.lane.b32.xlu0 %v1176, 32
      %v1252 = vpop.permute.xlu0 %1251
      %1253 = vrot.lane.b32.xlu0 %v1179, 32
      %v1254 = vpop.permute.xlu0 %1253
      %1255 = vrot.lane.b32.xlu0 %v1181, 32
      %v1256 = vpop.permute.xlu0 %1255
      %1257 = vrot.lane.b32.xlu0 %v1184, 32
      %v1258 = vpop.permute.xlu0 %1257
      %1259 = vrot.lane.b32.xlu0 %v1186, 32
      %v1260 = vpop.permute.xlu0 %1259
      %1261 = vrot.lane.b32.xlu0 %v1189, 32
      %v1262 = vpop.permute.xlu0 %1261
      %1263 = vrot.lane.b32.xlu0 %v1191, 32
      %v1264 = vpop.permute.xlu0 %1263
      %1265 = vrot.lane.b32.xlu0 %v1194, 32
      %v1266 = vpop.permute.xlu0 %1265
      %1267 = vrot.lane.b32.xlu0 %v1196, 32
      %v1268 = vpop.permute.xlu0 %1267
      %1269 = vrot.lane.b32.xlu0 %v1199, 32
      %v1270 = vpop.permute.xlu0 %1269
      %1271 = vrot.lane.b32.xlu0 %v1201, 32
      %v1272 = vpop.permute.xlu0 %1271
      %1273 = vrot.lane.b32.xlu0 %v1204, 32
      %v1274 = vpop.permute.xlu0 %1273
      %1275 = vrot.lane.b32.xlu0 %v1206, 32
      %v1276 = vpop.permute.xlu0 %1275
      %1277 = vrot.lane.b32.xlu0 %v1209, 32
      %v1278 = vpop.permute.xlu0 %1277
      %1279 = vrot.lane.b32.xlu0 %v1211, 32
      %v1280 = vpop.permute.xlu0 %1279
      %1281 = vrot.lane.b32.xlu0 %v1214, 32
      %v1282 = vpop.permute.xlu0 %1281
      %1283 = vrot.lane.b32.xlu0 %v1216, 32
      %v1284 = vpop.permute.xlu0 %1283
      %1285 = vrot.lane.b32.xlu0 %v1219, 32
      %v1286 = vpop.permute.xlu0 %1285
      %1287 = vrot.lane.b32.xlu0 %v1221, 32
      %v1288 = vpop.permute.xlu0 %1287
      %1289 = vrot.lane.b32.xlu0 %v1224, 32
      %v1290 = vpop.permute.xlu0 %1289
      %1291 = vrot.lane.b32.xlu0 %v1226, 32
      %v1292 = vpop.permute.xlu0 %1291
      %1293 = vrot.lane.b32.xlu0 %v1229, 32
      %v1294 = vpop.permute.xlu0 %1293
      %1295 = vrot.lane.b32.xlu0 %v1231, 32
      %v1296 = vpop.permute.xlu0 %1295
      %1297 = vrot.lane.b32.xlu0 %v1234, 32
      %v1298 = vpop.permute.xlu0 %1297
      %1299 = vrot.lane.b32.xlu0 %v1236, 32
      %v1300 = vpop.permute.xlu0 %1299
      %v1333 = vsel %vm433, %v915, %v1061
      %v1334 = vsel %vm433, %v821, %v1063
      %v1335 = vsel %vm433, %v916, %v1065
      %v1336 = vsel %vm433, %v824, %v1067
      %v1337 = vsel %vm433, %v917, %v1069
      %v1338 = vsel %vm433, %v827, %v1071
      %v1339 = vsel %vm433, %v918, %v1073
      %v1340 = vsel %vm433, %v830, %v1075
      %v1341 = vsel %vm433, %v919, %v1077
      %v1342 = vsel %vm433, %v833, %v1079
      %v1343 = vsel %vm433, %v920, %v1081
      %v1344 = vsel %vm433, %v836, %v1083
      %v1345 = vsel %vm433, %v921, %v1085
      %v1346 = vsel %vm433, %v839, %v1087
      %v1347 = vsel %vm433, %v922, %v1089
      %v1348 = vsel %vm433, %v842, %v1091
      %v1349 = vsel %vm433, %v923, %v1093
      %v1350 = vsel %vm433, %v845, %v1095
      %v1351 = vsel %vm433, %v924, %v1097
      %v1352 = vsel %vm433, %v848, %v1099
      %v1353 = vsel %vm433, %v925, %v1101
      %v1354 = vsel %vm433, %v851, %v1103
      %v1355 = vsel %vm433, %v926, %v1105
      %v1356 = vsel %vm433, %v854, %v1107
      %v1357 = vsel %vm433, %v927, %v1109
      %v1358 = vsel %vm433, %v857, %v1111
      %v1359 = vsel %vm433, %v928, %v1113
      %v1360 = vsel %vm433, %v860, %v1115
      %v1361 = vsel %vm433, %v929, %v1117
      %v1362 = vsel %vm433, %v863, %v1119
      %v1363 = vsel %vm433, %v930, %v1121
      %v1364 = vsel %vm433, %v866, %v1123
      %v1365 = vsel %vm466, %v1333, %v1238
      %v1366 = vsel %vm466, %v1334, %v1240
      %v1367 = vsel %vm466, %v1335, %v1242
      %v1368 = vsel %vm466, %v1336, %v1244
      %v1369 = vsel %vm466, %v1337, %v1246
      %v1370 = vsel %vm466, %v1338, %v1248
      %v1371 = vsel %vm466, %v1339, %v1250
      %v1372 = vsel %vm466, %v1340, %v1252
      %v1373 = vsel %vm466, %v1341, %v1254
      %v1374 = vsel %vm466, %v1342, %v1256
      %v1375 = vsel %vm466, %v1343, %v1258
      %v1376 = vsel %vm466, %v1344, %v1260
      %v1377 = vsel %vm466, %v1345, %v1262
      %v1378 = vsel %vm466, %v1346, %v1264
      %v1379 = vsel %vm466, %v1347, %v1266
      %v1380 = vsel %vm466, %v1348, %v1268
      %v1381 = vsel %vm466, %v1349, %v1270
      %v1382 = vsel %vm466, %v1350, %v1272
      %v1383 = vsel %vm466, %v1351, %v1274
      %v1384 = vsel %vm466, %v1352, %v1276
      %v1385 = vsel %vm466, %v1353, %v1278
      %v1386 = vsel %vm466, %v1354, %v1280
      %v1387 = vsel %vm466, %v1355, %v1282
      %v1388 = vsel %vm466, %v1356, %v1284
      %v1389 = vsel %vm466, %v1357, %v1286
      %v1390 = vsel %vm466, %v1358, %v1288
      %v1391 = vsel %vm466, %v1359, %v1290
      %v1392 = vsel %vm466, %v1360, %v1292
      %v1393 = vsel %vm466, %v1361, %v1294
      %v1394 = vsel %vm466, %v1362, %v1296
      %v1395 = vsel %vm466, %v1363, %v1298
      %v1396 = vsel %vm466, %v1364, %v1300
      %v1397 = vpack.c.bf16 %v1366, %v1365
      %v1398 = vpack.c.bf16 %v1368, %v1367
      %v1399 = vpack.c.bf16 %v1370, %v1369
      %v1400 = vpack.c.bf16 %v1372, %v1371
      %v1401 = vpack.c.bf16 %v1374, %v1373
      %v1402 = vpack.c.bf16 %v1376, %v1375
      %v1403 = vpack.c.bf16 %v1378, %v1377
      %v1404 = vpack.c.bf16 %v1380, %v1379
      %v1405 = vpack.c.bf16 %v1382, %v1381
      %v1406 = vpack.c.bf16 %v1384, %v1383
      %v1407 = vpack.c.bf16 %v1386, %v1385
      %v1408 = vpack.c.bf16 %v1388, %v1387
      %v1409 = vpack.c.bf16 %v1390, %v1389
      %v1410 = vpack.c.bf16 %v1392, %v1391
      %v1411 = vpack.c.bf16 %v1394, %v1393
      %v1412 = vpack.c.bf16 %v1396, %v1395
      %v1419 = vunpack.c.l.b16 %v780
      %v1420 = vunpack.c.l.b16 %v781
      %v1421 = vunpack.c.l.b16 %v782
      %v1422 = vunpack.c.l.b16 %v783
      %v1423 = vunpack.c.l.b16 %v784
      %v1424 = vunpack.c.l.b16 %v785
      %v1425 = vpack.c.b16 %v1420, %v1419
      %v1426 = vpack.c.b16 %v1422, %v1421
      %v1427 = vpack.c.b16 %v1424, %v1423
      %v1432 = vsel %vm537, %v1397, 0
      %v1435 = vsel %vm537, %v1398, 0
      %v1438 = vsel %vm537, %v1399, 0
      %v1441 = vsel %vm537, %v1400, 0
      %v1444 = vsel %vm537, %v1401, 0
      %v1447 = vsel %vm537, %v1402, 0
      %v1450 = vsel %vm537, %v1403, 0
      %v1453 = vsel %vm537, %v1404, 0
      %v1456 = vsel %vm537, %v1405, 0
      %v1459 = vsel %vm537, %v1406, 0
      %v1462 = vsel %vm537, %v1407, 0
      %v1465 = vsel %vm537, %v1408, 0
      %v1468 = vsel %vm537, %v1409, 0
      %v1471 = vsel %vm537, %v1410, 0
      %v1474 = vsel %vm537, %v1411, 0
      %v1477 = vsel %vm537, %v1412, 0
      %1479 = vmatprep.subr.bf16.mxu0 0
      %1480 = vmatpush1.bf16.msra.mxu0 %v1425
      %1481 = vmatprep.subr.bf16.mxu0 0
      %1482 = vmatpush1.bf16.msra.mxu0 %v1426
      %1483 = vmatprep.subr.bf16.mxu0 0
      %1484 = vmatpush1.bf16.msra.mxu0 %v1427
      %1485 = vmatprep.subr.bf16.mxu0 0
      %1486 = vmatpush1.bf16.msra.mxu0 0
      %1487 = vmatprep.subr.bf16.mxu0 0
      %1488 = vmatpush1.bf16.msra.mxu0 0
      %1489 = vmatprep.subr.bf16.mxu0 0
      %1490 = vmatpush1.bf16.msra.mxu0 0
      %1491 = vmatprep.subr.bf16.mxu0 0
      %1492 = vmatpush1.bf16.msra.mxu0 0
      %1493 = vmatprep.subr.bf16.mxu0 0
      %1494 = vmatpush1.bf16.msra.mxu0 0
      %1495 = vmatprep.subr.bf16.mxu0 0
      %1496 = vmatpush1.bf16.msra.mxu0 0
      %1497 = vmatprep.subr.bf16.mxu0 0
      %1498 = vmatpush1.bf16.msra.mxu0 0
      %1499 = vmatprep.subr.bf16.mxu0 0
      %1500 = vmatpush1.bf16.msra.mxu0 0
      %1501 = vmatprep.subr.bf16.mxu0 0
      %1502 = vmatpush1.bf16.msra.mxu0 0
      %1503 = vmatprep.subr.bf16.mxu0 0
      %1504 = vmatpush1.bf16.msra.mxu0 0
      %1505 = vmatprep.subr.bf16.mxu0 0
      %1506 = vmatpush1.bf16.msra.mxu0 0
      %1507 = vmatprep.subr.bf16.mxu0 0
      %1508 = vmatpush1.bf16.msra.mxu0 0
      %1509 = vmatprep.subr.bf16.mxu0 0
      %1510 = vmatpush1.bf16.msra.mxu0 0
      %1511 = vmatprep.mubr.bf16.mxu0 0
      %1512 = vmatmul.mubr.bf16.gmra.mrb[0].mxu0 %v1432
      %v1513 = vpop.f32.mrb[0].mxu0
      %v1514 = vadd.f32 0.0, %v1513
      %v1515 = vpop.f32.mrb[0].mxu0
      %v1516 = vpop.f32.mrb[0].mxu0
      %v1517 = vadd.f32 0.0, %v1516
      %v1518 = vpop.f32.mrb[0].mxu0
      %1519 = vmatprep.mubr.bf16.mxu0 0
      %1520 = vmatmul.mubr.bf16.gmra.mrb[0].mxu0 %v1435
      %v1521 = vpop.f32.mrb[0].mxu0
      %v1522 = vadd.f32 0.0, %v1521
      %v1523 = vpop.f32.mrb[0].mxu0
      %v1524 = vpop.f32.mrb[0].mxu0
      %v1525 = vadd.f32 0.0, %v1524
      %v1526 = vpop.f32.mrb[0].mxu0
      %1527 = vmatprep.mubr.bf16.mxu0 0
      %1528 = vmatmul.mubr.bf16.gmra.mrb[0].mxu0 %v1438
      %v1529 = vpop.f32.mrb[0].mxu0
      %v1530 = vadd.f32 0.0, %v1529
      %v1531 = vpop.f32.mrb[0].mxu0
      %v1532 = vpop.f32.mrb[0].mxu0
      %v1533 = vadd.f32 0.0, %v1532
      %v1534 = vpop.f32.mrb[0].mxu0
      %1535 = vmatprep.mubr.bf16.mxu0 0
      %1536 = vmatmul.mubr.bf16.gmra.mrb[0].mxu0 %v1441
      %v1537 = vpop.f32.mrb[0].mxu0
      %v1538 = vadd.f32 0.0, %v1537
      %v1539 = vpop.f32.mrb[0].mxu0
      %v1540 = vpop.f32.mrb[0].mxu0
      %v1541 = vadd.f32 0.0, %v1540
      %v1542 = vpop.f32.mrb[0].mxu0
      %1543 = vmatprep.mubr.bf16.mxu0 0
      %1544 = vmatmul.mubr.bf16.gmra.mrb[0].mxu0 %v1444
      %v1545 = vpop.f32.mrb[0].mxu0
      %v1546 = vadd.f32 0.0, %v1545
      %v1547 = vpop.f32.mrb[0].mxu0
      %v1548 = vpop.f32.mrb[0].mxu0
      %v1549 = vadd.f32 0.0, %v1548
      %v1550 = vpop.f32.mrb[0].mxu0
      %1551 = vmatprep.mubr.bf16.mxu0 0
      %1552 = vmatmul.mubr.bf16.gmra.mrb[0].mxu0 %v1447
      %v1553 = vpop.f32.mrb[0].mxu0
      %v1554 = vadd.f32 0.0, %v1553
      %v1555 = vpop.f32.mrb[0].mxu0
      %v1556 = vpop.f32.mrb[0].mxu0
      %v1557 = vadd.f32 0.0, %v1556
      %v1558 = vpop.f32.mrb[0].mxu0
      %1559 = vmatprep.mubr.bf16.mxu0 0
      %1560 = vmatmul.mubr.bf16.gmra.mrb[0].mxu0 %v1450
      %v1561 = vpop.f32.mrb[0].mxu0
      %v1562 = vadd.f32 0.0, %v1561
      %v1563 = vpop.f32.mrb[0].mxu0
      %v1564 = vpop.f32.mrb[0].mxu0
      %v1565 = vadd.f32 0.0, %v1564
      %v1566 = vpop.f32.mrb[0].mxu0
      %1567 = vmatprep.mubr.bf16.mxu0 0
      %1568 = vmatmul.mubr.bf16.gmra.mrb[0].mxu0 %v1453
      %v1569 = vpop.f32.mrb[0].mxu0
      %v1570 = vadd.f32 0.0, %v1569
      %v1571 = vpop.f32.mrb[0].mxu0
      %v1572 = vpop.f32.mrb[0].mxu0
      %v1573 = vadd.f32 0.0, %v1572
      %v1574 = vpop.f32.mrb[0].mxu0
      %1575 = vmatprep.mubr.bf16.mxu0 0
      %1576 = vmatmul.mubr.bf16.gmra.mrb[0].mxu0 %v1456
      %v1577 = vpop.f32.mrb[0].mxu0
      %v1578 = vadd.f32 0.0, %v1577
      %v1579 = vpop.f32.mrb[0].mxu0
      %v1580 = vpop.f32.mrb[0].mxu0
      %v1581 = vadd.f32 0.0, %v1580
      %v1582 = vpop.f32.mrb[0].mxu0
      %1583 = vmatprep.mubr.bf16.mxu0 0
      %1584 = vmatmul.mubr.bf16.gmra.mrb[0].mxu0 %v1459
      %v1585 = vpop.f32.mrb[0].mxu0
      %v1586 = vadd.f32 0.0, %v1585
      %v1587 = vpop.f32.mrb[0].mxu0
      %v1588 = vpop.f32.mrb[0].mxu0
      %v1589 = vadd.f32 0.0, %v1588
      %v1590 = vpop.f32.mrb[0].mxu0
      %1591 = vmatprep.mubr.bf16.mxu0 0
      %1592 = vmatmul.mubr.bf16.gmra.mrb[0].mxu0 %v1462
      %v1593 = vpop.f32.mrb[0].mxu0
      %v1594 = vadd.f32 0.0, %v1593
      %v1595 = vpop.f32.mrb[0].mxu0
      %v1596 = vpop.f32.mrb[0].mxu0
      %v1597 = vadd.f32 0.0, %v1596
      %v1598 = vpop.f32.mrb[0].mxu0
      %1599 = vmatprep.mubr.bf16.mxu0 0
      %1600 = vmatmul.mubr.bf16.gmra.mrb[0].mxu0 %v1465
      %v1601 = vpop.f32.mrb[0].mxu0
      %v1602 = vadd.f32 0.0, %v1601
      %v1603 = vpop.f32.mrb[0].mxu0
      %v1604 = vpop.f32.mrb[0].mxu0
      %v1605 = vadd.f32 0.0, %v1604
      %v1606 = vpop.f32.mrb[0].mxu0
      %1607 = vmatprep.mubr.bf16.mxu0 0
      %1608 = vmatmul.mubr.bf16.gmra.mrb[0].mxu0 %v1468
      %v1609 = vpop.f32.mrb[0].mxu0
      %v1610 = vadd.f32 0.0, %v1609
      %v1611 = vpop.f32.mrb[0].mxu0
      %v1612 = vpop.f32.mrb[0].mxu0
      %v1613 = vadd.f32 0.0, %v1612
      %v1614 = vpop.f32.mrb[0].mxu0
      %1615 = vmatprep.mubr.bf16.mxu0 0
      %1616 = vmatmul.mubr.bf16.gmra.mrb[0].mxu0 %v1471
      %v1617 = vpop.f32.mrb[0].mxu0
      %v1618 = vadd.f32 0.0, %v1617
      %v1619 = vpop.f32.mrb[0].mxu0
      %v1620 = vpop.f32.mrb[0].mxu0
      %v1621 = vadd.f32 0.0, %v1620
      %v1622 = vpop.f32.mrb[0].mxu0
      %1623 = vmatprep.mubr.bf16.mxu0 0
      %1624 = vmatmul.mubr.bf16.gmra.mrb[0].mxu0 %v1474
      %v1625 = vpop.f32.mrb[0].mxu0
      %v1626 = vadd.f32 0.0, %v1625
      %v1627 = vpop.f32.mrb[0].mxu0
      %v1628 = vpop.f32.mrb[0].mxu0
      %v1629 = vadd.f32 0.0, %v1628
      %v1630 = vpop.f32.mrb[0].mxu0
      %1631 = vmatprep.mubr.bf16.mxu0 0
      %1632 = vmatmul.mubr.bf16.gmra.mrb[0].mxu0 %v1477
      %v1633 = vpop.f32.mrb[0].mxu0
      %v1634 = vadd.f32 0.0, %v1633
      %v1635 = vpop.f32.mrb[0].mxu0
      %v1636 = vpop.f32.mrb[0].mxu0
      %v1637 = vadd.f32 0.0, %v1636
      %v1638 = vpop.f32.mrb[0].mxu0
      %1639 = vdwg.mxu0
      %v1640 = vlaneseq
      %v1641 = vshrl.u32 %v1640, 7
      %v1642 = vsub.s32 2, %v1641
      %v1643 = vrot.slane %v204, %v1642
      %v1644 = vmul.f32 %v1514, %v1643
      %v1645 = vmul.f32 %v1517, %v1643
      %v1646 = vmul.f32 %v1522, %v1643
      %v1647 = vmul.f32 %v1525, %v1643
      %v1648 = vmul.f32 %v1530, %v1643
      %v1649 = vmul.f32 %v1533, %v1643
      %v1650 = vmul.f32 %v1538, %v1643
      %v1651 = vmul.f32 %v1541, %v1643
      %v1652 = vmul.f32 %v1546, %v1643
      %v1653 = vmul.f32 %v1549, %v1643
      %v1654 = vmul.f32 %v1554, %v1643
      %v1655 = vmul.f32 %v1557, %v1643
      %v1656 = vmul.f32 %v1562, %v1643
      %v1657 = vmul.f32 %v1565, %v1643
      %v1658 = vmul.f32 %v1570, %v1643
      %v1659 = vmul.f32 %v1573, %v1643
      %v1660 = vmul.f32 %v1578, %v1643
      %v1661 = vmul.f32 %v1581, %v1643
      %v1662 = vmul.f32 %v1586, %v1643
      %v1663 = vmul.f32 %v1589, %v1643
      %v1664 = vmul.f32 %v1594, %v1643
      %v1665 = vmul.f32 %v1597, %v1643
      %v1666 = vmul.f32 %v1602, %v1643
      %v1667 = vmul.f32 %v1605, %v1643
      %v1668 = vmul.f32 %v1610, %v1643
      %v1669 = vmul.f32 %v1613, %v1643
      %v1670 = vmul.f32 %v1618, %v1643
      %v1671 = vmul.f32 %v1621, %v1643
      %v1672 = vmul.f32 %v1626, %v1643
      %v1673 = vmul.f32 %v1629, %v1643
      %v1674 = vmul.f32 %v1634, %v1643
      %v1675 = vmul.f32 %v1637, %v1643
      %v1676 = vlaneseq
      %v1677 = vshrl.u32 %v1676, 7
      %v1678 = vsub.s32 3, %v1677
      %v1679 = vrot.slane %v204, %v1678
      %v1680 = vadd.f32 %v1644, %v1679
      %v1681 = vadd.f32 %v1645, %v1679
      %v1682 = vadd.f32 %v1646, %v1679
      %v1683 = vadd.f32 %v1647, %v1679
      %v1684 = vadd.f32 %v1648, %v1679
      %v1685 = vadd.f32 %v1649, %v1679
      %v1686 = vadd.f32 %v1650, %v1679
      %v1687 = vadd.f32 %v1651, %v1679
      %v1688 = vadd.f32 %v1652, %v1679
      %v1689 = vadd.f32 %v1653, %v1679
      %v1690 = vadd.f32 %v1654, %v1679
      %v1691 = vadd.f32 %v1655, %v1679
      %v1692 = vadd.f32 %v1656, %v1679
      %v1693 = vadd.f32 %v1657, %v1679
      %v1694 = vadd.f32 %v1658, %v1679
      %v1695 = vadd.f32 %v1659, %v1679
      %v1696 = vadd.f32 %v1660, %v1679
      %v1697 = vadd.f32 %v1661, %v1679
      %v1698 = vadd.f32 %v1662, %v1679
      %v1699 = vadd.f32 %v1663, %v1679
      %v1700 = vadd.f32 %v1664, %v1679
      %v1701 = vadd.f32 %v1665, %v1679
      %v1702 = vadd.f32 %v1666, %v1679
      %v1703 = vadd.f32 %v1667, %v1679
      %v1704 = vadd.f32 %v1668, %v1679
      %v1705 = vadd.f32 %v1669, %v1679
      %v1706 = vadd.f32 %v1670, %v1679
      %v1707 = vadd.f32 %v1671, %v1679
      %v1708 = vadd.f32 %v1672, %v1679
      %v1709 = vadd.f32 %v1673, %v1679
      %v1710 = vadd.f32 %v1674, %v1679
      %v1711 = vadd.f32 %v1675, %v1679
      %v1712 = vmax.f32 %v1680, 0.0
      %v1713 = vmax.f32 %v1681, 0.0
      %v1714 = vmax.f32 %v1682, 0.0
      %v1715 = vmax.f32 %v1683, 0.0
      %v1716 = vmax.f32 %v1684, 0.0
      %v1717 = vmax.f32 %v1685, 0.0
      %v1718 = vmax.f32 %v1686, 0.0
      %v1719 = vmax.f32 %v1687, 0.0
      %v1720 = vmax.f32 %v1688, 0.0
      %v1721 = vmax.f32 %v1689, 0.0
      %v1722 = vmax.f32 %v1690, 0.0
      %v1723 = vmax.f32 %v1691, 0.0
      %v1724 = vmax.f32 %v1692, 0.0
      %v1725 = vmax.f32 %v1693, 0.0
      %v1726 = vmax.f32 %v1694, 0.0
      %v1727 = vmax.f32 %v1695, 0.0
      %v1728 = vmax.f32 %v1696, 0.0
      %v1729 = vmax.f32 %v1697, 0.0
      %v1730 = vmax.f32 %v1698, 0.0
      %v1731 = vmax.f32 %v1699, 0.0
      %v1732 = vmax.f32 %v1700, 0.0
      %v1733 = vmax.f32 %v1701, 0.0
      %v1734 = vmax.f32 %v1702, 0.0
      %v1735 = vmax.f32 %v1703, 0.0
      %v1736 = vmax.f32 %v1704, 0.0
      %v1737 = vmax.f32 %v1705, 0.0
      %v1738 = vmax.f32 %v1706, 0.0
      %v1739 = vmax.f32 %v1707, 0.0
      %v1740 = vmax.f32 %v1708, 0.0
      %v1741 = vmax.f32 %v1709, 0.0
      %v1742 = vmax.f32 %v1710, 0.0
      %v1743 = vmax.f32 %v1711, 0.0
      %s1744 = scalar_lea.vmem %s1, 48
      %v1745 = vld [vmem:[%s1744] sm:$0xf]
      %v1746 = vld [vmem:[%s1744 + $0x4] sm:$0xf]
      %v1747 = vld [vmem:[%s1744 + $0x8] sm:$0xf]
      %v1748 = vld [vmem:[%s1744 + $0xc] sm:$0xf]
      %v1749 = vld [vmem:[%s1744 + $0x10] sm:$0xf]
      %v1750 = vld [vmem:[%s1744 + $0x14] sm:$0xf]
      %1783 = vrot.lane.b32.xlu0 %v1712, 16
      %v1784 = vpop.permute.xlu0 %1783
      %1785 = vrot.lane.b32.xlu0 %v1713, 16
      %v1786 = vpop.permute.xlu0 %1785
      %1787 = vrot.lane.b32.xlu0 %v1714, 16
      %v1788 = vpop.permute.xlu0 %1787
      %1789 = vrot.lane.b32.xlu0 %v1715, 16
      %v1790 = vpop.permute.xlu0 %1789
      %1791 = vrot.lane.b32.xlu0 %v1716, 16
      %v1792 = vpop.permute.xlu0 %1791
      %1793 = vrot.lane.b32.xlu0 %v1717, 16
      %v1794 = vpop.permute.xlu0 %1793
      %1795 = vrot.lane.b32.xlu0 %v1718, 16
      %v1796 = vpop.permute.xlu0 %1795
      %1797 = vrot.lane.b32.xlu0 %v1719, 16
      %v1798 = vpop.permute.xlu0 %1797
      %1799 = vrot.lane.b32.xlu0 %v1720, 16
      %v1800 = vpop.permute.xlu0 %1799
      %1801 = vrot.lane.b32.xlu0 %v1721, 16
      %v1802 = vpop.permute.xlu0 %1801
      %1803 = vrot.lane.b32.xlu0 %v1722, 16
      %v1804 = vpop.permute.xlu0 %1803
      %1805 = vrot.lane.b32.xlu0 %v1723, 16
      %v1806 = vpop.permute.xlu0 %1805
      %1807 = vrot.lane.b32.xlu0 %v1724, 16
      %v1808 = vpop.permute.xlu0 %1807
      %1809 = vrot.lane.b32.xlu0 %v1725, 16
      %v1810 = vpop.permute.xlu0 %1809
      %1811 = vrot.lane.b32.xlu0 %v1726, 16
      %v1812 = vpop.permute.xlu0 %1811
      %1813 = vrot.lane.b32.xlu0 %v1727, 16
      %v1814 = vpop.permute.xlu0 %1813
      %1815 = vrot.lane.b32.xlu0 %v1728, 16
      %v1816 = vpop.permute.xlu0 %1815
      %1817 = vrot.lane.b32.xlu0 %v1729, 16
      %v1818 = vpop.permute.xlu0 %1817
      %1819 = vrot.lane.b32.xlu0 %v1730, 16
      %v1820 = vpop.permute.xlu0 %1819
      %1821 = vrot.lane.b32.xlu0 %v1731, 16
      %v1822 = vpop.permute.xlu0 %1821
      %1823 = vrot.lane.b32.xlu0 %v1732, 16
      %v1824 = vpop.permute.xlu0 %1823
      %1825 = vrot.lane.b32.xlu0 %v1733, 16
      %v1826 = vpop.permute.xlu0 %1825
      %1827 = vrot.lane.b32.xlu0 %v1734, 16
      %v1828 = vpop.permute.xlu0 %1827
      %1829 = vrot.lane.b32.xlu0 %v1735, 16
      %v1830 = vpop.permute.xlu0 %1829
      %1831 = vrot.lane.b32.xlu0 %v1736, 16
      %v1832 = vpop.permute.xlu0 %1831
      %1833 = vrot.lane.b32.xlu0 %v1737, 16
      %v1834 = vpop.permute.xlu0 %1833
      %1835 = vrot.lane.b32.xlu0 %v1738, 16
      %v1836 = vpop.permute.xlu0 %1835
      %1837 = vrot.lane.b32.xlu0 %v1739, 16
      %v1838 = vpop.permute.xlu0 %1837
      %1839 = vrot.lane.b32.xlu0 %v1740, 16
      %v1840 = vpop.permute.xlu0 %1839
      %1841 = vrot.lane.b32.xlu0 %v1741, 16
      %v1842 = vpop.permute.xlu0 %1841
      %1843 = vrot.lane.b32.xlu0 %v1742, 16
      %v1844 = vpop.permute.xlu0 %1843
      %1845 = vrot.lane.b32.xlu0 %v1743, 16
      %v1846 = vpop.permute.xlu0 %1845
      %1879 = vrot.lane.b32.xlu0 %v1714, 32
      %v1880 = vpop.permute.xlu0 %1879
      %1881 = vrot.lane.b32.xlu0 %v1715, 32
      %v1882 = vpop.permute.xlu0 %1881
      %1883 = vrot.lane.b32.xlu0 %v1716, 32
      %v1884 = vpop.permute.xlu0 %1883
      %1885 = vrot.lane.b32.xlu0 %v1717, 32
      %v1886 = vpop.permute.xlu0 %1885
      %1887 = vrot.lane.b32.xlu0 %v1718, 32
      %v1888 = vpop.permute.xlu0 %1887
      %1889 = vrot.lane.b32.xlu0 %v1719, 32
      %v1890 = vpop.permute.xlu0 %1889
      %1891 = vrot.lane.b32.xlu0 %v1720, 32
      %v1892 = vpop.permute.xlu0 %1891
      %1893 = vrot.lane.b32.xlu0 %v1721, 32
      %v1894 = vpop.permute.xlu0 %1893
      %1895 = vrot.lane.b32.xlu0 %v1722, 32
      %v1896 = vpop.permute.xlu0 %1895
      %1897 = vrot.lane.b32.xlu0 %v1723, 32
      %v1898 = vpop.permute.xlu0 %1897
      %1899 = vrot.lane.b32.xlu0 %v1724, 32
      %v1900 = vpop.permute.xlu0 %1899
      %1901 = vrot.lane.b32.xlu0 %v1725, 32
      %v1902 = vpop.permute.xlu0 %1901
      %1903 = vrot.lane.b32.xlu0 %v1726, 32
      %v1904 = vpop.permute.xlu0 %1903
      %1905 = vrot.lane.b32.xlu0 %v1727, 32
      %v1906 = vpop.permute.xlu0 %1905
      %1907 = vrot.lane.b32.xlu0 %v1728, 32
      %v1908 = vpop.permute.xlu0 %1907
      %1909 = vrot.lane.b32.xlu0 %v1729, 32
      %v1910 = vpop.permute.xlu0 %1909
      %1911 = vrot.lane.b32.xlu0 %v1730, 32
      %v1912 = vpop.permute.xlu0 %1911
      %1913 = vrot.lane.b32.xlu0 %v1731, 32
      %v1914 = vpop.permute.xlu0 %1913
      %1915 = vrot.lane.b32.xlu0 %v1732, 32
      %v1916 = vpop.permute.xlu0 %1915
      %1917 = vrot.lane.b32.xlu0 %v1733, 32
      %v1918 = vpop.permute.xlu0 %1917
      %1919 = vrot.lane.b32.xlu0 %v1734, 32
      %v1920 = vpop.permute.xlu0 %1919
      %1921 = vrot.lane.b32.xlu0 %v1735, 32
      %v1922 = vpop.permute.xlu0 %1921
      %1923 = vrot.lane.b32.xlu0 %v1736, 32
      %v1924 = vpop.permute.xlu0 %1923
      %1925 = vrot.lane.b32.xlu0 %v1737, 32
      %v1926 = vpop.permute.xlu0 %1925
      %1927 = vrot.lane.b32.xlu0 %v1738, 32
      %v1928 = vpop.permute.xlu0 %1927
      %1929 = vrot.lane.b32.xlu0 %v1739, 32
      %v1930 = vpop.permute.xlu0 %1929
      %1931 = vrot.lane.b32.xlu0 %v1740, 32
      %v1932 = vpop.permute.xlu0 %1931
      %1933 = vrot.lane.b32.xlu0 %v1741, 32
      %v1934 = vpop.permute.xlu0 %1933
      %1935 = vrot.lane.b32.xlu0 %v1742, 32
      %v1936 = vpop.permute.xlu0 %1935
      %1937 = vrot.lane.b32.xlu0 %v1743, 32
      %v1938 = vpop.permute.xlu0 %1937
      %v1969 = vsel %vm433, 0.0, %v1784
      %v1970 = vsel %vm433, 0.0, %v1786
      %v1971 = vsel %vm433, %v1712, %v1788
      %v1972 = vsel %vm433, %v1713, %v1790
      %v1973 = vsel %vm433, %v1714, %v1792
      %v1974 = vsel %vm433, %v1715, %v1794
      %v1975 = vsel %vm433, %v1716, %v1796
      %v1976 = vsel %vm433, %v1717, %v1798
      %v1977 = vsel %vm433, %v1718, %v1800
      %v1978 = vsel %vm433, %v1719, %v1802
      %v1979 = vsel %vm433, %v1720, %v1804
      %v1980 = vsel %vm433, %v1721, %v1806
      %v1981 = vsel %vm433, %v1722, %v1808
      %v1982 = vsel %vm433, %v1723, %v1810
      %v1983 = vsel %vm433, %v1724, %v1812
      %v1984 = vsel %vm433, %v1725, %v1814
      %v1985 = vsel %vm433, %v1726, %v1816
      %v1986 = vsel %vm433, %v1727, %v1818
      %v1987 = vsel %vm433, %v1728, %v1820
      %v1988 = vsel %vm433, %v1729, %v1822
      %v1989 = vsel %vm433, %v1730, %v1824
      %v1990 = vsel %vm433, %v1731, %v1826
      %v1991 = vsel %vm433, %v1732, %v1828
      %v1992 = vsel %vm433, %v1733, %v1830
      %v1993 = vsel %vm433, %v1734, %v1832
      %v1994 = vsel %vm433, %v1735, %v1834
      %v1995 = vsel %vm433, %v1736, %v1836
      %v1996 = vsel %vm433, %v1737, %v1838
      %v1997 = vsel %vm433, %v1738, %v1840
      %v1998 = vsel %vm433, %v1739, %v1842
      %v1999 = vsel %vm433, %v1740, %v1844
      %v2000 = vsel %vm433, %v1741, %v1846
      %v2001 = vsel %vm466, %v1969, %v1880
      %v2002 = vsel %vm466, %v1970, %v1882
      %v2003 = vsel %vm466, %v1971, %v1884
      %v2004 = vsel %vm466, %v1972, %v1886
      %v2005 = vsel %vm466, %v1973, %v1888
      %v2006 = vsel %vm466, %v1974, %v1890
      %v2007 = vsel %vm466, %v1975, %v1892
      %v2008 = vsel %vm466, %v1976, %v1894
      %v2009 = vsel %vm466, %v1977, %v1896
      %v2010 = vsel %vm466, %v1978, %v1898
      %v2011 = vsel %vm466, %v1979, %v1900
      %v2012 = vsel %vm466, %v1980, %v1902
      %v2013 = vsel %vm466, %v1981, %v1904
      %v2014 = vsel %vm466, %v1982, %v1906
      %v2015 = vsel %vm466, %v1983, %v1908
      %v2016 = vsel %vm466, %v1984, %v1910
      %v2017 = vsel %vm466, %v1985, %v1912
      %v2018 = vsel %vm466, %v1986, %v1914
      %v2019 = vsel %vm466, %v1987, %v1916
      %v2020 = vsel %vm466, %v1988, %v1918
      %v2021 = vsel %vm466, %v1989, %v1920
      %v2022 = vsel %vm466, %v1990, %v1922
      %v2023 = vsel %vm466, %v1991, %v1924
      %v2024 = vsel %vm466, %v1992, %v1926
      %v2025 = vsel %vm466, %v1993, %v1928
      %v2026 = vsel %vm466, %v1994, %v1930
      %v2027 = vsel %vm466, %v1995, %v1932
      %v2028 = vsel %vm466, %v1996, %v1934
      %v2029 = vsel %vm466, %v1997, %v1936
      %v2030 = vsel %vm466, %v1998, %v1938
      %v2031 = vsel %vm466, %v1999, %v401
      %v2032 = vsel %vm466, %v2000, %v401
      %v2033 = vpack.c.bf16 %v2002, %v2001
      %v2034 = vpack.c.bf16 %v2004, %v2003
      %v2035 = vpack.c.bf16 %v2006, %v2005
      %v2036 = vpack.c.bf16 %v2008, %v2007
      %v2037 = vpack.c.bf16 %v2010, %v2009
      %v2038 = vpack.c.bf16 %v2012, %v2011
      %v2039 = vpack.c.bf16 %v2014, %v2013
      %v2040 = vpack.c.bf16 %v2016, %v2015
      %v2041 = vpack.c.bf16 %v2018, %v2017
      %v2042 = vpack.c.bf16 %v2020, %v2019
      %v2043 = vpack.c.bf16 %v2022, %v2021
      %v2044 = vpack.c.bf16 %v2024, %v2023
      %v2045 = vpack.c.bf16 %v2026, %v2025
      %v2046 = vpack.c.bf16 %v2028, %v2027
      %v2047 = vpack.c.bf16 %v2030, %v2029
      %v2048 = vpack.c.bf16 %v2032, %v2031
      %v2049 = vlaneseq
      %v2050 = vshrl.u32 %v2049, 7
      %v2051 = vsub.s32 5, %v2050
      %v2052 = vrot.slane %v204, %v2051
      %v2059 = vunpack.c.l.b16 %v1745
      %v2060 = vunpack.c.l.b16 %v1746
      %v2061 = vunpack.c.l.b16 %v1747
      %v2062 = vunpack.c.l.b16 %v1748
      %v2063 = vunpack.c.l.b16 %v1749
      %v2064 = vunpack.c.l.b16 %v1750
      %v2065 = vpack.c.b16 %v2060, %v2059
      %v2066 = vpack.c.b16 %v2062, %v2061
      %v2067 = vpack.c.b16 %v2064, %v2063
      %v2072 = vsel %vm537, %v2033, 0
      %v2075 = vsel %vm537, %v2034, 0
      %v2078 = vsel %vm537, %v2035, 0
      %v2081 = vsel %vm537, %v2036, 0
      %v2084 = vsel %vm537, %v2037, 0
      %v2087 = vsel %vm537, %v2038, 0
      %v2090 = vsel %vm537, %v2039, 0
      %v2093 = vsel %vm537, %v2040, 0
      %v2096 = vsel %vm537, %v2041, 0
      %v2099 = vsel %vm537, %v2042, 0
      %v2102 = vsel %vm537, %v2043, 0
      %v2105 = vsel %vm537, %v2044, 0
      %v2108 = vsel %vm537, %v2045, 0
      %v2111 = vsel %vm537, %v2046, 0
      %v2114 = vsel %vm537, %v2047, 0
      %v2117 = vsel %vm537, %v2048, 0
      %2119 = vmatprep.subr.bf16.mxu0 0
      %2120 = vmatpush1.bf16.msra.mxu0 %v2065
      %2121 = vmatprep.subr.bf16.mxu0 0
      %2122 = vmatpush1.bf16.msra.mxu0 %v2066
      %2123 = vmatprep.subr.bf16.mxu0 0
      %2124 = vmatpush1.bf16.msra.mxu0 %v2067
      %2125 = vmatprep.subr.bf16.mxu0 0
      %2126 = vmatpush1.bf16.msra.mxu0 0
      %2127 = vmatprep.subr.bf16.mxu0 0
      %2128 = vmatpush1.bf16.msra.mxu0 0
      %2129 = vmatprep.subr.bf16.mxu0 0
      %2130 = vmatpush1.bf16.msra.mxu0 0
      %2131 = vmatprep.subr.bf16.mxu0 0
      %2132 = vmatpush1.bf16.msra.mxu0 0
      %2133 = vmatprep.subr.bf16.mxu0 0
      %2134 = vmatpush1.bf16.msra.mxu0 0
      %2135 = vmatprep.subr.bf16.mxu0 0
      %2136 = vmatpush1.bf16.msra.mxu0 0
      %2137 = vmatprep.subr.bf16.mxu0 0
      %2138 = vmatpush1.bf16.msra.mxu0 0
      %2139 = vmatprep.subr.bf16.mxu0 0
      %2140 = vmatpush1.bf16.msra.mxu0 0
      %2141 = vmatprep.subr.bf16.mxu0 0
      %2142 = vmatpush1.bf16.msra.mxu0 0
      %2143 = vmatprep.subr.bf16.mxu0 0
      %2144 = vmatpush1.bf16.msra.mxu0 0
      %2145 = vmatprep.subr.bf16.mxu0 0
      %2146 = vmatpush1.bf16.msra.mxu0 0
      %2147 = vmatprep.subr.bf16.mxu0 0
      %2148 = vmatpush1.bf16.msra.mxu0 0
      %2149 = vmatprep.subr.bf16.mxu0 0
      %2150 = vmatpush1.bf16.msra.mxu0 0
      %2151 = vmatprep.mubr.bf16.mxu0 0
      %2152 = vmatmul.mubr.bf16.gmra.mrb[0].mxu0 %v2072
      %v2153 = vpop.f32.mrb[0].mxu0
      %v2154 = vadd.f32 %v2052, %v2153
      %v2155 = vpop.f32.mrb[0].mxu0
      %v2156 = vpop.f32.mrb[0].mxu0
      %v2157 = vadd.f32 %v2052, %v2156
      %v2158 = vpop.f32.mrb[0].mxu0
      %2159 = vmatprep.mubr.bf16.mxu0 0
      %2160 = vmatmul.mubr.bf16.gmra.mrb[0].mxu0 %v2075
      %v2161 = vpop.f32.mrb[0].mxu0
      %v2162 = vadd.f32 %v2052, %v2161
      %v2163 = vpop.f32.mrb[0].mxu0
      %v2164 = vpop.f32.mrb[0].mxu0
      %v2165 = vadd.f32 %v2052, %v2164
      %v2166 = vpop.f32.mrb[0].mxu0
      %2167 = vmatprep.mubr.bf16.mxu0 0
      %2168 = vmatmul.mubr.bf16.gmra.mrb[0].mxu0 %v2078
      %v2169 = vpop.f32.mrb[0].mxu0
      %v2170 = vadd.f32 %v2052, %v2169
      %v2171 = vpop.f32.mrb[0].mxu0
      %v2172 = vpop.f32.mrb[0].mxu0
      %v2173 = vadd.f32 %v2052, %v2172
      %v2174 = vpop.f32.mrb[0].mxu0
      %2175 = vmatprep.mubr.bf16.mxu0 0
      %2176 = vmatmul.mubr.bf16.gmra.mrb[0].mxu0 %v2081
      %v2177 = vpop.f32.mrb[0].mxu0
      %v2178 = vadd.f32 %v2052, %v2177
      %v2179 = vpop.f32.mrb[0].mxu0
      %v2180 = vpop.f32.mrb[0].mxu0
      %v2181 = vadd.f32 %v2052, %v2180
      %v2182 = vpop.f32.mrb[0].mxu0
      %2183 = vmatprep.mubr.bf16.mxu0 0
      %2184 = vmatmul.mubr.bf16.gmra.mrb[0].mxu0 %v2084
      %v2185 = vpop.f32.mrb[0].mxu0
      %v2186 = vadd.f32 %v2052, %v2185
      %v2187 = vpop.f32.mrb[0].mxu0
      %v2188 = vpop.f32.mrb[0].mxu0
      %v2189 = vadd.f32 %v2052, %v2188
      %v2190 = vpop.f32.mrb[0].mxu0
      %2191 = vmatprep.mubr.bf16.mxu0 0
      %2192 = vmatmul.mubr.bf16.gmra.mrb[0].mxu0 %v2087
      %v2193 = vpop.f32.mrb[0].mxu0
      %v2194 = vadd.f32 %v2052, %v2193
      %v2195 = vpop.f32.mrb[0].mxu0
      %v2196 = vpop.f32.mrb[0].mxu0
      %v2197 = vadd.f32 %v2052, %v2196
      %v2198 = vpop.f32.mrb[0].mxu0
      %2199 = vmatprep.mubr.bf16.mxu0 0
      %2200 = vmatmul.mubr.bf16.gmra.mrb[0].mxu0 %v2090
      %v2201 = vpop.f32.mrb[0].mxu0
      %v2202 = vadd.f32 %v2052, %v2201
      %v2203 = vpop.f32.mrb[0].mxu0
      %v2204 = vpop.f32.mrb[0].mxu0
      %v2205 = vadd.f32 %v2052, %v2204
      %v2206 = vpop.f32.mrb[0].mxu0
      %2207 = vmatprep.mubr.bf16.mxu0 0
      %2208 = vmatmul.mubr.bf16.gmra.mrb[0].mxu0 %v2093
      %v2209 = vpop.f32.mrb[0].mxu0
      %v2210 = vadd.f32 %v2052, %v2209
      %v2211 = vpop.f32.mrb[0].mxu0
      %v2212 = vpop.f32.mrb[0].mxu0
      %v2213 = vadd.f32 %v2052, %v2212
      %v2214 = vpop.f32.mrb[0].mxu0
      %2215 = vmatprep.mubr.bf16.mxu0 0
      %2216 = vmatmul.mubr.bf16.gmra.mrb[0].mxu0 %v2096
      %v2217 = vpop.f32.mrb[0].mxu0
      %v2218 = vadd.f32 %v2052, %v2217
      %v2219 = vpop.f32.mrb[0].mxu0
      %v2220 = vpop.f32.mrb[0].mxu0
      %v2221 = vadd.f32 %v2052, %v2220
      %v2222 = vpop.f32.mrb[0].mxu0
      %2223 = vmatprep.mubr.bf16.mxu0 0
      %2224 = vmatmul.mubr.bf16.gmra.mrb[0].mxu0 %v2099
      %v2225 = vpop.f32.mrb[0].mxu0
      %v2226 = vadd.f32 %v2052, %v2225
      %v2227 = vpop.f32.mrb[0].mxu0
      %v2228 = vpop.f32.mrb[0].mxu0
      %v2229 = vadd.f32 %v2052, %v2228
      %v2230 = vpop.f32.mrb[0].mxu0
      %2231 = vmatprep.mubr.bf16.mxu0 0
      %2232 = vmatmul.mubr.bf16.gmra.mrb[0].mxu0 %v2102
      %v2233 = vpop.f32.mrb[0].mxu0
      %v2234 = vadd.f32 %v2052, %v2233
      %v2235 = vpop.f32.mrb[0].mxu0
      %v2236 = vpop.f32.mrb[0].mxu0
      %v2237 = vadd.f32 %v2052, %v2236
      %v2238 = vpop.f32.mrb[0].mxu0
      %2239 = vmatprep.mubr.bf16.mxu0 0
      %2240 = vmatmul.mubr.bf16.gmra.mrb[0].mxu0 %v2105
      %v2241 = vpop.f32.mrb[0].mxu0
      %v2242 = vadd.f32 %v2052, %v2241
      %v2243 = vpop.f32.mrb[0].mxu0
      %v2244 = vpop.f32.mrb[0].mxu0
      %v2245 = vadd.f32 %v2052, %v2244
      %v2246 = vpop.f32.mrb[0].mxu0
      %2247 = vmatprep.mubr.bf16.mxu0 0
      %2248 = vmatmul.mubr.bf16.gmra.mrb[0].mxu0 %v2108
      %v2249 = vpop.f32.mrb[0].mxu0
      %v2250 = vadd.f32 %v2052, %v2249
      %v2251 = vpop.f32.mrb[0].mxu0
      %v2252 = vpop.f32.mrb[0].mxu0
      %v2253 = vadd.f32 %v2052, %v2252
      %v2254 = vpop.f32.mrb[0].mxu0
      %2255 = vmatprep.mubr.bf16.mxu0 0
      %2256 = vmatmul.mubr.bf16.gmra.mrb[0].mxu0 %v2111
      %v2257 = vpop.f32.mrb[0].mxu0
      %v2258 = vadd.f32 %v2052, %v2257
      %v2259 = vpop.f32.mrb[0].mxu0
      %v2260 = vpop.f32.mrb[0].mxu0
      %v2261 = vadd.f32 %v2052, %v2260
      %v2262 = vpop.f32.mrb[0].mxu0
      %2263 = vmatprep.mubr.bf16.mxu0 0
      %2264 = vmatmul.mubr.bf16.gmra.mrb[0].mxu0 %v2114
      %v2265 = vpop.f32.mrb[0].mxu0
      %v2266 = vadd.f32 %v2052, %v2265
      %v2267 = vpop.f32.mrb[0].mxu0
      %v2268 = vpop.f32.mrb[0].mxu0
      %v2269 = vadd.f32 %v2052, %v2268
      %v2270 = vpop.f32.mrb[0].mxu0
      %2271 = vmatprep.mubr.bf16.mxu0 0
      %2272 = vmatmul.mubr.bf16.gmra.mrb[0].mxu0 %v2117
      %v2273 = vpop.f32.mrb[0].mxu0
      %v2274 = vadd.f32 %v2052, %v2273
      %v2275 = vpop.f32.mrb[0].mxu0
      %v2276 = vpop.f32.mrb[0].mxu0
      %v2277 = vadd.f32 %v2052, %v2276
      %v2278 = vpop.f32.mrb[0].mxu0
      %2279 = vdwg.mxu0
      %v2280 = vmax.f32 %v2154, 0.0
      %v2281 = vmax.f32 %v2157, 0.0
      %v2282 = vmax.f32 %v2162, 0.0
      %v2283 = vmax.f32 %v2165, 0.0
      %v2284 = vmax.f32 %v2170, 0.0
      %v2285 = vmax.f32 %v2173, 0.0
      %v2286 = vmax.f32 %v2178, 0.0
      %v2287 = vmax.f32 %v2181, 0.0
      %v2288 = vmax.f32 %v2186, 0.0
      %v2289 = vmax.f32 %v2189, 0.0
      %v2290 = vmax.f32 %v2194, 0.0
      %v2291 = vmax.f32 %v2197, 0.0
      %v2292 = vmax.f32 %v2202, 0.0
      %v2293 = vmax.f32 %v2205, 0.0
      %v2294 = vmax.f32 %v2210, 0.0
      %v2295 = vmax.f32 %v2213, 0.0
      %v2296 = vmax.f32 %v2218, 0.0
      %v2297 = vmax.f32 %v2221, 0.0
      %v2298 = vmax.f32 %v2226, 0.0
      %v2299 = vmax.f32 %v2229, 0.0
      %v2300 = vmax.f32 %v2234, 0.0
      %v2301 = vmax.f32 %v2237, 0.0
      %v2302 = vmax.f32 %v2242, 0.0
      %v2303 = vmax.f32 %v2245, 0.0
      %v2304 = vmax.f32 %v2250, 0.0
      %v2305 = vmax.f32 %v2253, 0.0
      %v2306 = vmax.f32 %v2258, 0.0
      %v2307 = vmax.f32 %v2261, 0.0
      %v2308 = vmax.f32 %v2266, 0.0
      %v2309 = vmax.f32 %v2269, 0.0
      %v2310 = vmax.f32 %v2274, 0.0
      %v2311 = vmax.f32 %v2277, 0.0
      %s2312 = scalar_lea.vmem %s1, 72
      %v2313 = vld [vmem:[%s2312] sm:$0xf]
      %v2314 = vld [vmem:[%s2312 + $0x4] sm:$0xf]
      %v2315 = vld [vmem:[%s2312 + $0x8] sm:$0xf]
      %v2316 = vld [vmem:[%s2312 + $0xc] sm:$0xf]
      %v2317 = vld [vmem:[%s2312 + $0x10] sm:$0xf]
      %v2318 = vld [vmem:[%s2312 + $0x14] sm:$0xf]
      %v2351 = vrot.slane %v2280, 7
      %v2352 = vrot.slane %v2281, 7
      %v2353 = vsel %vm818, %v2351, %v2352
      %v2354 = vrot.slane %v2282, 7
      %v2355 = vrot.slane %v2283, 7
      %v2356 = vsel %vm818, %v2354, %v2355
      %v2357 = vrot.slane %v2284, 7
      %v2358 = vrot.slane %v2285, 7
      %v2359 = vsel %vm818, %v2357, %v2358
      %v2360 = vrot.slane %v2286, 7
      %v2361 = vrot.slane %v2287, 7
      %v2362 = vsel %vm818, %v2360, %v2361
      %v2363 = vrot.slane %v2288, 7
      %v2364 = vrot.slane %v2289, 7
      %v2365 = vsel %vm818, %v2363, %v2364
      %v2366 = vrot.slane %v2290, 7
      %v2367 = vrot.slane %v2291, 7
      %v2368 = vsel %vm818, %v2366, %v2367
      %v2369 = vrot.slane %v2292, 7
      %v2370 = vrot.slane %v2293, 7
      %v2371 = vsel %vm818, %v2369, %v2370
      %v2372 = vrot.slane %v2294, 7
      %v2373 = vrot.slane %v2295, 7
      %v2374 = vsel %vm818, %v2372, %v2373
      %v2375 = vrot.slane %v2296, 7
      %v2376 = vrot.slane %v2297, 7
      %v2377 = vsel %vm818, %v2375, %v2376
      %v2378 = vrot.slane %v2298, 7
      %v2379 = vrot.slane %v2299, 7
      %v2380 = vsel %vm818, %v2378, %v2379
      %v2381 = vrot.slane %v2300, 7
      %v2382 = vrot.slane %v2301, 7
      %v2383 = vsel %vm818, %v2381, %v2382
      %v2384 = vrot.slane %v2302, 7
      %v2385 = vrot.slane %v2303, 7
      %v2386 = vsel %vm818, %v2384, %v2385
      %v2387 = vrot.slane %v2304, 7
      %v2388 = vrot.slane %v2305, 7
      %v2389 = vsel %vm818, %v2387, %v2388
      %v2390 = vrot.slane %v2306, 7
      %v2391 = vrot.slane %v2307, 7
      %v2392 = vsel %vm818, %v2390, %v2391
      %v2393 = vrot.slane %v2308, 7
      %v2394 = vrot.slane %v2309, 7
      %v2395 = vsel %vm818, %v2393, %v2394
      %v2396 = vrot.slane %v2310, 7
      %v2397 = vrot.slane %v2311, 7
      %v2398 = vsel %vm818, %v2396, %v2397
      %v2447 = vsel %vm818, 0.0, %v2351
      %v2448 = vsel %vm818, 0.0, %v2354
      %v2449 = vsel %vm818, 0.0, %v2357
      %v2450 = vsel %vm818, 0.0, %v2360
      %v2451 = vsel %vm818, 0.0, %v2363
      %v2452 = vsel %vm818, 0.0, %v2366
      %v2453 = vsel %vm818, 0.0, %v2369
      %v2454 = vsel %vm818, 0.0, %v2372
      %v2455 = vsel %vm818, 0.0, %v2375
      %v2456 = vsel %vm818, 0.0, %v2378
      %v2457 = vsel %vm818, 0.0, %v2381
      %v2458 = vsel %vm818, 0.0, %v2384
      %v2459 = vsel %vm818, 0.0, %v2387
      %v2460 = vsel %vm818, 0.0, %v2390
      %v2461 = vsel %vm818, 0.0, %v2393
      %v2462 = vsel %vm818, 0.0, %v2396
      %v2463 = vsel %vm818, %v2352, 0.0
      %v2464 = vsel %vm818, %v2355, 0.0
      %v2465 = vsel %vm818, %v2358, 0.0
      %v2466 = vsel %vm818, %v2361, 0.0
      %v2467 = vsel %vm818, %v2364, 0.0
      %v2468 = vsel %vm818, %v2367, 0.0
      %v2469 = vsel %vm818, %v2370, 0.0
      %v2470 = vsel %vm818, %v2373, 0.0
      %v2471 = vsel %vm818, %v2376, 0.0
      %v2472 = vsel %vm818, %v2379, 0.0
      %v2473 = vsel %vm818, %v2382, 0.0
      %v2474 = vsel %vm818, %v2385, 0.0
      %v2475 = vsel %vm818, %v2388, 0.0
      %v2476 = vsel %vm818, %v2391, 0.0
      %v2477 = vsel %vm818, %v2394, 0.0
      %v2478 = vsel %vm818, %v2397, 0.0
      %v2511 = vrot.slane %v2447, 1
      %v2512 = vrot.slane %v2353, 1
      %v2513 = vsel %vm979, %v2511, %v2512
      %v2514 = vrot.slane %v2463, 1
      %v2515 = vsel %vm979, %v2512, %v2514
      %v2516 = vrot.slane %v2448, 1
      %v2517 = vrot.slane %v2356, 1
      %v2518 = vsel %vm979, %v2516, %v2517
      %v2519 = vrot.slane %v2464, 1
      %v2520 = vsel %vm979, %v2517, %v2519
      %v2521 = vrot.slane %v2449, 1
      %v2522 = vrot.slane %v2359, 1
      %v2523 = vsel %vm979, %v2521, %v2522
      %v2524 = vrot.slane %v2465, 1
      %v2525 = vsel %vm979, %v2522, %v2524
      %v2526 = vrot.slane %v2450, 1
      %v2527 = vrot.slane %v2362, 1
      %v2528 = vsel %vm979, %v2526, %v2527
      %v2529 = vrot.slane %v2466, 1
      %v2530 = vsel %vm979, %v2527, %v2529
      %v2531 = vrot.slane %v2451, 1
      %v2532 = vrot.slane %v2365, 1
      %v2533 = vsel %vm979, %v2531, %v2532
      %v2534 = vrot.slane %v2467, 1
      %v2535 = vsel %vm979, %v2532, %v2534
      %v2536 = vrot.slane %v2452, 1
      %v2537 = vrot.slane %v2368, 1
      %v2538 = vsel %vm979, %v2536, %v2537
      %v2539 = vrot.slane %v2468, 1
      %v2540 = vsel %vm979, %v2537, %v2539
      %v2541 = vrot.slane %v2453, 1
      %v2542 = vrot.slane %v2371, 1
      %v2543 = vsel %vm979, %v2541, %v2542
      %v2544 = vrot.slane %v2469, 1
      %v2545 = vsel %vm979, %v2542, %v2544
      %v2546 = vrot.slane %v2454, 1
      %v2547 = vrot.slane %v2374, 1
      %v2548 = vsel %vm979, %v2546, %v2547
      %v2549 = vrot.slane %v2470, 1
      %v2550 = vsel %vm979, %v2547, %v2549
      %v2551 = vrot.slane %v2455, 1
      %v2552 = vrot.slane %v2377, 1
      %v2553 = vsel %vm979, %v2551, %v2552
      %v2554 = vrot.slane %v2471, 1
      %v2555 = vsel %vm979, %v2552, %v2554
      %v2556 = vrot.slane %v2456, 1
      %v2557 = vrot.slane %v2380, 1
      %v2558 = vsel %vm979, %v2556, %v2557
      %v2559 = vrot.slane %v2472, 1
      %v2560 = vsel %vm979, %v2557, %v2559
      %v2561 = vrot.slane %v2457, 1
      %v2562 = vrot.slane %v2383, 1
      %v2563 = vsel %vm979, %v2561, %v2562
      %v2564 = vrot.slane %v2473, 1
      %v2565 = vsel %vm979, %v2562, %v2564
      %v2566 = vrot.slane %v2458, 1
      %v2567 = vrot.slane %v2386, 1
      %v2568 = vsel %vm979, %v2566, %v2567
      %v2569 = vrot.slane %v2474, 1
      %v2570 = vsel %vm979, %v2567, %v2569
      %v2571 = vrot.slane %v2459, 1
      %v2572 = vrot.slane %v2389, 1
      %v2573 = vsel %vm979, %v2571, %v2572
      %v2574 = vrot.slane %v2475, 1
      %v2575 = vsel %vm979, %v2572, %v2574
      %v2576 = vrot.slane %v2460, 1
      %v2577 = vrot.slane %v2392, 1
      %v2578 = vsel %vm979, %v2576, %v2577
      %v2579 = vrot.slane %v2476, 1
      %v2580 = vsel %vm979, %v2577, %v2579
      %v2581 = vrot.slane %v2461, 1
      %v2582 = vrot.slane %v2395, 1
      %v2583 = vsel %vm979, %v2581, %v2582
      %v2584 = vrot.slane %v2477, 1
      %v2585 = vsel %vm979, %v2582, %v2584
      %v2586 = vrot.slane %v2462, 1
      %v2587 = vrot.slane %v2398, 1
      %v2588 = vsel %vm979, %v2586, %v2587
      %v2589 = vrot.slane %v2478, 1
      %v2590 = vsel %vm979, %v2587, %v2589
      %2591 = vrot.lane.b32.xlu0 %v2513, 16
      %v2592 = vpop.permute.xlu0 %2591
      %2593 = vrot.lane.b32.xlu0 %v2515, 16
      %v2594 = vpop.permute.xlu0 %2593
      %2595 = vrot.lane.b32.xlu0 %v2518, 16
      %v2596 = vpop.permute.xlu0 %2595
      %2597 = vrot.lane.b32.xlu0 %v2520, 16
      %v2598 = vpop.permute.xlu0 %2597
      %2599 = vrot.lane.b32.xlu0 %v2523, 16
      %v2600 = vpop.permute.xlu0 %2599
      %2601 = vrot.lane.b32.xlu0 %v2525, 16
      %v2602 = vpop.permute.xlu0 %2601
      %2603 = vrot.lane.b32.xlu0 %v2528, 16
      %v2604 = vpop.permute.xlu0 %2603
      %2605 = vrot.lane.b32.xlu0 %v2530, 16
      %v2606 = vpop.permute.xlu0 %2605
      %2607 = vrot.lane.b32.xlu0 %v2533, 16
      %v2608 = vpop.permute.xlu0 %2607
      %2609 = vrot.lane.b32.xlu0 %v2535, 16
      %v2610 = vpop.permute.xlu0 %2609
      %2611 = vrot.lane.b32.xlu0 %v2538, 16
      %v2612 = vpop.permute.xlu0 %2611
      %2613 = vrot.lane.b32.xlu0 %v2540, 16
      %v2614 = vpop.permute.xlu0 %2613
      %2615 = vrot.lane.b32.xlu0 %v2543, 16
      %v2616 = vpop.permute.xlu0 %2615
      %2617 = vrot.lane.b32.xlu0 %v2545, 16
      %v2618 = vpop.permute.xlu0 %2617
      %2619 = vrot.lane.b32.xlu0 %v2548, 16
      %v2620 = vpop.permute.xlu0 %2619
      %2621 = vrot.lane.b32.xlu0 %v2550, 16
      %v2622 = vpop.permute.xlu0 %2621
      %2623 = vrot.lane.b32.xlu0 %v2553, 16
      %v2624 = vpop.permute.xlu0 %2623
      %2625 = vrot.lane.b32.xlu0 %v2555, 16
      %v2626 = vpop.permute.xlu0 %2625
      %2627 = vrot.lane.b32.xlu0 %v2558, 16
      %v2628 = vpop.permute.xlu0 %2627
      %2629 = vrot.lane.b32.xlu0 %v2560, 16
      %v2630 = vpop.permute.xlu0 %2629
      %2631 = vrot.lane.b32.xlu0 %v2563, 16
      %v2632 = vpop.permute.xlu0 %2631
      %2633 = vrot.lane.b32.xlu0 %v2565, 16
      %v2634 = vpop.permute.xlu0 %2633
      %2635 = vrot.lane.b32.xlu0 %v2568, 16
      %v2636 = vpop.permute.xlu0 %2635
      %2637 = vrot.lane.b32.xlu0 %v2570, 16
      %v2638 = vpop.permute.xlu0 %2637
      %2639 = vrot.lane.b32.xlu0 %v2573, 16
      %v2640 = vpop.permute.xlu0 %2639
      %2641 = vrot.lane.b32.xlu0 %v2575, 16
      %v2642 = vpop.permute.xlu0 %2641
      %2643 = vrot.lane.b32.xlu0 %v2578, 16
      %v2644 = vpop.permute.xlu0 %2643
      %2645 = vrot.lane.b32.xlu0 %v2580, 16
      %v2646 = vpop.permute.xlu0 %2645
      %2647 = vrot.lane.b32.xlu0 %v2583, 16
      %v2648 = vpop.permute.xlu0 %2647
      %2649 = vrot.lane.b32.xlu0 %v2585, 16
      %v2650 = vpop.permute.xlu0 %2649
      %2651 = vrot.lane.b32.xlu0 %v2588, 16
      %v2652 = vpop.permute.xlu0 %2651
      %2653 = vrot.lane.b32.xlu0 %v2590, 16
      %v2654 = vpop.permute.xlu0 %2653
      %v2687 = vrot.slane %v2447, 2
      %v2688 = vrot.slane %v2353, 2
      %v2689 = vsel %vm1156, %v2687, %v2688
      %v2690 = vrot.slane %v2463, 2
      %v2691 = vsel %vm1156, %v2688, %v2690
      %v2692 = vrot.slane %v2448, 2
      %v2693 = vrot.slane %v2356, 2
      %v2694 = vsel %vm1156, %v2692, %v2693
      %v2695 = vrot.slane %v2464, 2
      %v2696 = vsel %vm1156, %v2693, %v2695
      %v2697 = vrot.slane %v2449, 2
      %v2698 = vrot.slane %v2359, 2
      %v2699 = vsel %vm1156, %v2697, %v2698
      %v2700 = vrot.slane %v2465, 2
      %v2701 = vsel %vm1156, %v2698, %v2700
      %v2702 = vrot.slane %v2450, 2
      %v2703 = vrot.slane %v2362, 2
      %v2704 = vsel %vm1156, %v2702, %v2703
      %v2705 = vrot.slane %v2466, 2
      %v2706 = vsel %vm1156, %v2703, %v2705
      %v2707 = vrot.slane %v2451, 2
      %v2708 = vrot.slane %v2365, 2
      %v2709 = vsel %vm1156, %v2707, %v2708
      %v2710 = vrot.slane %v2467, 2
      %v2711 = vsel %vm1156, %v2708, %v2710
      %v2712 = vrot.slane %v2452, 2
      %v2713 = vrot.slane %v2368, 2
      %v2714 = vsel %vm1156, %v2712, %v2713
      %v2715 = vrot.slane %v2468, 2
      %v2716 = vsel %vm1156, %v2713, %v2715
      %v2717 = vrot.slane %v2453, 2
      %v2718 = vrot.slane %v2371, 2
      %v2719 = vsel %vm1156, %v2717, %v2718
      %v2720 = vrot.slane %v2469, 2
      %v2721 = vsel %vm1156, %v2718, %v2720
      %v2722 = vrot.slane %v2454, 2
      %v2723 = vrot.slane %v2374, 2
      %v2724 = vsel %vm1156, %v2722, %v2723
      %v2725 = vrot.slane %v2470, 2
      %v2726 = vsel %vm1156, %v2723, %v2725
      %v2727 = vrot.slane %v2455, 2
      %v2728 = vrot.slane %v2377, 2
      %v2729 = vsel %vm1156, %v2727, %v2728
      %v2730 = vrot.slane %v2471, 2
      %v2731 = vsel %vm1156, %v2728, %v2730
      %v2732 = vrot.slane %v2456, 2
      %v2733 = vrot.slane %v2380, 2
      %v2734 = vsel %vm1156, %v2732, %v2733
      %v2735 = vrot.slane %v2472, 2
      %v2736 = vsel %vm1156, %v2733, %v2735
      %v2737 = vrot.slane %v2457, 2
      %v2738 = vrot.slane %v2383, 2
      %v2739 = vsel %vm1156, %v2737, %v2738
      %v2740 = vrot.slane %v2473, 2
      %v2741 = vsel %vm1156, %v2738, %v2740
      %v2742 = vrot.slane %v2458, 2
      %v2743 = vrot.slane %v2386, 2
      %v2744 = vsel %vm1156, %v2742, %v2743
      %v2745 = vrot.slane %v2474, 2
      %v2746 = vsel %vm1156, %v2743, %v2745
      %v2747 = vrot.slane %v2459, 2
      %v2748 = vrot.slane %v2389, 2
      %v2749 = vsel %vm1156, %v2747, %v2748
      %v2750 = vrot.slane %v2475, 2
      %v2751 = vsel %vm1156, %v2748, %v2750
      %v2752 = vrot.slane %v2460, 2
      %v2753 = vrot.slane %v2392, 2
      %v2754 = vsel %vm1156, %v2752, %v2753
      %v2755 = vrot.slane %v2476, 2
      %v2756 = vsel %vm1156, %v2753, %v2755
      %v2757 = vrot.slane %v2461, 2
      %v2758 = vrot.slane %v2395, 2
      %v2759 = vsel %vm1156, %v2757, %v2758
      %v2760 = vrot.slane %v2477, 2
      %v2761 = vsel %vm1156, %v2758, %v2760
      %v2762 = vrot.slane %v2462, 2
      %v2763 = vrot.slane %v2398, 2
      %v2764 = vsel %vm1156, %v2762, %v2763
      %v2765 = vrot.slane %v2478, 2
      %v2766 = vsel %vm1156, %v2763, %v2765
      %2767 = vrot.lane.b32.xlu0 %v2689, 32
      %v2768 = vpop.permute.xlu0 %2767
      %2769 = vrot.lane.b32.xlu0 %v2691, 32
      %v2770 = vpop.permute.xlu0 %2769
      %2771 = vrot.lane.b32.xlu0 %v2694, 32
      %v2772 = vpop.permute.xlu0 %2771
      %2773 = vrot.lane.b32.xlu0 %v2696, 32
      %v2774 = vpop.permute.xlu0 %2773
      %2775 = vrot.lane.b32.xlu0 %v2699, 32
      %v2776 = vpop.permute.xlu0 %2775
      %2777 = vrot.lane.b32.xlu0 %v2701, 32
      %v2778 = vpop.permute.xlu0 %2777
      %2779 = vrot.lane.b32.xlu0 %v2704, 32
      %v2780 = vpop.permute.xlu0 %2779
      %2781 = vrot.lane.b32.xlu0 %v2706, 32
      %v2782 = vpop.permute.xlu0 %2781
      %2783 = vrot.lane.b32.xlu0 %v2709, 32
      %v2784 = vpop.permute.xlu0 %2783
      %2785 = vrot.lane.b32.xlu0 %v2711, 32
      %v2786 = vpop.permute.xlu0 %2785
      %2787 = vrot.lane.b32.xlu0 %v2714, 32
      %v2788 = vpop.permute.xlu0 %2787
      %2789 = vrot.lane.b32.xlu0 %v2716, 32
      %v2790 = vpop.permute.xlu0 %2789
      %2791 = vrot.lane.b32.xlu0 %v2719, 32
      %v2792 = vpop.permute.xlu0 %2791
      %2793 = vrot.lane.b32.xlu0 %v2721, 32
      %v2794 = vpop.permute.xlu0 %2793
      %2795 = vrot.lane.b32.xlu0 %v2724, 32
      %v2796 = vpop.permute.xlu0 %2795
      %2797 = vrot.lane.b32.xlu0 %v2726, 32
      %v2798 = vpop.permute.xlu0 %2797
      %2799 = vrot.lane.b32.xlu0 %v2729, 32
      %v2800 = vpop.permute.xlu0 %2799
      %2801 = vrot.lane.b32.xlu0 %v2731, 32
      %v2802 = vpop.permute.xlu0 %2801
      %2803 = vrot.lane.b32.xlu0 %v2734, 32
      %v2804 = vpop.permute.xlu0 %2803
      %2805 = vrot.lane.b32.xlu0 %v2736, 32
      %v2806 = vpop.permute.xlu0 %2805
      %2807 = vrot.lane.b32.xlu0 %v2739, 32
      %v2808 = vpop.permute.xlu0 %2807
      %2809 = vrot.lane.b32.xlu0 %v2741, 32
      %v2810 = vpop.permute.xlu0 %2809
      %2811 = vrot.lane.b32.xlu0 %v2744, 32
      %v2812 = vpop.permute.xlu0 %2811
      %2813 = vrot.lane.b32.xlu0 %v2746, 32
      %v2814 = vpop.permute.xlu0 %2813
      %2815 = vrot.lane.b32.xlu0 %v2749, 32
      %v2816 = vpop.permute.xlu0 %2815
      %2817 = vrot.lane.b32.xlu0 %v2751, 32
      %v2818 = vpop.permute.xlu0 %2817
      %2819 = vrot.lane.b32.xlu0 %v2754, 32
      %v2820 = vpop.permute.xlu0 %2819
      %2821 = vrot.lane.b32.xlu0 %v2756, 32
      %v2822 = vpop.permute.xlu0 %2821
      %2823 = vrot.lane.b32.xlu0 %v2759, 32
      %v2824 = vpop.permute.xlu0 %2823
      %2825 = vrot.lane.b32.xlu0 %v2761, 32
      %v2826 = vpop.permute.xlu0 %2825
      %2827 = vrot.lane.b32.xlu0 %v2764, 32
      %v2828 = vpop.permute.xlu0 %2827
      %2829 = vrot.lane.b32.xlu0 %v2766, 32
      %v2830 = vpop.permute.xlu0 %2829
      %v2863 = vsel %vm433, %v2447, %v2592
      %v2864 = vsel %vm433, %v2353, %v2594
      %v2865 = vsel %vm433, %v2448, %v2596
      %v2866 = vsel %vm433, %v2356, %v2598
      %v2867 = vsel %vm433, %v2449, %v2600
      %v2868 = vsel %vm433, %v2359, %v2602
      %v2869 = vsel %vm433, %v2450, %v2604
      %v2870 = vsel %vm433, %v2362, %v2606
      %v2871 = vsel %vm433, %v2451, %v2608
      %v2872 = vsel %vm433, %v2365, %v2610
      %v2873 = vsel %vm433, %v2452, %v2612
      %v2874 = vsel %vm433, %v2368, %v2614
      %v2875 = vsel %vm433, %v2453, %v2616
      %v2876 = vsel %vm433, %v2371, %v2618
      %v2877 = vsel %vm433, %v2454, %v2620
      %v2878 = vsel %vm433, %v2374, %v2622
      %v2879 = vsel %vm433, %v2455, %v2624
      %v2880 = vsel %vm433, %v2377, %v2626
      %v2881 = vsel %vm433, %v2456, %v2628
      %v2882 = vsel %vm433, %v2380, %v2630
      %v2883 = vsel %vm433, %v2457, %v2632
      %v2884 = vsel %vm433, %v2383, %v2634
      %v2885 = vsel %vm433, %v2458, %v2636
      %v2886 = vsel %vm433, %v2386, %v2638
      %v2887 = vsel %vm433, %v2459, %v2640
      %v2888 = vsel %vm433, %v2389, %v2642
      %v2889 = vsel %vm433, %v2460, %v2644
      %v2890 = vsel %vm433, %v2392, %v2646
      %v2891 = vsel %vm433, %v2461, %v2648
      %v2892 = vsel %vm433, %v2395, %v2650
      %v2893 = vsel %vm433, %v2462, %v2652
      %v2894 = vsel %vm433, %v2398, %v2654
      %v2895 = vsel %vm466, %v2863, %v2768
      %v2896 = vsel %vm466, %v2864, %v2770
      %v2897 = vsel %vm466, %v2865, %v2772
      %v2898 = vsel %vm466, %v2866, %v2774
      %v2899 = vsel %vm466, %v2867, %v2776
      %v2900 = vsel %vm466, %v2868, %v2778
      %v2901 = vsel %vm466, %v2869, %v2780
      %v2902 = vsel %vm466, %v2870, %v2782
      %v2903 = vsel %vm466, %v2871, %v2784
      %v2904 = vsel %vm466, %v2872, %v2786
      %v2905 = vsel %vm466, %v2873, %v2788
      %v2906 = vsel %vm466, %v2874, %v2790
      %v2907 = vsel %vm466, %v2875, %v2792
      %v2908 = vsel %vm466, %v2876, %v2794
      %v2909 = vsel %vm466, %v2877, %v2796
      %v2910 = vsel %vm466, %v2878, %v2798
      %v2911 = vsel %vm466, %v2879, %v2800
      %v2912 = vsel %vm466, %v2880, %v2802
      %v2913 = vsel %vm466, %v2881, %v2804
      %v2914 = vsel %vm466, %v2882, %v2806
      %v2915 = vsel %vm466, %v2883, %v2808
      %v2916 = vsel %vm466, %v2884, %v2810
      %v2917 = vsel %vm466, %v2885, %v2812
      %v2918 = vsel %vm466, %v2886, %v2814
      %v2919 = vsel %vm466, %v2887, %v2816
      %v2920 = vsel %vm466, %v2888, %v2818
      %v2921 = vsel %vm466, %v2889, %v2820
      %v2922 = vsel %vm466, %v2890, %v2822
      %v2923 = vsel %vm466, %v2891, %v2824
      %v2924 = vsel %vm466, %v2892, %v2826
      %v2925 = vsel %vm466, %v2893, %v2828
      %v2926 = vsel %vm466, %v2894, %v2830
      %v2927 = vpack.c.bf16 %v2896, %v2895
      %v2928 = vpack.c.bf16 %v2898, %v2897
      %v2929 = vpack.c.bf16 %v2900, %v2899
      %v2930 = vpack.c.bf16 %v2902, %v2901
      %v2931 = vpack.c.bf16 %v2904, %v2903
      %v2932 = vpack.c.bf16 %v2906, %v2905
      %v2933 = vpack.c.bf16 %v2908, %v2907
      %v2934 = vpack.c.bf16 %v2910, %v2909
      %v2935 = vpack.c.bf16 %v2912, %v2911
      %v2936 = vpack.c.bf16 %v2914, %v2913
      %v2937 = vpack.c.bf16 %v2916, %v2915
      %v2938 = vpack.c.bf16 %v2918, %v2917
      %v2939 = vpack.c.bf16 %v2920, %v2919
      %v2940 = vpack.c.bf16 %v2922, %v2921
      %v2941 = vpack.c.bf16 %v2924, %v2923
      %v2942 = vpack.c.bf16 %v2926, %v2925
      %v2949 = vunpack.c.l.b16 %v2313
      %v2950 = vunpack.c.l.b16 %v2314
      %v2951 = vunpack.c.l.b16 %v2315
      %v2952 = vunpack.c.l.b16 %v2316
      %v2953 = vunpack.c.l.b16 %v2317
      %v2954 = vunpack.c.l.b16 %v2318
      %v2955 = vpack.c.b16 %v2950, %v2949
      %v2956 = vpack.c.b16 %v2952, %v2951
      %v2957 = vpack.c.b16 %v2954, %v2953
      %v2962 = vsel %vm537, %v2927, 0
      %v2965 = vsel %vm537, %v2928, 0
      %v2968 = vsel %vm537, %v2929, 0
      %v2971 = vsel %vm537, %v2930, 0
      %v2974 = vsel %vm537, %v2931, 0
      %v2977 = vsel %vm537, %v2932, 0
      %v2980 = vsel %vm537, %v2933, 0
      %v2983 = vsel %vm537, %v2934, 0
      %v2986 = vsel %vm537, %v2935, 0
      %v2989 = vsel %vm537, %v2936, 0
      %v2992 = vsel %vm537, %v2937, 0
      %v2995 = vsel %vm537, %v2938, 0
      %v2998 = vsel %vm537, %v2939, 0
      %v3001 = vsel %vm537, %v2940, 0
      %v3004 = vsel %vm537, %v2941, 0
      %v3007 = vsel %vm537, %v2942, 0
      %3009 = vmatprep.subr.bf16.mxu0 0
      %3010 = vmatpush1.bf16.msra.mxu0 %v2955
      %3011 = vmatprep.subr.bf16.mxu0 0
      %3012 = vmatpush1.bf16.msra.mxu0 %v2956
      %3013 = vmatprep.subr.bf16.mxu0 0
      %3014 = vmatpush1.bf16.msra.mxu0 %v2957
      %3015 = vmatprep.subr.bf16.mxu0 0
      %3016 = vmatpush1.bf16.msra.mxu0 0
      %3017 = vmatprep.subr.bf16.mxu0 0
      %3018 = vmatpush1.bf16.msra.mxu0 0
      %3019 = vmatprep.subr.bf16.mxu0 0
      %3020 = vmatpush1.bf16.msra.mxu0 0
      %3021 = vmatprep.subr.bf16.mxu0 0
      %3022 = vmatpush1.bf16.msra.mxu0 0
      %3023 = vmatprep.subr.bf16.mxu0 0
      %3024 = vmatpush1.bf16.msra.mxu0 0
      %3025 = vmatprep.subr.bf16.mxu0 0
      %3026 = vmatpush1.bf16.msra.mxu0 0
      %3027 = vmatprep.subr.bf16.mxu0 0
      %3028 = vmatpush1.bf16.msra.mxu0 0
      %3029 = vmatprep.subr.bf16.mxu0 0
      %3030 = vmatpush1.bf16.msra.mxu0 0
      %3031 = vmatprep.subr.bf16.mxu0 0
      %3032 = vmatpush1.bf16.msra.mxu0 0
      %3033 = vmatprep.subr.bf16.mxu0 0
      %3034 = vmatpush1.bf16.msra.mxu0 0
      %3035 = vmatprep.subr.bf16.mxu0 0
      %3036 = vmatpush1.bf16.msra.mxu0 0
      %3037 = vmatprep.subr.bf16.mxu0 0
      %3038 = vmatpush1.bf16.msra.mxu0 0
      %3039 = vmatprep.subr.bf16.mxu0 0
      %3040 = vmatpush1.bf16.msra.mxu0 0
      %3041 = vmatprep.mubr.bf16.mxu0 0
      %3042 = vmatmul.mubr.bf16.gmra.mrb[0].mxu0 %v2962
      %v3043 = vpop.f32.mrb[0].mxu0
      %v3044 = vadd.f32 0.0, %v3043
      %v3045 = vpop.f32.mrb[0].mxu0
      %v3046 = vpop.f32.mrb[0].mxu0
      %v3047 = vadd.f32 0.0, %v3046
      %v3048 = vpop.f32.mrb[0].mxu0
      %3049 = vmatprep.mubr.bf16.mxu0 0
      %3050 = vmatmul.mubr.bf16.gmra.mrb[0].mxu0 %v2965
      %v3051 = vpop.f32.mrb[0].mxu0
      %v3052 = vadd.f32 0.0, %v3051
      %v3053 = vpop.f32.mrb[0].mxu0
      %v3054 = vpop.f32.mrb[0].mxu0
      %v3055 = vadd.f32 0.0, %v3054
      %v3056 = vpop.f32.mrb[0].mxu0
      %3057 = vmatprep.mubr.bf16.mxu0 0
      %3058 = vmatmul.mubr.bf16.gmra.mrb[0].mxu0 %v2968
      %v3059 = vpop.f32.mrb[0].mxu0
      %v3060 = vadd.f32 0.0, %v3059
      %v3061 = vpop.f32.mrb[0].mxu0
      %v3062 = vpop.f32.mrb[0].mxu0
      %v3063 = vadd.f32 0.0, %v3062
      %v3064 = vpop.f32.mrb[0].mxu0
      %3065 = vmatprep.mubr.bf16.mxu0 0
      %3066 = vmatmul.mubr.bf16.gmra.mrb[0].mxu0 %v2971
      %v3067 = vpop.f32.mrb[0].mxu0
      %v3068 = vadd.f32 0.0, %v3067
      %v3069 = vpop.f32.mrb[0].mxu0
      %v3070 = vpop.f32.mrb[0].mxu0
      %v3071 = vadd.f32 0.0, %v3070
      %v3072 = vpop.f32.mrb[0].mxu0
      %3073 = vmatprep.mubr.bf16.mxu0 0
      %3074 = vmatmul.mubr.bf16.gmra.mrb[0].mxu0 %v2974
      %v3075 = vpop.f32.mrb[0].mxu0
      %v3076 = vadd.f32 0.0, %v3075
      %v3077 = vpop.f32.mrb[0].mxu0
      %v3078 = vpop.f32.mrb[0].mxu0
      %v3079 = vadd.f32 0.0, %v3078
      %v3080 = vpop.f32.mrb[0].mxu0
      %3081 = vmatprep.mubr.bf16.mxu0 0
      %3082 = vmatmul.mubr.bf16.gmra.mrb[0].mxu0 %v2977
      %v3083 = vpop.f32.mrb[0].mxu0
      %v3084 = vadd.f32 0.0, %v3083
      %v3085 = vpop.f32.mrb[0].mxu0
      %v3086 = vpop.f32.mrb[0].mxu0
      %v3087 = vadd.f32 0.0, %v3086
      %v3088 = vpop.f32.mrb[0].mxu0
      %3089 = vmatprep.mubr.bf16.mxu0 0
      %3090 = vmatmul.mubr.bf16.gmra.mrb[0].mxu0 %v2980
      %v3091 = vpop.f32.mrb[0].mxu0
      %v3092 = vadd.f32 0.0, %v3091
      %v3093 = vpop.f32.mrb[0].mxu0
      %v3094 = vpop.f32.mrb[0].mxu0
      %v3095 = vadd.f32 0.0, %v3094
      %v3096 = vpop.f32.mrb[0].mxu0
      %3097 = vmatprep.mubr.bf16.mxu0 0
      %3098 = vmatmul.mubr.bf16.gmra.mrb[0].mxu0 %v2983
      %v3099 = vpop.f32.mrb[0].mxu0
      %v3100 = vadd.f32 0.0, %v3099
      %v3101 = vpop.f32.mrb[0].mxu0
      %v3102 = vpop.f32.mrb[0].mxu0
      %v3103 = vadd.f32 0.0, %v3102
      %v3104 = vpop.f32.mrb[0].mxu0
      %3105 = vmatprep.mubr.bf16.mxu0 0
      %3106 = vmatmul.mubr.bf16.gmra.mrb[0].mxu0 %v2986
      %v3107 = vpop.f32.mrb[0].mxu0
      %v3108 = vadd.f32 0.0, %v3107
      %v3109 = vpop.f32.mrb[0].mxu0
      %v3110 = vpop.f32.mrb[0].mxu0
      %v3111 = vadd.f32 0.0, %v3110
      %v3112 = vpop.f32.mrb[0].mxu0
      %3113 = vmatprep.mubr.bf16.mxu0 0
      %3114 = vmatmul.mubr.bf16.gmra.mrb[0].mxu0 %v2989
      %v3115 = vpop.f32.mrb[0].mxu0
      %v3116 = vadd.f32 0.0, %v3115
      %v3117 = vpop.f32.mrb[0].mxu0
      %v3118 = vpop.f32.mrb[0].mxu0
      %v3119 = vadd.f32 0.0, %v3118
      %v3120 = vpop.f32.mrb[0].mxu0
      %3121 = vmatprep.mubr.bf16.mxu0 0
      %3122 = vmatmul.mubr.bf16.gmra.mrb[0].mxu0 %v2992
      %v3123 = vpop.f32.mrb[0].mxu0
      %v3124 = vadd.f32 0.0, %v3123
      %v3125 = vpop.f32.mrb[0].mxu0
      %v3126 = vpop.f32.mrb[0].mxu0
      %v3127 = vadd.f32 0.0, %v3126
      %v3128 = vpop.f32.mrb[0].mxu0
      %3129 = vmatprep.mubr.bf16.mxu0 0
      %3130 = vmatmul.mubr.bf16.gmra.mrb[0].mxu0 %v2995
      %v3131 = vpop.f32.mrb[0].mxu0
      %v3132 = vadd.f32 0.0, %v3131
      %v3133 = vpop.f32.mrb[0].mxu0
      %v3134 = vpop.f32.mrb[0].mxu0
      %v3135 = vadd.f32 0.0, %v3134
      %v3136 = vpop.f32.mrb[0].mxu0
      %3137 = vmatprep.mubr.bf16.mxu0 0
      %3138 = vmatmul.mubr.bf16.gmra.mrb[0].mxu0 %v2998
      %v3139 = vpop.f32.mrb[0].mxu0
      %v3140 = vadd.f32 0.0, %v3139
      %v3141 = vpop.f32.mrb[0].mxu0
      %v3142 = vpop.f32.mrb[0].mxu0
      %v3143 = vadd.f32 0.0, %v3142
      %v3144 = vpop.f32.mrb[0].mxu0
      %3145 = vmatprep.mubr.bf16.mxu0 0
      %3146 = vmatmul.mubr.bf16.gmra.mrb[0].mxu0 %v3001
      %v3147 = vpop.f32.mrb[0].mxu0
      %v3148 = vadd.f32 0.0, %v3147
      %v3149 = vpop.f32.mrb[0].mxu0
      %v3150 = vpop.f32.mrb[0].mxu0
      %v3151 = vadd.f32 0.0, %v3150
      %v3152 = vpop.f32.mrb[0].mxu0
      %3153 = vmatprep.mubr.bf16.mxu0 0
      %3154 = vmatmul.mubr.bf16.gmra.mrb[0].mxu0 %v3004
      %v3155 = vpop.f32.mrb[0].mxu0
      %v3156 = vadd.f32 0.0, %v3155
      %v3157 = vpop.f32.mrb[0].mxu0
      %v3158 = vpop.f32.mrb[0].mxu0
      %v3159 = vadd.f32 0.0, %v3158
      %v3160 = vpop.f32.mrb[0].mxu0
      %3161 = vmatprep.mubr.bf16.mxu0 0
      %3162 = vmatmul.mubr.bf16.gmra.mrb[0].mxu0 %v3007
      %v3163 = vpop.f32.mrb[0].mxu0
      %v3164 = vadd.f32 0.0, %v3163
      %v3165 = vpop.f32.mrb[0].mxu0
      %v3166 = vpop.f32.mrb[0].mxu0
      %v3167 = vadd.f32 0.0, %v3166
      %v3168 = vpop.f32.mrb[0].mxu0
      %3169 = vdwg.mxu0
      %v3170 = vlaneseq
      %v3171 = vshrl.u32 %v3170, 7
      %v3172 = vsub.s32 6, %v3171
      %v3173 = vrot.slane %v204, %v3172
      %v3174 = vmul.f32 %v3044, %v3173
      %v3175 = vmul.f32 %v3047, %v3173
      %v3176 = vmul.f32 %v3052, %v3173
      %v3177 = vmul.f32 %v3055, %v3173
      %v3178 = vmul.f32 %v3060, %v3173
      %v3179 = vmul.f32 %v3063, %v3173
      %v3180 = vmul.f32 %v3068, %v3173
      %v3181 = vmul.f32 %v3071, %v3173
      %v3182 = vmul.f32 %v3076, %v3173
      %v3183 = vmul.f32 %v3079, %v3173
      %v3184 = vmul.f32 %v3084, %v3173
      %v3185 = vmul.f32 %v3087, %v3173
      %v3186 = vmul.f32 %v3092, %v3173
      %v3187 = vmul.f32 %v3095, %v3173
      %v3188 = vmul.f32 %v3100, %v3173
      %v3189 = vmul.f32 %v3103, %v3173
      %v3190 = vmul.f32 %v3108, %v3173
      %v3191 = vmul.f32 %v3111, %v3173
      %v3192 = vmul.f32 %v3116, %v3173
      %v3193 = vmul.f32 %v3119, %v3173
      %v3194 = vmul.f32 %v3124, %v3173
      %v3195 = vmul.f32 %v3127, %v3173
      %v3196 = vmul.f32 %v3132, %v3173
      %v3197 = vmul.f32 %v3135, %v3173
      %v3198 = vmul.f32 %v3140, %v3173
      %v3199 = vmul.f32 %v3143, %v3173
      %v3200 = vmul.f32 %v3148, %v3173
      %v3201 = vmul.f32 %v3151, %v3173
      %v3202 = vmul.f32 %v3156, %v3173
      %v3203 = vmul.f32 %v3159, %v3173
      %v3204 = vmul.f32 %v3164, %v3173
      %v3205 = vmul.f32 %v3167, %v3173
      %v3206 = vlaneseq
      %v3207 = vshrl.u32 %v3206, 7
      %v3208 = vsub.s32 7, %v3207
      %v3209 = vrot.slane %v204, %v3208
      %v3210 = vadd.f32 %v3174, %v3209
      %v3211 = vadd.f32 %v3175, %v3209
      %v3212 = vadd.f32 %v3176, %v3209
      %v3213 = vadd.f32 %v3177, %v3209
      %v3214 = vadd.f32 %v3178, %v3209
      %v3215 = vadd.f32 %v3179, %v3209
      %v3216 = vadd.f32 %v3180, %v3209
      %v3217 = vadd.f32 %v3181, %v3209
      %v3218 = vadd.f32 %v3182, %v3209
      %v3219 = vadd.f32 %v3183, %v3209
      %v3220 = vadd.f32 %v3184, %v3209
      %v3221 = vadd.f32 %v3185, %v3209
      %v3222 = vadd.f32 %v3186, %v3209
      %v3223 = vadd.f32 %v3187, %v3209
      %v3224 = vadd.f32 %v3188, %v3209
      %v3225 = vadd.f32 %v3189, %v3209
      %v3226 = vadd.f32 %v3190, %v3209
      %v3227 = vadd.f32 %v3191, %v3209
      %v3228 = vadd.f32 %v3192, %v3209
      %v3229 = vadd.f32 %v3193, %v3209
      %v3230 = vadd.f32 %v3194, %v3209
      %v3231 = vadd.f32 %v3195, %v3209
      %v3232 = vadd.f32 %v3196, %v3209
      %v3233 = vadd.f32 %v3197, %v3209
      %v3234 = vadd.f32 %v3198, %v3209
      %v3235 = vadd.f32 %v3199, %v3209
      %v3236 = vadd.f32 %v3200, %v3209
      %v3237 = vadd.f32 %v3201, %v3209
      %v3238 = vadd.f32 %v3202, %v3209
      %v3239 = vadd.f32 %v3203, %v3209
      %v3240 = vadd.f32 %v3204, %v3209
      %v3241 = vadd.f32 %v3205, %v3209
      %v3242 = vadd.f32 %v3210, %v172
      %v3243 = vadd.f32 %v3211, %v173
      %v3244 = vadd.f32 %v3212, %v174
      %v3245 = vadd.f32 %v3213, %v175
      %v3246 = vadd.f32 %v3214, %v176
      %v3247 = vadd.f32 %v3215, %v177
      %v3248 = vadd.f32 %v3216, %v178
      %v3249 = vadd.f32 %v3217, %v179
      %v3250 = vadd.f32 %v3218, %v180
      %v3251 = vadd.f32 %v3219, %v181
      %v3252 = vadd.f32 %v3220, %v182
      %v3253 = vadd.f32 %v3221, %v183
      %v3254 = vadd.f32 %v3222, %v184
      %v3255 = vadd.f32 %v3223, %v185
      %v3256 = vadd.f32 %v3224, %v186
      %v3257 = vadd.f32 %v3225, %v187
      %v3258 = vadd.f32 %v3226, %v188
      %v3259 = vadd.f32 %v3227, %v189
      %v3260 = vadd.f32 %v3228, %v190
      %v3261 = vadd.f32 %v3229, %v191
      %v3262 = vadd.f32 %v3230, %v192
      %v3263 = vadd.f32 %v3231, %v193
      %v3264 = vadd.f32 %v3232, %v194
      %v3265 = vadd.f32 %v3233, %v195
      %v3266 = vadd.f32 %v3234, %v196
      %v3267 = vadd.f32 %v3235, %v197
      %v3268 = vadd.f32 %v3236, %v198
      %v3269 = vadd.f32 %v3237, %v199
      %v3270 = vadd.f32 %v3238, %v200
      %v3271 = vadd.f32 %v3239, %v201
      %v3272 = vadd.f32 %v3240, %v202
      %v3273 = vadd.f32 %v3241, %v203
      %v3274 = vmax.f32 %v3242, 0.0
      %v3275 = vmax.f32 %v3243, 0.0
      %v3276 = vmax.f32 %v3244, 0.0
      %v3277 = vmax.f32 %v3245, 0.0
      %v3278 = vmax.f32 %v3246, 0.0
      %v3279 = vmax.f32 %v3247, 0.0
      %v3280 = vmax.f32 %v3248, 0.0
      %v3281 = vmax.f32 %v3249, 0.0
      %v3282 = vmax.f32 %v3250, 0.0
      %v3283 = vmax.f32 %v3251, 0.0
      %v3284 = vmax.f32 %v3252, 0.0
      %v3285 = vmax.f32 %v3253, 0.0
      %v3286 = vmax.f32 %v3254, 0.0
      %v3287 = vmax.f32 %v3255, 0.0
      %v3288 = vmax.f32 %v3256, 0.0
      %v3289 = vmax.f32 %v3257, 0.0
      %v3290 = vmax.f32 %v3258, 0.0
      %v3291 = vmax.f32 %v3259, 0.0
      %v3292 = vmax.f32 %v3260, 0.0
      %v3293 = vmax.f32 %v3261, 0.0
      %v3294 = vmax.f32 %v3262, 0.0
      %v3295 = vmax.f32 %v3263, 0.0
      %v3296 = vmax.f32 %v3264, 0.0
      %v3297 = vmax.f32 %v3265, 0.0
      %v3298 = vmax.f32 %v3266, 0.0
      %v3299 = vmax.f32 %v3267, 0.0
      %v3300 = vmax.f32 %v3268, 0.0
      %v3301 = vmax.f32 %v3269, 0.0
      %v3302 = vmax.f32 %v3270, 0.0
      %v3303 = vmax.f32 %v3271, 0.0
      %v3304 = vmax.f32 %v3272, 0.0
      %v3305 = vmax.f32 %v3273, 0.0
      %3306 = vst.msk [vmem:[%s170] sm:$0xff] %vm433, %v3274
      %3307 = vst.msk [vmem:[%s170 + $0x8] sm:$0xff] %vm433, %v3275
      %3308 = vst.msk [vmem:[%s170 + $0x10] sm:$0xff] %vm433, %v3276
      %3309 = vst.msk [vmem:[%s170 + $0x18] sm:$0xff] %vm433, %v3277
      %3310 = vst.msk [vmem:[%s170 + $0x20] sm:$0xff] %vm433, %v3278
      %3311 = vst.msk [vmem:[%s170 + $0x28] sm:$0xff] %vm433, %v3279
      %3312 = vst.msk [vmem:[%s170 + $0x30] sm:$0xff] %vm433, %v3280
      %3313 = vst.msk [vmem:[%s170 + $0x38] sm:$0xff] %vm433, %v3281
      %3314 = vst.msk [vmem:[%s170 + $0x40] sm:$0xff] %vm433, %v3282
      %3315 = vst.msk [vmem:[%s170 + $0x48] sm:$0xff] %vm433, %v3283
      %3316 = vst.msk [vmem:[%s170 + $0x50] sm:$0xff] %vm433, %v3284
      %3317 = vst.msk [vmem:[%s170 + $0x58] sm:$0xff] %vm433, %v3285
      %3318 = vst.msk [vmem:[%s170 + $0x60] sm:$0xff] %vm433, %v3286
      %3319 = vst.msk [vmem:[%s170 + $0x68] sm:$0xff] %vm433, %v3287
      %3320 = vst.msk [vmem:[%s170 + $0x70] sm:$0xff] %vm433, %v3288
      %3321 = vst.msk [vmem:[%s170 + $0x78] sm:$0xff] %vm433, %v3289
      %3322 = vst.msk [vmem:[%s170 + $0x80] sm:$0xff] %vm433, %v3290
      %3323 = vst.msk [vmem:[%s170 + $0x88] sm:$0xff] %vm433, %v3291
      %3324 = vst.msk [vmem:[%s170 + $0x90] sm:$0xff] %vm433, %v3292
      %3325 = vst.msk [vmem:[%s170 + $0x98] sm:$0xff] %vm433, %v3293
      %3326 = vst.msk [vmem:[%s170 + $0xa0] sm:$0xff] %vm433, %v3294
      %3327 = vst.msk [vmem:[%s170 + $0xa8] sm:$0xff] %vm433, %v3295
      %3328 = vst.msk [vmem:[%s170 + $0xb0] sm:$0xff] %vm433, %v3296
      %3329 = vst.msk [vmem:[%s170 + $0xb8] sm:$0xff] %vm433, %v3297
      %3330 = vst.msk [vmem:[%s170 + $0xc0] sm:$0xff] %vm433, %v3298
      %3331 = vst.msk [vmem:[%s170 + $0xc8] sm:$0xff] %vm433, %v3299
      %3332 = vst.msk [vmem:[%s170 + $0xd0] sm:$0xff] %vm433, %v3300
      %3333 = vst.msk [vmem:[%s170 + $0xd8] sm:$0xff] %vm433, %v3301
      %3334 = vst.msk [vmem:[%s170 + $0xe0] sm:$0xff] %vm433, %v3302
      %3335 = vst.msk [vmem:[%s170 + $0xe8] sm:$0xff] %vm433, %v3303
      %3336 = vst.msk [vmem:[%s170 + $0xf0] sm:$0xff] %vm433, %v3304
      %3337 = vst.msk [vmem:[%s170 + $0xf8] sm:$0xff] %vm433, %v3305
      %p3338 = scmp.lt.s32.totalorder %s14, 1
      %s3339 = scalar_select %p3338, %s14, 1
      %s3340 = smul.addr %s3339, 32
      %s3341 = smul.addr %s3340, 8
      %s3342 = scalar_lea.vmem %s3, %s3341
      // Predicated region
      $region33: #{decoder_forward.11} parent=31 // pred_check
        %p3343 = pneg %p100
      $region34: #{decoder_forward.11} parent=31 // pred_check_branch
        %3345 = sbr.rel (%p3343) target = $region36
      $region35: #{decoder_forward.11} parent=31 // pred_region
        _
      $region36: #{decoder_forward.11} parent=31 // pred_fallthru
        _
    $region32: #{decoder_forward.11} parent=5 // pred_fallthru
      _
    %p3346 = scmp.le.s32.totalorder 2, %s9
    // Predicated region
    $region37: #{decoder_forward.11} parent=5 // pred_check
      %p3347 = pneg %p3346
    $region38: #{decoder_forward.11} parent=5 // pred_check_branch
      %3349 = sbr.rel (%p3347) target = $region40
    $region39: #{decoder_forward.11} parent=5 // pred_region
      %s3350 = ssub.s32 %s9, 2
      // Predicated region
      $region41: #{decoder_forward.11} parent=39 // pred_check
        %p3351 = pneg %p106
      $region42: #{decoder_forward.11} parent=39 // pred_check_branch
        %3353 = sbr.rel (%p3351) target = $region44
      $region43: #{decoder_forward.11} parent=39 // pred_region
        %p3354 = scmp.lt.s32.totalorder %s15, 1
        %s3355 = scalar_select %p3354, %s15, 1
        %s3356 = smul.addr %s3355, 32
        %s3357 = smul.addr %s3356, 8
        %s3358 = scalar_lea.vmem %s3, %s3357
      $region44: #{decoder_forward.11} parent=39 // pred_fallthru
        _
    $region40: #{decoder_forward.11} parent=5 // pred_fallthru
      _
  $region6: #{decoder_forward.11} parent=0 // loop_footer
    %s13 = sadd.s32 1, %s9
  $region7: #{decoder_forward.11} parent=0 // loop_footer_branch
    %8 = sbr.rel target = $region3
  $region8: #{decoder_forward.11} parent=0 // loop_exit
    _

</llo_original>
